<compile_context>
chip_gen: v5e
topology: v5e:2x2
jax: 0.10.0
libtpu: 0.0.40
codegen_flags: <defaults>
</compile_context>

<pallas_src>
import math

import jax
import jax.numpy as jnp
from jax import lax
from jax.experimental import pallas as pl
from jax.experimental.pallas import tpu as pltpu

NEG_INF = -1e9


# ----------------------------------------------------------------------------
# In-kernel helpers (traced only inside the Pallas kernel)
# ----------------------------------------------------------------------------

def _layernorm(x, g, b):
    """x: [M, E]; g/b: [1, E] broadcast rows."""
    mu = jnp.mean(x, axis=-1, keepdims=True)
    var = jnp.mean(jnp.square(x - mu), axis=-1, keepdims=True)
    return (x - mu) * lax.rsqrt(var + 1e-5) * g + b


def _softmax_lastdim(s):
    s = s - jnp.max(s, axis=-1, keepdims=True)
    p = jnp.exp(s)
    return p / jnp.sum(p, axis=-1, keepdims=True)   # exact (no approx reciprocal)


# ----------------------------------------------------------------------------
# Single fused kernel: whole BGD forward pass for one batch tile (TB batches)
# ----------------------------------------------------------------------------

def _bgd_kernel(
    x_ref, adj_ref, bond_ref, gep_ref, cnv_ref, mut_ref, bond_emb_ref,
    node_w_ref, node_b_ref, pos_ref,
    d_wattn_ref, d_battn_ref, d_wo_ref, d_bo_ref,
    d_w1_ref, d_b1_ref, d_w2_ref, d_b2_ref,
    d_ln1g_ref, d_ln1b_ref, d_ln2g_ref, d_ln2b_ref,
    c_ow_ref, c_ob_ref, c_wq_ref, c_bq_ref, c_wkv_ref, c_bkv_ref,
    c_wo_ref, c_bo_ref, c_lng_ref, c_lnb_ref,
    m_w1_ref, m_b1_ref, m_w2_ref, m_b2_ref,
    out_ref,
):
    f32, bf16 = jnp.float32, jnp.bfloat16
    TB, S, F = x_ref.shape
    E = node_w_ref.shape[1]
    L = d_wattn_ref.shape[0]
    NB = bond_emb_ref.shape[0]
    M = TB * S
    scale = 1.0 / math.sqrt(E)
    b0 = pl.multiple_of(pl.program_id(0) * TB, TB)   # first batch row of this tile

    # ---- additive self-attention bias, built fully in-kernel ---------------
    # (replaces the host-side eye/clip, bond_emb gather and jnp.where dispatches)
    adj = adj_ref[...]
    bond = bond_ref[...]
    row = lax.broadcasted_iota(jnp.int32, (TB, S, S), 1)
    col = lax.broadcasted_iota(jnp.int32, (TB, S, S), 2)
    allowed = jnp.logical_or(adj > 0.0, row == col)          # adjacency + self-loops
    bond_bias = jnp.zeros((TB, S, S), f32)
    for t in range(NB):                                      # 4-way one-hot "gather" on VPU
        bond_bias = bond_bias + jnp.where(bond == t, bond_emb_ref[t], 0.0)
    bias3 = jnp.where(allowed, bond_bias, NEG_INF)           # [TB, S, S]
    if TB == 1:
        bias_full = bias3.reshape(S, S)
    else:
        # batch folded into one score matmul -> block-diagonal additive mask
        bias_full = jnp.full((M, M), NEG_INF, f32)
        for t in range(TB):
            bias_full = lax.dynamic_update_slice(bias_full, bias3[t], (t * S, t * S))

    # ---- DrugEmbeddingModel: node projection + positional embedding --------
    # TODO(synk): DrugEmbeddingModel internals reconstructed from ctor args:
    # Linear(78->E) + learned positional emb + num_layers encoder layers with
    # adjacency/bond-biased single-head self-attention and ff_dim=2048 FFN.
    x2 = x_ref[...].reshape(M, F).astype(bf16)
    h = jnp.dot(x2, node_w_ref[...], preferred_element_type=f32) + node_b_ref[...]
    h = (h.reshape(TB, S, E) + pos_ref[...][None]).reshape(M, E)

    # ---- transformer encoder layers (batch folded into single matmuls) -----
    # TODO(synk): switch to lax.fori_loop over the stacked [L] weights if
    # num_layers grows enough for this static unroll to spill vregs.
    for l in range(L):
        hb = h.astype(bf16)
        q = jnp.dot(hb, d_wattn_ref[l, 0], preferred_element_type=f32) + d_battn_ref[l, 0]
        k = jnp.dot(hb, d_wattn_ref[l, 1], preferred_element_type=f32) + d_battn_ref[l, 1]
        v = jnp.dot(hb, d_wattn_ref[l, 2], preferred_element_type=f32) + d_battn_ref[l, 2]
        s = lax.dot_general(q.astype(bf16), k.astype(bf16),
                            (((1,), (1,)), ((), ())),
                            preferred_element_type=f32) * scale + bias_full   # [M, M]
        p = _softmax_lastdim(s)
        attn = jnp.dot(p.astype(bf16), v.astype(bf16), preferred_element_type=f32)
        attn = jnp.dot(attn.astype(bf16), d_wo_ref[l], preferred_element_type=f32) + d_bo_ref[l]
        h = _layernorm(h + attn, d_ln1g_ref[l], d_ln1b_ref[l])
        ff = jnp.dot(h.astype(bf16), d_w1_ref[l], preferred_element_type=f32) + d_b1_ref[l]
        ff = jnp.maximum(ff, 0.0)
        ff = jnp.dot(ff.astype(bf16), d_w2_ref[l], preferred_element_type=f32) + d_b2_ref[l]
        h = _layernorm(h + ff, d_ln2g_ref[l], d_ln2b_ref[l])

    # ---- cross-attention streams (gep / cnv / mut) --------------------------
    # TODO(synk): CrossAttentionModule internals reconstructed: the omics vector
    # is projected to one query token which cross-attends over the drug sequence
    # for num_layers rounds (residual + layernorm).  No key-padding mask is
    # applied (original padding handling unknown).
    drug_bf = h.astype(bf16)
    # single lane-dense [M, 3*L*2*E] K/V projection shared by all streams/layers
    kv_all = jnp.dot(drug_bf, c_wkv_ref[...], preferred_element_type=f32) + c_bkv_ref[...]

    omics_refs = (gep_ref, cnv_ref, mut_ref)
    stream_outs = []
    for m in range(3):
        om = omics_refs[m][pl.ds(b0, TB), :].astype(bf16)             # [TB, G]
        q_tok = jnp.dot(om, c_ow_ref[m], preferred_element_type=f32) + c_ob_ref[m]
        for l in range(L):
            q = (jnp.dot(q_tok.astype(bf16), c_wq_ref[m, l],
                         preferred_element_type=f32) + c_bq_ref[m, l])        # [TB, E]
            base = (m * L + l) * 2 * E
            k = kv_all[:, base:base + E]          # 32-lane slices of the fused projection
            v = kv_all[:, base + E:base + 2 * E]  # (tiny relayout; the matmul is lane-dense)
            s = lax.dot_general(q.astype(bf16), k.astype(bf16),
                                (((1,), (1,)), ((), ())),
                                preferred_element_type=f32) * scale           # [TB, M]
            if TB > 1:
                rq = lax.broadcasted_iota(jnp.int32, (TB, M), 0)
                cb = lax.broadcasted_iota(jnp.int32, (TB, M), 1) // S
                s = jnp.where(rq == cb, s, NEG_INF)                           # own batch only
            p = _softmax_lastdim(s)
            attn = jnp.dot(p.astype(bf16), v.astype(bf16), preferred_element_type=f32)
            attn = (jnp.dot(attn.astype(bf16), c_wo_ref[m, l],
                            preferred_element_type=f32) + c_bo_ref[m, l])
            q_tok = _layernorm(q_tok + attn, c_lng_ref[m, l], c_lnb_ref[m, l])
        stream_outs.append(q_tok)

    feats = jnp.concatenate(stream_outs, axis=1)                              # [TB, 3E]

    # ---- output MLP: Linear(3E,256) -> ReLU -> Dropout(eval=id) -> Linear(256,1)
    hid = jnp.dot(feats.astype(bf16), m_w1_ref[...], preferred_element_type=f32) + m_b1_ref[...]
    hid = jnp.maximum(hid, 0.0)
    pred = jnp.dot(hid.astype(bf16), m_w2_ref[...], preferred_element_type=f32) + m_b2_ref[...]
    out_ref[...] = pred.reshape(TB, 1, 1).astype(out_ref.dtype)


# ----------------------------------------------------------------------------
# Wrapper: one pallas_call, grid over the batch, weights VMEM-resident
# ----------------------------------------------------------------------------

def bgd_forward(params, x, adj_matrix, bond_info, gep, cnv, mut, tb=1):
    """Returns IC50 predictions of shape [bs, 1] (inference; dropout = identity)."""
    B, S, F = x.shape
    d, c, m = params["drug"], params["cross"], params["mlp"]
    E = d["node_w"].shape[1]
    L = d["wattn"].shape[0]
    FF = d["w1"].shape[2]
    G = gep.shape[1]
    NB = d["bond_emb"].shape[0]
    assert B % tb == 0
    steps = B // tb

    weights = (
        d["node_w"], d["node_b"], d["pos_emb"],
        d["wattn"], d["battn"], d["wo"], d["bo"],
        d["w1"], d["b1"], d["w2"], d["b2"],
        d["ln1_g"], d["ln1_b"], d["ln2_g"], d["ln2_b"],
        c["omics_w"], c["omics_b"], c["wq"], c["bq"], c["wkv"], c["bkv"],
        c["wo"], c["bo"], c["ln_g"], c["ln_b"],
        m["w1"], m["b1"], m["w2"], m["b2"],
    )

    def resident(a):        # full block, constant index -> stays resident in VMEM
        return pl.BlockSpec(a.shape, lambda b, nd=a.ndim: (0,) * nd)

    in_specs = [
        pl.BlockSpec((tb, S, F), lambda b: (b, 0, 0)),        # x
        pl.BlockSpec((tb, S, S), lambda b: (b, 0, 0)),        # adj_matrix
        pl.BlockSpec((tb, S, S), lambda b: (b, 0, 0)),        # bond_info
        resident(gep), resident(cnv), resident(mut),          # omics, sliced in-kernel
        pl.BlockSpec((NB,), lambda b: (0,),
                     memory_space=pltpu.MemorySpace.SMEM),    # bond-type bias table
    ] + [resident(w) for w in weights]

    out_specs = pl.BlockSpec((tb, 1, 1), lambda b: (b, 0, 0))

    # Advisory cost hint so XLA schedules the surrounding (tiny) ops sensibly.
    Mt = tb * S
    flops = steps * (
        2 * Mt * F * E
        + L * (6 * Mt * E * E + 4 * Mt * Mt * E + 2 * Mt * E * E + 4 * Mt * E * FF)
        + 2 * Mt * E * (3 * L * 2 * E)
        + 3 * (2 * tb * G * E + L * (4 * tb * E * E + 4 * tb * Mt * E))
        + 2 * tb * 3 * E * 256 + 2 * tb * 256)
    transc = steps * (L * Mt * Mt + 3 * L * tb * Mt)
    nbytes = sum(int(math.prod(a.shape)) * a.dtype.itemsize
                 for a in (x, adj_matrix, bond_info, gep, cnv, mut, d["bond_emb"]) + weights)
    nbytes += B * 4

    out = pl.pallas_call(
        _bgd_kernel,
        grid=(steps,),
        in_specs=in_specs,
        out_specs=out_specs,
        out_shape=jax.ShapeDtypeStruct((B, 1, 1), jnp.float32),
        compiler_params=pltpu.CompilerParams(
            dimension_semantics=("parallel",),          # shard batch across TCs (v7x megacore)
            vmem_limit_bytes=32 * 1024 * 1024),         # footprint ~3 MiB; safe on v5e/v6e/v7x
        cost_estimate=pl.CostEstimate(flops=int(flops), transcendentals=int(transc),
                                      bytes_accessed=int(nbytes)),
    )(x.astype(jnp.float32), adj_matrix.astype(jnp.float32),
      bond_info.astype(jnp.int32), gep.astype(jnp.float32),
      cnv.astype(jnp.float32), mut.astype(jnp.float32),
      d["bond_emb"], *weights)
    return out.reshape(B, 1)


# ----------------------------------------------------------------------------
# Parameter initialization (PyTorch nn.Linear-style uniform), bf16 matmul
# weights / f32 biases+norms, laid out in the stacked kernel format.
# ----------------------------------------------------------------------------

def _uniform(key, shape, bound, dtype=jnp.float32):
    return jax.random.uniform(key, shape, jnp.float32, -bound, bound).astype(dtype)


def init_params(key, *, feat_dim, embed_dim, seq_len, num_layers, num_genes,
                ff_dim, num_bond_types):
    E, L, G, FF = embed_dim, num_layers, num_genes, ff_dim
    bf16, f32 = jnp.bfloat16, jnp.float32
    ks = iter(jax.random.split(key, 32))

    def lin(shape_w, shape_b, fan_in):
        bnd = 1.0 / math.sqrt(fan_in)
        return (_uniform(next(ks), shape_w, bnd, bf16),
                _uniform(next(ks), shape_b, bnd, f32))

    node_w, node_b = lin((feat_dim, E), (1, E), feat_dim)
    wattn, battn = lin((L, 3, E, E), (L, 3, 1, E), E)        # Q/K/V stacked on axis 1
    wo, bo = lin((L, E, E), (L, 1, E), E)
    w1, b1 = lin((L, E, FF), (L, 1, FF), E)
    w2, b2 = lin((L, FF, E), (L, 1, E), FF)
    drug = {
        "node_w": node_w, "node_b": node_b,
        "pos_emb": 0.02 * jax.random.normal(next(ks), (seq_len, E), f32),
        # TODO(synk): exact bond-feature handling in DrugEmbeddingModel unknown;
        # bond types are used as a learned additive attention bias per edge.
        "bond_emb": 0.02 * jax.random.normal(next(ks), (num_bond_types,), f32),
        "wattn": wattn, "battn": battn, "wo": wo, "bo": bo,
        "w1": w1, "b1": b1, "w2": w2, "b2": b2,
        "ln1_g": jnp.ones((L, 1, E), f32), "ln1_b": jnp.zeros((L, 1, E), f32),
        "ln2_g": jnp.ones((L, 1, E), f32), "ln2_b": jnp.zeros((L, 1, E), f32),
    }

    ow, ob = lin((3, G, E), (3, 1, E), G)                    # gep / cnv / mut stacked
    cwq, cbq = lin((3, L, E, E), (3, L, 1, E), E)
    cwkv, cbkv = lin((E, 3 * L * 2 * E), (1, 3 * L * 2 * E), E)   # fused K|V, all streams/layers
    cwo, cbo = lin((3, L, E, E), (3, L, 1, E), E)
    cross = {
        "omics_w": ow, "omics_b": ob,
        "wq": cwq, "bq": cbq, "wkv": cwkv, "bkv": cbkv, "wo": cwo, "bo": cbo,
        "ln_g": jnp.ones((3, L, 1, E), f32), "ln_b": jnp.zeros((3, L, 1, E), f32),
    }

    mw1, mb1 = lin((3 * E, 256), (1, 256), 3 * E)
    mw2, mb2 = lin((256, 1), (1, 1), 256)
    mlp = {"w1": mw1, "b1": mb1, "w2": mw2, "b2": mb2}

    return {"drug": drug, "cross": cross, "mlp": mlp}


# ----------------------------------------------------------------------------
# Driver
# ----------------------------------------------------------------------------

if __name__ == "__main__":
    B = 2                    # batch
    S = 8                    # smiles_padding_length
    FEAT = 78                # input_feature_dim (fixed in module)
    E = 32                   # smiles_embedding_size
    LAYERS = 2               # num_layers
    GENES = 64               # number_of_genes
    FF = 2048                # ff_dim (fixed in module)
    NUM_BONDS = 4            # SINGLE, DOUBLE, TRIPLE, AROMATIC

    key = jax.random.PRNGKey(0)
    k_x, k_adj, k_bond, k_gep, k_cnv, k_mut, k_params = jax.random.split(key, 7)

    x = jax.random.normal(k_x, (B, S, FEAT), jnp.float32)
    adj_upper = (jax.random.uniform(k_adj, (B, S, S)) > 0.6).astype(jnp.float32)
    adj_matrix = jnp.clip(adj_upper + jnp.swapaxes(adj_upper, 1, 2), 0.0, 1.0)
    bond_info = jax.random.randint(k_bond, (B, S, S), 0, NUM_BONDS, jnp.int32)
    gep = jax.random.normal(k_gep, (B, GENES), jnp.float32)
    cnv = jax.random.normal(k_cnv, (B, GENES), jnp.float32)
    mut = jax.random.normal(k_mut, (B, GENES), jnp.float32)

    params = init_params(k_params, feat_dim=FEAT, embed_dim=E, seq_len=S,
                         num_layers=LAYERS, num_genes=GENES, ff_dim=FF,
                         num_bond_types=NUM_BONDS)

    fwd = jax.jit(bgd_forward, static_argnames=("tb",))
    preds = fwd(params, x, adj_matrix, bond_info, gep, cnv, mut, tb=1)
    preds = jax.block_until_ready(preds)
    assert preds.shape == (B, 1) and preds.dtype == jnp.float32
    assert bool(jnp.all(jnp.isfinite(preds)))
    print("KERNEL_OK")
</pallas_src>

<mosaic_0001>
module attributes {stable_mosaic.version = 11 : i64} {
  func.func @_bgd_kernel(%arg0: i32, %arg1: memref<1x8x78xf32, #tpu.memory_space<vmem>>, %arg2: memref<1x8x8xf32, #tpu.memory_space<vmem>>, %arg3: memref<1x8x8xi32, #tpu.memory_space<vmem>>, %arg4: memref<2x64xf32, #tpu.memory_space<vmem>>, %arg5: memref<2x64xf32, #tpu.memory_space<vmem>>, %arg6: memref<2x64xf32, #tpu.memory_space<vmem>>, %arg7: memref<4xf32, #tpu.memory_space<smem>>, %arg8: memref<78x32xbf16, #tpu.memory_space<vmem>>, %arg9: memref<1x32xf32, #tpu.memory_space<vmem>>, %arg10: memref<8x32xf32, #tpu.memory_space<vmem>>, %arg11: memref<2x3x32x32xbf16, #tpu.memory_space<vmem>>, %arg12: memref<2x3x1x32xf32, #tpu.memory_space<vmem>>, %arg13: memref<2x32x32xbf16, #tpu.memory_space<vmem>>, %arg14: memref<2x1x32xf32, #tpu.memory_space<vmem>>, %arg15: memref<2x32x2048xbf16, #tpu.memory_space<vmem>>, %arg16: memref<2x1x2048xf32, #tpu.memory_space<vmem>>, %arg17: memref<2x2048x32xbf16, #tpu.memory_space<vmem>>, %arg18: memref<2x1x32xf32, #tpu.memory_space<vmem>>, %arg19: memref<2x1x32xf32, #tpu.memory_space<vmem>>, %arg20: memref<2x1x32xf32, #tpu.memory_space<vmem>>, %arg21: memref<2x1x32xf32, #tpu.memory_space<vmem>>, %arg22: memref<2x1x32xf32, #tpu.memory_space<vmem>>, %arg23: memref<3x64x32xbf16, #tpu.memory_space<vmem>>, %arg24: memref<3x1x32xf32, #tpu.memory_space<vmem>>, %arg25: memref<3x2x32x32xbf16, #tpu.memory_space<vmem>>, %arg26: memref<3x2x1x32xf32, #tpu.memory_space<vmem>>, %arg27: memref<32x384xbf16, #tpu.memory_space<vmem>>, %arg28: memref<1x384xf32, #tpu.memory_space<vmem>>, %arg29: memref<3x2x32x32xbf16, #tpu.memory_space<vmem>>, %arg30: memref<3x2x1x32xf32, #tpu.memory_space<vmem>>, %arg31: memref<3x2x1x32xf32, #tpu.memory_space<vmem>>, %arg32: memref<3x2x1x32xf32, #tpu.memory_space<vmem>>, %arg33: memref<96x256xbf16, #tpu.memory_space<vmem>>, %arg34: memref<1x256xf32, #tpu.memory_space<vmem>>, %arg35: memref<256x1xbf16, #tpu.memory_space<vmem>>, %arg36: memref<1x1xf32, #tpu.memory_space<vmem>>, %arg37: memref<1x1x1xf32, #tpu.memory_space<vmem>>) attributes {dimension_semantics = [#tpu.dimension_semantics<parallel>], iteration_bounds = array<i64: 2>, scalar_prefetch = 0 : i64, scratch_operands = 0 : i64, tpu.core_type = #tpu.core_type<tc>, window_params = [{transform_indices = @transform_0, window_bounds = array<i64: 1, 8, 78>}, {transform_indices = @transform_1, window_bounds = array<i64: 1, 8, 8>}, {transform_indices = @transform_2, window_bounds = array<i64: 1, 8, 8>}, {pipeline_mode = #tpu.pipeline_mode<synchronous>, transform_indices = @transform_3, window_bounds = array<i64: 2, 64>}, {pipeline_mode = #tpu.pipeline_mode<synchronous>, transform_indices = @transform_4, window_bounds = array<i64: 2, 64>}, {pipeline_mode = #tpu.pipeline_mode<synchronous>, transform_indices = @transform_5, window_bounds = array<i64: 2, 64>}, {transform_indices = @transform_6, window_bounds = array<i64: 4>}, {pipeline_mode = #tpu.pipeline_mode<synchronous>, transform_indices = @transform_7, window_bounds = array<i64: 78, 32>}, {pipeline_mode = #tpu.pipeline_mode<synchronous>, transform_indices = @transform_8, window_bounds = array<i64: 1, 32>}, {pipeline_mode = #tpu.pipeline_mode<synchronous>, transform_indices = @transform_9, window_bounds = array<i64: 8, 32>}, {pipeline_mode = #tpu.pipeline_mode<synchronous>, transform_indices = @transform_10, window_bounds = array<i64: 2, 3, 32, 32>}, {pipeline_mode = #tpu.pipeline_mode<synchronous>, transform_indices = @transform_11, window_bounds = array<i64: 2, 3, 1, 32>}, {pipeline_mode = #tpu.pipeline_mode<synchronous>, transform_indices = @transform_12, window_bounds = array<i64: 2, 32, 32>}, {pipeline_mode = #tpu.pipeline_mode<synchronous>, transform_indices = @transform_13, window_bounds = array<i64: 2, 1, 32>}, {pipeline_mode = #tpu.pipeline_mode<synchronous>, transform_indices = @transform_14, window_bounds = array<i64: 2, 32, 2048>}, {pipeline_mode = #tpu.pipeline_mode<synchronous>, transform_indices = @transform_15, window_bounds = array<i64: 2, 1, 2048>}, {pipeline_mode = #tpu.pipeline_mode<synchronous>, transform_indices = @transform_16, window_bounds = array<i64: 2, 2048, 32>}, {pipeline_mode = #tpu.pipeline_mode<synchronous>, transform_indices = @transform_17, window_bounds = array<i64: 2, 1, 32>}, {pipeline_mode = #tpu.pipeline_mode<synchronous>, transform_indices = @transform_18, window_bounds = array<i64: 2, 1, 32>}, {pipeline_mode = #tpu.pipeline_mode<synchronous>, transform_indices = @transform_19, window_bounds = array<i64: 2, 1, 32>}, {pipeline_mode = #tpu.pipeline_mode<synchronous>, transform_indices = @transform_20, window_bounds = array<i64: 2, 1, 32>}, {pipeline_mode = #tpu.pipeline_mode<synchronous>, transform_indices = @transform_21, window_bounds = array<i64: 2, 1, 32>}, {pipeline_mode = #tpu.pipeline_mode<synchronous>, transform_indices = @transform_22, window_bounds = array<i64: 3, 64, 32>}, {pipeline_mode = #tpu.pipeline_mode<synchronous>, transform_indices = @transform_23, window_bounds = array<i64: 3, 1, 32>}, {pipeline_mode = #tpu.pipeline_mode<synchronous>, transform_indices = @transform_24, window_bounds = array<i64: 3, 2, 32, 32>}, {pipeline_mode = #tpu.pipeline_mode<synchronous>, transform_indices = @transform_25, window_bounds = array<i64: 3, 2, 1, 32>}, {pipeline_mode = #tpu.pipeline_mode<synchronous>, transform_indices = @transform_26, window_bounds = array<i64: 32, 384>}, {pipeline_mode = #tpu.pipeline_mode<synchronous>, transform_indices = @transform_27, window_bounds = array<i64: 1, 384>}, {pipeline_mode = #tpu.pipeline_mode<synchronous>, transform_indices = @transform_28, window_bounds = array<i64: 3, 2, 32, 32>}, {pipeline_mode = #tpu.pipeline_mode<synchronous>, transform_indices = @transform_29, window_bounds = array<i64: 3, 2, 1, 32>}, {pipeline_mode = #tpu.pipeline_mode<synchronous>, transform_indices = @transform_30, window_bounds = array<i64: 3, 2, 1, 32>}, {pipeline_mode = #tpu.pipeline_mode<synchronous>, transform_indices = @transform_31, window_bounds = array<i64: 3, 2, 1, 32>}, {pipeline_mode = #tpu.pipeline_mode<synchronous>, transform_indices = @transform_32, window_bounds = array<i64: 96, 256>}, {pipeline_mode = #tpu.pipeline_mode<synchronous>, transform_indices = @transform_33, window_bounds = array<i64: 1, 256>}, {pipeline_mode = #tpu.pipeline_mode<synchronous>, transform_indices = @transform_34, window_bounds = array<i64: 256, 1>}, {pipeline_mode = #tpu.pipeline_mode<synchronous>, transform_indices = @transform_35, window_bounds = array<i64: 1, 1>}, {transform_indices = @transform_36, window_bounds = array<i64: 1, 1, 1>}]} {
    %c1_i32 = arith.constant 1 : i32
    %0 = arith.muli %arg0, %c1_i32 : i32
    %1 = tpu.assume_multiple %0, 1 : i32
    %c0 = arith.constant 0 : index
    %c0_0 = arith.constant 0 : index
    %c0_1 = arith.constant 0 : index
    %2 = vector.load %arg2[%c0, %c0_0, %c0_1] : memref<1x8x8xf32, #tpu.memory_space<vmem>>, vector<1x8x8xf32>
    %c0_2 = arith.constant 0 : index
    %c0_3 = arith.constant 0 : index
    %c0_4 = arith.constant 0 : index
    %3 = vector.load %arg3[%c0_2, %c0_3, %c0_4] : memref<1x8x8xi32, #tpu.memory_space<vmem>>, vector<1x8x8xi32>
    %4 = tpu.iota {dimensions = array<i32: 1>} : vector<1x8x8xi32>
    %5 = tpu.iota {dimensions = array<i32: 2>} : vector<1x8x8xi32>
    %cst = arith.constant 0.000000e+00 : f32
    %6 = vector.broadcast %cst : f32 to vector<1x8x8xf32>
    %7 = arith.cmpf ogt, %2, %6 : vector<1x8x8xf32>
    %8 = arith.cmpi eq, %4, %5 : vector<1x8x8xi32>
    %9 = arith.ori %7, %8 : vector<1x8x8xi1>
    %cst_5 = arith.constant 0.000000e+00 : f32
    %10 = vector.broadcast %cst_5 : f32 to vector<1x8x8xf32>
    %c0_i32 = arith.constant 0 : i32
    %11 = vector.broadcast %c0_i32 : i32 to vector<1x8x8xi32>
    %12 = arith.cmpi eq, %3, %11 : vector<1x8x8xi32>
    %c0_6 = arith.constant 0 : index
    %13 = memref.load %arg7[%c0_6] : memref<4xf32, #tpu.memory_space<smem>>
    %cst_7 = arith.constant 0.000000e+00 : f32
    %14 = vector.broadcast %13 : f32 to vector<1x8x8xf32>
    %15 = vector.broadcast %cst_7 : f32 to vector<1x8x8xf32>
    %16 = arith.select %12, %14, %15 : vector<1x8x8xi1>, vector<1x8x8xf32>
    %17 = arith.addf %10, %16 : vector<1x8x8xf32>
    %c1_i32_8 = arith.constant 1 : i32
    %18 = vector.broadcast %c1_i32_8 : i32 to vector<1x8x8xi32>
    %19 = arith.cmpi eq, %3, %18 : vector<1x8x8xi32>
    %c1 = arith.constant 1 : index
    %20 = memref.load %arg7[%c1] : memref<4xf32, #tpu.memory_space<smem>>
    %cst_9 = arith.constant 0.000000e+00 : f32
    %21 = vector.broadcast %20 : f32 to vector<1x8x8xf32>
    %22 = vector.broadcast %cst_9 : f32 to vector<1x8x8xf32>
    %23 = arith.select %19, %21, %22 : vector<1x8x8xi1>, vector<1x8x8xf32>
    %24 = arith.addf %17, %23 : vector<1x8x8xf32>
    %c2_i32 = arith.constant 2 : i32
    %25 = vector.broadcast %c2_i32 : i32 to vector<1x8x8xi32>
    %26 = arith.cmpi eq, %3, %25 : vector<1x8x8xi32>
    %c2 = arith.constant 2 : index
    %27 = memref.load %arg7[%c2] : memref<4xf32, #tpu.memory_space<smem>>
    %cst_10 = arith.constant 0.000000e+00 : f32
    %28 = vector.broadcast %27 : f32 to vector<1x8x8xf32>
    %29 = vector.broadcast %cst_10 : f32 to vector<1x8x8xf32>
    %30 = arith.select %26, %28, %29 : vector<1x8x8xi1>, vector<1x8x8xf32>
    %31 = arith.addf %24, %30 : vector<1x8x8xf32>
    %c3_i32 = arith.constant 3 : i32
    %32 = vector.broadcast %c3_i32 : i32 to vector<1x8x8xi32>
    %33 = arith.cmpi eq, %3, %32 : vector<1x8x8xi32>
    %c3 = arith.constant 3 : index
    %34 = memref.load %arg7[%c3] : memref<4xf32, #tpu.memory_space<smem>>
    %cst_11 = arith.constant 0.000000e+00 : f32
    %35 = vector.broadcast %34 : f32 to vector<1x8x8xf32>
    %36 = vector.broadcast %cst_11 : f32 to vector<1x8x8xf32>
    %37 = arith.select %33, %35, %36 : vector<1x8x8xi1>, vector<1x8x8xf32>
    %38 = arith.addf %31, %37 : vector<1x8x8xf32>
    %cst_12 = arith.constant -1.000000e+09 : f32
    %39 = vector.broadcast %cst_12 : f32 to vector<1x8x8xf32>
    %40 = arith.select %9, %38, %39 : vector<1x8x8xi1>, vector<1x8x8xf32>
    %41 = vector.shape_cast %40 : vector<1x8x8xf32> to vector<8x8xf32>
    %c0_13 = arith.constant 0 : index
    %c0_14 = arith.constant 0 : index
    %c0_15 = arith.constant 0 : index
    %42 = vector.load %arg1[%c0_13, %c0_14, %c0_15] : memref<1x8x78xf32, #tpu.memory_space<vmem>>, vector<1x8x78xf32>
    %43 = vector.shape_cast %42 : vector<1x8x78xf32> to vector<8x78xf32>
    %44 = arith.truncf %43 : vector<8x78xf32> to vector<8x78xbf16>
    %c0_16 = arith.constant 0 : index
    %c0_17 = arith.constant 0 : index
    %45 = vector.load %arg8[%c0_16, %c0_17] : memref<78x32xbf16, #tpu.memory_space<vmem>>, vector<78x32xbf16>
    %cst_18 = arith.constant dense<0.000000e+00> : vector<8x32xf32>
    %46 = tpu.matmul %44, %45, %cst_18 {dimension_numbers = #tpu.dot_dimension_numbers<[1], [0], [0], [1], [0, 0, 1, 1], [], []>} : vector<8x78xbf16>, vector<78x32xbf16>, vector<8x32xf32> -> vector<8x32xf32>
    %c0_19 = arith.constant 0 : index
    %c0_20 = arith.constant 0 : index
    %47 = vector.load %arg9[%c0_19, %c0_20] : memref<1x32xf32, #tpu.memory_space<vmem>>, vector<1x32xf32>
    %48 = vector.broadcast %47 : vector<1x32xf32> to vector<8x32xf32>
    %49 = arith.addf %46, %48 : vector<8x32xf32>
    %50 = vector.shape_cast %49 : vector<8x32xf32> to vector<1x8x32xf32>
    %c0_21 = arith.constant 0 : index
    %c0_22 = arith.constant 0 : index
    %51 = vector.load %arg10[%c0_21, %c0_22] : memref<8x32xf32, #tpu.memory_space<vmem>>, vector<8x32xf32>
    %52 = vector.shape_cast %51 : vector<8x32xf32> to vector<1x8x32xf32>
    %53 = arith.addf %50, %52 : vector<1x8x32xf32>
    %54 = vector.shape_cast %53 : vector<1x8x32xf32> to vector<8x32xf32>
    %55 = arith.truncf %54 : vector<8x32xf32> to vector<8x32xbf16>
    %c0_23 = arith.constant 0 : index
    %c0_24 = arith.constant 0 : index
    %c0_25 = arith.constant 0 : index
    %c0_26 = arith.constant 0 : index
    %56 = vector.load %arg11[%c0_23, %c0_24, %c0_25, %c0_26] : memref<2x3x32x32xbf16, #tpu.memory_space<vmem>>, vector<1x1x32x32xbf16>
    %57 = vector.shape_cast %56 : vector<1x1x32x32xbf16> to vector<32x32xbf16>
    %cst_27 = arith.constant dense<0.000000e+00> : vector<8x32xf32>
    %58 = tpu.matmul %55, %57, %cst_27 {dimension_numbers = #tpu.dot_dimension_numbers<[1], [0], [0], [1], [0, 0, 1, 1], [], []>} : vector<8x32xbf16>, vector<32x32xbf16>, vector<8x32xf32> -> vector<8x32xf32>
    %c0_28 = arith.constant 0 : index
    %c0_29 = arith.constant 0 : index
    %c0_30 = arith.constant 0 : index
    %c0_31 = arith.constant 0 : index
    %59 = vector.load %arg12[%c0_28, %c0_29, %c0_30, %c0_31] : memref<2x3x1x32xf32, #tpu.memory_space<vmem>>, vector<1x1x1x32xf32>
    %60 = vector.shape_cast %59 : vector<1x1x1x32xf32> to vector<1x32xf32>
    %61 = vector.broadcast %60 : vector<1x32xf32> to vector<8x32xf32>
    %62 = arith.addf %58, %61 : vector<8x32xf32>
    %c0_32 = arith.constant 0 : index
    %c1_33 = arith.constant 1 : index
    %c0_34 = arith.constant 0 : index
    %c0_35 = arith.constant 0 : index
    %63 = vector.load %arg11[%c0_32, %c1_33, %c0_34, %c0_35] : memref<2x3x32x32xbf16, #tpu.memory_space<vmem>>, vector<1x1x32x32xbf16>
    %64 = vector.shape_cast %63 : vector<1x1x32x32xbf16> to vector<32x32xbf16>
    %cst_36 = arith.constant dense<0.000000e+00> : vector<8x32xf32>
    %65 = tpu.matmul %55, %64, %cst_36 {dimension_numbers = #tpu.dot_dimension_numbers<[1], [0], [0], [1], [0, 0, 1, 1], [], []>} : vector<8x32xbf16>, vector<32x32xbf16>, vector<8x32xf32> -> vector<8x32xf32>
    %c0_37 = arith.constant 0 : index
    %c1_38 = arith.constant 1 : index
    %c0_39 = arith.constant 0 : index
    %c0_40 = arith.constant 0 : index
    %66 = vector.load %arg12[%c0_37, %c1_38, %c0_39, %c0_40] : memref<2x3x1x32xf32, #tpu.memory_space<vmem>>, vector<1x1x1x32xf32>
    %67 = vector.shape_cast %66 : vector<1x1x1x32xf32> to vector<1x32xf32>
    %68 = vector.broadcast %67 : vector<1x32xf32> to vector<8x32xf32>
    %69 = arith.addf %65, %68 : vector<8x32xf32>
    %c0_41 = arith.constant 0 : index
    %c2_42 = arith.constant 2 : index
    %c0_43 = arith.constant 0 : index
    %c0_44 = arith.constant 0 : index
    %70 = vector.load %arg11[%c0_41, %c2_42, %c0_43, %c0_44] : memref<2x3x32x32xbf16, #tpu.memory_space<vmem>>, vector<1x1x32x32xbf16>
    %71 = vector.shape_cast %70 : vector<1x1x32x32xbf16> to vector<32x32xbf16>
    %cst_45 = arith.constant dense<0.000000e+00> : vector<8x32xf32>
    %72 = tpu.matmul %55, %71, %cst_45 {dimension_numbers = #tpu.dot_dimension_numbers<[1], [0], [0], [1], [0, 0, 1, 1], [], []>} : vector<8x32xbf16>, vector<32x32xbf16>, vector<8x32xf32> -> vector<8x32xf32>
    %c0_46 = arith.constant 0 : index
    %c2_47 = arith.constant 2 : index
    %c0_48 = arith.constant 0 : index
    %c0_49 = arith.constant 0 : index
    %73 = vector.load %arg12[%c0_46, %c2_47, %c0_48, %c0_49] : memref<2x3x1x32xf32, #tpu.memory_space<vmem>>, vector<1x1x1x32xf32>
    %74 = vector.shape_cast %73 : vector<1x1x1x32xf32> to vector<1x32xf32>
    %75 = vector.broadcast %74 : vector<1x32xf32> to vector<8x32xf32>
    %76 = arith.addf %72, %75 : vector<8x32xf32>
    %77 = arith.truncf %62 : vector<8x32xf32> to vector<8x32xbf16>
    %78 = arith.truncf %69 : vector<8x32xf32> to vector<8x32xbf16>
    %cst_50 = arith.constant dense<0.000000e+00> : vector<8x8xf32>
    %79 = tpu.matmul %77, %78, %cst_50 {dimension_numbers = #tpu.dot_dimension_numbers<[1], [1], [0], [0], [0, 0, 1, 0], [], []>} : vector<8x32xbf16>, vector<8x32xbf16>, vector<8x8xf32> -> vector<8x8xf32>
    %cst_51 = arith.constant 0.176776692 : f32
    %80 = vector.broadcast %cst_51 : f32 to vector<8x8xf32>
    %81 = arith.mulf %79, %80 : vector<8x8xf32>
    %82 = arith.addf %81, %41 : vector<8x8xf32>
    %cst_52 = arith.constant dense<0xFF800000> : vector<8xf32>
    %83 = vector.multi_reduction <maximumf>, %82, %cst_52 [1] : vector<8x8xf32> to vector<8xf32>
    %84 = vector.shape_cast %83 : vector<8xf32> to vector<8x1xf32>
    %85 = vector.broadcast %84 : vector<8x1xf32> to vector<8x8xf32>
    %86 = arith.subf %82, %85 : vector<8x8xf32>
    %87 = math.exp %86 : vector<8x8xf32>
    %cst_53 = arith.constant dense<0.000000e+00> : vector<8xf32>
    %88 = vector.multi_reduction <add>, %87, %cst_53 [1] : vector<8x8xf32> to vector<8xf32>
    %89 = vector.shape_cast %88 : vector<8xf32> to vector<8x1xf32>
    %90 = vector.broadcast %89 : vector<8x1xf32> to vector<8x8xf32>
    %91 = arith.divf %87, %90 : vector<8x8xf32>
    %92 = arith.truncf %91 : vector<8x8xf32> to vector<8x8xbf16>
    %93 = arith.truncf %76 : vector<8x32xf32> to vector<8x32xbf16>
    %cst_54 = arith.constant dense<0.000000e+00> : vector<8x32xf32>
    %94 = tpu.matmul %92, %93, %cst_54 {dimension_numbers = #tpu.dot_dimension_numbers<[1], [0], [0], [1], [0, 0, 1, 1], [], []>} : vector<8x8xbf16>, vector<8x32xbf16>, vector<8x32xf32> -> vector<8x32xf32>
    %95 = arith.truncf %94 : vector<8x32xf32> to vector<8x32xbf16>
    %c0_55 = arith.constant 0 : index
    %c0_56 = arith.constant 0 : index
    %c0_57 = arith.constant 0 : index
    %96 = vector.load %arg13[%c0_55, %c0_56, %c0_57] : memref<2x32x32xbf16, #tpu.memory_space<vmem>>, vector<1x32x32xbf16>
    %97 = vector.shape_cast %96 : vector<1x32x32xbf16> to vector<32x32xbf16>
    %cst_58 = arith.constant dense<0.000000e+00> : vector<8x32xf32>
    %98 = tpu.matmul %95, %97, %cst_58 {dimension_numbers = #tpu.dot_dimension_numbers<[1], [0], [0], [1], [0, 0, 1, 1], [], []>} : vector<8x32xbf16>, vector<32x32xbf16>, vector<8x32xf32> -> vector<8x32xf32>
    %c0_59 = arith.constant 0 : index
    %c0_60 = arith.constant 0 : index
    %c0_61 = arith.constant 0 : index
    %99 = vector.load %arg14[%c0_59, %c0_60, %c0_61] : memref<2x1x32xf32, #tpu.memory_space<vmem>>, vector<1x1x32xf32>
    %100 = vector.shape_cast %99 : vector<1x1x32xf32> to vector<1x32xf32>
    %101 = vector.broadcast %100 : vector<1x32xf32> to vector<8x32xf32>
    %102 = arith.addf %98, %101 : vector<8x32xf32>
    %103 = arith.addf %54, %102 : vector<8x32xf32>
    %c0_62 = arith.constant 0 : index
    %c0_63 = arith.constant 0 : index
    %c0_64 = arith.constant 0 : index
    %104 = vector.load %arg19[%c0_62, %c0_63, %c0_64] : memref<2x1x32xf32, #tpu.memory_space<vmem>>, vector<1x1x32xf32>
    %105 = vector.shape_cast %104 : vector<1x1x32xf32> to vector<1x32xf32>
    %c0_65 = arith.constant 0 : index
    %c0_66 = arith.constant 0 : index
    %c0_67 = arith.constant 0 : index
    %106 = vector.load %arg20[%c0_65, %c0_66, %c0_67] : memref<2x1x32xf32, #tpu.memory_space<vmem>>, vector<1x1x32xf32>
    %107 = vector.shape_cast %106 : vector<1x1x32xf32> to vector<1x32xf32>
    %cst_68 = arith.constant dense<0.000000e+00> : vector<8xf32>
    %108 = vector.multi_reduction <add>, %103, %cst_68 [1] : vector<8x32xf32> to vector<8xf32>
    %109 = vector.shape_cast %108 : vector<8xf32> to vector<8x1xf32>
    %cst_69 = arith.constant 3.200000e+01 : f32
    %110 = vector.broadcast %cst_69 : f32 to vector<8x1xf32>
    %111 = arith.divf %109, %110 : vector<8x1xf32>
    %112 = vector.broadcast %111 : vector<8x1xf32> to vector<8x32xf32>
    %113 = arith.subf %103, %112 : vector<8x32xf32>
    %114 = arith.mulf %113, %113 : vector<8x32xf32>
    %cst_70 = arith.constant dense<0.000000e+00> : vector<8xf32>
    %115 = vector.multi_reduction <add>, %114, %cst_70 [1] : vector<8x32xf32> to vector<8xf32>
    %116 = vector.shape_cast %115 : vector<8xf32> to vector<8x1xf32>
    %cst_71 = arith.constant 3.200000e+01 : f32
    %117 = vector.broadcast %cst_71 : f32 to vector<8x1xf32>
    %118 = arith.divf %116, %117 : vector<8x1xf32>
    %119 = vector.broadcast %111 : vector<8x1xf32> to vector<8x32xf32>
    %120 = arith.subf %103, %119 : vector<8x32xf32>
    %cst_72 = arith.constant 9.99999974E-6 : f32
    %121 = vector.broadcast %cst_72 : f32 to vector<8x1xf32>
    %122 = arith.addf %118, %121 : vector<8x1xf32>
    %123 = math.rsqrt %122 : vector<8x1xf32>
    %124 = vector.broadcast %123 : vector<8x1xf32> to vector<8x32xf32>
    %125 = arith.mulf %120, %124 : vector<8x32xf32>
    %126 = vector.broadcast %105 : vector<1x32xf32> to vector<8x32xf32>
    %127 = arith.mulf %125, %126 : vector<8x32xf32>
    %128 = vector.broadcast %107 : vector<1x32xf32> to vector<8x32xf32>
    %129 = arith.addf %127, %128 : vector<8x32xf32>
    %130 = arith.truncf %129 : vector<8x32xf32> to vector<8x32xbf16>
    %c0_73 = arith.constant 0 : index
    %c0_74 = arith.constant 0 : index
    %c0_75 = arith.constant 0 : index
    %131 = vector.load %arg15[%c0_73, %c0_74, %c0_75] : memref<2x32x2048xbf16, #tpu.memory_space<vmem>>, vector<1x32x2048xbf16>
    %132 = vector.shape_cast %131 : vector<1x32x2048xbf16> to vector<32x2048xbf16>
    %cst_76 = arith.constant dense<0.000000e+00> : vector<8x2048xf32>
    %133 = tpu.matmul %130, %132, %cst_76 {dimension_numbers = #tpu.dot_dimension_numbers<[1], [0], [0], [1], [0, 0, 1, 1], [], []>} : vector<8x32xbf16>, vector<32x2048xbf16>, vector<8x2048xf32> -> vector<8x2048xf32>
    %c0_77 = arith.constant 0 : index
    %c0_78 = arith.constant 0 : index
    %c0_79 = arith.constant 0 : index
    %134 = vector.load %arg16[%c0_77, %c0_78, %c0_79] : memref<2x1x2048xf32, #tpu.memory_space<vmem>>, vector<1x1x2048xf32>
    %135 = vector.shape_cast %134 : vector<1x1x2048xf32> to vector<1x2048xf32>
    %136 = vector.broadcast %135 : vector<1x2048xf32> to vector<8x2048xf32>
    %137 = arith.addf %133, %136 : vector<8x2048xf32>
    %cst_80 = arith.constant 0.000000e+00 : f32
    %138 = vector.broadcast %cst_80 : f32 to vector<8x2048xf32>
    %139 = arith.maximumf %137, %138 : vector<8x2048xf32>
    %140 = arith.truncf %139 : vector<8x2048xf32> to vector<8x2048xbf16>
    %c0_81 = arith.constant 0 : index
    %c0_82 = arith.constant 0 : index
    %c0_83 = arith.constant 0 : index
    %141 = vector.load %arg17[%c0_81, %c0_82, %c0_83] : memref<2x2048x32xbf16, #tpu.memory_space<vmem>>, vector<1x2048x32xbf16>
    %142 = vector.shape_cast %141 : vector<1x2048x32xbf16> to vector<2048x32xbf16>
    %cst_84 = arith.constant dense<0.000000e+00> : vector<8x32xf32>
    %143 = tpu.matmul %140, %142, %cst_84 {dimension_numbers = #tpu.dot_dimension_numbers<[1], [0], [0], [1], [0, 0, 1, 1], [], []>} : vector<8x2048xbf16>, vector<2048x32xbf16>, vector<8x32xf32> -> vector<8x32xf32>
    %c0_85 = arith.constant 0 : index
    %c0_86 = arith.constant 0 : index
    %c0_87 = arith.constant 0 : index
    %144 = vector.load %arg18[%c0_85, %c0_86, %c0_87] : memref<2x1x32xf32, #tpu.memory_space<vmem>>, vector<1x1x32xf32>
    %145 = vector.shape_cast %144 : vector<1x1x32xf32> to vector<1x32xf32>
    %146 = vector.broadcast %145 : vector<1x32xf32> to vector<8x32xf32>
    %147 = arith.addf %143, %146 : vector<8x32xf32>
    %148 = arith.addf %129, %147 : vector<8x32xf32>
    %c0_88 = arith.constant 0 : index
    %c0_89 = arith.constant 0 : index
    %c0_90 = arith.constant 0 : index
    %149 = vector.load %arg21[%c0_88, %c0_89, %c0_90] : memref<2x1x32xf32, #tpu.memory_space<vmem>>, vector<1x1x32xf32>
    %150 = vector.shape_cast %149 : vector<1x1x32xf32> to vector<1x32xf32>
    %c0_91 = arith.constant 0 : index
    %c0_92 = arith.constant 0 : index
    %c0_93 = arith.constant 0 : index
    %151 = vector.load %arg22[%c0_91, %c0_92, %c0_93] : memref<2x1x32xf32, #tpu.memory_space<vmem>>, vector<1x1x32xf32>
    %152 = vector.shape_cast %151 : vector<1x1x32xf32> to vector<1x32xf32>
    %cst_94 = arith.constant dense<0.000000e+00> : vector<8xf32>
    %153 = vector.multi_reduction <add>, %148, %cst_94 [1] : vector<8x32xf32> to vector<8xf32>
    %154 = vector.shape_cast %153 : vector<8xf32> to vector<8x1xf32>
    %cst_95 = arith.constant 3.200000e+01 : f32
    %155 = vector.broadcast %cst_95 : f32 to vector<8x1xf32>
    %156 = arith.divf %154, %155 : vector<8x1xf32>
    %157 = vector.broadcast %156 : vector<8x1xf32> to vector<8x32xf32>
    %158 = arith.subf %148, %157 : vector<8x32xf32>
    %159 = arith.mulf %158, %158 : vector<8x32xf32>
    %cst_96 = arith.constant dense<0.000000e+00> : vector<8xf32>
    %160 = vector.multi_reduction <add>, %159, %cst_96 [1] : vector<8x32xf32> to vector<8xf32>
    %161 = vector.shape_cast %160 : vector<8xf32> to vector<8x1xf32>
    %cst_97 = arith.constant 3.200000e+01 : f32
    %162 = vector.broadcast %cst_97 : f32 to vector<8x1xf32>
    %163 = arith.divf %161, %162 : vector<8x1xf32>
    %164 = vector.broadcast %156 : vector<8x1xf32> to vector<8x32xf32>
    %165 = arith.subf %148, %164 : vector<8x32xf32>
    %cst_98 = arith.constant 9.99999974E-6 : f32
    %166 = vector.broadcast %cst_98 : f32 to vector<8x1xf32>
    %167 = arith.addf %163, %166 : vector<8x1xf32>
    %168 = math.rsqrt %167 : vector<8x1xf32>
    %169 = vector.broadcast %168 : vector<8x1xf32> to vector<8x32xf32>
    %170 = arith.mulf %165, %169 : vector<8x32xf32>
    %171 = vector.broadcast %150 : vector<1x32xf32> to vector<8x32xf32>
    %172 = arith.mulf %170, %171 : vector<8x32xf32>
    %173 = vector.broadcast %152 : vector<1x32xf32> to vector<8x32xf32>
    %174 = arith.addf %172, %173 : vector<8x32xf32>
    %175 = arith.truncf %174 : vector<8x32xf32> to vector<8x32xbf16>
    %c1_99 = arith.constant 1 : index
    %c0_100 = arith.constant 0 : index
    %c0_101 = arith.constant 0 : index
    %c0_102 = arith.constant 0 : index
    %176 = vector.load %arg11[%c1_99, %c0_100, %c0_101, %c0_102] : memref<2x3x32x32xbf16, #tpu.memory_space<vmem>>, vector<1x1x32x32xbf16>
    %177 = vector.shape_cast %176 : vector<1x1x32x32xbf16> to vector<32x32xbf16>
    %cst_103 = arith.constant dense<0.000000e+00> : vector<8x32xf32>
    %178 = tpu.matmul %175, %177, %cst_103 {dimension_numbers = #tpu.dot_dimension_numbers<[1], [0], [0], [1], [0, 0, 1, 1], [], []>} : vector<8x32xbf16>, vector<32x32xbf16>, vector<8x32xf32> -> vector<8x32xf32>
    %c1_104 = arith.constant 1 : index
    %c0_105 = arith.constant 0 : index
    %c0_106 = arith.constant 0 : index
    %c0_107 = arith.constant 0 : index
    %179 = vector.load %arg12[%c1_104, %c0_105, %c0_106, %c0_107] : memref<2x3x1x32xf32, #tpu.memory_space<vmem>>, vector<1x1x1x32xf32>
    %180 = vector.shape_cast %179 : vector<1x1x1x32xf32> to vector<1x32xf32>
    %181 = vector.broadcast %180 : vector<1x32xf32> to vector<8x32xf32>
    %182 = arith.addf %178, %181 : vector<8x32xf32>
    %c1_108 = arith.constant 1 : index
    %c1_109 = arith.constant 1 : index
    %c0_110 = arith.constant 0 : index
    %c0_111 = arith.constant 0 : index
    %183 = vector.load %arg11[%c1_108, %c1_109, %c0_110, %c0_111] : memref<2x3x32x32xbf16, #tpu.memory_space<vmem>>, vector<1x1x32x32xbf16>
    %184 = vector.shape_cast %183 : vector<1x1x32x32xbf16> to vector<32x32xbf16>
    %cst_112 = arith.constant dense<0.000000e+00> : vector<8x32xf32>
    %185 = tpu.matmul %175, %184, %cst_112 {dimension_numbers = #tpu.dot_dimension_numbers<[1], [0], [0], [1], [0, 0, 1, 1], [], []>} : vector<8x32xbf16>, vector<32x32xbf16>, vector<8x32xf32> -> vector<8x32xf32>
    %c1_113 = arith.constant 1 : index
    %c1_114 = arith.constant 1 : index
    %c0_115 = arith.constant 0 : index
    %c0_116 = arith.constant 0 : index
    %186 = vector.load %arg12[%c1_113, %c1_114, %c0_115, %c0_116] : memref<2x3x1x32xf32, #tpu.memory_space<vmem>>, vector<1x1x1x32xf32>
    %187 = vector.shape_cast %186 : vector<1x1x1x32xf32> to vector<1x32xf32>
    %188 = vector.broadcast %187 : vector<1x32xf32> to vector<8x32xf32>
    %189 = arith.addf %185, %188 : vector<8x32xf32>
    %c1_117 = arith.constant 1 : index
    %c2_118 = arith.constant 2 : index
    %c0_119 = arith.constant 0 : index
    %c0_120 = arith.constant 0 : index
    %190 = vector.load %arg11[%c1_117, %c2_118, %c0_119, %c0_120] : memref<2x3x32x32xbf16, #tpu.memory_space<vmem>>, vector<1x1x32x32xbf16>
    %191 = vector.shape_cast %190 : vector<1x1x32x32xbf16> to vector<32x32xbf16>
    %cst_121 = arith.constant dense<0.000000e+00> : vector<8x32xf32>
    %192 = tpu.matmul %175, %191, %cst_121 {dimension_numbers = #tpu.dot_dimension_numbers<[1], [0], [0], [1], [0, 0, 1, 1], [], []>} : vector<8x32xbf16>, vector<32x32xbf16>, vector<8x32xf32> -> vector<8x32xf32>
    %c1_122 = arith.constant 1 : index
    %c2_123 = arith.constant 2 : index
    %c0_124 = arith.constant 0 : index
    %c0_125 = arith.constant 0 : index
    %193 = vector.load %arg12[%c1_122, %c2_123, %c0_124, %c0_125] : memref<2x3x1x32xf32, #tpu.memory_space<vmem>>, vector<1x1x1x32xf32>
    %194 = vector.shape_cast %193 : vector<1x1x1x32xf32> to vector<1x32xf32>
    %195 = vector.broadcast %194 : vector<1x32xf32> to vector<8x32xf32>
    %196 = arith.addf %192, %195 : vector<8x32xf32>
    %197 = arith.truncf %182 : vector<8x32xf32> to vector<8x32xbf16>
    %198 = arith.truncf %189 : vector<8x32xf32> to vector<8x32xbf16>
    %cst_126 = arith.constant dense<0.000000e+00> : vector<8x8xf32>
    %199 = tpu.matmul %197, %198, %cst_126 {dimension_numbers = #tpu.dot_dimension_numbers<[1], [1], [0], [0], [0, 0, 1, 0], [], []>} : vector<8x32xbf16>, vector<8x32xbf16>, vector<8x8xf32> -> vector<8x8xf32>
    %cst_127 = arith.constant 0.176776692 : f32
    %200 = vector.broadcast %cst_127 : f32 to vector<8x8xf32>
    %201 = arith.mulf %199, %200 : vector<8x8xf32>
    %202 = arith.addf %201, %41 : vector<8x8xf32>
    %cst_128 = arith.constant dense<0xFF800000> : vector<8xf32>
    %203 = vector.multi_reduction <maximumf>, %202, %cst_128 [1] : vector<8x8xf32> to vector<8xf32>
    %204 = vector.shape_cast %203 : vector<8xf32> to vector<8x1xf32>
    %205 = vector.broadcast %204 : vector<8x1xf32> to vector<8x8xf32>
    %206 = arith.subf %202, %205 : vector<8x8xf32>
    %207 = math.exp %206 : vector<8x8xf32>
    %cst_129 = arith.constant dense<0.000000e+00> : vector<8xf32>
    %208 = vector.multi_reduction <add>, %207, %cst_129 [1] : vector<8x8xf32> to vector<8xf32>
    %209 = vector.shape_cast %208 : vector<8xf32> to vector<8x1xf32>
    %210 = vector.broadcast %209 : vector<8x1xf32> to vector<8x8xf32>
    %211 = arith.divf %207, %210 : vector<8x8xf32>
    %212 = arith.truncf %211 : vector<8x8xf32> to vector<8x8xbf16>
    %213 = arith.truncf %196 : vector<8x32xf32> to vector<8x32xbf16>
    %cst_130 = arith.constant dense<0.000000e+00> : vector<8x32xf32>
    %214 = tpu.matmul %212, %213, %cst_130 {dimension_numbers = #tpu.dot_dimension_numbers<[1], [0], [0], [1], [0, 0, 1, 1], [], []>} : vector<8x8xbf16>, vector<8x32xbf16>, vector<8x32xf32> -> vector<8x32xf32>
    %215 = arith.truncf %214 : vector<8x32xf32> to vector<8x32xbf16>
    %c1_131 = arith.constant 1 : index
    %c0_132 = arith.constant 0 : index
    %c0_133 = arith.constant 0 : index
    %216 = vector.load %arg13[%c1_131, %c0_132, %c0_133] : memref<2x32x32xbf16, #tpu.memory_space<vmem>>, vector<1x32x32xbf16>
    %217 = vector.shape_cast %216 : vector<1x32x32xbf16> to vector<32x32xbf16>
    %cst_134 = arith.constant dense<0.000000e+00> : vector<8x32xf32>
    %218 = tpu.matmul %215, %217, %cst_134 {dimension_numbers = #tpu.dot_dimension_numbers<[1], [0], [0], [1], [0, 0, 1, 1], [], []>} : vector<8x32xbf16>, vector<32x32xbf16>, vector<8x32xf32> -> vector<8x32xf32>
    %c1_135 = arith.constant 1 : index
    %c0_136 = arith.constant 0 : index
    %c0_137 = arith.constant 0 : index
    %219 = vector.load %arg14[%c1_135, %c0_136, %c0_137] : memref<2x1x32xf32, #tpu.memory_space<vmem>>, vector<1x1x32xf32>
    %220 = vector.shape_cast %219 : vector<1x1x32xf32> to vector<1x32xf32>
    %221 = vector.broadcast %220 : vector<1x32xf32> to vector<8x32xf32>
    %222 = arith.addf %218, %221 : vector<8x32xf32>
    %223 = arith.addf %174, %222 : vector<8x32xf32>
    %c1_138 = arith.constant 1 : index
    %c0_139 = arith.constant 0 : index
    %c0_140 = arith.constant 0 : index
    %224 = vector.load %arg19[%c1_138, %c0_139, %c0_140] : memref<2x1x32xf32, #tpu.memory_space<vmem>>, vector<1x1x32xf32>
    %225 = vector.shape_cast %224 : vector<1x1x32xf32> to vector<1x32xf32>
    %c1_141 = arith.constant 1 : index
    %c0_142 = arith.constant 0 : index
    %c0_143 = arith.constant 0 : index
    %226 = vector.load %arg20[%c1_141, %c0_142, %c0_143] : memref<2x1x32xf32, #tpu.memory_space<vmem>>, vector<1x1x32xf32>
    %227 = vector.shape_cast %226 : vector<1x1x32xf32> to vector<1x32xf32>
    %cst_144 = arith.constant dense<0.000000e+00> : vector<8xf32>
    %228 = vector.multi_reduction <add>, %223, %cst_144 [1] : vector<8x32xf32> to vector<8xf32>
    %229 = vector.shape_cast %228 : vector<8xf32> to vector<8x1xf32>
    %cst_145 = arith.constant 3.200000e+01 : f32
    %230 = vector.broadcast %cst_145 : f32 to vector<8x1xf32>
    %231 = arith.divf %229, %230 : vector<8x1xf32>
    %232 = vector.broadcast %231 : vector<8x1xf32> to vector<8x32xf32>
    %233 = arith.subf %223, %232 : vector<8x32xf32>
    %234 = arith.mulf %233, %233 : vector<8x32xf32>
    %cst_146 = arith.constant dense<0.000000e+00> : vector<8xf32>
    %235 = vector.multi_reduction <add>, %234, %cst_146 [1] : vector<8x32xf32> to vector<8xf32>
    %236 = vector.shape_cast %235 : vector<8xf32> to vector<8x1xf32>
    %cst_147 = arith.constant 3.200000e+01 : f32
    %237 = vector.broadcast %cst_147 : f32 to vector<8x1xf32>
    %238 = arith.divf %236, %237 : vector<8x1xf32>
    %239 = vector.broadcast %231 : vector<8x1xf32> to vector<8x32xf32>
    %240 = arith.subf %223, %239 : vector<8x32xf32>
    %cst_148 = arith.constant 9.99999974E-6 : f32
    %241 = vector.broadcast %cst_148 : f32 to vector<8x1xf32>
    %242 = arith.addf %238, %241 : vector<8x1xf32>
    %243 = math.rsqrt %242 : vector<8x1xf32>
    %244 = vector.broadcast %243 : vector<8x1xf32> to vector<8x32xf32>
    %245 = arith.mulf %240, %244 : vector<8x32xf32>
    %246 = vector.broadcast %225 : vector<1x32xf32> to vector<8x32xf32>
    %247 = arith.mulf %245, %246 : vector<8x32xf32>
    %248 = vector.broadcast %227 : vector<1x32xf32> to vector<8x32xf32>
    %249 = arith.addf %247, %248 : vector<8x32xf32>
    %250 = arith.truncf %249 : vector<8x32xf32> to vector<8x32xbf16>
    %c1_149 = arith.constant 1 : index
    %c0_150 = arith.constant 0 : index
    %c0_151 = arith.constant 0 : index
    %251 = vector.load %arg15[%c1_149, %c0_150, %c0_151] : memref<2x32x2048xbf16, #tpu.memory_space<vmem>>, vector<1x32x2048xbf16>
    %252 = vector.shape_cast %251 : vector<1x32x2048xbf16> to vector<32x2048xbf16>
    %cst_152 = arith.constant dense<0.000000e+00> : vector<8x2048xf32>
    %253 = tpu.matmul %250, %252, %cst_152 {dimension_numbers = #tpu.dot_dimension_numbers<[1], [0], [0], [1], [0, 0, 1, 1], [], []>} : vector<8x32xbf16>, vector<32x2048xbf16>, vector<8x2048xf32> -> vector<8x2048xf32>
    %c1_153 = arith.constant 1 : index
    %c0_154 = arith.constant 0 : index
    %c0_155 = arith.constant 0 : index
    %254 = vector.load %arg16[%c1_153, %c0_154, %c0_155] : memref<2x1x2048xf32, #tpu.memory_space<vmem>>, vector<1x1x2048xf32>
    %255 = vector.shape_cast %254 : vector<1x1x2048xf32> to vector<1x2048xf32>
    %256 = vector.broadcast %255 : vector<1x2048xf32> to vector<8x2048xf32>
    %257 = arith.addf %253, %256 : vector<8x2048xf32>
    %cst_156 = arith.constant 0.000000e+00 : f32
    %258 = vector.broadcast %cst_156 : f32 to vector<8x2048xf32>
    %259 = arith.maximumf %257, %258 : vector<8x2048xf32>
    %260 = arith.truncf %259 : vector<8x2048xf32> to vector<8x2048xbf16>
    %c1_157 = arith.constant 1 : index
    %c0_158 = arith.constant 0 : index
    %c0_159 = arith.constant 0 : index
    %261 = vector.load %arg17[%c1_157, %c0_158, %c0_159] : memref<2x2048x32xbf16, #tpu.memory_space<vmem>>, vector<1x2048x32xbf16>
    %262 = vector.shape_cast %261 : vector<1x2048x32xbf16> to vector<2048x32xbf16>
    %cst_160 = arith.constant dense<0.000000e+00> : vector<8x32xf32>
    %263 = tpu.matmul %260, %262, %cst_160 {dimension_numbers = #tpu.dot_dimension_numbers<[1], [0], [0], [1], [0, 0, 1, 1], [], []>} : vector<8x2048xbf16>, vector<2048x32xbf16>, vector<8x32xf32> -> vector<8x32xf32>
    %c1_161 = arith.constant 1 : index
    %c0_162 = arith.constant 0 : index
    %c0_163 = arith.constant 0 : index
    %264 = vector.load %arg18[%c1_161, %c0_162, %c0_163] : memref<2x1x32xf32, #tpu.memory_space<vmem>>, vector<1x1x32xf32>
    %265 = vector.shape_cast %264 : vector<1x1x32xf32> to vector<1x32xf32>
    %266 = vector.broadcast %265 : vector<1x32xf32> to vector<8x32xf32>
    %267 = arith.addf %263, %266 : vector<8x32xf32>
    %268 = arith.addf %249, %267 : vector<8x32xf32>
    %c1_164 = arith.constant 1 : index
    %c0_165 = arith.constant 0 : index
    %c0_166 = arith.constant 0 : index
    %269 = vector.load %arg21[%c1_164, %c0_165, %c0_166] : memref<2x1x32xf32, #tpu.memory_space<vmem>>, vector<1x1x32xf32>
    %270 = vector.shape_cast %269 : vector<1x1x32xf32> to vector<1x32xf32>
    %c1_167 = arith.constant 1 : index
    %c0_168 = arith.constant 0 : index
    %c0_169 = arith.constant 0 : index
    %271 = vector.load %arg22[%c1_167, %c0_168, %c0_169] : memref<2x1x32xf32, #tpu.memory_space<vmem>>, vector<1x1x32xf32>
    %272 = vector.shape_cast %271 : vector<1x1x32xf32> to vector<1x32xf32>
    %cst_170 = arith.constant dense<0.000000e+00> : vector<8xf32>
    %273 = vector.multi_reduction <add>, %268, %cst_170 [1] : vector<8x32xf32> to vector<8xf32>
    %274 = vector.shape_cast %273 : vector<8xf32> to vector<8x1xf32>
    %cst_171 = arith.constant 3.200000e+01 : f32
    %275 = vector.broadcast %cst_171 : f32 to vector<8x1xf32>
    %276 = arith.divf %274, %275 : vector<8x1xf32>
    %277 = vector.broadcast %276 : vector<8x1xf32> to vector<8x32xf32>
    %278 = arith.subf %268, %277 : vector<8x32xf32>
    %279 = arith.mulf %278, %278 : vector<8x32xf32>
    %cst_172 = arith.constant dense<0.000000e+00> : vector<8xf32>
    %280 = vector.multi_reduction <add>, %279, %cst_172 [1] : vector<8x32xf32> to vector<8xf32>
    %281 = vector.shape_cast %280 : vector<8xf32> to vector<8x1xf32>
    %cst_173 = arith.constant 3.200000e+01 : f32
    %282 = vector.broadcast %cst_173 : f32 to vector<8x1xf32>
    %283 = arith.divf %281, %282 : vector<8x1xf32>
    %284 = vector.broadcast %276 : vector<8x1xf32> to vector<8x32xf32>
    %285 = arith.subf %268, %284 : vector<8x32xf32>
    %cst_174 = arith.constant 9.99999974E-6 : f32
    %286 = vector.broadcast %cst_174 : f32 to vector<8x1xf32>
    %287 = arith.addf %283, %286 : vector<8x1xf32>
    %288 = math.rsqrt %287 : vector<8x1xf32>
    %289 = vector.broadcast %288 : vector<8x1xf32> to vector<8x32xf32>
    %290 = arith.mulf %285, %289 : vector<8x32xf32>
    %291 = vector.broadcast %270 : vector<1x32xf32> to vector<8x32xf32>
    %292 = arith.mulf %290, %291 : vector<8x32xf32>
    %293 = vector.broadcast %272 : vector<1x32xf32> to vector<8x32xf32>
    %294 = arith.addf %292, %293 : vector<8x32xf32>
    %295 = arith.truncf %294 : vector<8x32xf32> to vector<8x32xbf16>
    %c0_175 = arith.constant 0 : index
    %c0_176 = arith.constant 0 : index
    %296 = vector.load %arg27[%c0_175, %c0_176] : memref<32x384xbf16, #tpu.memory_space<vmem>>, vector<32x384xbf16>
    %cst_177 = arith.constant dense<0.000000e+00> : vector<8x384xf32>
    %297 = tpu.matmul %295, %296, %cst_177 {dimension_numbers = #tpu.dot_dimension_numbers<[1], [0], [0], [1], [0, 0, 1, 1], [], []>} : vector<8x32xbf16>, vector<32x384xbf16>, vector<8x384xf32> -> vector<8x384xf32>
    %c0_178 = arith.constant 0 : index
    %c0_179 = arith.constant 0 : index
    %298 = vector.load %arg28[%c0_178, %c0_179] : memref<1x384xf32, #tpu.memory_space<vmem>>, vector<1x384xf32>
    %299 = vector.broadcast %298 : vector<1x384xf32> to vector<8x384xf32>
    %300 = arith.addf %297, %299 : vector<8x384xf32>
    %301 = arith.index_cast %1 : i32 to index
    %c0_180 = arith.constant 0 : index
    %302 = vector.load %arg4[%301, %c0_180] : memref<2x64xf32, #tpu.memory_space<vmem>>, vector<1x64xf32>
    %303 = arith.truncf %302 : vector<1x64xf32> to vector<1x64xbf16>
    %c0_181 = arith.constant 0 : index
    %c0_182 = arith.constant 0 : index
    %c0_183 = arith.constant 0 : index
    %304 = vector.load %arg23[%c0_181, %c0_182, %c0_183] : memref<3x64x32xbf16, #tpu.memory_space<vmem>>, vector<1x64x32xbf16>
    %305 = vector.shape_cast %304 : vector<1x64x32xbf16> to vector<64x32xbf16>
    %cst_184 = arith.constant dense<0.000000e+00> : vector<1x32xf32>
    %306 = tpu.matmul %303, %305, %cst_184 {dimension_numbers = #tpu.dot_dimension_numbers<[1], [0], [0], [1], [0, 0, 1, 1], [], []>} : vector<1x64xbf16>, vector<64x32xbf16>, vector<1x32xf32> -> vector<1x32xf32>
    %c0_185 = arith.constant 0 : index
    %c0_186 = arith.constant 0 : index
    %c0_187 = arith.constant 0 : index
    %307 = vector.load %arg24[%c0_185, %c0_186, %c0_187] : memref<3x1x32xf32, #tpu.memory_space<vmem>>, vector<1x1x32xf32>
    %308 = vector.shape_cast %307 : vector<1x1x32xf32> to vector<1x32xf32>
    %309 = arith.addf %306, %308 : vector<1x32xf32>
    %310 = arith.truncf %309 : vector<1x32xf32> to vector<1x32xbf16>
    %c0_188 = arith.constant 0 : index
    %c0_189 = arith.constant 0 : index
    %c0_190 = arith.constant 0 : index
    %c0_191 = arith.constant 0 : index
    %311 = vector.load %arg25[%c0_188, %c0_189, %c0_190, %c0_191] : memref<3x2x32x32xbf16, #tpu.memory_space<vmem>>, vector<1x1x32x32xbf16>
    %312 = vector.shape_cast %311 : vector<1x1x32x32xbf16> to vector<32x32xbf16>
    %cst_192 = arith.constant dense<0.000000e+00> : vector<1x32xf32>
    %313 = tpu.matmul %310, %312, %cst_192 {dimension_numbers = #tpu.dot_dimension_numbers<[1], [0], [0], [1], [0, 0, 1, 1], [], []>} : vector<1x32xbf16>, vector<32x32xbf16>, vector<1x32xf32> -> vector<1x32xf32>
    %c0_193 = arith.constant 0 : index
    %c0_194 = arith.constant 0 : index
    %c0_195 = arith.constant 0 : index
    %c0_196 = arith.constant 0 : index
    %314 = vector.load %arg26[%c0_193, %c0_194, %c0_195, %c0_196] : memref<3x2x1x32xf32, #tpu.memory_space<vmem>>, vector<1x1x1x32xf32>
    %315 = vector.shape_cast %314 : vector<1x1x1x32xf32> to vector<1x32xf32>
    %316 = arith.addf %313, %315 : vector<1x32xf32>
    %317 = vector.extract_strided_slice %300 {offsets = [0, 0], sizes = [8, 32], strides = [1, 1]} : vector<8x384xf32> to vector<8x32xf32>
    %318 = vector.extract_strided_slice %300 {offsets = [0, 32], sizes = [8, 32], strides = [1, 1]} : vector<8x384xf32> to vector<8x32xf32>
    %319 = arith.truncf %316 : vector<1x32xf32> to vector<1x32xbf16>
    %320 = arith.truncf %317 : vector<8x32xf32> to vector<8x32xbf16>
    %cst_197 = arith.constant dense<0.000000e+00> : vector<1x8xf32>
    %321 = tpu.matmul %319, %320, %cst_197 {dimension_numbers = #tpu.dot_dimension_numbers<[1], [1], [0], [0], [0, 0, 1, 0], [], []>} : vector<1x32xbf16>, vector<8x32xbf16>, vector<1x8xf32> -> vector<1x8xf32>
    %cst_198 = arith.constant 0.176776692 : f32
    %322 = vector.broadcast %cst_198 : f32 to vector<1x8xf32>
    %323 = arith.mulf %321, %322 : vector<1x8xf32>
    %cst_199 = arith.constant dense<0xFF800000> : vector<1xf32>
    %324 = vector.multi_reduction <maximumf>, %323, %cst_199 [1] : vector<1x8xf32> to vector<1xf32>
    %325 = vector.shape_cast %324 : vector<1xf32> to vector<1x1xf32>
    %326 = vector.broadcast %325 : vector<1x1xf32> to vector<1x8xf32>
    %327 = arith.subf %323, %326 : vector<1x8xf32>
    %328 = math.exp %327 : vector<1x8xf32>
    %cst_200 = arith.constant dense<0.000000e+00> : vector<1xf32>
    %329 = vector.multi_reduction <add>, %328, %cst_200 [1] : vector<1x8xf32> to vector<1xf32>
    %330 = vector.shape_cast %329 : vector<1xf32> to vector<1x1xf32>
    %331 = vector.broadcast %330 : vector<1x1xf32> to vector<1x8xf32>
    %332 = arith.divf %328, %331 : vector<1x8xf32>
    %333 = arith.truncf %332 : vector<1x8xf32> to vector<1x8xbf16>
    %334 = arith.truncf %318 : vector<8x32xf32> to vector<8x32xbf16>
    %cst_201 = arith.constant dense<0.000000e+00> : vector<1x32xf32>
    %335 = tpu.matmul %333, %334, %cst_201 {dimension_numbers = #tpu.dot_dimension_numbers<[1], [0], [0], [1], [0, 0, 1, 1], [], []>} : vector<1x8xbf16>, vector<8x32xbf16>, vector<1x32xf32> -> vector<1x32xf32>
    %336 = arith.truncf %335 : vector<1x32xf32> to vector<1x32xbf16>
    %c0_202 = arith.constant 0 : index
    %c0_203 = arith.constant 0 : index
    %c0_204 = arith.constant 0 : index
    %c0_205 = arith.constant 0 : index
    %337 = vector.load %arg29[%c0_202, %c0_203, %c0_204, %c0_205] : memref<3x2x32x32xbf16, #tpu.memory_space<vmem>>, vector<1x1x32x32xbf16>
    %338 = vector.shape_cast %337 : vector<1x1x32x32xbf16> to vector<32x32xbf16>
    %cst_206 = arith.constant dense<0.000000e+00> : vector<1x32xf32>
    %339 = tpu.matmul %336, %338, %cst_206 {dimension_numbers = #tpu.dot_dimension_numbers<[1], [0], [0], [1], [0, 0, 1, 1], [], []>} : vector<1x32xbf16>, vector<32x32xbf16>, vector<1x32xf32> -> vector<1x32xf32>
    %c0_207 = arith.constant 0 : index
    %c0_208 = arith.constant 0 : index
    %c0_209 = arith.constant 0 : index
    %c0_210 = arith.constant 0 : index
    %340 = vector.load %arg30[%c0_207, %c0_208, %c0_209, %c0_210] : memref<3x2x1x32xf32, #tpu.memory_space<vmem>>, vector<1x1x1x32xf32>
    %341 = vector.shape_cast %340 : vector<1x1x1x32xf32> to vector<1x32xf32>
    %342 = arith.addf %339, %341 : vector<1x32xf32>
    %343 = arith.addf %309, %342 : vector<1x32xf32>
    %c0_211 = arith.constant 0 : index
    %c0_212 = arith.constant 0 : index
    %c0_213 = arith.constant 0 : index
    %c0_214 = arith.constant 0 : index
    %344 = vector.load %arg31[%c0_211, %c0_212, %c0_213, %c0_214] : memref<3x2x1x32xf32, #tpu.memory_space<vmem>>, vector<1x1x1x32xf32>
    %345 = vector.shape_cast %344 : vector<1x1x1x32xf32> to vector<1x32xf32>
    %c0_215 = arith.constant 0 : index
    %c0_216 = arith.constant 0 : index
    %c0_217 = arith.constant 0 : index
    %c0_218 = arith.constant 0 : index
    %346 = vector.load %arg32[%c0_215, %c0_216, %c0_217, %c0_218] : memref<3x2x1x32xf32, #tpu.memory_space<vmem>>, vector<1x1x1x32xf32>
    %347 = vector.shape_cast %346 : vector<1x1x1x32xf32> to vector<1x32xf32>
    %cst_219 = arith.constant dense<0.000000e+00> : vector<1xf32>
    %348 = vector.multi_reduction <add>, %343, %cst_219 [1] : vector<1x32xf32> to vector<1xf32>
    %349 = vector.shape_cast %348 : vector<1xf32> to vector<1x1xf32>
    %cst_220 = arith.constant 3.200000e+01 : f32
    %350 = vector.broadcast %cst_220 : f32 to vector<1x1xf32>
    %351 = arith.divf %349, %350 : vector<1x1xf32>
    %352 = vector.broadcast %351 : vector<1x1xf32> to vector<1x32xf32>
    %353 = arith.subf %343, %352 : vector<1x32xf32>
    %354 = arith.mulf %353, %353 : vector<1x32xf32>
    %cst_221 = arith.constant dense<0.000000e+00> : vector<1xf32>
    %355 = vector.multi_reduction <add>, %354, %cst_221 [1] : vector<1x32xf32> to vector<1xf32>
    %356 = vector.shape_cast %355 : vector<1xf32> to vector<1x1xf32>
    %cst_222 = arith.constant 3.200000e+01 : f32
    %357 = vector.broadcast %cst_222 : f32 to vector<1x1xf32>
    %358 = arith.divf %356, %357 : vector<1x1xf32>
    %359 = vector.broadcast %351 : vector<1x1xf32> to vector<1x32xf32>
    %360 = arith.subf %343, %359 : vector<1x32xf32>
    %cst_223 = arith.constant 9.99999974E-6 : f32
    %361 = vector.broadcast %cst_223 : f32 to vector<1x1xf32>
    %362 = arith.addf %358, %361 : vector<1x1xf32>
    %363 = math.rsqrt %362 : vector<1x1xf32>
    %364 = vector.broadcast %363 : vector<1x1xf32> to vector<1x32xf32>
    %365 = arith.mulf %360, %364 : vector<1x32xf32>
    %366 = arith.mulf %365, %345 : vector<1x32xf32>
    %367 = arith.addf %366, %347 : vector<1x32xf32>
    %368 = arith.truncf %367 : vector<1x32xf32> to vector<1x32xbf16>
    %c0_224 = arith.constant 0 : index
    %c1_225 = arith.constant 1 : index
    %c0_226 = arith.constant 0 : index
    %c0_227 = arith.constant 0 : index
    %369 = vector.load %arg25[%c0_224, %c1_225, %c0_226, %c0_227] : memref<3x2x32x32xbf16, #tpu.memory_space<vmem>>, vector<1x1x32x32xbf16>
    %370 = vector.shape_cast %369 : vector<1x1x32x32xbf16> to vector<32x32xbf16>
    %cst_228 = arith.constant dense<0.000000e+00> : vector<1x32xf32>
    %371 = tpu.matmul %368, %370, %cst_228 {dimension_numbers = #tpu.dot_dimension_numbers<[1], [0], [0], [1], [0, 0, 1, 1], [], []>} : vector<1x32xbf16>, vector<32x32xbf16>, vector<1x32xf32> -> vector<1x32xf32>
    %c0_229 = arith.constant 0 : index
    %c1_230 = arith.constant 1 : index
    %c0_231 = arith.constant 0 : index
    %c0_232 = arith.constant 0 : index
    %372 = vector.load %arg26[%c0_229, %c1_230, %c0_231, %c0_232] : memref<3x2x1x32xf32, #tpu.memory_space<vmem>>, vector<1x1x1x32xf32>
    %373 = vector.shape_cast %372 : vector<1x1x1x32xf32> to vector<1x32xf32>
    %374 = arith.addf %371, %373 : vector<1x32xf32>
    %375 = vector.extract_strided_slice %300 {offsets = [0, 64], sizes = [8, 32], strides = [1, 1]} : vector<8x384xf32> to vector<8x32xf32>
    %376 = vector.extract_strided_slice %300 {offsets = [0, 96], sizes = [8, 32], strides = [1, 1]} : vector<8x384xf32> to vector<8x32xf32>
    %377 = arith.truncf %374 : vector<1x32xf32> to vector<1x32xbf16>
    %378 = arith.truncf %375 : vector<8x32xf32> to vector<8x32xbf16>
    %cst_233 = arith.constant dense<0.000000e+00> : vector<1x8xf32>
    %379 = tpu.matmul %377, %378, %cst_233 {dimension_numbers = #tpu.dot_dimension_numbers<[1], [1], [0], [0], [0, 0, 1, 0], [], []>} : vector<1x32xbf16>, vector<8x32xbf16>, vector<1x8xf32> -> vector<1x8xf32>
    %cst_234 = arith.constant 0.176776692 : f32
    %380 = vector.broadcast %cst_234 : f32 to vector<1x8xf32>
    %381 = arith.mulf %379, %380 : vector<1x8xf32>
    %cst_235 = arith.constant dense<0xFF800000> : vector<1xf32>
    %382 = vector.multi_reduction <maximumf>, %381, %cst_235 [1] : vector<1x8xf32> to vector<1xf32>
    %383 = vector.shape_cast %382 : vector<1xf32> to vector<1x1xf32>
    %384 = vector.broadcast %383 : vector<1x1xf32> to vector<1x8xf32>
    %385 = arith.subf %381, %384 : vector<1x8xf32>
    %386 = math.exp %385 : vector<1x8xf32>
    %cst_236 = arith.constant dense<0.000000e+00> : vector<1xf32>
    %387 = vector.multi_reduction <add>, %386, %cst_236 [1] : vector<1x8xf32> to vector<1xf32>
    %388 = vector.shape_cast %387 : vector<1xf32> to vector<1x1xf32>
    %389 = vector.broadcast %388 : vector<1x1xf32> to vector<1x8xf32>
    %390 = arith.divf %386, %389 : vector<1x8xf32>
    %391 = arith.truncf %390 : vector<1x8xf32> to vector<1x8xbf16>
    %392 = arith.truncf %376 : vector<8x32xf32> to vector<8x32xbf16>
    %cst_237 = arith.constant dense<0.000000e+00> : vector<1x32xf32>
    %393 = tpu.matmul %391, %392, %cst_237 {dimension_numbers = #tpu.dot_dimension_numbers<[1], [0], [0], [1], [0, 0, 1, 1], [], []>} : vector<1x8xbf16>, vector<8x32xbf16>, vector<1x32xf32> -> vector<1x32xf32>
    %394 = arith.truncf %393 : vector<1x32xf32> to vector<1x32xbf16>
    %c0_238 = arith.constant 0 : index
    %c1_239 = arith.constant 1 : index
    %c0_240 = arith.constant 0 : index
    %c0_241 = arith.constant 0 : index
    %395 = vector.load %arg29[%c0_238, %c1_239, %c0_240, %c0_241] : memref<3x2x32x32xbf16, #tpu.memory_space<vmem>>, vector<1x1x32x32xbf16>
    %396 = vector.shape_cast %395 : vector<1x1x32x32xbf16> to vector<32x32xbf16>
    %cst_242 = arith.constant dense<0.000000e+00> : vector<1x32xf32>
    %397 = tpu.matmul %394, %396, %cst_242 {dimension_numbers = #tpu.dot_dimension_numbers<[1], [0], [0], [1], [0, 0, 1, 1], [], []>} : vector<1x32xbf16>, vector<32x32xbf16>, vector<1x32xf32> -> vector<1x32xf32>
    %c0_243 = arith.constant 0 : index
    %c1_244 = arith.constant 1 : index
    %c0_245 = arith.constant 0 : index
    %c0_246 = arith.constant 0 : index
    %398 = vector.load %arg30[%c0_243, %c1_244, %c0_245, %c0_246] : memref<3x2x1x32xf32, #tpu.memory_space<vmem>>, vector<1x1x1x32xf32>
    %399 = vector.shape_cast %398 : vector<1x1x1x32xf32> to vector<1x32xf32>
    %400 = arith.addf %397, %399 : vector<1x32xf32>
    %401 = arith.addf %367, %400 : vector<1x32xf32>
    %c0_247 = arith.constant 0 : index
    %c1_248 = arith.constant 1 : index
    %c0_249 = arith.constant 0 : index
    %c0_250 = arith.constant 0 : index
    %402 = vector.load %arg31[%c0_247, %c1_248, %c0_249, %c0_250] : memref<3x2x1x32xf32, #tpu.memory_space<vmem>>, vector<1x1x1x32xf32>
    %403 = vector.shape_cast %402 : vector<1x1x1x32xf32> to vector<1x32xf32>
    %c0_251 = arith.constant 0 : index
    %c1_252 = arith.constant 1 : index
    %c0_253 = arith.constant 0 : index
    %c0_254 = arith.constant 0 : index
    %404 = vector.load %arg32[%c0_251, %c1_252, %c0_253, %c0_254] : memref<3x2x1x32xf32, #tpu.memory_space<vmem>>, vector<1x1x1x32xf32>
    %405 = vector.shape_cast %404 : vector<1x1x1x32xf32> to vector<1x32xf32>
    %cst_255 = arith.constant dense<0.000000e+00> : vector<1xf32>
    %406 = vector.multi_reduction <add>, %401, %cst_255 [1] : vector<1x32xf32> to vector<1xf32>
    %407 = vector.shape_cast %406 : vector<1xf32> to vector<1x1xf32>
    %cst_256 = arith.constant 3.200000e+01 : f32
    %408 = vector.broadcast %cst_256 : f32 to vector<1x1xf32>
    %409 = arith.divf %407, %408 : vector<1x1xf32>
    %410 = vector.broadcast %409 : vector<1x1xf32> to vector<1x32xf32>
    %411 = arith.subf %401, %410 : vector<1x32xf32>
    %412 = arith.mulf %411, %411 : vector<1x32xf32>
    %cst_257 = arith.constant dense<0.000000e+00> : vector<1xf32>
    %413 = vector.multi_reduction <add>, %412, %cst_257 [1] : vector<1x32xf32> to vector<1xf32>
    %414 = vector.shape_cast %413 : vector<1xf32> to vector<1x1xf32>
    %cst_258 = arith.constant 3.200000e+01 : f32
    %415 = vector.broadcast %cst_258 : f32 to vector<1x1xf32>
    %416 = arith.divf %414, %415 : vector<1x1xf32>
    %417 = vector.broadcast %409 : vector<1x1xf32> to vector<1x32xf32>
    %418 = arith.subf %401, %417 : vector<1x32xf32>
    %cst_259 = arith.constant 9.99999974E-6 : f32
    %419 = vector.broadcast %cst_259 : f32 to vector<1x1xf32>
    %420 = arith.addf %416, %419 : vector<1x1xf32>
    %421 = math.rsqrt %420 : vector<1x1xf32>
    %422 = vector.broadcast %421 : vector<1x1xf32> to vector<1x32xf32>
    %423 = arith.mulf %418, %422 : vector<1x32xf32>
    %424 = arith.mulf %423, %403 : vector<1x32xf32>
    %425 = arith.addf %424, %405 : vector<1x32xf32>
    %426 = arith.index_cast %1 : i32 to index
    %c0_260 = arith.constant 0 : index
    %427 = vector.load %arg5[%426, %c0_260] : memref<2x64xf32, #tpu.memory_space<vmem>>, vector<1x64xf32>
    %428 = arith.truncf %427 : vector<1x64xf32> to vector<1x64xbf16>
    %c1_261 = arith.constant 1 : index
    %c0_262 = arith.constant 0 : index
    %c0_263 = arith.constant 0 : index
    %429 = vector.load %arg23[%c1_261, %c0_262, %c0_263] : memref<3x64x32xbf16, #tpu.memory_space<vmem>>, vector<1x64x32xbf16>
    %430 = vector.shape_cast %429 : vector<1x64x32xbf16> to vector<64x32xbf16>
    %cst_264 = arith.constant dense<0.000000e+00> : vector<1x32xf32>
    %431 = tpu.matmul %428, %430, %cst_264 {dimension_numbers = #tpu.dot_dimension_numbers<[1], [0], [0], [1], [0, 0, 1, 1], [], []>} : vector<1x64xbf16>, vector<64x32xbf16>, vector<1x32xf32> -> vector<1x32xf32>
    %c1_265 = arith.constant 1 : index
    %c0_266 = arith.constant 0 : index
    %c0_267 = arith.constant 0 : index
    %432 = vector.load %arg24[%c1_265, %c0_266, %c0_267] : memref<3x1x32xf32, #tpu.memory_space<vmem>>, vector<1x1x32xf32>
    %433 = vector.shape_cast %432 : vector<1x1x32xf32> to vector<1x32xf32>
    %434 = arith.addf %431, %433 : vector<1x32xf32>
    %435 = arith.truncf %434 : vector<1x32xf32> to vector<1x32xbf16>
    %c1_268 = arith.constant 1 : index
    %c0_269 = arith.constant 0 : index
    %c0_270 = arith.constant 0 : index
    %c0_271 = arith.constant 0 : index
    %436 = vector.load %arg25[%c1_268, %c0_269, %c0_270, %c0_271] : memref<3x2x32x32xbf16, #tpu.memory_space<vmem>>, vector<1x1x32x32xbf16>
    %437 = vector.shape_cast %436 : vector<1x1x32x32xbf16> to vector<32x32xbf16>
    %cst_272 = arith.constant dense<0.000000e+00> : vector<1x32xf32>
    %438 = tpu.matmul %435, %437, %cst_272 {dimension_numbers = #tpu.dot_dimension_numbers<[1], [0], [0], [1], [0, 0, 1, 1], [], []>} : vector<1x32xbf16>, vector<32x32xbf16>, vector<1x32xf32> -> vector<1x32xf32>
    %c1_273 = arith.constant 1 : index
    %c0_274 = arith.constant 0 : index
    %c0_275 = arith.constant 0 : index
    %c0_276 = arith.constant 0 : index
    %439 = vector.load %arg26[%c1_273, %c0_274, %c0_275, %c0_276] : memref<3x2x1x32xf32, #tpu.memory_space<vmem>>, vector<1x1x1x32xf32>
    %440 = vector.shape_cast %439 : vector<1x1x1x32xf32> to vector<1x32xf32>
    %441 = arith.addf %438, %440 : vector<1x32xf32>
    %442 = vector.extract_strided_slice %300 {offsets = [0, 128], sizes = [8, 32], strides = [1, 1]} : vector<8x384xf32> to vector<8x32xf32>
    %443 = vector.extract_strided_slice %300 {offsets = [0, 160], sizes = [8, 32], strides = [1, 1]} : vector<8x384xf32> to vector<8x32xf32>
    %444 = arith.truncf %441 : vector<1x32xf32> to vector<1x32xbf16>
    %445 = arith.truncf %442 : vector<8x32xf32> to vector<8x32xbf16>
    %cst_277 = arith.constant dense<0.000000e+00> : vector<1x8xf32>
    %446 = tpu.matmul %444, %445, %cst_277 {dimension_numbers = #tpu.dot_dimension_numbers<[1], [1], [0], [0], [0, 0, 1, 0], [], []>} : vector<1x32xbf16>, vector<8x32xbf16>, vector<1x8xf32> -> vector<1x8xf32>
    %cst_278 = arith.constant 0.176776692 : f32
    %447 = vector.broadcast %cst_278 : f32 to vector<1x8xf32>
    %448 = arith.mulf %446, %447 : vector<1x8xf32>
    %cst_279 = arith.constant dense<0xFF800000> : vector<1xf32>
    %449 = vector.multi_reduction <maximumf>, %448, %cst_279 [1] : vector<1x8xf32> to vector<1xf32>
    %450 = vector.shape_cast %449 : vector<1xf32> to vector<1x1xf32>
    %451 = vector.broadcast %450 : vector<1x1xf32> to vector<1x8xf32>
    %452 = arith.subf %448, %451 : vector<1x8xf32>
    %453 = math.exp %452 : vector<1x8xf32>
    %cst_280 = arith.constant dense<0.000000e+00> : vector<1xf32>
    %454 = vector.multi_reduction <add>, %453, %cst_280 [1] : vector<1x8xf32> to vector<1xf32>
    %455 = vector.shape_cast %454 : vector<1xf32> to vector<1x1xf32>
    %456 = vector.broadcast %455 : vector<1x1xf32> to vector<1x8xf32>
    %457 = arith.divf %453, %456 : vector<1x8xf32>
    %458 = arith.truncf %457 : vector<1x8xf32> to vector<1x8xbf16>
    %459 = arith.truncf %443 : vector<8x32xf32> to vector<8x32xbf16>
    %cst_281 = arith.constant dense<0.000000e+00> : vector<1x32xf32>
    %460 = tpu.matmul %458, %459, %cst_281 {dimension_numbers = #tpu.dot_dimension_numbers<[1], [0], [0], [1], [0, 0, 1, 1], [], []>} : vector<1x8xbf16>, vector<8x32xbf16>, vector<1x32xf32> -> vector<1x32xf32>
    %461 = arith.truncf %460 : vector<1x32xf32> to vector<1x32xbf16>
    %c1_282 = arith.constant 1 : index
    %c0_283 = arith.constant 0 : index
    %c0_284 = arith.constant 0 : index
    %c0_285 = arith.constant 0 : index
    %462 = vector.load %arg29[%c1_282, %c0_283, %c0_284, %c0_285] : memref<3x2x32x32xbf16, #tpu.memory_space<vmem>>, vector<1x1x32x32xbf16>
    %463 = vector.shape_cast %462 : vector<1x1x32x32xbf16> to vector<32x32xbf16>
    %cst_286 = arith.constant dense<0.000000e+00> : vector<1x32xf32>
    %464 = tpu.matmul %461, %463, %cst_286 {dimension_numbers = #tpu.dot_dimension_numbers<[1], [0], [0], [1], [0, 0, 1, 1], [], []>} : vector<1x32xbf16>, vector<32x32xbf16>, vector<1x32xf32> -> vector<1x32xf32>
    %c1_287 = arith.constant 1 : index
    %c0_288 = arith.constant 0 : index
    %c0_289 = arith.constant 0 : index
    %c0_290 = arith.constant 0 : index
    %465 = vector.load %arg30[%c1_287, %c0_288, %c0_289, %c0_290] : memref<3x2x1x32xf32, #tpu.memory_space<vmem>>, vector<1x1x1x32xf32>
    %466 = vector.shape_cast %465 : vector<1x1x1x32xf32> to vector<1x32xf32>
    %467 = arith.addf %464, %466 : vector<1x32xf32>
    %468 = arith.addf %434, %467 : vector<1x32xf32>
    %c1_291 = arith.constant 1 : index
    %c0_292 = arith.constant 0 : index
    %c0_293 = arith.constant 0 : index
    %c0_294 = arith.constant 0 : index
    %469 = vector.load %arg31[%c1_291, %c0_292, %c0_293, %c0_294] : memref<3x2x1x32xf32, #tpu.memory_space<vmem>>, vector<1x1x1x32xf32>
    %470 = vector.shape_cast %469 : vector<1x1x1x32xf32> to vector<1x32xf32>
    %c1_295 = arith.constant 1 : index
    %c0_296 = arith.constant 0 : index
    %c0_297 = arith.constant 0 : index
    %c0_298 = arith.constant 0 : index
    %471 = vector.load %arg32[%c1_295, %c0_296, %c0_297, %c0_298] : memref<3x2x1x32xf32, #tpu.memory_space<vmem>>, vector<1x1x1x32xf32>
    %472 = vector.shape_cast %471 : vector<1x1x1x32xf32> to vector<1x32xf32>
    %cst_299 = arith.constant dense<0.000000e+00> : vector<1xf32>
    %473 = vector.multi_reduction <add>, %468, %cst_299 [1] : vector<1x32xf32> to vector<1xf32>
    %474 = vector.shape_cast %473 : vector<1xf32> to vector<1x1xf32>
    %cst_300 = arith.constant 3.200000e+01 : f32
    %475 = vector.broadcast %cst_300 : f32 to vector<1x1xf32>
    %476 = arith.divf %474, %475 : vector<1x1xf32>
    %477 = vector.broadcast %476 : vector<1x1xf32> to vector<1x32xf32>
    %478 = arith.subf %468, %477 : vector<1x32xf32>
    %479 = arith.mulf %478, %478 : vector<1x32xf32>
    %cst_301 = arith.constant dense<0.000000e+00> : vector<1xf32>
    %480 = vector.multi_reduction <add>, %479, %cst_301 [1] : vector<1x32xf32> to vector<1xf32>
    %481 = vector.shape_cast %480 : vector<1xf32> to vector<1x1xf32>
    %cst_302 = arith.constant 3.200000e+01 : f32
    %482 = vector.broadcast %cst_302 : f32 to vector<1x1xf32>
    %483 = arith.divf %481, %482 : vector<1x1xf32>
    %484 = vector.broadcast %476 : vector<1x1xf32> to vector<1x32xf32>
    %485 = arith.subf %468, %484 : vector<1x32xf32>
    %cst_303 = arith.constant 9.99999974E-6 : f32
    %486 = vector.broadcast %cst_303 : f32 to vector<1x1xf32>
    %487 = arith.addf %483, %486 : vector<1x1xf32>
    %488 = math.rsqrt %487 : vector<1x1xf32>
    %489 = vector.broadcast %488 : vector<1x1xf32> to vector<1x32xf32>
    %490 = arith.mulf %485, %489 : vector<1x32xf32>
    %491 = arith.mulf %490, %470 : vector<1x32xf32>
    %492 = arith.addf %491, %472 : vector<1x32xf32>
    %493 = arith.truncf %492 : vector<1x32xf32> to vector<1x32xbf16>
    %c1_304 = arith.constant 1 : index
    %c1_305 = arith.constant 1 : index
    %c0_306 = arith.constant 0 : index
    %c0_307 = arith.constant 0 : index
    %494 = vector.load %arg25[%c1_304, %c1_305, %c0_306, %c0_307] : memref<3x2x32x32xbf16, #tpu.memory_space<vmem>>, vector<1x1x32x32xbf16>
    %495 = vector.shape_cast %494 : vector<1x1x32x32xbf16> to vector<32x32xbf16>
    %cst_308 = arith.constant dense<0.000000e+00> : vector<1x32xf32>
    %496 = tpu.matmul %493, %495, %cst_308 {dimension_numbers = #tpu.dot_dimension_numbers<[1], [0], [0], [1], [0, 0, 1, 1], [], []>} : vector<1x32xbf16>, vector<32x32xbf16>, vector<1x32xf32> -> vector<1x32xf32>
    %c1_309 = arith.constant 1 : index
    %c1_310 = arith.constant 1 : index
    %c0_311 = arith.constant 0 : index
    %c0_312 = arith.constant 0 : index
    %497 = vector.load %arg26[%c1_309, %c1_310, %c0_311, %c0_312] : memref<3x2x1x32xf32, #tpu.memory_space<vmem>>, vector<1x1x1x32xf32>
    %498 = vector.shape_cast %497 : vector<1x1x1x32xf32> to vector<1x32xf32>
    %499 = arith.addf %496, %498 : vector<1x32xf32>
    %500 = vector.extract_strided_slice %300 {offsets = [0, 192], sizes = [8, 32], strides = [1, 1]} : vector<8x384xf32> to vector<8x32xf32>
    %501 = vector.extract_strided_slice %300 {offsets = [0, 224], sizes = [8, 32], strides = [1, 1]} : vector<8x384xf32> to vector<8x32xf32>
    %502 = arith.truncf %499 : vector<1x32xf32> to vector<1x32xbf16>
    %503 = arith.truncf %500 : vector<8x32xf32> to vector<8x32xbf16>
    %cst_313 = arith.constant dense<0.000000e+00> : vector<1x8xf32>
    %504 = tpu.matmul %502, %503, %cst_313 {dimension_numbers = #tpu.dot_dimension_numbers<[1], [1], [0], [0], [0, 0, 1, 0], [], []>} : vector<1x32xbf16>, vector<8x32xbf16>, vector<1x8xf32> -> vector<1x8xf32>
    %cst_314 = arith.constant 0.176776692 : f32
    %505 = vector.broadcast %cst_314 : f32 to vector<1x8xf32>
    %506 = arith.mulf %504, %505 : vector<1x8xf32>
    %cst_315 = arith.constant dense<0xFF800000> : vector<1xf32>
    %507 = vector.multi_reduction <maximumf>, %506, %cst_315 [1] : vector<1x8xf32> to vector<1xf32>
    %508 = vector.shape_cast %507 : vector<1xf32> to vector<1x1xf32>
    %509 = vector.broadcast %508 : vector<1x1xf32> to vector<1x8xf32>
    %510 = arith.subf %506, %509 : vector<1x8xf32>
    %511 = math.exp %510 : vector<1x8xf32>
    %cst_316 = arith.constant dense<0.000000e+00> : vector<1xf32>
    %512 = vector.multi_reduction <add>, %511, %cst_316 [1] : vector<1x8xf32> to vector<1xf32>
    %513 = vector.shape_cast %512 : vector<1xf32> to vector<1x1xf32>
    %514 = vector.broadcast %513 : vector<1x1xf32> to vector<1x8xf32>
    %515 = arith.divf %511, %514 : vector<1x8xf32>
    %516 = arith.truncf %515 : vector<1x8xf32> to vector<1x8xbf16>
    %517 = arith.truncf %501 : vector<8x32xf32> to vector<8x32xbf16>
    %cst_317 = arith.constant dense<0.000000e+00> : vector<1x32xf32>
    %518 = tpu.matmul %516, %517, %cst_317 {dimension_numbers = #tpu.dot_dimension_numbers<[1], [0], [0], [1], [0, 0, 1, 1], [], []>} : vector<1x8xbf16>, vector<8x32xbf16>, vector<1x32xf32> -> vector<1x32xf32>
    %519 = arith.truncf %518 : vector<1x32xf32> to vector<1x32xbf16>
    %c1_318 = arith.constant 1 : index
    %c1_319 = arith.constant 1 : index
    %c0_320 = arith.constant 0 : index
    %c0_321 = arith.constant 0 : index
    %520 = vector.load %arg29[%c1_318, %c1_319, %c0_320, %c0_321] : memref<3x2x32x32xbf16, #tpu.memory_space<vmem>>, vector<1x1x32x32xbf16>
    %521 = vector.shape_cast %520 : vector<1x1x32x32xbf16> to vector<32x32xbf16>
    %cst_322 = arith.constant dense<0.000000e+00> : vector<1x32xf32>
    %522 = tpu.matmul %519, %521, %cst_322 {dimension_numbers = #tpu.dot_dimension_numbers<[1], [0], [0], [1], [0, 0, 1, 1], [], []>} : vector<1x32xbf16>, vector<32x32xbf16>, vector<1x32xf32> -> vector<1x32xf32>
    %c1_323 = arith.constant 1 : index
    %c1_324 = arith.constant 1 : index
    %c0_325 = arith.constant 0 : index
    %c0_326 = arith.constant 0 : index
    %523 = vector.load %arg30[%c1_323, %c1_324, %c0_325, %c0_326] : memref<3x2x1x32xf32, #tpu.memory_space<vmem>>, vector<1x1x1x32xf32>
    %524 = vector.shape_cast %523 : vector<1x1x1x32xf32> to vector<1x32xf32>
    %525 = arith.addf %522, %524 : vector<1x32xf32>
    %526 = arith.addf %492, %525 : vector<1x32xf32>
    %c1_327 = arith.constant 1 : index
    %c1_328 = arith.constant 1 : index
    %c0_329 = arith.constant 0 : index
    %c0_330 = arith.constant 0 : index
    %527 = vector.load %arg31[%c1_327, %c1_328, %c0_329, %c0_330] : memref<3x2x1x32xf32, #tpu.memory_space<vmem>>, vector<1x1x1x32xf32>
    %528 = vector.shape_cast %527 : vector<1x1x1x32xf32> to vector<1x32xf32>
    %c1_331 = arith.constant 1 : index
    %c1_332 = arith.constant 1 : index
    %c0_333 = arith.constant 0 : index
    %c0_334 = arith.constant 0 : index
    %529 = vector.load %arg32[%c1_331, %c1_332, %c0_333, %c0_334] : memref<3x2x1x32xf32, #tpu.memory_space<vmem>>, vector<1x1x1x32xf32>
    %530 = vector.shape_cast %529 : vector<1x1x1x32xf32> to vector<1x32xf32>
    %cst_335 = arith.constant dense<0.000000e+00> : vector<1xf32>
    %531 = vector.multi_reduction <add>, %526, %cst_335 [1] : vector<1x32xf32> to vector<1xf32>
    %532 = vector.shape_cast %531 : vector<1xf32> to vector<1x1xf32>
    %cst_336 = arith.constant 3.200000e+01 : f32
    %533 = vector.broadcast %cst_336 : f32 to vector<1x1xf32>
    %534 = arith.divf %532, %533 : vector<1x1xf32>
    %535 = vector.broadcast %534 : vector<1x1xf32> to vector<1x32xf32>
    %536 = arith.subf %526, %535 : vector<1x32xf32>
    %537 = arith.mulf %536, %536 : vector<1x32xf32>
    %cst_337 = arith.constant dense<0.000000e+00> : vector<1xf32>
    %538 = vector.multi_reduction <add>, %537, %cst_337 [1] : vector<1x32xf32> to vector<1xf32>
    %539 = vector.shape_cast %538 : vector<1xf32> to vector<1x1xf32>
    %cst_338 = arith.constant 3.200000e+01 : f32
    %540 = vector.broadcast %cst_338 : f32 to vector<1x1xf32>
    %541 = arith.divf %539, %540 : vector<1x1xf32>
    %542 = vector.broadcast %534 : vector<1x1xf32> to vector<1x32xf32>
    %543 = arith.subf %526, %542 : vector<1x32xf32>
    %cst_339 = arith.constant 9.99999974E-6 : f32
    %544 = vector.broadcast %cst_339 : f32 to vector<1x1xf32>
    %545 = arith.addf %541, %544 : vector<1x1xf32>
    %546 = math.rsqrt %545 : vector<1x1xf32>
    %547 = vector.broadcast %546 : vector<1x1xf32> to vector<1x32xf32>
    %548 = arith.mulf %543, %547 : vector<1x32xf32>
    %549 = arith.mulf %548, %528 : vector<1x32xf32>
    %550 = arith.addf %549, %530 : vector<1x32xf32>
    %551 = arith.index_cast %1 : i32 to index
    %c0_340 = arith.constant 0 : index
    %552 = vector.load %arg6[%551, %c0_340] : memref<2x64xf32, #tpu.memory_space<vmem>>, vector<1x64xf32>
    %553 = arith.truncf %552 : vector<1x64xf32> to vector<1x64xbf16>
    %c2_341 = arith.constant 2 : index
    %c0_342 = arith.constant 0 : index
    %c0_343 = arith.constant 0 : index
    %554 = vector.load %arg23[%c2_341, %c0_342, %c0_343] : memref<3x64x32xbf16, #tpu.memory_space<vmem>>, vector<1x64x32xbf16>
    %555 = vector.shape_cast %554 : vector<1x64x32xbf16> to vector<64x32xbf16>
    %cst_344 = arith.constant dense<0.000000e+00> : vector<1x32xf32>
    %556 = tpu.matmul %553, %555, %cst_344 {dimension_numbers = #tpu.dot_dimension_numbers<[1], [0], [0], [1], [0, 0, 1, 1], [], []>} : vector<1x64xbf16>, vector<64x32xbf16>, vector<1x32xf32> -> vector<1x32xf32>
    %c2_345 = arith.constant 2 : index
    %c0_346 = arith.constant 0 : index
    %c0_347 = arith.constant 0 : index
    %557 = vector.load %arg24[%c2_345, %c0_346, %c0_347] : memref<3x1x32xf32, #tpu.memory_space<vmem>>, vector<1x1x32xf32>
    %558 = vector.shape_cast %557 : vector<1x1x32xf32> to vector<1x32xf32>
    %559 = arith.addf %556, %558 : vector<1x32xf32>
    %560 = arith.truncf %559 : vector<1x32xf32> to vector<1x32xbf16>
    %c2_348 = arith.constant 2 : index
    %c0_349 = arith.constant 0 : index
    %c0_350 = arith.constant 0 : index
    %c0_351 = arith.constant 0 : index
    %561 = vector.load %arg25[%c2_348, %c0_349, %c0_350, %c0_351] : memref<3x2x32x32xbf16, #tpu.memory_space<vmem>>, vector<1x1x32x32xbf16>
    %562 = vector.shape_cast %561 : vector<1x1x32x32xbf16> to vector<32x32xbf16>
    %cst_352 = arith.constant dense<0.000000e+00> : vector<1x32xf32>
    %563 = tpu.matmul %560, %562, %cst_352 {dimension_numbers = #tpu.dot_dimension_numbers<[1], [0], [0], [1], [0, 0, 1, 1], [], []>} : vector<1x32xbf16>, vector<32x32xbf16>, vector<1x32xf32> -> vector<1x32xf32>
    %c2_353 = arith.constant 2 : index
    %c0_354 = arith.constant 0 : index
    %c0_355 = arith.constant 0 : index
    %c0_356 = arith.constant 0 : index
    %564 = vector.load %arg26[%c2_353, %c0_354, %c0_355, %c0_356] : memref<3x2x1x32xf32, #tpu.memory_space<vmem>>, vector<1x1x1x32xf32>
    %565 = vector.shape_cast %564 : vector<1x1x1x32xf32> to vector<1x32xf32>
    %566 = arith.addf %563, %565 : vector<1x32xf32>
    %567 = vector.extract_strided_slice %300 {offsets = [0, 256], sizes = [8, 32], strides = [1, 1]} : vector<8x384xf32> to vector<8x32xf32>
    %568 = vector.extract_strided_slice %300 {offsets = [0, 288], sizes = [8, 32], strides = [1, 1]} : vector<8x384xf32> to vector<8x32xf32>
    %569 = arith.truncf %566 : vector<1x32xf32> to vector<1x32xbf16>
    %570 = arith.truncf %567 : vector<8x32xf32> to vector<8x32xbf16>
    %cst_357 = arith.constant dense<0.000000e+00> : vector<1x8xf32>
    %571 = tpu.matmul %569, %570, %cst_357 {dimension_numbers = #tpu.dot_dimension_numbers<[1], [1], [0], [0], [0, 0, 1, 0], [], []>} : vector<1x32xbf16>, vector<8x32xbf16>, vector<1x8xf32> -> vector<1x8xf32>
    %cst_358 = arith.constant 0.176776692 : f32
    %572 = vector.broadcast %cst_358 : f32 to vector<1x8xf32>
    %573 = arith.mulf %571, %572 : vector<1x8xf32>
    %cst_359 = arith.constant dense<0xFF800000> : vector<1xf32>
    %574 = vector.multi_reduction <maximumf>, %573, %cst_359 [1] : vector<1x8xf32> to vector<1xf32>
    %575 = vector.shape_cast %574 : vector<1xf32> to vector<1x1xf32>
    %576 = vector.broadcast %575 : vector<1x1xf32> to vector<1x8xf32>
    %577 = arith.subf %573, %576 : vector<1x8xf32>
    %578 = math.exp %577 : vector<1x8xf32>
    %cst_360 = arith.constant dense<0.000000e+00> : vector<1xf32>
    %579 = vector.multi_reduction <add>, %578, %cst_360 [1] : vector<1x8xf32> to vector<1xf32>
    %580 = vector.shape_cast %579 : vector<1xf32> to vector<1x1xf32>
    %581 = vector.broadcast %580 : vector<1x1xf32> to vector<1x8xf32>
    %582 = arith.divf %578, %581 : vector<1x8xf32>
    %583 = arith.truncf %582 : vector<1x8xf32> to vector<1x8xbf16>
    %584 = arith.truncf %568 : vector<8x32xf32> to vector<8x32xbf16>
    %cst_361 = arith.constant dense<0.000000e+00> : vector<1x32xf32>
    %585 = tpu.matmul %583, %584, %cst_361 {dimension_numbers = #tpu.dot_dimension_numbers<[1], [0], [0], [1], [0, 0, 1, 1], [], []>} : vector<1x8xbf16>, vector<8x32xbf16>, vector<1x32xf32> -> vector<1x32xf32>
    %586 = arith.truncf %585 : vector<1x32xf32> to vector<1x32xbf16>
    %c2_362 = arith.constant 2 : index
    %c0_363 = arith.constant 0 : index
    %c0_364 = arith.constant 0 : index
    %c0_365 = arith.constant 0 : index
    %587 = vector.load %arg29[%c2_362, %c0_363, %c0_364, %c0_365] : memref<3x2x32x32xbf16, #tpu.memory_space<vmem>>, vector<1x1x32x32xbf16>
    %588 = vector.shape_cast %587 : vector<1x1x32x32xbf16> to vector<32x32xbf16>
    %cst_366 = arith.constant dense<0.000000e+00> : vector<1x32xf32>
    %589 = tpu.matmul %586, %588, %cst_366 {dimension_numbers = #tpu.dot_dimension_numbers<[1], [0], [0], [1], [0, 0, 1, 1], [], []>} : vector<1x32xbf16>, vector<32x32xbf16>, vector<1x32xf32> -> vector<1x32xf32>
    %c2_367 = arith.constant 2 : index
    %c0_368 = arith.constant 0 : index
    %c0_369 = arith.constant 0 : index
    %c0_370 = arith.constant 0 : index
    %590 = vector.load %arg30[%c2_367, %c0_368, %c0_369, %c0_370] : memref<3x2x1x32xf32, #tpu.memory_space<vmem>>, vector<1x1x1x32xf32>
    %591 = vector.shape_cast %590 : vector<1x1x1x32xf32> to vector<1x32xf32>
    %592 = arith.addf %589, %591 : vector<1x32xf32>
    %593 = arith.addf %559, %592 : vector<1x32xf32>
    %c2_371 = arith.constant 2 : index
    %c0_372 = arith.constant 0 : index
    %c0_373 = arith.constant 0 : index
    %c0_374 = arith.constant 0 : index
    %594 = vector.load %arg31[%c2_371, %c0_372, %c0_373, %c0_374] : memref<3x2x1x32xf32, #tpu.memory_space<vmem>>, vector<1x1x1x32xf32>
    %595 = vector.shape_cast %594 : vector<1x1x1x32xf32> to vector<1x32xf32>
    %c2_375 = arith.constant 2 : index
    %c0_376 = arith.constant 0 : index
    %c0_377 = arith.constant 0 : index
    %c0_378 = arith.constant 0 : index
    %596 = vector.load %arg32[%c2_375, %c0_376, %c0_377, %c0_378] : memref<3x2x1x32xf32, #tpu.memory_space<vmem>>, vector<1x1x1x32xf32>
    %597 = vector.shape_cast %596 : vector<1x1x1x32xf32> to vector<1x32xf32>
    %cst_379 = arith.constant dense<0.000000e+00> : vector<1xf32>
    %598 = vector.multi_reduction <add>, %593, %cst_379 [1] : vector<1x32xf32> to vector<1xf32>
    %599 = vector.shape_cast %598 : vector<1xf32> to vector<1x1xf32>
    %cst_380 = arith.constant 3.200000e+01 : f32
    %600 = vector.broadcast %cst_380 : f32 to vector<1x1xf32>
    %601 = arith.divf %599, %600 : vector<1x1xf32>
    %602 = vector.broadcast %601 : vector<1x1xf32> to vector<1x32xf32>
    %603 = arith.subf %593, %602 : vector<1x32xf32>
    %604 = arith.mulf %603, %603 : vector<1x32xf32>
    %cst_381 = arith.constant dense<0.000000e+00> : vector<1xf32>
    %605 = vector.multi_reduction <add>, %604, %cst_381 [1] : vector<1x32xf32> to vector<1xf32>
    %606 = vector.shape_cast %605 : vector<1xf32> to vector<1x1xf32>
    %cst_382 = arith.constant 3.200000e+01 : f32
    %607 = vector.broadcast %cst_382 : f32 to vector<1x1xf32>
    %608 = arith.divf %606, %607 : vector<1x1xf32>
    %609 = vector.broadcast %601 : vector<1x1xf32> to vector<1x32xf32>
    %610 = arith.subf %593, %609 : vector<1x32xf32>
    %cst_383 = arith.constant 9.99999974E-6 : f32
    %611 = vector.broadcast %cst_383 : f32 to vector<1x1xf32>
    %612 = arith.addf %608, %611 : vector<1x1xf32>
    %613 = math.rsqrt %612 : vector<1x1xf32>
    %614 = vector.broadcast %613 : vector<1x1xf32> to vector<1x32xf32>
    %615 = arith.mulf %610, %614 : vector<1x32xf32>
    %616 = arith.mulf %615, %595 : vector<1x32xf32>
    %617 = arith.addf %616, %597 : vector<1x32xf32>
    %618 = arith.truncf %617 : vector<1x32xf32> to vector<1x32xbf16>
    %c2_384 = arith.constant 2 : index
    %c1_385 = arith.constant 1 : index
    %c0_386 = arith.constant 0 : index
    %c0_387 = arith.constant 0 : index
    %619 = vector.load %arg25[%c2_384, %c1_385, %c0_386, %c0_387] : memref<3x2x32x32xbf16, #tpu.memory_space<vmem>>, vector<1x1x32x32xbf16>
    %620 = vector.shape_cast %619 : vector<1x1x32x32xbf16> to vector<32x32xbf16>
    %cst_388 = arith.constant dense<0.000000e+00> : vector<1x32xf32>
    %621 = tpu.matmul %618, %620, %cst_388 {dimension_numbers = #tpu.dot_dimension_numbers<[1], [0], [0], [1], [0, 0, 1, 1], [], []>} : vector<1x32xbf16>, vector<32x32xbf16>, vector<1x32xf32> -> vector<1x32xf32>
    %c2_389 = arith.constant 2 : index
    %c1_390 = arith.constant 1 : index
    %c0_391 = arith.constant 0 : index
    %c0_392 = arith.constant 0 : index
    %622 = vector.load %arg26[%c2_389, %c1_390, %c0_391, %c0_392] : memref<3x2x1x32xf32, #tpu.memory_space<vmem>>, vector<1x1x1x32xf32>
    %623 = vector.shape_cast %622 : vector<1x1x1x32xf32> to vector<1x32xf32>
    %624 = arith.addf %621, %623 : vector<1x32xf32>
    %625 = vector.extract_strided_slice %300 {offsets = [0, 320], sizes = [8, 32], strides = [1, 1]} : vector<8x384xf32> to vector<8x32xf32>
    %626 = vector.extract_strided_slice %300 {offsets = [0, 352], sizes = [8, 32], strides = [1, 1]} : vector<8x384xf32> to vector<8x32xf32>
    %627 = arith.truncf %624 : vector<1x32xf32> to vector<1x32xbf16>
    %628 = arith.truncf %625 : vector<8x32xf32> to vector<8x32xbf16>
    %cst_393 = arith.constant dense<0.000000e+00> : vector<1x8xf32>
    %629 = tpu.matmul %627, %628, %cst_393 {dimension_numbers = #tpu.dot_dimension_numbers<[1], [1], [0], [0], [0, 0, 1, 0], [], []>} : vector<1x32xbf16>, vector<8x32xbf16>, vector<1x8xf32> -> vector<1x8xf32>
    %cst_394 = arith.constant 0.176776692 : f32
    %630 = vector.broadcast %cst_394 : f32 to vector<1x8xf32>
    %631 = arith.mulf %629, %630 : vector<1x8xf32>
    %cst_395 = arith.constant dense<0xFF800000> : vector<1xf32>
    %632 = vector.multi_reduction <maximumf>, %631, %cst_395 [1] : vector<1x8xf32> to vector<1xf32>
    %633 = vector.shape_cast %632 : vector<1xf32> to vector<1x1xf32>
    %634 = vector.broadcast %633 : vector<1x1xf32> to vector<1x8xf32>
    %635 = arith.subf %631, %634 : vector<1x8xf32>
    %636 = math.exp %635 : vector<1x8xf32>
    %cst_396 = arith.constant dense<0.000000e+00> : vector<1xf32>
    %637 = vector.multi_reduction <add>, %636, %cst_396 [1] : vector<1x8xf32> to vector<1xf32>
    %638 = vector.shape_cast %637 : vector<1xf32> to vector<1x1xf32>
    %639 = vector.broadcast %638 : vector<1x1xf32> to vector<1x8xf32>
    %640 = arith.divf %636, %639 : vector<1x8xf32>
    %641 = arith.truncf %640 : vector<1x8xf32> to vector<1x8xbf16>
    %642 = arith.truncf %626 : vector<8x32xf32> to vector<8x32xbf16>
    %cst_397 = arith.constant dense<0.000000e+00> : vector<1x32xf32>
    %643 = tpu.matmul %641, %642, %cst_397 {dimension_numbers = #tpu.dot_dimension_numbers<[1], [0], [0], [1], [0, 0, 1, 1], [], []>} : vector<1x8xbf16>, vector<8x32xbf16>, vector<1x32xf32> -> vector<1x32xf32>
    %644 = arith.truncf %643 : vector<1x32xf32> to vector<1x32xbf16>
    %c2_398 = arith.constant 2 : index
    %c1_399 = arith.constant 1 : index
    %c0_400 = arith.constant 0 : index
    %c0_401 = arith.constant 0 : index
    %645 = vector.load %arg29[%c2_398, %c1_399, %c0_400, %c0_401] : memref<3x2x32x32xbf16, #tpu.memory_space<vmem>>, vector<1x1x32x32xbf16>
    %646 = vector.shape_cast %645 : vector<1x1x32x32xbf16> to vector<32x32xbf16>
    %cst_402 = arith.constant dense<0.000000e+00> : vector<1x32xf32>
    %647 = tpu.matmul %644, %646, %cst_402 {dimension_numbers = #tpu.dot_dimension_numbers<[1], [0], [0], [1], [0, 0, 1, 1], [], []>} : vector<1x32xbf16>, vector<32x32xbf16>, vector<1x32xf32> -> vector<1x32xf32>
    %c2_403 = arith.constant 2 : index
    %c1_404 = arith.constant 1 : index
    %c0_405 = arith.constant 0 : index
    %c0_406 = arith.constant 0 : index
    %648 = vector.load %arg30[%c2_403, %c1_404, %c0_405, %c0_406] : memref<3x2x1x32xf32, #tpu.memory_space<vmem>>, vector<1x1x1x32xf32>
    %649 = vector.shape_cast %648 : vector<1x1x1x32xf32> to vector<1x32xf32>
    %650 = arith.addf %647, %649 : vector<1x32xf32>
    %651 = arith.addf %617, %650 : vector<1x32xf32>
    %c2_407 = arith.constant 2 : index
    %c1_408 = arith.constant 1 : index
    %c0_409 = arith.constant 0 : index
    %c0_410 = arith.constant 0 : index
    %652 = vector.load %arg31[%c2_407, %c1_408, %c0_409, %c0_410] : memref<3x2x1x32xf32, #tpu.memory_space<vmem>>, vector<1x1x1x32xf32>
    %653 = vector.shape_cast %652 : vector<1x1x1x32xf32> to vector<1x32xf32>
    %c2_411 = arith.constant 2 : index
    %c1_412 = arith.constant 1 : index
    %c0_413 = arith.constant 0 : index
    %c0_414 = arith.constant 0 : index
    %654 = vector.load %arg32[%c2_411, %c1_412, %c0_413, %c0_414] : memref<3x2x1x32xf32, #tpu.memory_space<vmem>>, vector<1x1x1x32xf32>
    %655 = vector.shape_cast %654 : vector<1x1x1x32xf32> to vector<1x32xf32>
    %cst_415 = arith.constant dense<0.000000e+00> : vector<1xf32>
    %656 = vector.multi_reduction <add>, %651, %cst_415 [1] : vector<1x32xf32> to vector<1xf32>
    %657 = vector.shape_cast %656 : vector<1xf32> to vector<1x1xf32>
    %cst_416 = arith.constant 3.200000e+01 : f32
    %658 = vector.broadcast %cst_416 : f32 to vector<1x1xf32>
    %659 = arith.divf %657, %658 : vector<1x1xf32>
    %660 = vector.broadcast %659 : vector<1x1xf32> to vector<1x32xf32>
    %661 = arith.subf %651, %660 : vector<1x32xf32>
    %662 = arith.mulf %661, %661 : vector<1x32xf32>
    %cst_417 = arith.constant dense<0.000000e+00> : vector<1xf32>
    %663 = vector.multi_reduction <add>, %662, %cst_417 [1] : vector<1x32xf32> to vector<1xf32>
    %664 = vector.shape_cast %663 : vector<1xf32> to vector<1x1xf32>
    %cst_418 = arith.constant 3.200000e+01 : f32
    %665 = vector.broadcast %cst_418 : f32 to vector<1x1xf32>
    %666 = arith.divf %664, %665 : vector<1x1xf32>
    %667 = vector.broadcast %659 : vector<1x1xf32> to vector<1x32xf32>
    %668 = arith.subf %651, %667 : vector<1x32xf32>
    %cst_419 = arith.constant 9.99999974E-6 : f32
    %669 = vector.broadcast %cst_419 : f32 to vector<1x1xf32>
    %670 = arith.addf %666, %669 : vector<1x1xf32>
    %671 = math.rsqrt %670 : vector<1x1xf32>
    %672 = vector.broadcast %671 : vector<1x1xf32> to vector<1x32xf32>
    %673 = arith.mulf %668, %672 : vector<1x32xf32>
    %674 = arith.mulf %673, %653 : vector<1x32xf32>
    %675 = arith.addf %674, %655 : vector<1x32xf32>
    %676 = tpu.concatenate %425, %550, %675 in 1 : vector<1x32xf32>, vector<1x32xf32>, vector<1x32xf32> -> vector<1x96xf32>
    %677 = arith.truncf %676 : vector<1x96xf32> to vector<1x96xbf16>
    %c0_420 = arith.constant 0 : index
    %c0_421 = arith.constant 0 : index
    %678 = vector.load %arg33[%c0_420, %c0_421] : memref<96x256xbf16, #tpu.memory_space<vmem>>, vector<96x256xbf16>
    %cst_422 = arith.constant dense<0.000000e+00> : vector<1x256xf32>
    %679 = tpu.matmul %677, %678, %cst_422 {dimension_numbers = #tpu.dot_dimension_numbers<[1], [0], [0], [1], [0, 0, 1, 1], [], []>} : vector<1x96xbf16>, vector<96x256xbf16>, vector<1x256xf32> -> vector<1x256xf32>
    %c0_423 = arith.constant 0 : index
    %c0_424 = arith.constant 0 : index
    %680 = vector.load %arg34[%c0_423, %c0_424] : memref<1x256xf32, #tpu.memory_space<vmem>>, vector<1x256xf32>
    %681 = arith.addf %679, %680 : vector<1x256xf32>
    %cst_425 = arith.constant 0.000000e+00 : f32
    %682 = vector.broadcast %cst_425 : f32 to vector<1x256xf32>
    %683 = arith.maximumf %681, %682 : vector<1x256xf32>
    %684 = arith.truncf %683 : vector<1x256xf32> to vector<1x256xbf16>
    %c0_426 = arith.constant 0 : index
    %c0_427 = arith.constant 0 : index
    %685 = vector.load %arg35[%c0_426, %c0_427] : memref<256x1xbf16, #tpu.memory_space<vmem>>, vector<256x1xbf16>
    %cst_428 = arith.constant dense<0.000000e+00> : vector<1x1xf32>
    %686 = tpu.matmul %684, %685, %cst_428 {dimension_numbers = #tpu.dot_dimension_numbers<[1], [0], [0], [1], [0, 0, 1, 1], [], []>} : vector<1x256xbf16>, vector<256x1xbf16>, vector<1x1xf32> -> vector<1x1xf32>
    %c0_429 = arith.constant 0 : index
    %c0_430 = arith.constant 0 : index
    %687 = vector.load %arg36[%c0_429, %c0_430] : memref<1x1xf32, #tpu.memory_space<vmem>>, vector<1x1xf32>
    %688 = arith.addf %686, %687 : vector<1x1xf32>
    %689 = vector.shape_cast %688 : vector<1x1xf32> to vector<1x1x1xf32>
    %c0_431 = arith.constant 0 : index
    %c0_432 = arith.constant 0 : index
    %c0_433 = arith.constant 0 : index
    %690 = vector.load %arg37[%c0_431, %c0_432, %c0_433] : memref<1x1x1xf32, #tpu.memory_space<vmem>>, vector<1x1x1xf32>
    tpu.vector_store %arg37[%c0_431, %c0_432, %c0_433], %689 {strides = array<i32>} : memref<1x1x1xf32, #tpu.memory_space<vmem>>, vector<1x1x1xf32>,
    return
  }
  func.func @transform_0(%arg0: i32) -> (i32, i32, i32) {
    %c0_i32 = arith.constant 0 : i32
    %c0_i32_0 = arith.constant 0 : i32
    %c0_i32_1 = arith.constant 0 : i32
    return %arg0, %c0_i32, %c0_i32_0 : i32, i32, i32
  }
  func.func @transform_1(%arg0: i32) -> (i32, i32, i32) {
    %c0_i32 = arith.constant 0 : i32
    %c0_i32_0 = arith.constant 0 : i32
    %c0_i32_1 = arith.constant 0 : i32
    return %arg0, %c0_i32, %c0_i32_0 : i32, i32, i32
  }
  func.func @transform_2(%arg0: i32) -> (i32, i32, i32) {
    %c0_i32 = arith.constant 0 : i32
    %c0_i32_0 = arith.constant 0 : i32
    %c0_i32_1 = arith.constant 0 : i32
    return %arg0, %c0_i32, %c0_i32_0 : i32, i32, i32
  }
  func.func @transform_3(%arg0: i32) -> (i32, i32) {
    %c0_i32 = arith.constant 0 : i32
    %c0_i32_0 = arith.constant 0 : i32
    %c0_i32_1 = arith.constant 0 : i32
    return %c0_i32, %c0_i32_0 : i32, i32
  }
  func.func @transform_4(%arg0: i32) -> (i32, i32) {
    %c0_i32 = arith.constant 0 : i32
    %c0_i32_0 = arith.constant 0 : i32
    %c0_i32_1 = arith.constant 0 : i32
    return %c0_i32, %c0_i32_0 : i32, i32
  }
  func.func @transform_5(%arg0: i32) -> (i32, i32) {
    %c0_i32 = arith.constant 0 : i32
    %c0_i32_0 = arith.constant 0 : i32
    %c0_i32_1 = arith.constant 0 : i32
    return %c0_i32, %c0_i32_0 : i32, i32
  }
  func.func @transform_6(%arg0: i32) -> i32 {
    %c0_i32 = arith.constant 0 : i32
    %c0_i32_0 = arith.constant 0 : i32
    return %c0_i32 : i32
  }
  func.func @transform_7(%arg0: i32) -> (i32, i32) {
    %c0_i32 = arith.constant 0 : i32
    %c0_i32_0 = arith.constant 0 : i32
    %c0_i32_1 = arith.constant 0 : i32
    return %c0_i32, %c0_i32_0 : i32, i32
  }
  func.func @transform_8(%arg0: i32) -> (i32, i32) {
    %c0_i32 = arith.constant 0 : i32
    %c0_i32_0 = arith.constant 0 : i32
    %c0_i32_1 = arith.constant 0 : i32
    return %c0_i32, %c0_i32_0 : i32, i32
  }
  func.func @transform_9(%arg0: i32) -> (i32, i32) {
    %c0_i32 = arith.constant 0 : i32
    %c0_i32_0 = arith.constant 0 : i32
    %c0_i32_1 = arith.constant 0 : i32
    return %c0_i32, %c0_i32_0 : i32, i32
  }
  func.func @transform_10(%arg0: i32) -> (i32, i32, i32, i32) {
    %c0_i32 = arith.constant 0 : i32
    %c0_i32_0 = arith.constant 0 : i32
    %c0_i32_1 = arith.constant 0 : i32
    %c0_i32_2 = arith.constant 0 : i32
    %c0_i32_3 = arith.constant 0 : i32
    return %c0_i32, %c0_i32_0, %c0_i32_1, %c0_i32_2 : i32, i32, i32, i32
  }
  func.func @transform_11(%arg0: i32) -> (i32, i32, i32, i32) {
    %c0_i32 = arith.constant 0 : i32
    %c0_i32_0 = arith.constant 0 : i32
    %c0_i32_1 = arith.constant 0 : i32
    %c0_i32_2 = arith.constant 0 : i32
    %c0_i32_3 = arith.constant 0 : i32
    return %c0_i32, %c0_i32_0, %c0_i32_1, %c0_i32_2 : i32, i32, i32, i32
  }
  func.func @transform_12(%arg0: i32) -> (i32, i32, i32) {
    %c0_i32 = arith.constant 0 : i32
    %c0_i32_0 = arith.constant 0 : i32
    %c0_i32_1 = arith.constant 0 : i32
    %c0_i32_2 = arith.constant 0 : i32
    return %c0_i32, %c0_i32_0, %c0_i32_1 : i32, i32, i32
  }
  func.func @transform_13(%arg0: i32) -> (i32, i32, i32) {
    %c0_i32 = arith.constant 0 : i32
    %c0_i32_0 = arith.constant 0 : i32
    %c0_i32_1 = arith.constant 0 : i32
    %c0_i32_2 = arith.constant 0 : i32
    return %c0_i32, %c0_i32_0, %c0_i32_1 : i32, i32, i32
  }
  func.func @transform_14(%arg0: i32) -> (i32, i32, i32) {
    %c0_i32 = arith.constant 0 : i32
    %c0_i32_0 = arith.constant 0 : i32
    %c0_i32_1 = arith.constant 0 : i32
    %c0_i32_2 = arith.constant 0 : i32
    return %c0_i32, %c0_i32_0, %c0_i32_1 : i32, i32, i32
  }
  func.func @transform_15(%arg0: i32) -> (i32, i32, i32) {
    %c0_i32 = arith.constant 0 : i32
    %c0_i32_0 = arith.constant 0 : i32
    %c0_i32_1 = arith.constant 0 : i32
    %c0_i32_2 = arith.constant 0 : i32
    return %c0_i32, %c0_i32_0, %c0_i32_1 : i32, i32, i32
  }
  func.func @transform_16(%arg0: i32) -> (i32, i32, i32) {
    %c0_i32 = arith.constant 0 : i32
    %c0_i32_0 = arith.constant 0 : i32
    %c0_i32_1 = arith.constant 0 : i32
    %c0_i32_2 = arith.constant 0 : i32
    return %c0_i32, %c0_i32_0, %c0_i32_1 : i32, i32, i32
  }
  func.func @transform_17(%arg0: i32) -> (i32, i32, i32) {
    %c0_i32 = arith.constant 0 : i32
    %c0_i32_0 = arith.constant 0 : i32
    %c0_i32_1 = arith.constant 0 : i32
    %c0_i32_2 = arith.constant 0 : i32
    return %c0_i32, %c0_i32_0, %c0_i32_1 : i32, i32, i32
  }
  func.func @transform_18(%arg0: i32) -> (i32, i32, i32) {
    %c0_i32 = arith.constant 0 : i32
    %c0_i32_0 = arith.constant 0 : i32
    %c0_i32_1 = arith.constant 0 : i32
    %c0_i32_2 = arith.constant 0 : i32
    return %c0_i32, %c0_i32_0, %c0_i32_1 : i32, i32, i32
  }
  func.func @transform_19(%arg0: i32) -> (i32, i32, i32) {
    %c0_i32 = arith.constant 0 : i32
    %c0_i32_0 = arith.constant 0 : i32
    %c0_i32_1 = arith.constant 0 : i32
    %c0_i32_2 = arith.constant 0 : i32
    return %c0_i32, %c0_i32_0, %c0_i32_1 : i32, i32, i32
  }
  func.func @transform_20(%arg0: i32) -> (i32, i32, i32) {
    %c0_i32 = arith.constant 0 : i32
    %c0_i32_0 = arith.constant 0 : i32
    %c0_i32_1 = arith.constant 0 : i32
    %c0_i32_2 = arith.constant 0 : i32
    return %c0_i32, %c0_i32_0, %c0_i32_1 : i32, i32, i32
  }
  func.func @transform_21(%arg0: i32) -> (i32, i32, i32) {
    %c0_i32 = arith.constant 0 : i32
    %c0_i32_0 = arith.constant 0 : i32
    %c0_i32_1 = arith.constant 0 : i32
    %c0_i32_2 = arith.constant 0 : i32
    return %c0_i32, %c0_i32_0, %c0_i32_1 : i32, i32, i32
  }
  func.func @transform_22(%arg0: i32) -> (i32, i32, i32) {
    %c0_i32 = arith.constant 0 : i32
    %c0_i32_0 = arith.constant 0 : i32
    %c0_i32_1 = arith.constant 0 : i32
    %c0_i32_2 = arith.constant 0 : i32
    return %c0_i32, %c0_i32_0, %c0_i32_1 : i32, i32, i32
  }
  func.func @transform_23(%arg0: i32) -> (i32, i32, i32) {
    %c0_i32 = arith.constant 0 : i32
    %c0_i32_0 = arith.constant 0 : i32
    %c0_i32_1 = arith.constant 0 : i32
    %c0_i32_2 = arith.constant 0 : i32
    return %c0_i32, %c0_i32_0, %c0_i32_1 : i32, i32, i32
  }
  func.func @transform_24(%arg0: i32) -> (i32, i32, i32, i32) {
    %c0_i32 = arith.constant 0 : i32
    %c0_i32_0 = arith.constant 0 : i32
    %c0_i32_1 = arith.constant 0 : i32
    %c0_i32_2 = arith.constant 0 : i32
    %c0_i32_3 = arith.constant 0 : i32
    return %c0_i32, %c0_i32_0, %c0_i32_1, %c0_i32_2 : i32, i32, i32, i32
  }
  func.func @transform_25(%arg0: i32) -> (i32, i32, i32, i32) {
    %c0_i32 = arith.constant 0 : i32
    %c0_i32_0 = arith.constant 0 : i32
    %c0_i32_1 = arith.constant 0 : i32
    %c0_i32_2 = arith.constant 0 : i32
    %c0_i32_3 = arith.constant 0 : i32
    return %c0_i32, %c0_i32_0, %c0_i32_1, %c0_i32_2 : i32, i32, i32, i32
  }
  func.func @transform_26(%arg0: i32) -> (i32, i32) {
    %c0_i32 = arith.constant 0 : i32
    %c0_i32_0 = arith.constant 0 : i32
    %c0_i32_1 = arith.constant 0 : i32
    return %c0_i32, %c0_i32_0 : i32, i32
  }
  func.func @transform_27(%arg0: i32) -> (i32, i32) {
    %c0_i32 = arith.constant 0 : i32
    %c0_i32_0 = arith.constant 0 : i32
    %c0_i32_1 = arith.constant 0 : i32
    return %c0_i32, %c0_i32_0 : i32, i32
  }
  func.func @transform_28(%arg0: i32) -> (i32, i32, i32, i32) {
    %c0_i32 = arith.constant 0 : i32
    %c0_i32_0 = arith.constant 0 : i32
    %c0_i32_1 = arith.constant 0 : i32
    %c0_i32_2 = arith.constant 0 : i32
    %c0_i32_3 = arith.constant 0 : i32
    return %c0_i32, %c0_i32_0, %c0_i32_1, %c0_i32_2 : i32, i32, i32, i32
  }
  func.func @transform_29(%arg0: i32) -> (i32, i32, i32, i32) {
    %c0_i32 = arith.constant 0 : i32
    %c0_i32_0 = arith.constant 0 : i32
    %c0_i32_1 = arith.constant 0 : i32
    %c0_i32_2 = arith.constant 0 : i32
    %c0_i32_3 = arith.constant 0 : i32
    return %c0_i32, %c0_i32_0, %c0_i32_1, %c0_i32_2 : i32, i32, i32, i32
  }
  func.func @transform_30(%arg0: i32) -> (i32, i32, i32, i32) {
    %c0_i32 = arith.constant 0 : i32
    %c0_i32_0 = arith.constant 0 : i32
    %c0_i32_1 = arith.constant 0 : i32
    %c0_i32_2 = arith.constant 0 : i32
    %c0_i32_3 = arith.constant 0 : i32
    return %c0_i32, %c0_i32_0, %c0_i32_1, %c0_i32_2 : i32, i32, i32, i32
  }
  func.func @transform_31(%arg0: i32) -> (i32, i32, i32, i32) {
    %c0_i32 = arith.constant 0 : i32
    %c0_i32_0 = arith.constant 0 : i32
    %c0_i32_1 = arith.constant 0 : i32
    %c0_i32_2 = arith.constant 0 : i32
    %c0_i32_3 = arith.constant 0 : i32
    return %c0_i32, %c0_i32_0, %c0_i32_1, %c0_i32_2 : i32, i32, i32, i32
  }
  func.func @transform_32(%arg0: i32) -> (i32, i32) {
    %c0_i32 = arith.constant 0 : i32
    %c0_i32_0 = arith.constant 0 : i32
    %c0_i32_1 = arith.constant 0 : i32
    return %c0_i32, %c0_i32_0 : i32, i32
  }
  func.func @transform_33(%arg0: i32) -> (i32, i32) {
    %c0_i32 = arith.constant 0 : i32
    %c0_i32_0 = arith.constant 0 : i32
    %c0_i32_1 = arith.constant 0 : i32
    return %c0_i32, %c0_i32_0 : i32, i32
  }
  func.func @transform_34(%arg0: i32) -> (i32, i32) {
    %c0_i32 = arith.constant 0 : i32
    %c0_i32_0 = arith.constant 0 : i32
    %c0_i32_1 = arith.constant 0 : i32
    return %c0_i32, %c0_i32_0 : i32, i32
  }
  func.func @transform_35(%arg0: i32) -> (i32, i32) {
    %c0_i32 = arith.constant 0 : i32
    %c0_i32_0 = arith.constant 0 : i32
    %c0_i32_1 = arith.constant 0 : i32
    return %c0_i32, %c0_i32_0 : i32, i32
  }
  func.func @transform_36(%arg0: i32) -> (i32, i32, i32) {
    %c0_i32 = arith.constant 0 : i32
    %c0_i32_0 = arith.constant 0 : i32
    %c0_i32_1 = arith.constant 0 : i32
    return %arg0, %c0_i32, %c0_i32_0 : i32, i32, i32
  }
}

</mosaic_0001>

<llo_original>
// kernel: bgd_forward.1
$region0: #{bgd_forward.1}
  #allocation0 [shape = 'u32[]', space=smem, size = 0x4, offset = 0x4, fixed_abs, tag = 'smem constant byte address 0x4 - core index']
  #allocation1 [shape = 'u32[72,128]{1,0:T(1,128)}', space=vmem, size = 0x9000, scoped, tag = 'internal scratch']
  #allocation2 [shape = 'f32[1,1]{1,0:T(1,128)S(1)}', space=vmem, size = 0x200, scoped, tag = 'scoped memory for bgd_forward.1']
  %s0 = inlined_call_operand.smem [shape: u32[37], index: -1, kind: input, shape index: {}]
  %s1 = sld [smem:[%s0]]
  %s2 = scalar_lea.smem %s0, 1
  %s3 = sld [smem:[%s2]]
  %s4 = scalar_lea.smem %s0, 2
  %s5 = sld [smem:[%s4]]
  %s6 = scalar_lea.smem %s0, 3
  %s7 = sld [smem:[%s6]]
  %s8 = scalar_lea.smem %s0, 4
  %s9 = sld [smem:[%s8]]
  %s10 = scalar_lea.smem %s0, 5
  %s11 = sld [smem:[%s10]]
  %s12 = scalar_lea.smem %s0, 6
  %s13 = sld [smem:[%s12]]
  %s14 = scalar_lea.smem %s0, 7
  %s15 = sld [smem:[%s14]]
  %s16 = scalar_lea.smem %s0, 8
  %s17 = sld [smem:[%s16]]
  %s18 = scalar_lea.smem %s0, 9
  %s19 = sld [smem:[%s18]]
  %s20 = scalar_lea.smem %s0, 10
  %s21 = sld [smem:[%s20]]
  %s22 = scalar_lea.smem %s0, 11
  %s23 = sld [smem:[%s22]]
  %s24 = scalar_lea.smem %s0, 12
  %s25 = sld [smem:[%s24]]
  %s26 = scalar_lea.smem %s0, 13
  %s27 = sld [smem:[%s26]]
  %s28 = scalar_lea.smem %s0, 14
  %s29 = sld [smem:[%s28]]
  %s30 = scalar_lea.smem %s0, 15
  %s31 = sld [smem:[%s30]]
  %s32 = scalar_lea.smem %s0, 16
  %s33 = sld [smem:[%s32]]
  %s34 = scalar_lea.smem %s0, 17
  %s35 = sld [smem:[%s34]]
  %s36 = scalar_lea.smem %s0, 18
  %s37 = sld [smem:[%s36]]
  %s38 = scalar_lea.smem %s0, 19
  %s39 = sld [smem:[%s38]]
  %s40 = scalar_lea.smem %s0, 20
  %s41 = sld [smem:[%s40]]
  %s42 = scalar_lea.smem %s0, 21
  %s43 = sld [smem:[%s42]]
  %s44 = scalar_lea.smem %s0, 22
  %s45 = sld [smem:[%s44]]
  %s46 = scalar_lea.smem %s0, 23
  %s47 = sld [smem:[%s46]]
  %s48 = scalar_lea.smem %s0, 24
  %s49 = sld [smem:[%s48]]
  %s50 = scalar_lea.smem %s0, 25
  %s51 = sld [smem:[%s50]]
  %s52 = scalar_lea.smem %s0, 26
  %s53 = sld [smem:[%s52]]
  %s54 = scalar_lea.smem %s0, 27
  %s55 = sld [smem:[%s54]]
  %s56 = scalar_lea.smem %s0, 28
  %s57 = sld [smem:[%s56]]
  %s58 = scalar_lea.smem %s0, 29
  %s59 = sld [smem:[%s58]]
  %s60 = scalar_lea.smem %s0, 30
  %s61 = sld [smem:[%s60]]
  %s62 = scalar_lea.smem %s0, 31
  %s63 = sld [smem:[%s62]]
  %s64 = scalar_lea.smem %s0, 32
  %s65 = sld [smem:[%s64]]
  %s66 = scalar_lea.smem %s0, 33
  %s67 = sld [smem:[%s66]]
  %s68 = scalar_lea.smem %s0, 34
  %s69 = sld [smem:[%s68]]
  %s70 = scalar_lea.smem %s0, 35
  %s71 = sld [smem:[%s70]]
  %s72 = scalar_lea.smem %s0, 36
  %s73 = sld [smem:[%s72]]
  %s74 = sld [smem:[#allocation0]]
  $region181: #{bgd_forward.1} parent=0
    _
  %s76 = ssub.s32 1, %s74
  %s77 = scalar_select 0, %s76, %s74
  %v78 = vstv %s71
  %79 = vst [vmem:[#allocation2] sm:$0x1] %v78
  $region1: #{bgd_forward.1} parent=0
    #allocation3 [shape = 'u8[512]{0}', space=smem, size = 0x200, scoped, tag = 'input window, operand 6, single buffered']
    #allocation4 [shape = 's32[2]{0}', space=sflag, size = 0x8, scoped, tag = 'scoped memory for bgd_forward.1']
    %80 = vsyncpa [#allocation4], 0
    loop: start=0, step=1, limit=4
    $region2: #{bgd_forward.1} parent=1 // loop_pre_header
      _
    $region3: #{bgd_forward.1} parent=1 // loop_header
      %s82 = sphi 0, %s86
      %p83 = scmp.ge.s32.totalorder %s82, 4
      %s92 = sphi 0, %s94
      %s95 = sphi 0, %s92
      %s96 = sphi 0, %s95
      %s112 = sphi 0, %s96
      %s118 = sphi 0, %s120
      %s121 = sphi 0, %s118
      %s122 = sphi 0, %s121
      %s138 = sphi 0, %s122
      %s144 = sphi 0, %s146
      %s147 = sphi 0, %s144
      %s148 = sphi 0, %s147
      %s164 = sphi 0, %s148
      %s168 = sphi 0, %s168
      %s170 = sphi 0, %s168
      %s171 = sphi 0, %s170
      %s185 = sphi 0, %s171
      %s189 = sphi 0, %s189
      %s191 = sphi 0, %s189
      %s192 = sphi 0, %s191
      %s206 = sphi 0, %s192
      %s210 = sphi 0, %s210
      %s212 = sphi 0, %s210
      %s213 = sphi 0, %s212
      %s227 = sphi 0, %s213
      %s231 = sphi 0, %s231
      %s233 = sphi 0, %s231
      %s234 = sphi 0, %s233
      %s248 = sphi 0, %s234
      %s252 = sphi 0, %s252
      %s254 = sphi 0, %s252
      %s255 = sphi 0, %s254
      %s269 = sphi 0, %s255
      %s273 = sphi 0, %s273
      %s275 = sphi 0, %s273
      %s276 = sphi 0, %s275
      %s290 = sphi 0, %s276
      %s294 = sphi 0, %s294
      %s296 = sphi 0, %s294
      %s297 = sphi 0, %s296
      %s311 = sphi 0, %s297
      %s315 = sphi 0, %s315
      %s317 = sphi 0, %s315
      %s318 = sphi 0, %s317
      %s332 = sphi 0, %s318
      %s336 = sphi 0, %s336
      %s338 = sphi 0, %s336
      %s339 = sphi 0, %s338
      %s353 = sphi 0, %s339
      %s357 = sphi 0, %s357
      %s359 = sphi 0, %s357
      %s360 = sphi 0, %s359
      %s374 = sphi 0, %s360
      %s378 = sphi 0, %s378
      %s380 = sphi 0, %s378
      %s381 = sphi 0, %s380
      %s395 = sphi 0, %s381
      %s399 = sphi 0, %s399
      %s401 = sphi 0, %s399
      %s402 = sphi 0, %s401
      %s416 = sphi 0, %s402
      %s420 = sphi 0, %s420
      %s422 = sphi 0, %s420
      %s423 = sphi 0, %s422
      %s437 = sphi 0, %s423
      %s441 = sphi 0, %s441
      %s443 = sphi 0, %s441
      %s444 = sphi 0, %s443
      %s458 = sphi 0, %s444
      %s462 = sphi 0, %s462
      %s464 = sphi 0, %s462
      %s465 = sphi 0, %s464
      %s479 = sphi 0, %s465
      %s483 = sphi 0, %s483
      %s485 = sphi 0, %s483
      %s486 = sphi 0, %s485
      %s500 = sphi 0, %s486
      %s504 = sphi 0, %s504
      %s506 = sphi 0, %s504
      %s507 = sphi 0, %s506
      %s521 = sphi 0, %s507
      %s525 = sphi 0, %s525
      %s527 = sphi 0, %s525
      %s528 = sphi 0, %s527
      %s542 = sphi 0, %s528
      %s546 = sphi 0, %s546
      %s548 = sphi 0, %s546
      %s549 = sphi 0, %s548
      %s563 = sphi 0, %s549
      %s567 = sphi 0, %s567
      %s569 = sphi 0, %s567
      %s570 = sphi 0, %s569
      %s584 = sphi 0, %s570
      %s588 = sphi 0, %s588
      %s590 = sphi 0, %s588
      %s591 = sphi 0, %s590
      %s605 = sphi 0, %s591
      %s609 = sphi 0, %s609
      %s611 = sphi 0, %s609
      %s612 = sphi 0, %s611
      %s626 = sphi 0, %s612
      %s630 = sphi 0, %s630
      %s632 = sphi 0, %s630
      %s633 = sphi 0, %s632
      %s647 = sphi 0, %s633
      %s651 = sphi 0, %s651
      %s653 = sphi 0, %s651
      %s654 = sphi 0, %s653
      %s668 = sphi 0, %s654
      %s672 = sphi 0, %s672
      %s674 = sphi 0, %s672
      %s675 = sphi 0, %s674
      %s689 = sphi 0, %s675
      %s693 = sphi 0, %s693
      %s695 = sphi 0, %s693
      %s696 = sphi 0, %s695
      %s710 = sphi 0, %s696
      %s714 = sphi 0, %s714
      %s716 = sphi 0, %s714
      %s717 = sphi 0, %s716
      %s731 = sphi 0, %s717
      %s735 = sphi 0, %s735
      %s737 = sphi 0, %s735
      %s738 = sphi 0, %s737
      %s752 = sphi 0, %s738
      %s756 = sphi 0, %s756
      %s758 = sphi 0, %s756
      %s759 = sphi 0, %s758
      %s773 = sphi 0, %s759
      %s777 = sphi 0, %s777
      %s779 = sphi 0, %s777
      %s780 = sphi 0, %s779
      %s794 = sphi 0, %s780
      %s798 = sphi 0, %s798
      %s800 = sphi 0, %s798
      %s801 = sphi 0, %s800
      %s815 = sphi 0, %s801
      %s819 = sphi 0, %s819
      %s821 = sphi 0, %s819
      %s822 = sphi 0, %s821
      %s836 = sphi 0, %s822
      %s840 = sphi 0, %s840
      %s842 = sphi 0, %s840
      %s843 = sphi 0, %s842
      %s857 = sphi 0, %s843
      %s863 = sphi 0, %s865
      %s866 = sphi 0, %s863
      %s867 = sphi 0, %s866
      %s883 = sphi 0, %s867
    $region4: #{bgd_forward.1} parent=1 // loop_header_branch
      %85 = sbr.rel (%p83) target = $region8
    $region5: #{bgd_forward.1} parent=1 // loop_body
      %s87 = ssub.s32 %s82, 1
      %s88 = ssub.s32 %s82, 2
      %s89 = sadd.s32 %s82, 1
      %s90 = ssub.s32 %s82, %s89
      %p91 = scmp.eq.s32.totalorder %s90, 0
      %s93 = sadd.s32 %s92, 1
      %s94 = scalar_select %p91, %s92, %s93
      %p97 = pneg %p91
      %p98 = scmp.eq.s32.totalorder %s82, 1
      %p99 = por %p97, %p98
      %p100 = scmp.ne.s32.totalorder %s92, %s95
      %p101 = scmp.eq.s32.totalorder %s82, 0
      %p102 = por %p100, %p101
      %p103 = scmp.ne.s32.totalorder %s92, %s95
      %p104 = scmp.eq.s32.totalorder %s87, 1
      %p105 = por %p103, %p104
      %p106 = scmp.ne.s32.totalorder %s95, %s96
      %p107 = scmp.eq.s32.totalorder %s87, 0
      %p108 = por %p106, %p107
      %p109 = scmp.ne.s32.totalorder %s95, %s96
      %p110 = scmp.eq.s32.totalorder %s88, 1
      %p111 = por %p109, %p110
      %p113 = scmp.ne.s32.totalorder %s96, %s112
      %p114 = scmp.eq.s32.totalorder %s88, 0
      %p115 = por %p113, %p114
      %s116 = ssub.s32 %s82, %s89
      %p117 = scmp.eq.s32.totalorder %s116, 0
      %s119 = sadd.s32 %s118, 1
      %s120 = scalar_select %p117, %s118, %s119
      %p123 = pneg %p117
      %p124 = scmp.eq.s32.totalorder %s82, 1
      %p125 = por %p123, %p124
      %p126 = scmp.ne.s32.totalorder %s118, %s121
      %p127 = scmp.eq.s32.totalorder %s82, 0
      %p128 = por %p126, %p127
      %p129 = scmp.ne.s32.totalorder %s118, %s121
      %p130 = scmp.eq.s32.totalorder %s87, 1
      %p131 = por %p129, %p130
      %p132 = scmp.ne.s32.totalorder %s121, %s122
      %p133 = scmp.eq.s32.totalorder %s87, 0
      %p134 = por %p132, %p133
      %p135 = scmp.ne.s32.totalorder %s121, %s122
      %p136 = scmp.eq.s32.totalorder %s88, 1
      %p137 = por %p135, %p136
      %p139 = scmp.ne.s32.totalorder %s122, %s138
      %p140 = scmp.eq.s32.totalorder %s88, 0
      %p141 = por %p139, %p140
      %s142 = ssub.s32 %s82, %s89
      %p143 = scmp.eq.s32.totalorder %s142, 0
      %s145 = sadd.s32 %s144, 1
      %s146 = scalar_select %p143, %s144, %s145
      %p149 = pneg %p143
      %p150 = scmp.eq.s32.totalorder %s82, 1
      %p151 = por %p149, %p150
      %p152 = scmp.ne.s32.totalorder %s144, %s147
      %p153 = scmp.eq.s32.totalorder %s82, 0
      %p154 = por %p152, %p153
      %p155 = scmp.ne.s32.totalorder %s144, %s147
      %p156 = scmp.eq.s32.totalorder %s87, 1
      %p157 = por %p155, %p156
      %p158 = scmp.ne.s32.totalorder %s147, %s148
      %p159 = scmp.eq.s32.totalorder %s87, 0
      %p160 = por %p158, %p159
      %p161 = scmp.ne.s32.totalorder %s147, %s148
      %p162 = scmp.eq.s32.totalorder %s88, 1
      %p163 = por %p161, %p162
      %p165 = scmp.ne.s32.totalorder %s148, %s164
      %p166 = scmp.eq.s32.totalorder %s88, 0
      %p167 = por %p165, %p166
      %s169 = sadd.s32 %s168, 1
      %p172 = scmp.eq.s32.totalorder %s82, 1
      %p173 = scmp.ne.s32.totalorder %s168, %s170
      %p174 = scmp.eq.s32.totalorder %s82, 0
      %p175 = por %p173, %p174
      %p176 = scmp.ne.s32.totalorder %s168, %s170
      %p177 = scmp.eq.s32.totalorder %s87, 1
      %p178 = por %p176, %p177
      %p179 = scmp.ne.s32.totalorder %s170, %s171
      %p180 = scmp.eq.s32.totalorder %s87, 0
      %p181 = por %p179, %p180
      %p182 = scmp.ne.s32.totalorder %s170, %s171
      %p183 = scmp.eq.s32.totalorder %s88, 1
      %p184 = por %p182, %p183
      %p186 = scmp.ne.s32.totalorder %s171, %s185
      %p187 = scmp.eq.s32.totalorder %s88, 0
      %p188 = por %p186, %p187
      %s190 = sadd.s32 %s189, 1
      %p193 = scmp.eq.s32.totalorder %s82, 1
      %p194 = scmp.ne.s32.totalorder %s189, %s191
      %p195 = scmp.eq.s32.totalorder %s82, 0
      %p196 = por %p194, %p195
      %p197 = scmp.ne.s32.totalorder %s189, %s191
      %p198 = scmp.eq.s32.totalorder %s87, 1
      %p199 = por %p197, %p198
      %p200 = scmp.ne.s32.totalorder %s191, %s192
      %p201 = scmp.eq.s32.totalorder %s87, 0
      %p202 = por %p200, %p201
      %p203 = scmp.ne.s32.totalorder %s191, %s192
      %p204 = scmp.eq.s32.totalorder %s88, 1
      %p205 = por %p203, %p204
      %p207 = scmp.ne.s32.totalorder %s192, %s206
      %p208 = scmp.eq.s32.totalorder %s88, 0
      %p209 = por %p207, %p208
      %s211 = sadd.s32 %s210, 1
      %p214 = scmp.eq.s32.totalorder %s82, 1
      %p215 = scmp.ne.s32.totalorder %s210, %s212
      %p216 = scmp.eq.s32.totalorder %s82, 0
      %p217 = por %p215, %p216
      %p218 = scmp.ne.s32.totalorder %s210, %s212
      %p219 = scmp.eq.s32.totalorder %s87, 1
      %p220 = por %p218, %p219
      %p221 = scmp.ne.s32.totalorder %s212, %s213
      %p222 = scmp.eq.s32.totalorder %s87, 0
      %p223 = por %p221, %p222
      %p224 = scmp.ne.s32.totalorder %s212, %s213
      %p225 = scmp.eq.s32.totalorder %s88, 1
      %p226 = por %p224, %p225
      %p228 = scmp.ne.s32.totalorder %s213, %s227
      %p229 = scmp.eq.s32.totalorder %s88, 0
      %p230 = por %p228, %p229
      %s232 = sadd.s32 %s231, 1
      %p235 = scmp.eq.s32.totalorder %s82, 1
      %p236 = scmp.ne.s32.totalorder %s231, %s233
      %p237 = scmp.eq.s32.totalorder %s82, 0
      %p238 = por %p236, %p237
      %p239 = scmp.ne.s32.totalorder %s231, %s233
      %p240 = scmp.eq.s32.totalorder %s87, 1
      %p241 = por %p239, %p240
      %p242 = scmp.ne.s32.totalorder %s233, %s234
      %p243 = scmp.eq.s32.totalorder %s87, 0
      %p244 = por %p242, %p243
      %p245 = scmp.ne.s32.totalorder %s233, %s234
      %p246 = scmp.eq.s32.totalorder %s88, 1
      %p247 = por %p245, %p246
      %p249 = scmp.ne.s32.totalorder %s234, %s248
      %p250 = scmp.eq.s32.totalorder %s88, 0
      %p251 = por %p249, %p250
      %s253 = sadd.s32 %s252, 1
      %p256 = scmp.eq.s32.totalorder %s82, 1
      %p257 = scmp.ne.s32.totalorder %s252, %s254
      %p258 = scmp.eq.s32.totalorder %s82, 0
      %p259 = por %p257, %p258
      %p260 = scmp.ne.s32.totalorder %s252, %s254
      %p261 = scmp.eq.s32.totalorder %s87, 1
      %p262 = por %p260, %p261
      %p263 = scmp.ne.s32.totalorder %s254, %s255
      %p264 = scmp.eq.s32.totalorder %s87, 0
      %p265 = por %p263, %p264
      %p266 = scmp.ne.s32.totalorder %s254, %s255
      %p267 = scmp.eq.s32.totalorder %s88, 1
      %p268 = por %p266, %p267
      %p270 = scmp.ne.s32.totalorder %s255, %s269
      %p271 = scmp.eq.s32.totalorder %s88, 0
      %p272 = por %p270, %p271
      %s274 = sadd.s32 %s273, 1
      %p277 = scmp.eq.s32.totalorder %s82, 1
      %p278 = scmp.ne.s32.totalorder %s273, %s275
      %p279 = scmp.eq.s32.totalorder %s82, 0
      %p280 = por %p278, %p279
      %p281 = scmp.ne.s32.totalorder %s273, %s275
      %p282 = scmp.eq.s32.totalorder %s87, 1
      %p283 = por %p281, %p282
      %p284 = scmp.ne.s32.totalorder %s275, %s276
      %p285 = scmp.eq.s32.totalorder %s87, 0
      %p286 = por %p284, %p285
      %p287 = scmp.ne.s32.totalorder %s275, %s276
      %p288 = scmp.eq.s32.totalorder %s88, 1
      %p289 = por %p287, %p288
      %p291 = scmp.ne.s32.totalorder %s276, %s290
      %p292 = scmp.eq.s32.totalorder %s88, 0
      %p293 = por %p291, %p292
      %s295 = sadd.s32 %s294, 1
      %p298 = scmp.eq.s32.totalorder %s82, 1
      %p299 = scmp.ne.s32.totalorder %s294, %s296
      %p300 = scmp.eq.s32.totalorder %s82, 0
      %p301 = por %p299, %p300
      %p302 = scmp.ne.s32.totalorder %s294, %s296
      %p303 = scmp.eq.s32.totalorder %s87, 1
      %p304 = por %p302, %p303
      %p305 = scmp.ne.s32.totalorder %s296, %s297
      %p306 = scmp.eq.s32.totalorder %s87, 0
      %p307 = por %p305, %p306
      %p308 = scmp.ne.s32.totalorder %s296, %s297
      %p309 = scmp.eq.s32.totalorder %s88, 1
      %p310 = por %p308, %p309
      %p312 = scmp.ne.s32.totalorder %s297, %s311
      %p313 = scmp.eq.s32.totalorder %s88, 0
      %p314 = por %p312, %p313
      %s316 = sadd.s32 %s315, 1
      %p319 = scmp.eq.s32.totalorder %s82, 1
      %p320 = scmp.ne.s32.totalorder %s315, %s317
      %p321 = scmp.eq.s32.totalorder %s82, 0
      %p322 = por %p320, %p321
      %p323 = scmp.ne.s32.totalorder %s315, %s317
      %p324 = scmp.eq.s32.totalorder %s87, 1
      %p325 = por %p323, %p324
      %p326 = scmp.ne.s32.totalorder %s317, %s318
      %p327 = scmp.eq.s32.totalorder %s87, 0
      %p328 = por %p326, %p327
      %p329 = scmp.ne.s32.totalorder %s317, %s318
      %p330 = scmp.eq.s32.totalorder %s88, 1
      %p331 = por %p329, %p330
      %p333 = scmp.ne.s32.totalorder %s318, %s332
      %p334 = scmp.eq.s32.totalorder %s88, 0
      %p335 = por %p333, %p334
      %s337 = sadd.s32 %s336, 1
      %p340 = scmp.eq.s32.totalorder %s82, 1
      %p341 = scmp.ne.s32.totalorder %s336, %s338
      %p342 = scmp.eq.s32.totalorder %s82, 0
      %p343 = por %p341, %p342
      %p344 = scmp.ne.s32.totalorder %s336, %s338
      %p345 = scmp.eq.s32.totalorder %s87, 1
      %p346 = por %p344, %p345
      %p347 = scmp.ne.s32.totalorder %s338, %s339
      %p348 = scmp.eq.s32.totalorder %s87, 0
      %p349 = por %p347, %p348
      %p350 = scmp.ne.s32.totalorder %s338, %s339
      %p351 = scmp.eq.s32.totalorder %s88, 1
      %p352 = por %p350, %p351
      %p354 = scmp.ne.s32.totalorder %s339, %s353
      %p355 = scmp.eq.s32.totalorder %s88, 0
      %p356 = por %p354, %p355
      %s358 = sadd.s32 %s357, 1
      %p361 = scmp.eq.s32.totalorder %s82, 1
      %p362 = scmp.ne.s32.totalorder %s357, %s359
      %p363 = scmp.eq.s32.totalorder %s82, 0
      %p364 = por %p362, %p363
      %p365 = scmp.ne.s32.totalorder %s357, %s359
      %p366 = scmp.eq.s32.totalorder %s87, 1
      %p367 = por %p365, %p366
      %p368 = scmp.ne.s32.totalorder %s359, %s360
      %p369 = scmp.eq.s32.totalorder %s87, 0
      %p370 = por %p368, %p369
      %p371 = scmp.ne.s32.totalorder %s359, %s360
      %p372 = scmp.eq.s32.totalorder %s88, 1
      %p373 = por %p371, %p372
      %p375 = scmp.ne.s32.totalorder %s360, %s374
      %p376 = scmp.eq.s32.totalorder %s88, 0
      %p377 = por %p375, %p376
      %s379 = sadd.s32 %s378, 1
      %p382 = scmp.eq.s32.totalorder %s82, 1
      %p383 = scmp.ne.s32.totalorder %s378, %s380
      %p384 = scmp.eq.s32.totalorder %s82, 0
      %p385 = por %p383, %p384
      %p386 = scmp.ne.s32.totalorder %s378, %s380
      %p387 = scmp.eq.s32.totalorder %s87, 1
      %p388 = por %p386, %p387
      %p389 = scmp.ne.s32.totalorder %s380, %s381
      %p390 = scmp.eq.s32.totalorder %s87, 0
      %p391 = por %p389, %p390
      %p392 = scmp.ne.s32.totalorder %s380, %s381
      %p393 = scmp.eq.s32.totalorder %s88, 1
      %p394 = por %p392, %p393
      %p396 = scmp.ne.s32.totalorder %s381, %s395
      %p397 = scmp.eq.s32.totalorder %s88, 0
      %p398 = por %p396, %p397
      %s400 = sadd.s32 %s399, 1
      %p403 = scmp.eq.s32.totalorder %s82, 1
      %p404 = scmp.ne.s32.totalorder %s399, %s401
      %p405 = scmp.eq.s32.totalorder %s82, 0
      %p406 = por %p404, %p405
      %p407 = scmp.ne.s32.totalorder %s399, %s401
      %p408 = scmp.eq.s32.totalorder %s87, 1
      %p409 = por %p407, %p408
      %p410 = scmp.ne.s32.totalorder %s401, %s402
      %p411 = scmp.eq.s32.totalorder %s87, 0
      %p412 = por %p410, %p411
      %p413 = scmp.ne.s32.totalorder %s401, %s402
      %p414 = scmp.eq.s32.totalorder %s88, 1
      %p415 = por %p413, %p414
      %p417 = scmp.ne.s32.totalorder %s402, %s416
      %p418 = scmp.eq.s32.totalorder %s88, 0
      %p419 = por %p417, %p418
      %s421 = sadd.s32 %s420, 1
      %p424 = scmp.eq.s32.totalorder %s82, 1
      %p425 = scmp.ne.s32.totalorder %s420, %s422
      %p426 = scmp.eq.s32.totalorder %s82, 0
      %p427 = por %p425, %p426
      %p428 = scmp.ne.s32.totalorder %s420, %s422
      %p429 = scmp.eq.s32.totalorder %s87, 1
      %p430 = por %p428, %p429
      %p431 = scmp.ne.s32.totalorder %s422, %s423
      %p432 = scmp.eq.s32.totalorder %s87, 0
      %p433 = por %p431, %p432
      %p434 = scmp.ne.s32.totalorder %s422, %s423
      %p435 = scmp.eq.s32.totalorder %s88, 1
      %p436 = por %p434, %p435
      %p438 = scmp.ne.s32.totalorder %s423, %s437
      %p439 = scmp.eq.s32.totalorder %s88, 0
      %p440 = por %p438, %p439
      %s442 = sadd.s32 %s441, 1
      %p445 = scmp.eq.s32.totalorder %s82, 1
      %p446 = scmp.ne.s32.totalorder %s441, %s443
      %p447 = scmp.eq.s32.totalorder %s82, 0
      %p448 = por %p446, %p447
      %p449 = scmp.ne.s32.totalorder %s441, %s443
      %p450 = scmp.eq.s32.totalorder %s87, 1
      %p451 = por %p449, %p450
      %p452 = scmp.ne.s32.totalorder %s443, %s444
      %p453 = scmp.eq.s32.totalorder %s87, 0
      %p454 = por %p452, %p453
      %p455 = scmp.ne.s32.totalorder %s443, %s444
      %p456 = scmp.eq.s32.totalorder %s88, 1
      %p457 = por %p455, %p456
      %p459 = scmp.ne.s32.totalorder %s444, %s458
      %p460 = scmp.eq.s32.totalorder %s88, 0
      %p461 = por %p459, %p460
      %s463 = sadd.s32 %s462, 1
      %p466 = scmp.eq.s32.totalorder %s82, 1
      %p467 = scmp.ne.s32.totalorder %s462, %s464
      %p468 = scmp.eq.s32.totalorder %s82, 0
      %p469 = por %p467, %p468
      %p470 = scmp.ne.s32.totalorder %s462, %s464
      %p471 = scmp.eq.s32.totalorder %s87, 1
      %p472 = por %p470, %p471
      %p473 = scmp.ne.s32.totalorder %s464, %s465
      %p474 = scmp.eq.s32.totalorder %s87, 0
      %p475 = por %p473, %p474
      %p476 = scmp.ne.s32.totalorder %s464, %s465
      %p477 = scmp.eq.s32.totalorder %s88, 1
      %p478 = por %p476, %p477
      %p480 = scmp.ne.s32.totalorder %s465, %s479
      %p481 = scmp.eq.s32.totalorder %s88, 0
      %p482 = por %p480, %p481
      %s484 = sadd.s32 %s483, 1
      %p487 = scmp.eq.s32.totalorder %s82, 1
      %p488 = scmp.ne.s32.totalorder %s483, %s485
      %p489 = scmp.eq.s32.totalorder %s82, 0
      %p490 = por %p488, %p489
      %p491 = scmp.ne.s32.totalorder %s483, %s485
      %p492 = scmp.eq.s32.totalorder %s87, 1
      %p493 = por %p491, %p492
      %p494 = scmp.ne.s32.totalorder %s485, %s486
      %p495 = scmp.eq.s32.totalorder %s87, 0
      %p496 = por %p494, %p495
      %p497 = scmp.ne.s32.totalorder %s485, %s486
      %p498 = scmp.eq.s32.totalorder %s88, 1
      %p499 = por %p497, %p498
      %p501 = scmp.ne.s32.totalorder %s486, %s500
      %p502 = scmp.eq.s32.totalorder %s88, 0
      %p503 = por %p501, %p502
      %s505 = sadd.s32 %s504, 1
      %p508 = scmp.eq.s32.totalorder %s82, 1
      %p509 = scmp.ne.s32.totalorder %s504, %s506
      %p510 = scmp.eq.s32.totalorder %s82, 0
      %p511 = por %p509, %p510
      %p512 = scmp.ne.s32.totalorder %s504, %s506
      %p513 = scmp.eq.s32.totalorder %s87, 1
      %p514 = por %p512, %p513
      %p515 = scmp.ne.s32.totalorder %s506, %s507
      %p516 = scmp.eq.s32.totalorder %s87, 0
      %p517 = por %p515, %p516
      %p518 = scmp.ne.s32.totalorder %s506, %s507
      %p519 = scmp.eq.s32.totalorder %s88, 1
      %p520 = por %p518, %p519
      %p522 = scmp.ne.s32.totalorder %s507, %s521
      %p523 = scmp.eq.s32.totalorder %s88, 0
      %p524 = por %p522, %p523
      %s526 = sadd.s32 %s525, 1
      %p529 = scmp.eq.s32.totalorder %s82, 1
      %p530 = scmp.ne.s32.totalorder %s525, %s527
      %p531 = scmp.eq.s32.totalorder %s82, 0
      %p532 = por %p530, %p531
      %p533 = scmp.ne.s32.totalorder %s525, %s527
      %p534 = scmp.eq.s32.totalorder %s87, 1
      %p535 = por %p533, %p534
      %p536 = scmp.ne.s32.totalorder %s527, %s528
      %p537 = scmp.eq.s32.totalorder %s87, 0
      %p538 = por %p536, %p537
      %p539 = scmp.ne.s32.totalorder %s527, %s528
      %p540 = scmp.eq.s32.totalorder %s88, 1
      %p541 = por %p539, %p540
      %p543 = scmp.ne.s32.totalorder %s528, %s542
      %p544 = scmp.eq.s32.totalorder %s88, 0
      %p545 = por %p543, %p544
      %s547 = sadd.s32 %s546, 1
      %p550 = scmp.eq.s32.totalorder %s82, 1
      %p551 = scmp.ne.s32.totalorder %s546, %s548
      %p552 = scmp.eq.s32.totalorder %s82, 0
      %p553 = por %p551, %p552
      %p554 = scmp.ne.s32.totalorder %s546, %s548
      %p555 = scmp.eq.s32.totalorder %s87, 1
      %p556 = por %p554, %p555
      %p557 = scmp.ne.s32.totalorder %s548, %s549
      %p558 = scmp.eq.s32.totalorder %s87, 0
      %p559 = por %p557, %p558
      %p560 = scmp.ne.s32.totalorder %s548, %s549
      %p561 = scmp.eq.s32.totalorder %s88, 1
      %p562 = por %p560, %p561
      %p564 = scmp.ne.s32.totalorder %s549, %s563
      %p565 = scmp.eq.s32.totalorder %s88, 0
      %p566 = por %p564, %p565
      %s568 = sadd.s32 %s567, 1
      %p571 = scmp.eq.s32.totalorder %s82, 1
      %p572 = scmp.ne.s32.totalorder %s567, %s569
      %p573 = scmp.eq.s32.totalorder %s82, 0
      %p574 = por %p572, %p573
      %p575 = scmp.ne.s32.totalorder %s567, %s569
      %p576 = scmp.eq.s32.totalorder %s87, 1
      %p577 = por %p575, %p576
      %p578 = scmp.ne.s32.totalorder %s569, %s570
      %p579 = scmp.eq.s32.totalorder %s87, 0
      %p580 = por %p578, %p579
      %p581 = scmp.ne.s32.totalorder %s569, %s570
      %p582 = scmp.eq.s32.totalorder %s88, 1
      %p583 = por %p581, %p582
      %p585 = scmp.ne.s32.totalorder %s570, %s584
      %p586 = scmp.eq.s32.totalorder %s88, 0
      %p587 = por %p585, %p586
      %s589 = sadd.s32 %s588, 1
      %p592 = scmp.eq.s32.totalorder %s82, 1
      %p593 = scmp.ne.s32.totalorder %s588, %s590
      %p594 = scmp.eq.s32.totalorder %s82, 0
      %p595 = por %p593, %p594
      %p596 = scmp.ne.s32.totalorder %s588, %s590
      %p597 = scmp.eq.s32.totalorder %s87, 1
      %p598 = por %p596, %p597
      %p599 = scmp.ne.s32.totalorder %s590, %s591
      %p600 = scmp.eq.s32.totalorder %s87, 0
      %p601 = por %p599, %p600
      %p602 = scmp.ne.s32.totalorder %s590, %s591
      %p603 = scmp.eq.s32.totalorder %s88, 1
      %p604 = por %p602, %p603
      %p606 = scmp.ne.s32.totalorder %s591, %s605
      %p607 = scmp.eq.s32.totalorder %s88, 0
      %p608 = por %p606, %p607
      %s610 = sadd.s32 %s609, 1
      %p613 = scmp.eq.s32.totalorder %s82, 1
      %p614 = scmp.ne.s32.totalorder %s609, %s611
      %p615 = scmp.eq.s32.totalorder %s82, 0
      %p616 = por %p614, %p615
      %p617 = scmp.ne.s32.totalorder %s609, %s611
      %p618 = scmp.eq.s32.totalorder %s87, 1
      %p619 = por %p617, %p618
      %p620 = scmp.ne.s32.totalorder %s611, %s612
      %p621 = scmp.eq.s32.totalorder %s87, 0
      %p622 = por %p620, %p621
      %p623 = scmp.ne.s32.totalorder %s611, %s612
      %p624 = scmp.eq.s32.totalorder %s88, 1
      %p625 = por %p623, %p624
      %p627 = scmp.ne.s32.totalorder %s612, %s626
      %p628 = scmp.eq.s32.totalorder %s88, 0
      %p629 = por %p627, %p628
      %s631 = sadd.s32 %s630, 1
      %p634 = scmp.eq.s32.totalorder %s82, 1
      %p635 = scmp.ne.s32.totalorder %s630, %s632
      %p636 = scmp.eq.s32.totalorder %s82, 0
      %p637 = por %p635, %p636
      %p638 = scmp.ne.s32.totalorder %s630, %s632
      %p639 = scmp.eq.s32.totalorder %s87, 1
      %p640 = por %p638, %p639
      %p641 = scmp.ne.s32.totalorder %s632, %s633
      %p642 = scmp.eq.s32.totalorder %s87, 0
      %p643 = por %p641, %p642
      %p644 = scmp.ne.s32.totalorder %s632, %s633
      %p645 = scmp.eq.s32.totalorder %s88, 1
      %p646 = por %p644, %p645
      %p648 = scmp.ne.s32.totalorder %s633, %s647
      %p649 = scmp.eq.s32.totalorder %s88, 0
      %p650 = por %p648, %p649
      %s652 = sadd.s32 %s651, 1
      %p655 = scmp.eq.s32.totalorder %s82, 1
      %p656 = scmp.ne.s32.totalorder %s651, %s653
      %p657 = scmp.eq.s32.totalorder %s82, 0
      %p658 = por %p656, %p657
      %p659 = scmp.ne.s32.totalorder %s651, %s653
      %p660 = scmp.eq.s32.totalorder %s87, 1
      %p661 = por %p659, %p660
      %p662 = scmp.ne.s32.totalorder %s653, %s654
      %p663 = scmp.eq.s32.totalorder %s87, 0
      %p664 = por %p662, %p663
      %p665 = scmp.ne.s32.totalorder %s653, %s654
      %p666 = scmp.eq.s32.totalorder %s88, 1
      %p667 = por %p665, %p666
      %p669 = scmp.ne.s32.totalorder %s654, %s668
      %p670 = scmp.eq.s32.totalorder %s88, 0
      %p671 = por %p669, %p670
      %s673 = sadd.s32 %s672, 1
      %p676 = scmp.eq.s32.totalorder %s82, 1
      %p677 = scmp.ne.s32.totalorder %s672, %s674
      %p678 = scmp.eq.s32.totalorder %s82, 0
      %p679 = por %p677, %p678
      %p680 = scmp.ne.s32.totalorder %s672, %s674
      %p681 = scmp.eq.s32.totalorder %s87, 1
      %p682 = por %p680, %p681
      %p683 = scmp.ne.s32.totalorder %s674, %s675
      %p684 = scmp.eq.s32.totalorder %s87, 0
      %p685 = por %p683, %p684
      %p686 = scmp.ne.s32.totalorder %s674, %s675
      %p687 = scmp.eq.s32.totalorder %s88, 1
      %p688 = por %p686, %p687
      %p690 = scmp.ne.s32.totalorder %s675, %s689
      %p691 = scmp.eq.s32.totalorder %s88, 0
      %p692 = por %p690, %p691
      %s694 = sadd.s32 %s693, 1
      %p697 = scmp.eq.s32.totalorder %s82, 1
      %p698 = scmp.ne.s32.totalorder %s693, %s695
      %p699 = scmp.eq.s32.totalorder %s82, 0
      %p700 = por %p698, %p699
      %p701 = scmp.ne.s32.totalorder %s693, %s695
      %p702 = scmp.eq.s32.totalorder %s87, 1
      %p703 = por %p701, %p702
      %p704 = scmp.ne.s32.totalorder %s695, %s696
      %p705 = scmp.eq.s32.totalorder %s87, 0
      %p706 = por %p704, %p705
      %p707 = scmp.ne.s32.totalorder %s695, %s696
      %p708 = scmp.eq.s32.totalorder %s88, 1
      %p709 = por %p707, %p708
      %p711 = scmp.ne.s32.totalorder %s696, %s710
      %p712 = scmp.eq.s32.totalorder %s88, 0
      %p713 = por %p711, %p712
      %s715 = sadd.s32 %s714, 1
      %p718 = scmp.eq.s32.totalorder %s82, 1
      %p719 = scmp.ne.s32.totalorder %s714, %s716
      %p720 = scmp.eq.s32.totalorder %s82, 0
      %p721 = por %p719, %p720
      %p722 = scmp.ne.s32.totalorder %s714, %s716
      %p723 = scmp.eq.s32.totalorder %s87, 1
      %p724 = por %p722, %p723
      %p725 = scmp.ne.s32.totalorder %s716, %s717
      %p726 = scmp.eq.s32.totalorder %s87, 0
      %p727 = por %p725, %p726
      %p728 = scmp.ne.s32.totalorder %s716, %s717
      %p729 = scmp.eq.s32.totalorder %s88, 1
      %p730 = por %p728, %p729
      %p732 = scmp.ne.s32.totalorder %s717, %s731
      %p733 = scmp.eq.s32.totalorder %s88, 0
      %p734 = por %p732, %p733
      %s736 = sadd.s32 %s735, 1
      %p739 = scmp.eq.s32.totalorder %s82, 1
      %p740 = scmp.ne.s32.totalorder %s735, %s737
      %p741 = scmp.eq.s32.totalorder %s82, 0
      %p742 = por %p740, %p741
      %p743 = scmp.ne.s32.totalorder %s735, %s737
      %p744 = scmp.eq.s32.totalorder %s87, 1
      %p745 = por %p743, %p744
      %p746 = scmp.ne.s32.totalorder %s737, %s738
      %p747 = scmp.eq.s32.totalorder %s87, 0
      %p748 = por %p746, %p747
      %p749 = scmp.ne.s32.totalorder %s737, %s738
      %p750 = scmp.eq.s32.totalorder %s88, 1
      %p751 = por %p749, %p750
      %p753 = scmp.ne.s32.totalorder %s738, %s752
      %p754 = scmp.eq.s32.totalorder %s88, 0
      %p755 = por %p753, %p754
      %s757 = sadd.s32 %s756, 1
      %p760 = scmp.eq.s32.totalorder %s82, 1
      %p761 = scmp.ne.s32.totalorder %s756, %s758
      %p762 = scmp.eq.s32.totalorder %s82, 0
      %p763 = por %p761, %p762
      %p764 = scmp.ne.s32.totalorder %s756, %s758
      %p765 = scmp.eq.s32.totalorder %s87, 1
      %p766 = por %p764, %p765
      %p767 = scmp.ne.s32.totalorder %s758, %s759
      %p768 = scmp.eq.s32.totalorder %s87, 0
      %p769 = por %p767, %p768
      %p770 = scmp.ne.s32.totalorder %s758, %s759
      %p771 = scmp.eq.s32.totalorder %s88, 1
      %p772 = por %p770, %p771
      %p774 = scmp.ne.s32.totalorder %s759, %s773
      %p775 = scmp.eq.s32.totalorder %s88, 0
      %p776 = por %p774, %p775
      %s778 = sadd.s32 %s777, 1
      %p781 = scmp.eq.s32.totalorder %s82, 1
      %p782 = scmp.ne.s32.totalorder %s777, %s779
      %p783 = scmp.eq.s32.totalorder %s82, 0
      %p784 = por %p782, %p783
      %p785 = scmp.ne.s32.totalorder %s777, %s779
      %p786 = scmp.eq.s32.totalorder %s87, 1
      %p787 = por %p785, %p786
      %p788 = scmp.ne.s32.totalorder %s779, %s780
      %p789 = scmp.eq.s32.totalorder %s87, 0
      %p790 = por %p788, %p789
      %p791 = scmp.ne.s32.totalorder %s779, %s780
      %p792 = scmp.eq.s32.totalorder %s88, 1
      %p793 = por %p791, %p792
      %p795 = scmp.ne.s32.totalorder %s780, %s794
      %p796 = scmp.eq.s32.totalorder %s88, 0
      %p797 = por %p795, %p796
      %s799 = sadd.s32 %s798, 1
      %p802 = scmp.eq.s32.totalorder %s82, 1
      %p803 = scmp.ne.s32.totalorder %s798, %s800
      %p804 = scmp.eq.s32.totalorder %s82, 0
      %p805 = por %p803, %p804
      %p806 = scmp.ne.s32.totalorder %s798, %s800
      %p807 = scmp.eq.s32.totalorder %s87, 1
      %p808 = por %p806, %p807
      %p809 = scmp.ne.s32.totalorder %s800, %s801
      %p810 = scmp.eq.s32.totalorder %s87, 0
      %p811 = por %p809, %p810
      %p812 = scmp.ne.s32.totalorder %s800, %s801
      %p813 = scmp.eq.s32.totalorder %s88, 1
      %p814 = por %p812, %p813
      %p816 = scmp.ne.s32.totalorder %s801, %s815
      %p817 = scmp.eq.s32.totalorder %s88, 0
      %p818 = por %p816, %p817
      %s820 = sadd.s32 %s819, 1
      %p823 = scmp.eq.s32.totalorder %s82, 1
      %p824 = scmp.ne.s32.totalorder %s819, %s821
      %p825 = scmp.eq.s32.totalorder %s82, 0
      %p826 = por %p824, %p825
      %p827 = scmp.ne.s32.totalorder %s819, %s821
      %p828 = scmp.eq.s32.totalorder %s87, 1
      %p829 = por %p827, %p828
      %p830 = scmp.ne.s32.totalorder %s821, %s822
      %p831 = scmp.eq.s32.totalorder %s87, 0
      %p832 = por %p830, %p831
      %p833 = scmp.ne.s32.totalorder %s821, %s822
      %p834 = scmp.eq.s32.totalorder %s88, 1
      %p835 = por %p833, %p834
      %p837 = scmp.ne.s32.totalorder %s822, %s836
      %p838 = scmp.eq.s32.totalorder %s88, 0
      %p839 = por %p837, %p838
      %s841 = sadd.s32 %s840, 1
      %p844 = scmp.eq.s32.totalorder %s82, 1
      %p845 = scmp.ne.s32.totalorder %s840, %s842
      %p846 = scmp.eq.s32.totalorder %s82, 0
      %p847 = por %p845, %p846
      %p848 = scmp.ne.s32.totalorder %s840, %s842
      %p849 = scmp.eq.s32.totalorder %s87, 1
      %p850 = por %p848, %p849
      %p851 = scmp.ne.s32.totalorder %s842, %s843
      %p852 = scmp.eq.s32.totalorder %s87, 0
      %p853 = por %p851, %p852
      %p854 = scmp.ne.s32.totalorder %s842, %s843
      %p855 = scmp.eq.s32.totalorder %s88, 1
      %p856 = por %p854, %p855
      %p858 = scmp.ne.s32.totalorder %s843, %s857
      %p859 = scmp.eq.s32.totalorder %s88, 0
      %p860 = por %p858, %p859
      %s861 = ssub.s32 %s82, %s89
      %p862 = scmp.eq.s32.totalorder %s861, 0
      %s864 = sadd.s32 %s863, 1
      %s865 = scalar_select %p862, %s863, %s864
      %p868 = pneg %p862
      %p869 = scmp.eq.s32.totalorder %s82, 1
      %p870 = por %p868, %p869
      %p871 = scmp.ne.s32.totalorder %s863, %s866
      %p872 = scmp.eq.s32.totalorder %s82, 0
      %p873 = por %p871, %p872
      %p874 = scmp.ne.s32.totalorder %s863, %s866
      %p875 = scmp.eq.s32.totalorder %s87, 1
      %p876 = por %p874, %p875
      %p877 = scmp.ne.s32.totalorder %s866, %s867
      %p878 = scmp.eq.s32.totalorder %s87, 0
      %p879 = por %p877, %p878
      %p880 = scmp.ne.s32.totalorder %s866, %s867
      %p881 = scmp.eq.s32.totalorder %s88, 1
      %p882 = por %p880, %p881
      %p884 = scmp.ne.s32.totalorder %s867, %s883
      %p885 = scmp.eq.s32.totalorder %s88, 0
      %p886 = por %p884, %p885
      %p887 = scmp.le.s32.totalorder 1, %s82
      %p888 = scmp.lt.s32.totalorder %s82, 3
      %p889 = pnand %p887, %p888
      %p890 = pneg %p889
      // Predicated region
      $region9: #{bgd_forward.1} parent=5 // pred_check
        _
      $region10: #{bgd_forward.1} parent=5 // pred_check_branch
        %892 = sbr.rel (%p889) target = $region12
      $region11: #{bgd_forward.1} parent=5 // pred_region
        %s893 = ssub.s32 %s82, 1
        // Predicated region
        $region13: #{bgd_forward.1} parent=11 // pred_check
          %p894 = pneg %p181
        $region14: #{bgd_forward.1} parent=11 // pred_check_branch
          %896 = sbr.rel (%p894) target = $region16
        $region15: #{bgd_forward.1} parent=11 // pred_region
          _
        $region16: #{bgd_forward.1} parent=11 // pred_fallthru
          _
        // Predicated region
        $region17: #{bgd_forward.1} parent=11 // pred_check
          %p897 = pneg %p202
        $region18: #{bgd_forward.1} parent=11 // pred_check_branch
          %899 = sbr.rel (%p897) target = $region20
        $region19: #{bgd_forward.1} parent=11 // pred_region
          _
        $region20: #{bgd_forward.1} parent=11 // pred_fallthru
          _
        // Predicated region
        $region21: #{bgd_forward.1} parent=11 // pred_check
          %p900 = pneg %p223
        $region22: #{bgd_forward.1} parent=11 // pred_check_branch
          %902 = sbr.rel (%p900) target = $region24
        $region23: #{bgd_forward.1} parent=11 // pred_region
          _
        $region24: #{bgd_forward.1} parent=11 // pred_fallthru
          _
        // Predicated region
        $region25: #{bgd_forward.1} parent=11 // pred_check
          %p903 = pneg %p244
        $region26: #{bgd_forward.1} parent=11 // pred_check_branch
          %905 = sbr.rel (%p903) target = $region28
        $region27: #{bgd_forward.1} parent=11 // pred_region
          %907 = vsyncadd [#allocation4], 0
          %s909 = sshll.u32 %s13, 4
          %s910 = int_to_ptr.vmem [resolvable:$true] %s909
          %912 = dma.vmem_to_smem %s910, 16, [#allocation3], [#allocation4]
        $region28: #{bgd_forward.1} parent=11 // pred_fallthru
          _
        // Predicated region
        $region29: #{bgd_forward.1} parent=11 // pred_check
          %p913 = pneg %p265
        $region30: #{bgd_forward.1} parent=11 // pred_check_branch
          %915 = sbr.rel (%p913) target = $region32
        $region31: #{bgd_forward.1} parent=11 // pred_region
          _
        $region32: #{bgd_forward.1} parent=11 // pred_fallthru
          _
        // Predicated region
        $region33: #{bgd_forward.1} parent=11 // pred_check
          %p916 = pneg %p286
        $region34: #{bgd_forward.1} parent=11 // pred_check_branch
          %918 = sbr.rel (%p916) target = $region36
        $region35: #{bgd_forward.1} parent=11 // pred_region
          _
        $region36: #{bgd_forward.1} parent=11 // pred_fallthru
          _
        // Predicated region
        $region37: #{bgd_forward.1} parent=11 // pred_check
          %p919 = pneg %p307
        $region38: #{bgd_forward.1} parent=11 // pred_check_branch
          %921 = sbr.rel (%p919) target = $region40
        $region39: #{bgd_forward.1} parent=11 // pred_region
          _
        $region40: #{bgd_forward.1} parent=11 // pred_fallthru
          _
        // Predicated region
        $region41: #{bgd_forward.1} parent=11 // pred_check
          %p922 = pneg %p328
        $region42: #{bgd_forward.1} parent=11 // pred_check_branch
          %924 = sbr.rel (%p922) target = $region44
        $region43: #{bgd_forward.1} parent=11 // pred_region
          _
        $region44: #{bgd_forward.1} parent=11 // pred_fallthru
          _
        // Predicated region
        $region45: #{bgd_forward.1} parent=11 // pred_check
          %p925 = pneg %p349
        $region46: #{bgd_forward.1} parent=11 // pred_check_branch
          %927 = sbr.rel (%p925) target = $region48
        $region47: #{bgd_forward.1} parent=11 // pred_region
          _
        $region48: #{bgd_forward.1} parent=11 // pred_fallthru
          _
        // Predicated region
        $region49: #{bgd_forward.1} parent=11 // pred_check
          %p928 = pneg %p370
        $region50: #{bgd_forward.1} parent=11 // pred_check_branch
          %930 = sbr.rel (%p928) target = $region52
        $region51: #{bgd_forward.1} parent=11 // pred_region
          _
        $region52: #{bgd_forward.1} parent=11 // pred_fallthru
          _
        // Predicated region
        $region53: #{bgd_forward.1} parent=11 // pred_check
          %p931 = pneg %p391
        $region54: #{bgd_forward.1} parent=11 // pred_check_branch
          %933 = sbr.rel (%p931) target = $region56
        $region55: #{bgd_forward.1} parent=11 // pred_region
          _
        $region56: #{bgd_forward.1} parent=11 // pred_fallthru
          _
        // Predicated region
        $region57: #{bgd_forward.1} parent=11 // pred_check
          %p934 = pneg %p412
        $region58: #{bgd_forward.1} parent=11 // pred_check_branch
          %936 = sbr.rel (%p934) target = $region60
        $region59: #{bgd_forward.1} parent=11 // pred_region
          _
        $region60: #{bgd_forward.1} parent=11 // pred_fallthru
          _
        // Predicated region
        $region61: #{bgd_forward.1} parent=11 // pred_check
          %p937 = pneg %p433
        $region62: #{bgd_forward.1} parent=11 // pred_check_branch
          %939 = sbr.rel (%p937) target = $region64
        $region63: #{bgd_forward.1} parent=11 // pred_region
          _
        $region64: #{bgd_forward.1} parent=11 // pred_fallthru
          _
        // Predicated region
        $region65: #{bgd_forward.1} parent=11 // pred_check
          %p940 = pneg %p454
        $region66: #{bgd_forward.1} parent=11 // pred_check_branch
          %942 = sbr.rel (%p940) target = $region68
        $region67: #{bgd_forward.1} parent=11 // pred_region
          _
        $region68: #{bgd_forward.1} parent=11 // pred_fallthru
          _
        // Predicated region
        $region69: #{bgd_forward.1} parent=11 // pred_check
          %p943 = pneg %p475
        $region70: #{bgd_forward.1} parent=11 // pred_check_branch
          %945 = sbr.rel (%p943) target = $region72
        $region71: #{bgd_forward.1} parent=11 // pred_region
          _
        $region72: #{bgd_forward.1} parent=11 // pred_fallthru
          _
        // Predicated region
        $region73: #{bgd_forward.1} parent=11 // pred_check
          %p946 = pneg %p496
        $region74: #{bgd_forward.1} parent=11 // pred_check_branch
          %948 = sbr.rel (%p946) target = $region76
        $region75: #{bgd_forward.1} parent=11 // pred_region
          _
        $region76: #{bgd_forward.1} parent=11 // pred_fallthru
          _
        // Predicated region
        $region77: #{bgd_forward.1} parent=11 // pred_check
          %p949 = pneg %p517
        $region78: #{bgd_forward.1} parent=11 // pred_check_branch
          %951 = sbr.rel (%p949) target = $region80
        $region79: #{bgd_forward.1} parent=11 // pred_region
          _
        $region80: #{bgd_forward.1} parent=11 // pred_fallthru
          _
        // Predicated region
        $region81: #{bgd_forward.1} parent=11 // pred_check
          %p952 = pneg %p538
        $region82: #{bgd_forward.1} parent=11 // pred_check_branch
          %954 = sbr.rel (%p952) target = $region84
        $region83: #{bgd_forward.1} parent=11 // pred_region
          _
        $region84: #{bgd_forward.1} parent=11 // pred_fallthru
          _
        // Predicated region
        $region85: #{bgd_forward.1} parent=11 // pred_check
          %p955 = pneg %p559
        $region86: #{bgd_forward.1} parent=11 // pred_check_branch
          %957 = sbr.rel (%p955) target = $region88
        $region87: #{bgd_forward.1} parent=11 // pred_region
          _
        $region88: #{bgd_forward.1} parent=11 // pred_fallthru
          _
        // Predicated region
        $region89: #{bgd_forward.1} parent=11 // pred_check
          %p958 = pneg %p580
        $region90: #{bgd_forward.1} parent=11 // pred_check_branch
          %960 = sbr.rel (%p958) target = $region92
        $region91: #{bgd_forward.1} parent=11 // pred_region
          _
        $region92: #{bgd_forward.1} parent=11 // pred_fallthru
          _
        // Predicated region
        $region93: #{bgd_forward.1} parent=11 // pred_check
          %p961 = pneg %p601
        $region94: #{bgd_forward.1} parent=11 // pred_check_branch
          %963 = sbr.rel (%p961) target = $region96
        $region95: #{bgd_forward.1} parent=11 // pred_region
          _
        $region96: #{bgd_forward.1} parent=11 // pred_fallthru
          _
        // Predicated region
        $region97: #{bgd_forward.1} parent=11 // pred_check
          %p964 = pneg %p622
        $region98: #{bgd_forward.1} parent=11 // pred_check_branch
          %966 = sbr.rel (%p964) target = $region100
        $region99: #{bgd_forward.1} parent=11 // pred_region
          _
        $region100: #{bgd_forward.1} parent=11 // pred_fallthru
          _
        // Predicated region
        $region101: #{bgd_forward.1} parent=11 // pred_check
          %p967 = pneg %p643
        $region102: #{bgd_forward.1} parent=11 // pred_check_branch
          %969 = sbr.rel (%p967) target = $region104
        $region103: #{bgd_forward.1} parent=11 // pred_region
          _
        $region104: #{bgd_forward.1} parent=11 // pred_fallthru
          _
        // Predicated region
        $region105: #{bgd_forward.1} parent=11 // pred_check
          %p970 = pneg %p664
        $region106: #{bgd_forward.1} parent=11 // pred_check_branch
          %972 = sbr.rel (%p970) target = $region108
        $region107: #{bgd_forward.1} parent=11 // pred_region
          _
        $region108: #{bgd_forward.1} parent=11 // pred_fallthru
          _
        // Predicated region
        $region109: #{bgd_forward.1} parent=11 // pred_check
          %p973 = pneg %p685
        $region110: #{bgd_forward.1} parent=11 // pred_check_branch
          %975 = sbr.rel (%p973) target = $region112
        $region111: #{bgd_forward.1} parent=11 // pred_region
          _
        $region112: #{bgd_forward.1} parent=11 // pred_fallthru
          _
        // Predicated region
        $region113: #{bgd_forward.1} parent=11 // pred_check
          %p976 = pneg %p706
        $region114: #{bgd_forward.1} parent=11 // pred_check_branch
          %978 = sbr.rel (%p976) target = $region116
        $region115: #{bgd_forward.1} parent=11 // pred_region
          _
        $region116: #{bgd_forward.1} parent=11 // pred_fallthru
          _
        // Predicated region
        $region117: #{bgd_forward.1} parent=11 // pred_check
          %p979 = pneg %p727
        $region118: #{bgd_forward.1} parent=11 // pred_check_branch
          %981 = sbr.rel (%p979) target = $region120
        $region119: #{bgd_forward.1} parent=11 // pred_region
          _
        $region120: #{bgd_forward.1} parent=11 // pred_fallthru
          _
        // Predicated region
        $region121: #{bgd_forward.1} parent=11 // pred_check
          %p982 = pneg %p748
        $region122: #{bgd_forward.1} parent=11 // pred_check_branch
          %984 = sbr.rel (%p982) target = $region124
        $region123: #{bgd_forward.1} parent=11 // pred_region
          _
        $region124: #{bgd_forward.1} parent=11 // pred_fallthru
          _
        // Predicated region
        $region125: #{bgd_forward.1} parent=11 // pred_check
          %p985 = pneg %p769
        $region126: #{bgd_forward.1} parent=11 // pred_check_branch
          %987 = sbr.rel (%p985) target = $region128
        $region127: #{bgd_forward.1} parent=11 // pred_region
          _
        $region128: #{bgd_forward.1} parent=11 // pred_fallthru
          _
        // Predicated region
        $region129: #{bgd_forward.1} parent=11 // pred_check
          %p988 = pneg %p790
        $region130: #{bgd_forward.1} parent=11 // pred_check_branch
          %990 = sbr.rel (%p988) target = $region132
        $region131: #{bgd_forward.1} parent=11 // pred_region
          _
        $region132: #{bgd_forward.1} parent=11 // pred_fallthru
          _
        // Predicated region
        $region133: #{bgd_forward.1} parent=11 // pred_check
          %p991 = pneg %p811
        $region134: #{bgd_forward.1} parent=11 // pred_check_branch
          %993 = sbr.rel (%p991) target = $region136
        $region135: #{bgd_forward.1} parent=11 // pred_region
          _
        $region136: #{bgd_forward.1} parent=11 // pred_fallthru
          _
        // Predicated region
        $region137: #{bgd_forward.1} parent=11 // pred_check
          %p994 = pneg %p832
        $region138: #{bgd_forward.1} parent=11 // pred_check_branch
          %996 = sbr.rel (%p994) target = $region140
        $region139: #{bgd_forward.1} parent=11 // pred_region
          _
        $region140: #{bgd_forward.1} parent=11 // pred_fallthru
          _
        // Predicated region
        $region141: #{bgd_forward.1} parent=11 // pred_check
          %p997 = pneg %p853
        $region142: #{bgd_forward.1} parent=11 // pred_check_branch
          %999 = sbr.rel (%p997) target = $region144
        $region143: #{bgd_forward.1} parent=11 // pred_region
          _
        $region144: #{bgd_forward.1} parent=11 // pred_fallthru
          _
      $region12: #{bgd_forward.1} parent=5 // pred_fallthru
        _
      %p1000 = scmp.lt.s32.totalorder %s82, 2
      // Predicated region
      $region145: #{bgd_forward.1} parent=5 // pred_check
        %p1001 = pneg %p1000
      $region146: #{bgd_forward.1} parent=5 // pred_check_branch
        %1003 = sbr.rel (%p1001) target = $region148
      $region147: #{bgd_forward.1} parent=5 // pred_region
        // Predicated region
        $region149: #{bgd_forward.1} parent=147 // pred_check
          %p1004 = pneg %p102
        $region150: #{bgd_forward.1} parent=147 // pred_check_branch
          %1006 = sbr.rel (%p1004) target = $region152
        $region151: #{bgd_forward.1} parent=147 // pred_region
          %p1007 = scmp.lt.s32.totalorder %s82, 1
          %s1008 = scalar_select %p1007, %s82, 1
          %s1009 = smul.addr %s1008, 8
          %s1010 = scalar_lea.vmem %s1, %s1009
        $region152: #{bgd_forward.1} parent=147 // pred_fallthru
          _
        // Predicated region
        $region153: #{bgd_forward.1} parent=147 // pred_check
          %p1011 = pneg %p128
        $region154: #{bgd_forward.1} parent=147 // pred_check_branch
          %1013 = sbr.rel (%p1011) target = $region156
        $region155: #{bgd_forward.1} parent=147 // pred_region
          %p1014 = scmp.lt.s32.totalorder %s82, 1
          %s1015 = scalar_select %p1014, %s82, 1
          %s1016 = smul.addr %s1015, 8
          %s1017 = scalar_lea.vmem %s3, %s1016
        $region156: #{bgd_forward.1} parent=147 // pred_fallthru
          _
        // Predicated region
        $region157: #{bgd_forward.1} parent=147 // pred_check
          %p1018 = pneg %p154
        $region158: #{bgd_forward.1} parent=147 // pred_check_branch
          %1020 = sbr.rel (%p1018) target = $region160
        $region159: #{bgd_forward.1} parent=147 // pred_region
          %p1021 = scmp.lt.s32.totalorder %s82, 1
          %s1022 = scalar_select %p1021, %s82, 1
          %s1023 = smul.addr %s1022, 8
          %s1024 = scalar_lea.vmem %s5, %s1023
        $region160: #{bgd_forward.1} parent=147 // pred_fallthru
          _
      $region148: #{bgd_forward.1} parent=5 // pred_fallthru
        _
      %p1025 = scmp.le.s32.totalorder 1, %s82
      %p1026 = scmp.lt.s32.totalorder %s82, 3
      %p1027 = pnand %p1025, %p1026
      %p1028 = pneg %p1027
      // Predicated region
      $region161: #{bgd_forward.1} parent=5 // pred_check
        _
      $region162: #{bgd_forward.1} parent=5 // pred_check_branch
        %1030 = sbr.rel (%p1027) target = $region164
      $region163: #{bgd_forward.1} parent=5 // pred_region
        %s1031 = ssub.s32 %s82, 1
        // Predicated region
        $region165: #{bgd_forward.1} parent=163 // pred_check
          %p1032 = pneg %p244
        $region166: #{bgd_forward.1} parent=163 // pred_check_branch
          %1034 = sbr.rel (%p1032) target = $region168
        $region167: #{bgd_forward.1} parent=163 // pred_region
          %1036 = dma.done [#allocation4], 16
        $region168: #{bgd_forward.1} parent=163 // pred_fallthru
          _
        %1037 = sfence
        %p1038 = scmp.lt.s32.totalorder %s87, 1
        %s1039 = scalar_select %p1038, %s87, 1
        %s1040 = smul.addr %s1039, 8
        %s1041 = scalar_lea.vmem %s1, %s1040
        %p1042 = pneg %p108
        %p1043 = pneg %p105
        %p1044 = scmp.lt.s32.totalorder %s87, 1
        %s1045 = scalar_select %p1044, %s87, 1
        %s1046 = smul.addr %s1045, 8
        %s1047 = scalar_lea.vmem %s3, %s1046
        %p1048 = pneg %p134
        %p1049 = pneg %p131
        %p1050 = scmp.lt.s32.totalorder %s87, 1
        %s1051 = scalar_select %p1050, %s87, 1
        %s1052 = smul.addr %s1051, 8
        %s1053 = scalar_lea.vmem %s5, %s1052
        %p1054 = pneg %p160
        %p1055 = pneg %p157
        %p1056 = pneg %p181
        %p1057 = pneg %p178
        %p1058 = pneg %p202
        %p1059 = pneg %p199
        %p1060 = pneg %p223
        %p1061 = pneg %p220
        %p1062 = pneg %p244
        %p1063 = pneg %p241
        %p1064 = pneg %p265
        %p1065 = pneg %p262
        %p1066 = pneg %p286
        %p1067 = pneg %p283
        %p1068 = pneg %p307
        %p1069 = pneg %p304
        %p1070 = pneg %p328
        %p1071 = pneg %p325
        %p1072 = pneg %p349
        %p1073 = pneg %p346
        %p1074 = pneg %p370
        %p1075 = pneg %p367
        %p1076 = pneg %p391
        %p1077 = pneg %p388
        %p1078 = pneg %p412
        %p1079 = pneg %p409
        %p1080 = pneg %p433
        %p1081 = pneg %p430
        %p1082 = pneg %p454
        %p1083 = pneg %p451
        %p1084 = pneg %p475
        %p1085 = pneg %p472
        %p1086 = pneg %p496
        %p1087 = pneg %p493
        %p1088 = pneg %p517
        %p1089 = pneg %p514
        %p1090 = pneg %p538
        %p1091 = pneg %p535
        %p1092 = pneg %p559
        %p1093 = pneg %p556
        %p1094 = pneg %p580
        %p1095 = pneg %p577
        %p1096 = pneg %p601
        %p1097 = pneg %p598
        %p1098 = pneg %p622
        %p1099 = pneg %p619
        %p1100 = pneg %p643
        %p1101 = pneg %p640
        %p1102 = pneg %p664
        %p1103 = pneg %p661
        %p1104 = pneg %p685
        %p1105 = pneg %p682
        %p1106 = pneg %p706
        %p1107 = pneg %p703
        %p1108 = pneg %p727
        %p1109 = pneg %p724
        %p1110 = pneg %p748
        %p1111 = pneg %p745
        %p1112 = pneg %p769
        %p1113 = pneg %p766
        %p1114 = pneg %p790
        %p1115 = pneg %p787
        %p1116 = pneg %p811
        %p1117 = pneg %p808
        %p1118 = pneg %p832
        %p1119 = pneg %p829
        %p1120 = pneg %p853
        %p1121 = pneg %p850
        %p1122 = pneg %p879
        %p1123 = pneg %p876
        %p1124 = scmp.lt.s32.totalorder %s87, 1
        %s1125 = scalar_select %p1124, %s87, 1
        %s1126 = scalar_lea.vmem %s73, %s1125
        %p1127 = scmp.lt.s32.totalorder %s87, 1
        %s1128 = scalar_select %p1127, %s87, 1
        %s1129 = smul.addr %s1128, 8
        %s1130 = scalar_lea.vmem %s1, %s1129
        %p1131 = scmp.lt.s32.totalorder %s87, 1
        %s1132 = scalar_select %p1131, %s87, 1
        %s1133 = smul.addr %s1132, 8
        %s1134 = scalar_lea.vmem %s3, %s1133
        %p1135 = scmp.lt.s32.totalorder %s87, 1
        %s1136 = scalar_select %p1135, %s87, 1
        %s1137 = smul.addr %s1136, 8
        %s1138 = scalar_lea.vmem %s5, %s1137
        %p1139 = scmp.lt.s32.totalorder %s87, 1
        %s1140 = scalar_select %p1139, %s87, 1
        %s1141 = scalar_lea.vmem %s73, %s1140
        %v1143 = vld [vmem:[%s1134] sm:$0xff]
        %v1144 = vld [vmem:[%s1138] sm:$0xff]
        %v1145 = vlaneseq
        %v1146 = vshrl.u32 %v1145, 7
        %v1147 = vlaneseq
        %v1148 = vand.u32 %v1147, 127
        %vm1149 = vcmp.gt.f32.partialorder %v1143, 0.0
        %vm1150 = vcmp.eq.s32.totalorder %v1146, %v1148
        %vm1151 = vmor %vm1149, %vm1150
        %vm1152 = vcmp.eq.s32.totalorder %v1144, 0
        %s1153 = sld [smem:[#allocation3]]
        %v1154 = vstv %s1153
        %v1155 = vsel %vm1152, %v1154, 0.0
        %v1156 = vadd.f32 %v1155, 0.0
        %vm1157 = vcmp.eq.s32.totalorder %v1144, 1
        %s1158 = sld [smem:[#allocation3 + $0x1]]
        %v1159 = vstv %s1158
        %v1160 = vsel %vm1157, %v1159, 0.0
        %v1161 = vadd.f32 %v1156, %v1160
        %vm1162 = vcmp.eq.s32.totalorder %v1144, 2
        %s1163 = sld [smem:[#allocation3 + $0x2]]
        %v1164 = vstv %s1163
        %v1165 = vsel %vm1162, %v1164, 0.0
        %v1166 = vadd.f32 %v1161, %v1165
        %vm1167 = vcmp.eq.s32.totalorder %v1144, 3
        %s1168 = sld [smem:[#allocation3 + $0x3]]
        %v1169 = vstv %s1168
        %v1170 = vsel %vm1167, %v1169, 0.0
        %v1171 = vadd.f32 %v1166, %v1170
        %v1172 = vsel %vm1151, %v1171, -1e+09
        %v1173 = vld [vmem:[%s1130] sm:$0xff]
        %v1174 = vpack.c.bf16 %v1173, %v1173
        %v1175 = vld [vmem:[%s15] sm:$0xf]
        %v1176 = vld [vmem:[%s15 + $0x4] sm:$0xf]
        %v1177 = vld [vmem:[%s15 + $0x8] sm:$0xf]
        %v1178 = vld [vmem:[%s15 + $0xc] sm:$0xf]
        %v1179 = vld [vmem:[%s15 + $0x10] sm:$0xf]
        %v1180 = vld [vmem:[%s15 + $0x14] sm:$0xf]
        %v1181 = vld [vmem:[%s15 + $0x18] sm:$0xf]
        %v1182 = vld [vmem:[%s15 + $0x1c] sm:$0xf]
        %v1183 = vld [vmem:[%s15 + $0x20] sm:$0xf]
        %v1184 = vld [vmem:[%s15 + $0x24] sm:$0x7]
        %v1185 = vld [vmem:[%s17] sm:$0x1]
        %v1187 = vperm.slane %v1185, 0
        %v1199 = vunpack.c.l.b16 %v1175
        %v1200 = vunpack.c.l.b16 %v1176
        %v1201 = vunpack.c.l.b16 %v1177
        %v1202 = vunpack.c.l.b16 %v1178
        %v1203 = vunpack.c.l.b16 %v1179
        %v1204 = vunpack.c.l.b16 %v1180
        %v1205 = vunpack.c.l.b16 %v1181
        %v1206 = vunpack.c.l.b16 %v1182
        %v1207 = vunpack.c.l.b16 %v1183
        %v1208 = vunpack.c.l.b16 %v1184
        %v1209 = vpack.c.b16 %v1200, %v1199
        %v1210 = vpack.c.b16 %v1202, %v1201
        %v1211 = vpack.c.b16 %v1204, %v1203
        %v1212 = vpack.c.b16 %v1206, %v1205
        %v1213 = vpack.c.b16 %v1208, %v1207
        %vm1218 = vcmask 637952
        %v1220 = vsel %vm1218, %v1174, 0
        %vm1222 = vcmask 1046528
        %v1224 = vsel %vm1222, %v1213, 0
        %1226 = vmatpush.bf16.msra.mxu0 0
        %1227 = vmatpush.bf16.msra.mxu0 0
        %1228 = vmatpush.bf16.msra.mxu0 0
        %1229 = vmatpush.bf16.msra.mxu0 %v1224
        %1230 = vmatpush.bf16.msra.mxu0 %v1212
        %1231 = vmatpush.bf16.msra.mxu0 %v1211
        %1232 = vmatpush.bf16.msra.mxu0 %v1210
        %1233 = vmatpush.bf16.msra.mxu0 %v1209
        %1234 = vmatmul.bf16.gmra.mxu0 %v1220
        %v1235 = vpop.f32.mrf.mxu0
        %v1236 = vadd.f32 %v1187, %v1235
        %v1237 = vpop.f32.mrf.mxu0
        %1238 = vdwg.mxu0
        %v1239 = vld [vmem:[%s19] sm:$0xff]
        %v1240 = vadd.f32 %v1236, %v1239
        %v1241 = vpack.c.bf16 %v1240, %v1240
        %v1242 = vld [vmem:[%s21] sm:$0xf]
        %v1243 = vld [vmem:[%s21 + $0x4] sm:$0xf]
        %v1244 = vld [vmem:[%s21 + $0x8] sm:$0xf]
        %v1245 = vld [vmem:[%s21 + $0xc] sm:$0xf]
        %v1246 = vld [vmem:[%s23] sm:$0x1]
        %v1248 = vperm.slane %v1246, 0
        %v1254 = vunpack.c.l.b16 %v1242
        %v1255 = vunpack.c.l.b16 %v1243
        %v1256 = vunpack.c.l.b16 %v1244
        %v1257 = vunpack.c.l.b16 %v1245
        %v1258 = vpack.c.b16 %v1255, %v1254
        %v1259 = vpack.c.b16 %v1257, %v1256
        %vm1262 = vcmask 261120
        %v1264 = vsel %vm1262, %v1241, 0
        %1266 = vmatpush.bf16.msra.mxu0 0
        %1267 = vmatpush.bf16.msra.mxu0 0
        %1268 = vmatpush.bf16.msra.mxu0 0
        %1269 = vmatpush.bf16.msra.mxu0 0
        %1270 = vmatpush.bf16.msra.mxu0 0
        %1271 = vmatpush.bf16.msra.mxu0 0
        %1272 = vmatpush.bf16.msra.mxu0 %v1259
        %1273 = vmatpush.bf16.msra.mxu0 %v1258
        %1274 = vmatmul.bf16.gmra.mxu0 %v1264
        %v1275 = vpop.f32.mrf.mxu0
        %v1276 = vadd.f32 %v1248, %v1275
        %v1277 = vpop.f32.mrf.mxu0
        %1278 = vdwg.mxu0
        %s1279 = scalar_lea.vmem %s21, 16
        %v1280 = vld [vmem:[%s1279] sm:$0xf]
        %v1281 = vld [vmem:[%s1279 + $0x4] sm:$0xf]
        %v1282 = vld [vmem:[%s1279 + $0x8] sm:$0xf]
        %v1283 = vld [vmem:[%s1279 + $0xc] sm:$0xf]
        %s1284 = scalar_lea.vmem %s23, 1
        %v1285 = vld [vmem:[%s1284] sm:$0x1]
        %v1287 = vperm.slane %v1285, 0
        %v1293 = vunpack.c.l.b16 %v1280
        %v1294 = vunpack.c.l.b16 %v1281
        %v1295 = vunpack.c.l.b16 %v1282
        %v1296 = vunpack.c.l.b16 %v1283
        %v1297 = vpack.c.b16 %v1294, %v1293
        %v1298 = vpack.c.b16 %v1296, %v1295
        %1301 = vmatpush.bf16.msra.mxu0 0
        %1302 = vmatpush.bf16.msra.mxu0 0
        %1303 = vmatpush.bf16.msra.mxu0 0
        %1304 = vmatpush.bf16.msra.mxu0 0
        %1305 = vmatpush.bf16.msra.mxu0 0
        %1306 = vmatpush.bf16.msra.mxu0 0
        %1307 = vmatpush.bf16.msra.mxu0 %v1298
        %1308 = vmatpush.bf16.msra.mxu0 %v1297
        %1309 = vmatmul.bf16.gmra.mxu0 %v1264
        %v1310 = vpop.f32.mrf.mxu0
        %v1311 = vadd.f32 %v1287, %v1310
        %v1312 = vpop.f32.mrf.mxu0
        %1313 = vdwg.mxu0
        %s1314 = scalar_lea.vmem %s21, 32
        %v1315 = vld [vmem:[%s1314] sm:$0xf]
        %v1316 = vld [vmem:[%s1314 + $0x4] sm:$0xf]
        %v1317 = vld [vmem:[%s1314 + $0x8] sm:$0xf]
        %v1318 = vld [vmem:[%s1314 + $0xc] sm:$0xf]
        %s1319 = scalar_lea.vmem %s23, 2
        %v1320 = vld [vmem:[%s1319] sm:$0x1]
        %v1322 = vperm.slane %v1320, 0
        %v1328 = vunpack.c.l.b16 %v1315
        %v1329 = vunpack.c.l.b16 %v1316
        %v1330 = vunpack.c.l.b16 %v1317
        %v1331 = vunpack.c.l.b16 %v1318
        %v1332 = vpack.c.b16 %v1329, %v1328
        %v1333 = vpack.c.b16 %v1331, %v1330
        %1336 = vmatpush.bf16.msra.mxu0 0
        %1337 = vmatpush.bf16.msra.mxu0 0
        %1338 = vmatpush.bf16.msra.mxu0 0
        %1339 = vmatpush.bf16.msra.mxu0 0
        %1340 = vmatpush.bf16.msra.mxu0 0
        %1341 = vmatpush.bf16.msra.mxu0 0
        %1342 = vmatpush.bf16.msra.mxu0 %v1333
        %1343 = vmatpush.bf16.msra.mxu0 %v1332
        %1344 = vmatmul.bf16.gmra.mxu0 %v1264
        %v1345 = vpop.f32.mrf.mxu0
        %v1346 = vadd.f32 %v1322, %v1345
        %v1347 = vpop.f32.mrf.mxu0
        %1348 = vdwg.mxu0
        %v1349 = vpack.c.bf16 %v1276, %v1276
        %v1350 = vpack.c.bf16 %v1311, %v1311
        %v1352 = vsel %vm1262, %v1349, 0
        %v1355 = vsel %vm1262, %v1350, 0
        %1357 = vmatpush.bf16.xpose.msra.mxu0 0
        %1358 = vmatpush.bf16.xpose.msra.mxu0 0
        %1359 = vmatpush.bf16.xpose.msra.mxu0 0
        %1360 = vmatpush.bf16.xpose.msra.mxu0 0
        %1361 = vmatpush.bf16.xpose.msra.mxu0 0
        %1362 = vmatpush.bf16.xpose.msra.mxu0 0
        %1363 = vmatpush.bf16.xpose.msra.mxu0 0
        %1364 = vmatpush.bf16.xpose.msra.mxu0 %v1355
        %1365 = vmatmul.bf16.gmra.mxu0 %v1352
        %v1366 = vpop.f32.mrf.mxu0
        %v1367 = vadd.f32 0.0, %v1366
        %v1368 = vpop.f32.mrf.mxu0
        %1369 = vdwg.mxu0
        %v1370 = vmul.f32 %v1367, 0.17677669
        %v1371 = vadd.f32 %v1370, %v1172
        %vm1372 = vcmask 64512
        %v1373 = vsel %vm1372, %v1371, -inf
        %1374 = vmax.xlane.f32.xlu0 %v1373
        %v1375 = vpop.xlane.xlu0 %1374
        %v1376 = vsub.f32 %v1371, %v1375
        %v1377 = vmul.f32 %v1376, 1.442695
        %v1378 = vpow.pop %v1377
        %v1379 = vsel %vm1372, %v1378, 0.0
        %1380 = vadd.xlane.f32.xlu0 %v1379
        %v1381 = vpop.xlane.xlu0 %1380
        %v1382 = vrcp.pop %v1381
        %v1383 = vmul.f32 %v1381, %v1382
        %v1384 = vsub.f32 1.0, %v1383
        %v1385 = vmul.f32 %v1382, %v1384
        %v1386 = vadd.f32 %v1382, %v1385
        %vm1387 = vweird.f32 %v1381
        %vm1388 = vweird.f32 %v1382
        %vm1389 = vmor %vm1387, %vm1388
        %v1390 = vsel %vm1389, %v1382, %v1386
        %v1391 = vand.u32 2147483647, %v1381
        %vm1392 = vcmp.eq.f32.partialorder %v1391, 8.507059e+37
        %v1393 = vand.u32 %v1381, 2147483648
        %v1394 = vor.u32 1.1754944e-38, %v1393
        %v1395 = vsel %vm1392, %v1394, %v1390
        %v1396 = vmul.f32 %v1378, %v1395
        %v1397 = vpack.c.bf16 %v1396, %v1396
        %v1398 = vpack.c.bf16 %v1346, %v1346
        %v1400 = vsel %vm1372, %v1397, 0
        %vm1402 = vcmask 1043456
        %v1404 = vsel %vm1402, %v1398, 0
        %1406 = vmatpush.bf16.msra.mxu0 0
        %1407 = vmatpush.bf16.msra.mxu0 0
        %1408 = vmatpush.bf16.msra.mxu0 0
        %1409 = vmatpush.bf16.msra.mxu0 0
        %1410 = vmatpush.bf16.msra.mxu0 0
        %1411 = vmatpush.bf16.msra.mxu0 0
        %1412 = vmatpush.bf16.msra.mxu0 0
        %1413 = vmatpush.bf16.msra.mxu0 %v1404
        %1414 = vmatmul.bf16.gmra.mxu0 %v1400
        %v1415 = vpop.f32.mrf.mxu0
        %v1416 = vadd.f32 0.0, %v1415
        %v1417 = vpop.f32.mrf.mxu0
        %1418 = vdwg.mxu0
        %v1419 = vpack.c.bf16 %v1416, %v1416
        %v1420 = vld [vmem:[%s25] sm:$0xf]
        %v1421 = vld [vmem:[%s25 + $0x4] sm:$0xf]
        %v1422 = vld [vmem:[%s25 + $0x8] sm:$0xf]
        %v1423 = vld [vmem:[%s25 + $0xc] sm:$0xf]
        %v1424 = vld [vmem:[%s27] sm:$0x1]
        %v1426 = vperm.slane %v1424, 0
        %v1432 = vunpack.c.l.b16 %v1420
        %v1433 = vunpack.c.l.b16 %v1421
        %v1434 = vunpack.c.l.b16 %v1422
        %v1435 = vunpack.c.l.b16 %v1423
        %v1436 = vpack.c.b16 %v1433, %v1432
        %v1437 = vpack.c.b16 %v1435, %v1434
        %v1441 = vsel %vm1262, %v1419, 0
        %1443 = vmatpush.bf16.msra.mxu0 0
        %1444 = vmatpush.bf16.msra.mxu0 0
        %1445 = vmatpush.bf16.msra.mxu0 0
        %1446 = vmatpush.bf16.msra.mxu0 0
        %1447 = vmatpush.bf16.msra.mxu0 0
        %1448 = vmatpush.bf16.msra.mxu0 0
        %1449 = vmatpush.bf16.msra.mxu0 %v1437
        %1450 = vmatpush.bf16.msra.mxu0 %v1436
        %1451 = vmatmul.bf16.gmra.mxu0 %v1441
        %v1452 = vpop.f32.mrf.mxu0
        %v1453 = vadd.f32 %v1426, %v1452
        %v1454 = vpop.f32.mrf.mxu0
        %1455 = vdwg.mxu0
        %v1456 = vadd.f32 %v1240, %v1453
        %v1457 = vld [vmem:[%s37] sm:$0x1]
        %v1458 = vld [vmem:[%s39] sm:$0x1]
        %v1459 = vsel %vm1262, %v1456, 0.0
        %1460 = vadd.xlane.f32.xlu0 %v1459
        %v1461 = vpop.xlane.xlu0 %1460
        %v1462 = vrcp.pop 32.0
        %v1463 = vmul.f32 32.0, %v1462
        %v1464 = vsub.f32 1.0, %v1463
        %v1465 = vmul.f32 %v1462, %v1464
        %v1466 = vadd.f32 %v1462, %v1465
        %vm1467 = vweird.f32 %v1462
        %v1468 = vsel %vm1467, %v1462, %v1466
        %v1469 = vmul.f32 %v1461, %v1468
        %v1470 = vsub.f32 %v1456, %v1469
        %v1471 = vmul.f32 %v1470, %v1470
        %v1472 = vsel %vm1262, %v1471, 0.0
        %1473 = vadd.xlane.f32.xlu0 %v1472
        %v1474 = vpop.xlane.xlu0 %1473
        %v1475 = vmul.f32 %v1474, %v1468
        %v1476 = vadd.f32 %v1475, 1e-05
        %v1477 = vrsqrt.pop %v1476
        %v1478 = vmul.f32 %v1477, %v1476
        %v1479 = vmul.f32 %v1478, %v1477
        %v1480 = vmul.f32 0.5, %v1479
        %v1481 = vsub.f32 1.5, %v1480
        %v1482 = vmul.f32 %v1477, %v1481
        %vm1483 = vweird.f32 %v1476
        %vm1484 = vweird.f32 %v1477
        %vm1485 = vmor %vm1483, %vm1484
        %v1486 = vsel %vm1485, %v1477, %v1482
        %v1487 = vmul.f32 %v1470, %v1486
        %v1489 = vperm.slane %v1457, 0
        %v1491 = vmul.f32 %v1487, %v1489
        %v1493 = vperm.slane %v1458, 0
        %v1495 = vadd.f32 %v1491, %v1493
        %v1496 = vpack.c.bf16 %v1495, %v1495
        %v1497 = vld [vmem:[%s29] sm:$0xff]
        %v1498 = vld [vmem:[%s29 + $0x8] sm:$0xff]
        %v1499 = vld [vmem:[%s29 + $0x10] sm:$0xff]
        %v1500 = vld [vmem:[%s29 + $0x18] sm:$0xff]
        %v1501 = vld [vmem:[%s29 + $0x20] sm:$0xff]
        %v1502 = vld [vmem:[%s29 + $0x28] sm:$0xff]
        %v1503 = vld [vmem:[%s29 + $0x30] sm:$0xff]
        %v1504 = vld [vmem:[%s29 + $0x38] sm:$0xff]
        %v1505 = vld [vmem:[%s29 + $0x40] sm:$0xff]
        %v1506 = vld [vmem:[%s29 + $0x48] sm:$0xff]
        %v1507 = vld [vmem:[%s29 + $0x50] sm:$0xff]
        %v1508 = vld [vmem:[%s29 + $0x58] sm:$0xff]
        %v1509 = vld [vmem:[%s29 + $0x60] sm:$0xff]
        %v1510 = vld [vmem:[%s29 + $0x68] sm:$0xff]
        %v1511 = vld [vmem:[%s29 + $0x70] sm:$0xff]
        %v1512 = vld [vmem:[%s29 + $0x78] sm:$0xff]
        %v1513 = vld [vmem:[%s29 + $0x80] sm:$0xff]
        %v1514 = vld [vmem:[%s29 + $0x88] sm:$0xff]
        %v1515 = vld [vmem:[%s29 + $0x90] sm:$0xff]
        %v1516 = vld [vmem:[%s29 + $0x98] sm:$0xff]
        %v1517 = vld [vmem:[%s29 + $0xa0] sm:$0xff]
        %v1518 = vld [vmem:[%s29 + $0xa8] sm:$0xff]
        %v1519 = vld [vmem:[%s29 + $0xb0] sm:$0xff]
        %v1520 = vld [vmem:[%s29 + $0xb8] sm:$0xff]
        %v1521 = vld [vmem:[%s29 + $0xc0] sm:$0xff]
        %v1522 = vld [vmem:[%s29 + $0xc8] sm:$0xff]
        %v1523 = vld [vmem:[%s29 + $0xd0] sm:$0xff]
        %v1524 = vld [vmem:[%s29 + $0xd8] sm:$0xff]
        %v1525 = vld [vmem:[%s29 + $0xe0] sm:$0xff]
        %v1526 = vld [vmem:[%s29 + $0xe8] sm:$0xff]
        %v1527 = vld [vmem:[%s29 + $0xf0] sm:$0xff]
        %v1528 = vld [vmem:[%s29 + $0xf8] sm:$0xff]
        %v1529 = vld [vmem:[%s31] sm:$0xff]
        %v1530 = vld [vmem:[%s31 + $0x8] sm:$0xff]
        %v1533 = vperm.slane %v1529, 0
        %v1534 = vperm.slane %v1529, 1
        %v1535 = vperm.slane %v1529, 2
        %v1536 = vperm.slane %v1529, 3
        %v1537 = vperm.slane %v1529, 4
        %v1538 = vperm.slane %v1529, 5
        %v1539 = vperm.slane %v1529, 6
        %v1540 = vperm.slane %v1529, 7
        %v1541 = vperm.slane %v1530, 0
        %v1542 = vperm.slane %v1530, 1
        %v1543 = vperm.slane %v1530, 2
        %v1544 = vperm.slane %v1530, 3
        %v1545 = vperm.slane %v1530, 4
        %v1546 = vperm.slane %v1530, 5
        %v1547 = vperm.slane %v1530, 6
        %v1548 = vperm.slane %v1530, 7
        %v1597 = vunpack.c.l.b16 %v1497
        %v1598 = vunpack.c.h.b16 %v1497
        %v1599 = vunpack.c.l.b16 %v1498
        %v1600 = vunpack.c.h.b16 %v1498
        %v1601 = vunpack.c.l.b16 %v1499
        %v1602 = vunpack.c.h.b16 %v1499
        %v1603 = vunpack.c.l.b16 %v1500
        %v1604 = vunpack.c.h.b16 %v1500
        %v1605 = vunpack.c.l.b16 %v1501
        %v1606 = vunpack.c.h.b16 %v1501
        %v1607 = vunpack.c.l.b16 %v1502
        %v1608 = vunpack.c.h.b16 %v1502
        %v1609 = vunpack.c.l.b16 %v1503
        %v1610 = vunpack.c.h.b16 %v1503
        %v1611 = vunpack.c.l.b16 %v1504
        %v1612 = vunpack.c.h.b16 %v1504
        %v1613 = vunpack.c.l.b16 %v1505
        %v1614 = vunpack.c.h.b16 %v1505
        %v1615 = vunpack.c.l.b16 %v1506
        %v1616 = vunpack.c.h.b16 %v1506
        %v1617 = vunpack.c.l.b16 %v1507
        %v1618 = vunpack.c.h.b16 %v1507
        %v1619 = vunpack.c.l.b16 %v1508
        %v1620 = vunpack.c.h.b16 %v1508
        %v1621 = vunpack.c.l.b16 %v1509
        %v1622 = vunpack.c.h.b16 %v1509
        %v1623 = vunpack.c.l.b16 %v1510
        %v1624 = vunpack.c.h.b16 %v1510
        %v1625 = vunpack.c.l.b16 %v1511
        %v1626 = vunpack.c.h.b16 %v1511
        %v1627 = vunpack.c.l.b16 %v1512
        %v1628 = vunpack.c.h.b16 %v1512
        %v1629 = vunpack.c.l.b16 %v1513
        %v1630 = vunpack.c.h.b16 %v1513
        %v1631 = vunpack.c.l.b16 %v1514
        %v1632 = vunpack.c.h.b16 %v1514
        %v1633 = vunpack.c.l.b16 %v1515
        %v1634 = vunpack.c.h.b16 %v1515
        %v1635 = vunpack.c.l.b16 %v1516
        %v1636 = vunpack.c.h.b16 %v1516
        %v1637 = vunpack.c.l.b16 %v1517
        %v1638 = vunpack.c.h.b16 %v1517
        %v1639 = vunpack.c.l.b16 %v1518
        %v1640 = vunpack.c.h.b16 %v1518
        %v1641 = vunpack.c.l.b16 %v1519
        %v1642 = vunpack.c.h.b16 %v1519
        %v1643 = vunpack.c.l.b16 %v1520
        %v1644 = vunpack.c.h.b16 %v1520
        %v1645 = vunpack.c.l.b16 %v1521
        %v1646 = vunpack.c.h.b16 %v1521
        %v1647 = vunpack.c.l.b16 %v1522
        %v1648 = vunpack.c.h.b16 %v1522
        %v1649 = vunpack.c.l.b16 %v1523
        %v1650 = vunpack.c.h.b16 %v1523
        %v1651 = vunpack.c.l.b16 %v1524
        %v1652 = vunpack.c.h.b16 %v1524
        %v1653 = vunpack.c.l.b16 %v1525
        %v1654 = vunpack.c.h.b16 %v1525
        %v1655 = vunpack.c.l.b16 %v1526
        %v1656 = vunpack.c.h.b16 %v1526
        %v1657 = vunpack.c.l.b16 %v1527
        %v1658 = vunpack.c.h.b16 %v1527
        %v1659 = vunpack.c.l.b16 %v1528
        %v1660 = vunpack.c.h.b16 %v1528
        %v1661 = vpack.c.b16 %v1613, %v1597
        %v1662 = vpack.c.b16 %v1614, %v1598
        %v1663 = vpack.c.b16 %v1615, %v1599
        %v1664 = vpack.c.b16 %v1616, %v1600
        %v1665 = vpack.c.b16 %v1617, %v1601
        %v1666 = vpack.c.b16 %v1618, %v1602
        %v1667 = vpack.c.b16 %v1619, %v1603
        %v1668 = vpack.c.b16 %v1620, %v1604
        %v1669 = vpack.c.b16 %v1621, %v1605
        %v1670 = vpack.c.b16 %v1622, %v1606
        %v1671 = vpack.c.b16 %v1623, %v1607
        %v1672 = vpack.c.b16 %v1624, %v1608
        %v1673 = vpack.c.b16 %v1625, %v1609
        %v1674 = vpack.c.b16 %v1626, %v1610
        %v1675 = vpack.c.b16 %v1627, %v1611
        %v1676 = vpack.c.b16 %v1628, %v1612
        %v1677 = vpack.c.b16 %v1645, %v1629
        %v1678 = vpack.c.b16 %v1646, %v1630
        %v1679 = vpack.c.b16 %v1647, %v1631
        %v1680 = vpack.c.b16 %v1648, %v1632
        %v1681 = vpack.c.b16 %v1649, %v1633
        %v1682 = vpack.c.b16 %v1650, %v1634
        %v1683 = vpack.c.b16 %v1651, %v1635
        %v1684 = vpack.c.b16 %v1652, %v1636
        %v1685 = vpack.c.b16 %v1653, %v1637
        %v1686 = vpack.c.b16 %v1654, %v1638
        %v1687 = vpack.c.b16 %v1655, %v1639
        %v1688 = vpack.c.b16 %v1656, %v1640
        %v1689 = vpack.c.b16 %v1657, %v1641
        %v1690 = vpack.c.b16 %v1658, %v1642
        %v1691 = vpack.c.b16 %v1659, %v1643
        %v1692 = vpack.c.b16 %v1660, %v1644
        %v1726 = vsel %vm1262, %v1496, 0
        %1728 = vmatpush.bf16.msra.mxu0 0
        %1729 = vmatpush.bf16.msra.mxu0 0
        %1730 = vmatpush.bf16.msra.mxu0 0
        %1731 = vmatpush.bf16.msra.mxu0 0
        %1732 = vmatpush.bf16.msra.mxu0 0
        %1733 = vmatpush.bf16.msra.mxu0 0
        %1734 = vmatpush.bf16.msra.mxu0 %v1677
        %1735 = vmatpush.bf16.msra.mxu0 %v1661
        %1736 = vmatmul.bf16.gmra.mxu0 %v1726
        %v1737 = vpop.f32.mrf.mxu0
        %v1738 = vadd.f32 %v1533, %v1737
        %v1739 = vpop.f32.mrf.mxu0
        %1740 = vdwg.mxu0
        %1741 = vmatpush.bf16.msra.mxu0 0
        %1742 = vmatpush.bf16.msra.mxu0 0
        %1743 = vmatpush.bf16.msra.mxu0 0
        %1744 = vmatpush.bf16.msra.mxu0 0
        %1745 = vmatpush.bf16.msra.mxu0 0
        %1746 = vmatpush.bf16.msra.mxu0 0
        %1747 = vmatpush.bf16.msra.mxu0 %v1678
        %1748 = vmatpush.bf16.msra.mxu0 %v1662
        %1749 = vmatmul.bf16.gmra.mxu0 %v1726
        %v1750 = vpop.f32.mrf.mxu0
        %v1751 = vadd.f32 %v1534, %v1750
        %v1752 = vpop.f32.mrf.mxu0
        %1753 = vdwg.mxu0
        %1754 = vmatpush.bf16.msra.mxu0 0
        %1755 = vmatpush.bf16.msra.mxu0 0
        %1756 = vmatpush.bf16.msra.mxu0 0
        %1757 = vmatpush.bf16.msra.mxu0 0
        %1758 = vmatpush.bf16.msra.mxu0 0
        %1759 = vmatpush.bf16.msra.mxu0 0
        %1760 = vmatpush.bf16.msra.mxu0 %v1679
        %1761 = vmatpush.bf16.msra.mxu0 %v1663
        %1762 = vmatmul.bf16.gmra.mxu0 %v1726
        %v1763 = vpop.f32.mrf.mxu0
        %v1764 = vadd.f32 %v1535, %v1763
        %v1765 = vpop.f32.mrf.mxu0
        %1766 = vdwg.mxu0
        %1767 = vmatpush.bf16.msra.mxu0 0
        %1768 = vmatpush.bf16.msra.mxu0 0
        %1769 = vmatpush.bf16.msra.mxu0 0
        %1770 = vmatpush.bf16.msra.mxu0 0
        %1771 = vmatpush.bf16.msra.mxu0 0
        %1772 = vmatpush.bf16.msra.mxu0 0
        %1773 = vmatpush.bf16.msra.mxu0 %v1680
        %1774 = vmatpush.bf16.msra.mxu0 %v1664
        %1775 = vmatmul.bf16.gmra.mxu0 %v1726
        %v1776 = vpop.f32.mrf.mxu0
        %v1777 = vadd.f32 %v1536, %v1776
        %v1778 = vpop.f32.mrf.mxu0
        %1779 = vdwg.mxu0
        %1780 = vmatpush.bf16.msra.mxu0 0
        %1781 = vmatpush.bf16.msra.mxu0 0
        %1782 = vmatpush.bf16.msra.mxu0 0
        %1783 = vmatpush.bf16.msra.mxu0 0
        %1784 = vmatpush.bf16.msra.mxu0 0
        %1785 = vmatpush.bf16.msra.mxu0 0
        %1786 = vmatpush.bf16.msra.mxu0 %v1681
        %1787 = vmatpush.bf16.msra.mxu0 %v1665
        %1788 = vmatmul.bf16.gmra.mxu0 %v1726
        %v1789 = vpop.f32.mrf.mxu0
        %v1790 = vadd.f32 %v1537, %v1789
        %v1791 = vpop.f32.mrf.mxu0
        %1792 = vdwg.mxu0
        %1793 = vmatpush.bf16.msra.mxu0 0
        %1794 = vmatpush.bf16.msra.mxu0 0
        %1795 = vmatpush.bf16.msra.mxu0 0
        %1796 = vmatpush.bf16.msra.mxu0 0
        %1797 = vmatpush.bf16.msra.mxu0 0
        %1798 = vmatpush.bf16.msra.mxu0 0
        %1799 = vmatpush.bf16.msra.mxu0 %v1682
        %1800 = vmatpush.bf16.msra.mxu0 %v1666
        %1801 = vmatmul.bf16.gmra.mxu0 %v1726
        %v1802 = vpop.f32.mrf.mxu0
        %v1803 = vadd.f32 %v1538, %v1802
        %v1804 = vpop.f32.mrf.mxu0
        %1805 = vdwg.mxu0
        %1806 = vmatpush.bf16.msra.mxu0 0
        %1807 = vmatpush.bf16.msra.mxu0 0
        %1808 = vmatpush.bf16.msra.mxu0 0
        %1809 = vmatpush.bf16.msra.mxu0 0
        %1810 = vmatpush.bf16.msra.mxu0 0
        %1811 = vmatpush.bf16.msra.mxu0 0
        %1812 = vmatpush.bf16.msra.mxu0 %v1683
        %1813 = vmatpush.bf16.msra.mxu0 %v1667
        %1814 = vmatmul.bf16.gmra.mxu0 %v1726
        %v1815 = vpop.f32.mrf.mxu0
        %v1816 = vadd.f32 %v1539, %v1815
        %v1817 = vpop.f32.mrf.mxu0
        %1818 = vdwg.mxu0
        %1819 = vmatpush.bf16.msra.mxu0 0
        %1820 = vmatpush.bf16.msra.mxu0 0
        %1821 = vmatpush.bf16.msra.mxu0 0
        %1822 = vmatpush.bf16.msra.mxu0 0
        %1823 = vmatpush.bf16.msra.mxu0 0
        %1824 = vmatpush.bf16.msra.mxu0 0
        %1825 = vmatpush.bf16.msra.mxu0 %v1684
        %1826 = vmatpush.bf16.msra.mxu0 %v1668
        %1827 = vmatmul.bf16.gmra.mxu0 %v1726
        %v1828 = vpop.f32.mrf.mxu0
        %v1829 = vadd.f32 %v1540, %v1828
        %v1830 = vpop.f32.mrf.mxu0
        %1831 = vdwg.mxu0
        %1832 = vmatpush.bf16.msra.mxu0 0
        %1833 = vmatpush.bf16.msra.mxu0 0
        %1834 = vmatpush.bf16.msra.mxu0 0
        %1835 = vmatpush.bf16.msra.mxu0 0
        %1836 = vmatpush.bf16.msra.mxu0 0
        %1837 = vmatpush.bf16.msra.mxu0 0
        %1838 = vmatpush.bf16.msra.mxu0 %v1685
        %1839 = vmatpush.bf16.msra.mxu0 %v1669
        %1840 = vmatmul.bf16.gmra.mxu0 %v1726
        %v1841 = vpop.f32.mrf.mxu0
        %v1842 = vadd.f32 %v1541, %v1841
        %v1843 = vpop.f32.mrf.mxu0
        %1844 = vdwg.mxu0
        %1845 = vmatpush.bf16.msra.mxu0 0
        %1846 = vmatpush.bf16.msra.mxu0 0
        %1847 = vmatpush.bf16.msra.mxu0 0
        %1848 = vmatpush.bf16.msra.mxu0 0
        %1849 = vmatpush.bf16.msra.mxu0 0
        %1850 = vmatpush.bf16.msra.mxu0 0
        %1851 = vmatpush.bf16.msra.mxu0 %v1686
        %1852 = vmatpush.bf16.msra.mxu0 %v1670
        %1853 = vmatmul.bf16.gmra.mxu0 %v1726
        %v1854 = vpop.f32.mrf.mxu0
        %v1855 = vadd.f32 %v1542, %v1854
        %v1856 = vpop.f32.mrf.mxu0
        %1857 = vdwg.mxu0
        %1858 = vmatpush.bf16.msra.mxu0 0
        %1859 = vmatpush.bf16.msra.mxu0 0
        %1860 = vmatpush.bf16.msra.mxu0 0
        %1861 = vmatpush.bf16.msra.mxu0 0
        %1862 = vmatpush.bf16.msra.mxu0 0
        %1863 = vmatpush.bf16.msra.mxu0 0
        %1864 = vmatpush.bf16.msra.mxu0 %v1687
        %1865 = vmatpush.bf16.msra.mxu0 %v1671
        %1866 = vmatmul.bf16.gmra.mxu0 %v1726
        %v1867 = vpop.f32.mrf.mxu0
        %v1868 = vadd.f32 %v1543, %v1867
        %v1869 = vpop.f32.mrf.mxu0
        %1870 = vdwg.mxu0
        %1871 = vmatpush.bf16.msra.mxu0 0
        %1872 = vmatpush.bf16.msra.mxu0 0
        %1873 = vmatpush.bf16.msra.mxu0 0
        %1874 = vmatpush.bf16.msra.mxu0 0
        %1875 = vmatpush.bf16.msra.mxu0 0
        %1876 = vmatpush.bf16.msra.mxu0 0
        %1877 = vmatpush.bf16.msra.mxu0 %v1688
        %1878 = vmatpush.bf16.msra.mxu0 %v1672
        %1879 = vmatmul.bf16.gmra.mxu0 %v1726
        %v1880 = vpop.f32.mrf.mxu0
        %v1881 = vadd.f32 %v1544, %v1880
        %v1882 = vpop.f32.mrf.mxu0
        %1883 = vdwg.mxu0
        %1884 = vmatpush.bf16.msra.mxu0 0
        %1885 = vmatpush.bf16.msra.mxu0 0
        %1886 = vmatpush.bf16.msra.mxu0 0
        %1887 = vmatpush.bf16.msra.mxu0 0
        %1888 = vmatpush.bf16.msra.mxu0 0
        %1889 = vmatpush.bf16.msra.mxu0 0
        %1890 = vmatpush.bf16.msra.mxu0 %v1689
        %1891 = vmatpush.bf16.msra.mxu0 %v1673
        %1892 = vmatmul.bf16.gmra.mxu0 %v1726
        %v1893 = vpop.f32.mrf.mxu0
        %v1894 = vadd.f32 %v1545, %v1893
        %v1895 = vpop.f32.mrf.mxu0
        %1896 = vdwg.mxu0
        %1897 = vmatpush.bf16.msra.mxu0 0
        %1898 = vmatpush.bf16.msra.mxu0 0
        %1899 = vmatpush.bf16.msra.mxu0 0
        %1900 = vmatpush.bf16.msra.mxu0 0
        %1901 = vmatpush.bf16.msra.mxu0 0
        %1902 = vmatpush.bf16.msra.mxu0 0
        %1903 = vmatpush.bf16.msra.mxu0 %v1690
        %1904 = vmatpush.bf16.msra.mxu0 %v1674
        %1905 = vmatmul.bf16.gmra.mxu0 %v1726
        %v1906 = vpop.f32.mrf.mxu0
        %v1907 = vadd.f32 %v1546, %v1906
        %v1908 = vpop.f32.mrf.mxu0
        %1909 = vdwg.mxu0
        %1910 = vmatpush.bf16.msra.mxu0 0
        %1911 = vmatpush.bf16.msra.mxu0 0
        %1912 = vmatpush.bf16.msra.mxu0 0
        %1913 = vmatpush.bf16.msra.mxu0 0
        %1914 = vmatpush.bf16.msra.mxu0 0
        %1915 = vmatpush.bf16.msra.mxu0 0
        %1916 = vmatpush.bf16.msra.mxu0 %v1691
        %1917 = vmatpush.bf16.msra.mxu0 %v1675
        %1918 = vmatmul.bf16.gmra.mxu0 %v1726
        %v1919 = vpop.f32.mrf.mxu0
        %v1920 = vadd.f32 %v1547, %v1919
        %v1921 = vpop.f32.mrf.mxu0
        %1922 = vdwg.mxu0
        %1923 = vmatpush.bf16.msra.mxu0 0
        %1924 = vmatpush.bf16.msra.mxu0 0
        %1925 = vmatpush.bf16.msra.mxu0 0
        %1926 = vmatpush.bf16.msra.mxu0 0
        %1927 = vmatpush.bf16.msra.mxu0 0
        %1928 = vmatpush.bf16.msra.mxu0 0
        %1929 = vmatpush.bf16.msra.mxu0 %v1692
        %1930 = vmatpush.bf16.msra.mxu0 %v1676
        %1931 = vmatmul.bf16.gmra.mxu0 %v1726
        %v1932 = vpop.f32.mrf.mxu0
        %v1933 = vadd.f32 %v1548, %v1932
        %v1934 = vpop.f32.mrf.mxu0
        %1935 = vdwg.mxu0
        %v1936 = vmax.f32 %v1738, 0.0
        %v1937 = vmax.f32 %v1751, 0.0
        %v1938 = vmax.f32 %v1764, 0.0
        %v1939 = vmax.f32 %v1777, 0.0
        %v1940 = vmax.f32 %v1790, 0.0
        %v1941 = vmax.f32 %v1803, 0.0
        %v1942 = vmax.f32 %v1816, 0.0
        %v1943 = vmax.f32 %v1829, 0.0
        %v1944 = vmax.f32 %v1842, 0.0
        %v1945 = vmax.f32 %v1855, 0.0
        %v1946 = vmax.f32 %v1868, 0.0
        %v1947 = vmax.f32 %v1881, 0.0
        %v1948 = vmax.f32 %v1894, 0.0
        %v1949 = vmax.f32 %v1907, 0.0
        %v1950 = vmax.f32 %v1920, 0.0
        %v1951 = vmax.f32 %v1933, 0.0
        %v1952 = vpack.c.bf16 %v1936, %v1936
        %v1953 = vpack.c.bf16 %v1937, %v1937
        %v1954 = vpack.c.bf16 %v1938, %v1938
        %v1955 = vpack.c.bf16 %v1939, %v1939
        %v1956 = vpack.c.bf16 %v1940, %v1940
        %v1957 = vpack.c.bf16 %v1941, %v1941
        %v1958 = vpack.c.bf16 %v1942, %v1942
        %v1959 = vpack.c.bf16 %v1943, %v1943
        %v1960 = vpack.c.bf16 %v1944, %v1944
        %v1961 = vpack.c.bf16 %v1945, %v1945
        %v1962 = vpack.c.bf16 %v1946, %v1946
        %v1963 = vpack.c.bf16 %v1947, %v1947
        %v1964 = vpack.c.bf16 %v1948, %v1948
        %v1965 = vpack.c.bf16 %v1949, %v1949
        %v1966 = vpack.c.bf16 %v1950, %v1950
        %v1967 = vpack.c.bf16 %v1951, %v1951
        %v1968 = vld [vmem:[%s33] sm:$0xf]
        %v1969 = vld [vmem:[%s33 + $0x4] sm:$0xf]
        %v1970 = vld [vmem:[%s33 + $0x8] sm:$0xf]
        %v1971 = vld [vmem:[%s33 + $0xc] sm:$0xf]
        %v1972 = vld [vmem:[%s33 + $0x10] sm:$0xf]
        %v1973 = vld [vmem:[%s33 + $0x14] sm:$0xf]
        %v1974 = vld [vmem:[%s33 + $0x18] sm:$0xf]
        %v1975 = vld [vmem:[%s33 + $0x1c] sm:$0xf]
        %v1976 = vld [vmem:[%s33 + $0x20] sm:$0xf]
        %v1977 = vld [vmem:[%s33 + $0x24] sm:$0xf]
        %v1978 = vld [vmem:[%s33 + $0x28] sm:$0xf]
        %v1979 = vld [vmem:[%s33 + $0x2c] sm:$0xf]
        %v1980 = vld [vmem:[%s33 + $0x30] sm:$0xf]
        %v1981 = vld [vmem:[%s33 + $0x34] sm:$0xf]
        %v1982 = vld [vmem:[%s33 + $0x38] sm:$0xf]
        %v1983 = vld [vmem:[%s33 + $0x3c] sm:$0xf]
        %v1984 = vld [vmem:[%s33 + $0x40] sm:$0xf]
        %v1985 = vld [vmem:[%s33 + $0x44] sm:$0xf]
        %v1986 = vld [vmem:[%s33 + $0x48] sm:$0xf]
        %v1987 = vld [vmem:[%s33 + $0x4c] sm:$0xf]
        %v1988 = vld [vmem:[%s33 + $0x50] sm:$0xf]
        %v1989 = vld [vmem:[%s33 + $0x54] sm:$0xf]
        %v1990 = vld [vmem:[%s33 + $0x58] sm:$0xf]
        %v1991 = vld [vmem:[%s33 + $0x5c] sm:$0xf]
        %v1992 = vld [vmem:[%s33 + $0x60] sm:$0xf]
        %v1993 = vld [vmem:[%s33 + $0x64] sm:$0xf]
        %v1994 = vld [vmem:[%s33 + $0x68] sm:$0xf]
        %v1995 = vld [vmem:[%s33 + $0x6c] sm:$0xf]
        %v1996 = vld [vmem:[%s33 + $0x70] sm:$0xf]
        %v1997 = vld [vmem:[%s33 + $0x74] sm:$0xf]
        %v1998 = vld [vmem:[%s33 + $0x78] sm:$0xf]
        %v1999 = vld [vmem:[%s33 + $0x7c] sm:$0xf]
        %v2000 = vld [vmem:[%s33 + $0x80] sm:$0xf]
        %v2001 = vld [vmem:[%s33 + $0x84] sm:$0xf]
        %v2002 = vld [vmem:[%s33 + $0x88] sm:$0xf]
        %v2003 = vld [vmem:[%s33 + $0x8c] sm:$0xf]
        %v2004 = vld [vmem:[%s33 + $0x90] sm:$0xf]
        %v2005 = vld [vmem:[%s33 + $0x94] sm:$0xf]
        %v2006 = vld [vmem:[%s33 + $0x98] sm:$0xf]
        %v2007 = vld [vmem:[%s33 + $0x9c] sm:$0xf]
        %v2008 = vld [vmem:[%s33 + $0xa0] sm:$0xf]
        %v2009 = vld [vmem:[%s33 + $0xa4] sm:$0xf]
        %v2010 = vld [vmem:[%s33 + $0xa8] sm:$0xf]
        %v2011 = vld [vmem:[%s33 + $0xac] sm:$0xf]
        %v2012 = vld [vmem:[%s33 + $0xb0] sm:$0xf]
        %v2013 = vld [vmem:[%s33 + $0xb4] sm:$0xf]
        %v2014 = vld [vmem:[%s33 + $0xb8] sm:$0xf]
        %v2015 = vld [vmem:[%s33 + $0xbc] sm:$0xf]
        %v2016 = vld [vmem:[%s33 + $0xc0] sm:$0xf]
        %v2017 = vld [vmem:[%s33 + $0xc4] sm:$0xf]
        %v2018 = vld [vmem:[%s33 + $0xc8] sm:$0xf]
        %v2019 = vld [vmem:[%s33 + $0xcc] sm:$0xf]
        %v2020 = vld [vmem:[%s33 + $0xd0] sm:$0xf]
        %v2021 = vld [vmem:[%s33 + $0xd4] sm:$0xf]
        %v2022 = vld [vmem:[%s33 + $0xd8] sm:$0xf]
        %v2023 = vld [vmem:[%s33 + $0xdc] sm:$0xf]
        %v2024 = vld [vmem:[%s33 + $0xe0] sm:$0xf]
        %v2025 = vld [vmem:[%s33 + $0xe4] sm:$0xf]
        %v2026 = vld [vmem:[%s33 + $0xe8] sm:$0xf]
        %v2027 = vld [vmem:[%s33 + $0xec] sm:$0xf]
        %v2028 = vld [vmem:[%s33 + $0xf0] sm:$0xf]
        %v2029 = vld [vmem:[%s33 + $0xf4] sm:$0xf]
        %v2030 = vld [vmem:[%s33 + $0xf8] sm:$0xf]
        %v2031 = vld [vmem:[%s33 + $0xfc] sm:$0xf]
        %v2032 = vld [vmem:[%s33 + $0x100] sm:$0xf]
        %v2033 = vld [vmem:[%s33 + $0x104] sm:$0xf]
        %v2034 = vld [vmem:[%s33 + $0x108] sm:$0xf]
        %v2035 = vld [vmem:[%s33 + $0x10c] sm:$0xf]
        %v2036 = vld [vmem:[%s33 + $0x110] sm:$0xf]
        %v2037 = vld [vmem:[%s33 + $0x114] sm:$0xf]
        %v2038 = vld [vmem:[%s33 + $0x118] sm:$0xf]
        %v2039 = vld [vmem:[%s33 + $0x11c] sm:$0xf]
        %v2040 = vld [vmem:[%s33 + $0x120] sm:$0xf]
        %v2041 = vld [vmem:[%s33 + $0x124] sm:$0xf]
        %v2042 = vld [vmem:[%s33 + $0x128] sm:$0xf]
        %v2043 = vld [vmem:[%s33 + $0x12c] sm:$0xf]
        %v2044 = vld [vmem:[%s33 + $0x130] sm:$0xf]
        %v2045 = vld [vmem:[%s33 + $0x134] sm:$0xf]
        %v2046 = vld [vmem:[%s33 + $0x138] sm:$0xf]
        %v2047 = vld [vmem:[%s33 + $0x13c] sm:$0xf]
        %v2048 = vld [vmem:[%s33 + $0x140] sm:$0xf]
        %v2049 = vld [vmem:[%s33 + $0x144] sm:$0xf]
        %v2050 = vld [vmem:[%s33 + $0x148] sm:$0xf]
        %v2051 = vld [vmem:[%s33 + $0x14c] sm:$0xf]
        %v2052 = vld [vmem:[%s33 + $0x150] sm:$0xf]
        %v2053 = vld [vmem:[%s33 + $0x154] sm:$0xf]
        %v2054 = vld [vmem:[%s33 + $0x158] sm:$0xf]
        %v2055 = vld [vmem:[%s33 + $0x15c] sm:$0xf]
        %v2056 = vld [vmem:[%s33 + $0x160] sm:$0xf]
        %v2057 = vld [vmem:[%s33 + $0x164] sm:$0xf]
        %v2058 = vld [vmem:[%s33 + $0x168] sm:$0xf]
        %v2059 = vld [vmem:[%s33 + $0x16c] sm:$0xf]
        %v2060 = vld [vmem:[%s33 + $0x170] sm:$0xf]
        %v2061 = vld [vmem:[%s33 + $0x174] sm:$0xf]
        %v2062 = vld [vmem:[%s33 + $0x178] sm:$0xf]
        %v2063 = vld [vmem:[%s33 + $0x17c] sm:$0xf]
        %v2064 = vld [vmem:[%s33 + $0x180] sm:$0xf]
        %v2065 = vld [vmem:[%s33 + $0x184] sm:$0xf]
        %v2066 = vld [vmem:[%s33 + $0x188] sm:$0xf]
        %v2067 = vld [vmem:[%s33 + $0x18c] sm:$0xf]
        %v2068 = vld [vmem:[%s33 + $0x190] sm:$0xf]
        %v2069 = vld [vmem:[%s33 + $0x194] sm:$0xf]
        %v2070 = vld [vmem:[%s33 + $0x198] sm:$0xf]
        %v2071 = vld [vmem:[%s33 + $0x19c] sm:$0xf]
        %v2072 = vld [vmem:[%s33 + $0x1a0] sm:$0xf]
        %v2073 = vld [vmem:[%s33 + $0x1a4] sm:$0xf]
        %v2074 = vld [vmem:[%s33 + $0x1a8] sm:$0xf]
        %v2075 = vld [vmem:[%s33 + $0x1ac] sm:$0xf]
        %v2076 = vld [vmem:[%s33 + $0x1b0] sm:$0xf]
        %v2077 = vld [vmem:[%s33 + $0x1b4] sm:$0xf]
        %v2078 = vld [vmem:[%s33 + $0x1b8] sm:$0xf]
        %v2079 = vld [vmem:[%s33 + $0x1bc] sm:$0xf]
        %v2080 = vld [vmem:[%s33 + $0x1c0] sm:$0xf]
        %v2081 = vld [vmem:[%s33 + $0x1c4] sm:$0xf]
        %v2082 = vld [vmem:[%s33 + $0x1c8] sm:$0xf]
        %v2083 = vld [vmem:[%s33 + $0x1cc] sm:$0xf]
        %v2084 = vld [vmem:[%s33 + $0x1d0] sm:$0xf]
        %v2085 = vld [vmem:[%s33 + $0x1d4] sm:$0xf]
        %v2086 = vld [vmem:[%s33 + $0x1d8] sm:$0xf]
        %v2087 = vld [vmem:[%s33 + $0x1dc] sm:$0xf]
        %v2088 = vld [vmem:[%s33 + $0x1e0] sm:$0xf]
        %v2089 = vld [vmem:[%s33 + $0x1e4] sm:$0xf]
        %v2090 = vld [vmem:[%s33 + $0x1e8] sm:$0xf]
        %v2091 = vld [vmem:[%s33 + $0x1ec] sm:$0xf]
        %v2092 = vld [vmem:[%s33 + $0x1f0] sm:$0xf]
        %v2093 = vld [vmem:[%s33 + $0x1f4] sm:$0xf]
        %v2094 = vld [vmem:[%s33 + $0x1f8] sm:$0xf]
        %v2095 = vld [vmem:[%s33 + $0x1fc] sm:$0xf]
        %v2096 = vld [vmem:[%s33 + $0x200] sm:$0xf]
        %v2097 = vld [vmem:[%s33 + $0x204] sm:$0xf]
        %v2098 = vld [vmem:[%s33 + $0x208] sm:$0xf]
        %v2099 = vld [vmem:[%s33 + $0x20c] sm:$0xf]
        %v2100 = vld [vmem:[%s33 + $0x210] sm:$0xf]
        %v2101 = vld [vmem:[%s33 + $0x214] sm:$0xf]
        %v2102 = vld [vmem:[%s33 + $0x218] sm:$0xf]
        %v2103 = vld [vmem:[%s33 + $0x21c] sm:$0xf]
        %v2104 = vld [vmem:[%s33 + $0x220] sm:$0xf]
        %v2105 = vld [vmem:[%s33 + $0x224] sm:$0xf]
        %v2106 = vld [vmem:[%s33 + $0x228] sm:$0xf]
        %v2107 = vld [vmem:[%s33 + $0x22c] sm:$0xf]
        %v2108 = vld [vmem:[%s33 + $0x230] sm:$0xf]
        %v2109 = vld [vmem:[%s33 + $0x234] sm:$0xf]
        %v2110 = vld [vmem:[%s33 + $0x238] sm:$0xf]
        %v2111 = vld [vmem:[%s33 + $0x23c] sm:$0xf]
        %v2112 = vld [vmem:[%s33 + $0x240] sm:$0xf]
        %v2113 = vld [vmem:[%s33 + $0x244] sm:$0xf]
        %v2114 = vld [vmem:[%s33 + $0x248] sm:$0xf]
        %v2115 = vld [vmem:[%s33 + $0x24c] sm:$0xf]
        %v2116 = vld [vmem:[%s33 + $0x250] sm:$0xf]
        %v2117 = vld [vmem:[%s33 + $0x254] sm:$0xf]
        %v2118 = vld [vmem:[%s33 + $0x258] sm:$0xf]
        %v2119 = vld [vmem:[%s33 + $0x25c] sm:$0xf]
        %v2120 = vld [vmem:[%s33 + $0x260] sm:$0xf]
        %v2121 = vld [vmem:[%s33 + $0x264] sm:$0xf]
        %v2122 = vld [vmem:[%s33 + $0x268] sm:$0xf]
        %v2123 = vld [vmem:[%s33 + $0x26c] sm:$0xf]
        %v2124 = vld [vmem:[%s33 + $0x270] sm:$0xf]
        %v2125 = vld [vmem:[%s33 + $0x274] sm:$0xf]
        %v2126 = vld [vmem:[%s33 + $0x278] sm:$0xf]
        %v2127 = vld [vmem:[%s33 + $0x27c] sm:$0xf]
        %v2128 = vld [vmem:[%s33 + $0x280] sm:$0xf]
        %v2129 = vld [vmem:[%s33 + $0x284] sm:$0xf]
        %v2130 = vld [vmem:[%s33 + $0x288] sm:$0xf]
        %v2131 = vld [vmem:[%s33 + $0x28c] sm:$0xf]
        %v2132 = vld [vmem:[%s33 + $0x290] sm:$0xf]
        %v2133 = vld [vmem:[%s33 + $0x294] sm:$0xf]
        %v2134 = vld [vmem:[%s33 + $0x298] sm:$0xf]
        %v2135 = vld [vmem:[%s33 + $0x29c] sm:$0xf]
        %v2136 = vld [vmem:[%s33 + $0x2a0] sm:$0xf]
        %v2137 = vld [vmem:[%s33 + $0x2a4] sm:$0xf]
        %v2138 = vld [vmem:[%s33 + $0x2a8] sm:$0xf]
        %v2139 = vld [vmem:[%s33 + $0x2ac] sm:$0xf]
        %v2140 = vld [vmem:[%s33 + $0x2b0] sm:$0xf]
        %v2141 = vld [vmem:[%s33 + $0x2b4] sm:$0xf]
        %v2142 = vld [vmem:[%s33 + $0x2b8] sm:$0xf]
        %v2143 = vld [vmem:[%s33 + $0x2bc] sm:$0xf]
        %v2144 = vld [vmem:[%s33 + $0x2c0] sm:$0xf]
        %v2145 = vld [vmem:[%s33 + $0x2c4] sm:$0xf]
        %v2146 = vld [vmem:[%s33 + $0x2c8] sm:$0xf]
        %v2147 = vld [vmem:[%s33 + $0x2cc] sm:$0xf]
        %v2148 = vld [vmem:[%s33 + $0x2d0] sm:$0xf]
        %v2149 = vld [vmem:[%s33 + $0x2d4] sm:$0xf]
        %v2150 = vld [vmem:[%s33 + $0x2d8] sm:$0xf]
        %v2151 = vld [vmem:[%s33 + $0x2dc] sm:$0xf]
        %v2152 = vld [vmem:[%s33 + $0x2e0] sm:$0xf]
        %v2153 = vld [vmem:[%s33 + $0x2e4] sm:$0xf]
        %v2154 = vld [vmem:[%s33 + $0x2e8] sm:$0xf]
        %v2155 = vld [vmem:[%s33 + $0x2ec] sm:$0xf]
        %v2156 = vld [vmem:[%s33 + $0x2f0] sm:$0xf]
        %v2157 = vld [vmem:[%s33 + $0x2f4] sm:$0xf]
        %v2158 = vld [vmem:[%s33 + $0x2f8] sm:$0xf]
        %v2159 = vld [vmem:[%s33 + $0x2fc] sm:$0xf]
        %v2160 = vld [vmem:[%s33 + $0x300] sm:$0xf]
        %v2161 = vld [vmem:[%s33 + $0x304] sm:$0xf]
        %v2162 = vld [vmem:[%s33 + $0x308] sm:$0xf]
        %v2163 = vld [vmem:[%s33 + $0x30c] sm:$0xf]
        %v2164 = vld [vmem:[%s33 + $0x310] sm:$0xf]
        %v2165 = vld [vmem:[%s33 + $0x314] sm:$0xf]
        %v2166 = vld [vmem:[%s33 + $0x318] sm:$0xf]
        %v2167 = vld [vmem:[%s33 + $0x31c] sm:$0xf]
        %v2168 = vld [vmem:[%s33 + $0x320] sm:$0xf]
        %v2169 = vld [vmem:[%s33 + $0x324] sm:$0xf]
        %v2170 = vld [vmem:[%s33 + $0x328] sm:$0xf]
        %v2171 = vld [vmem:[%s33 + $0x32c] sm:$0xf]
        %v2172 = vld [vmem:[%s33 + $0x330] sm:$0xf]
        %v2173 = vld [vmem:[%s33 + $0x334] sm:$0xf]
        %v2174 = vld [vmem:[%s33 + $0x338] sm:$0xf]
        %v2175 = vld [vmem:[%s33 + $0x33c] sm:$0xf]
        %v2176 = vld [vmem:[%s33 + $0x340] sm:$0xf]
        %v2177 = vld [vmem:[%s33 + $0x344] sm:$0xf]
        %v2178 = vld [vmem:[%s33 + $0x348] sm:$0xf]
        %v2179 = vld [vmem:[%s33 + $0x34c] sm:$0xf]
        %v2180 = vld [vmem:[%s33 + $0x350] sm:$0xf]
        %v2181 = vld [vmem:[%s33 + $0x354] sm:$0xf]
        %v2182 = vld [vmem:[%s33 + $0x358] sm:$0xf]
        %v2183 = vld [vmem:[%s33 + $0x35c] sm:$0xf]
        %v2184 = vld [vmem:[%s33 + $0x360] sm:$0xf]
        %v2185 = vld [vmem:[%s33 + $0x364] sm:$0xf]
        %v2186 = vld [vmem:[%s33 + $0x368] sm:$0xf]
        %v2187 = vld [vmem:[%s33 + $0x36c] sm:$0xf]
        %v2188 = vld [vmem:[%s33 + $0x370] sm:$0xf]
        %v2189 = vld [vmem:[%s33 + $0x374] sm:$0xf]
        %v2190 = vld [vmem:[%s33 + $0x378] sm:$0xf]
        %v2191 = vld [vmem:[%s33 + $0x37c] sm:$0xf]
        %v2192 = vld [vmem:[%s33 + $0x380] sm:$0xf]
        %v2193 = vld [vmem:[%s33 + $0x384] sm:$0xf]
        %v2194 = vld [vmem:[%s33 + $0x388] sm:$0xf]
        %v2195 = vld [vmem:[%s33 + $0x38c] sm:$0xf]
        %v2196 = vld [vmem:[%s33 + $0x390] sm:$0xf]
        %v2197 = vld [vmem:[%s33 + $0x394] sm:$0xf]
        %v2198 = vld [vmem:[%s33 + $0x398] sm:$0xf]
        %v2199 = vld [vmem:[%s33 + $0x39c] sm:$0xf]
        %v2200 = vld [vmem:[%s33 + $0x3a0] sm:$0xf]
        %v2201 = vld [vmem:[%s33 + $0x3a4] sm:$0xf]
        %v2202 = vld [vmem:[%s33 + $0x3a8] sm:$0xf]
        %v2203 = vld [vmem:[%s33 + $0x3ac] sm:$0xf]
        %v2204 = vld [vmem:[%s33 + $0x3b0] sm:$0xf]
        %v2205 = vld [vmem:[%s33 + $0x3b4] sm:$0xf]
        %v2206 = vld [vmem:[%s33 + $0x3b8] sm:$0xf]
        %v2207 = vld [vmem:[%s33 + $0x3bc] sm:$0xf]
        %v2208 = vld [vmem:[%s33 + $0x3c0] sm:$0xf]
        %v2209 = vld [vmem:[%s33 + $0x3c4] sm:$0xf]
        %v2210 = vld [vmem:[%s33 + $0x3c8] sm:$0xf]
        %v2211 = vld [vmem:[%s33 + $0x3cc] sm:$0xf]
        %v2212 = vld [vmem:[%s33 + $0x3d0] sm:$0xf]
        %v2213 = vld [vmem:[%s33 + $0x3d4] sm:$0xf]
        %v2214 = vld [vmem:[%s33 + $0x3d8] sm:$0xf]
        %v2215 = vld [vmem:[%s33 + $0x3dc] sm:$0xf]
        %v2216 = vld [vmem:[%s33 + $0x3e0] sm:$0xf]
        %v2217 = vld [vmem:[%s33 + $0x3e4] sm:$0xf]
        %v2218 = vld [vmem:[%s33 + $0x3e8] sm:$0xf]
        %v2219 = vld [vmem:[%s33 + $0x3ec] sm:$0xf]
        %v2220 = vld [vmem:[%s33 + $0x3f0] sm:$0xf]
        %v2221 = vld [vmem:[%s33 + $0x3f4] sm:$0xf]
        %v2222 = vld [vmem:[%s33 + $0x3f8] sm:$0xf]
        %v2223 = vld [vmem:[%s33 + $0x3fc] sm:$0xf]
        %v2224 = vld [vmem:[%s35] sm:$0x1]
        %v2226 = vperm.slane %v2224, 0
        %v2484 = vunpack.c.l.b16 %v1968
        %v2485 = vunpack.c.l.b16 %v1969
        %v2486 = vunpack.c.l.b16 %v1970
        %v2487 = vunpack.c.l.b16 %v1971
        %v2488 = vunpack.c.l.b16 %v1972
        %v2489 = vunpack.c.l.b16 %v1973
        %v2490 = vunpack.c.l.b16 %v1974
        %v2491 = vunpack.c.l.b16 %v1975
        %v2492 = vunpack.c.l.b16 %v1976
        %v2493 = vunpack.c.l.b16 %v1977
        %v2494 = vunpack.c.l.b16 %v1978
        %v2495 = vunpack.c.l.b16 %v1979
        %v2496 = vunpack.c.l.b16 %v1980
        %v2497 = vunpack.c.l.b16 %v1981
        %v2498 = vunpack.c.l.b16 %v1982
        %v2499 = vunpack.c.l.b16 %v1983
        %v2500 = vunpack.c.l.b16 %v1984
        %v2501 = vunpack.c.l.b16 %v1985
        %v2502 = vunpack.c.l.b16 %v1986
        %v2503 = vunpack.c.l.b16 %v1987
        %v2504 = vunpack.c.l.b16 %v1988
        %v2505 = vunpack.c.l.b16 %v1989
        %v2506 = vunpack.c.l.b16 %v1990
        %v2507 = vunpack.c.l.b16 %v1991
        %v2508 = vunpack.c.l.b16 %v1992
        %v2509 = vunpack.c.l.b16 %v1993
        %v2510 = vunpack.c.l.b16 %v1994
        %v2511 = vunpack.c.l.b16 %v1995
        %v2512 = vunpack.c.l.b16 %v1996
        %v2513 = vunpack.c.l.b16 %v1997
        %v2514 = vunpack.c.l.b16 %v1998
        %v2515 = vunpack.c.l.b16 %v1999
        %v2516 = vunpack.c.l.b16 %v2000
        %v2517 = vunpack.c.l.b16 %v2001
        %v2518 = vunpack.c.l.b16 %v2002
        %v2519 = vunpack.c.l.b16 %v2003
        %v2520 = vunpack.c.l.b16 %v2004
        %v2521 = vunpack.c.l.b16 %v2005
        %v2522 = vunpack.c.l.b16 %v2006
        %v2523 = vunpack.c.l.b16 %v2007
        %v2524 = vunpack.c.l.b16 %v2008
        %v2525 = vunpack.c.l.b16 %v2009
        %v2526 = vunpack.c.l.b16 %v2010
        %v2527 = vunpack.c.l.b16 %v2011
        %v2528 = vunpack.c.l.b16 %v2012
        %v2529 = vunpack.c.l.b16 %v2013
        %v2530 = vunpack.c.l.b16 %v2014
        %v2531 = vunpack.c.l.b16 %v2015
        %v2532 = vunpack.c.l.b16 %v2016
        %v2533 = vunpack.c.l.b16 %v2017
        %v2534 = vunpack.c.l.b16 %v2018
        %v2535 = vunpack.c.l.b16 %v2019
        %v2536 = vunpack.c.l.b16 %v2020
        %v2537 = vunpack.c.l.b16 %v2021
        %v2538 = vunpack.c.l.b16 %v2022
        %v2539 = vunpack.c.l.b16 %v2023
        %v2540 = vunpack.c.l.b16 %v2024
        %v2541 = vunpack.c.l.b16 %v2025
        %v2542 = vunpack.c.l.b16 %v2026
        %v2543 = vunpack.c.l.b16 %v2027
        %v2544 = vunpack.c.l.b16 %v2028
        %v2545 = vunpack.c.l.b16 %v2029
        %v2546 = vunpack.c.l.b16 %v2030
        %v2547 = vunpack.c.l.b16 %v2031
        %v2548 = vunpack.c.l.b16 %v2032
        %v2549 = vunpack.c.l.b16 %v2033
        %v2550 = vunpack.c.l.b16 %v2034
        %v2551 = vunpack.c.l.b16 %v2035
        %v2552 = vunpack.c.l.b16 %v2036
        %v2553 = vunpack.c.l.b16 %v2037
        %v2554 = vunpack.c.l.b16 %v2038
        %v2555 = vunpack.c.l.b16 %v2039
        %v2556 = vunpack.c.l.b16 %v2040
        %v2557 = vunpack.c.l.b16 %v2041
        %v2558 = vunpack.c.l.b16 %v2042
        %v2559 = vunpack.c.l.b16 %v2043
        %v2560 = vunpack.c.l.b16 %v2044
        %v2561 = vunpack.c.l.b16 %v2045
        %v2562 = vunpack.c.l.b16 %v2046
        %v2563 = vunpack.c.l.b16 %v2047
        %v2564 = vunpack.c.l.b16 %v2048
        %v2565 = vunpack.c.l.b16 %v2049
        %v2566 = vunpack.c.l.b16 %v2050
        %v2567 = vunpack.c.l.b16 %v2051
        %v2568 = vunpack.c.l.b16 %v2052
        %v2569 = vunpack.c.l.b16 %v2053
        %v2570 = vunpack.c.l.b16 %v2054
        %v2571 = vunpack.c.l.b16 %v2055
        %v2572 = vunpack.c.l.b16 %v2056
        %v2573 = vunpack.c.l.b16 %v2057
        %v2574 = vunpack.c.l.b16 %v2058
        %v2575 = vunpack.c.l.b16 %v2059
        %v2576 = vunpack.c.l.b16 %v2060
        %v2577 = vunpack.c.l.b16 %v2061
        %v2578 = vunpack.c.l.b16 %v2062
        %v2579 = vunpack.c.l.b16 %v2063
        %v2580 = vunpack.c.l.b16 %v2064
        %v2581 = vunpack.c.l.b16 %v2065
        %v2582 = vunpack.c.l.b16 %v2066
        %v2583 = vunpack.c.l.b16 %v2067
        %v2584 = vunpack.c.l.b16 %v2068
        %v2585 = vunpack.c.l.b16 %v2069
        %v2586 = vunpack.c.l.b16 %v2070
        %v2587 = vunpack.c.l.b16 %v2071
        %v2588 = vunpack.c.l.b16 %v2072
        %v2589 = vunpack.c.l.b16 %v2073
        %v2590 = vunpack.c.l.b16 %v2074
        %v2591 = vunpack.c.l.b16 %v2075
        %v2592 = vunpack.c.l.b16 %v2076
        %v2593 = vunpack.c.l.b16 %v2077
        %v2594 = vunpack.c.l.b16 %v2078
        %v2595 = vunpack.c.l.b16 %v2079
        %v2596 = vunpack.c.l.b16 %v2080
        %v2597 = vunpack.c.l.b16 %v2081
        %v2598 = vunpack.c.l.b16 %v2082
        %v2599 = vunpack.c.l.b16 %v2083
        %v2600 = vunpack.c.l.b16 %v2084
        %v2601 = vunpack.c.l.b16 %v2085
        %v2602 = vunpack.c.l.b16 %v2086
        %v2603 = vunpack.c.l.b16 %v2087
        %v2604 = vunpack.c.l.b16 %v2088
        %v2605 = vunpack.c.l.b16 %v2089
        %v2606 = vunpack.c.l.b16 %v2090
        %v2607 = vunpack.c.l.b16 %v2091
        %v2608 = vunpack.c.l.b16 %v2092
        %v2609 = vunpack.c.l.b16 %v2093
        %v2610 = vunpack.c.l.b16 %v2094
        %v2611 = vunpack.c.l.b16 %v2095
        %v2612 = vunpack.c.l.b16 %v2096
        %v2613 = vunpack.c.l.b16 %v2097
        %v2614 = vunpack.c.l.b16 %v2098
        %v2615 = vunpack.c.l.b16 %v2099
        %v2616 = vunpack.c.l.b16 %v2100
        %v2617 = vunpack.c.l.b16 %v2101
        %v2618 = vunpack.c.l.b16 %v2102
        %v2619 = vunpack.c.l.b16 %v2103
        %v2620 = vunpack.c.l.b16 %v2104
        %v2621 = vunpack.c.l.b16 %v2105
        %v2622 = vunpack.c.l.b16 %v2106
        %v2623 = vunpack.c.l.b16 %v2107
        %v2624 = vunpack.c.l.b16 %v2108
        %v2625 = vunpack.c.l.b16 %v2109
        %v2626 = vunpack.c.l.b16 %v2110
        %v2627 = vunpack.c.l.b16 %v2111
        %v2628 = vunpack.c.l.b16 %v2112
        %v2629 = vunpack.c.l.b16 %v2113
        %v2630 = vunpack.c.l.b16 %v2114
        %v2631 = vunpack.c.l.b16 %v2115
        %v2632 = vunpack.c.l.b16 %v2116
        %v2633 = vunpack.c.l.b16 %v2117
        %v2634 = vunpack.c.l.b16 %v2118
        %v2635 = vunpack.c.l.b16 %v2119
        %v2636 = vunpack.c.l.b16 %v2120
        %v2637 = vunpack.c.l.b16 %v2121
        %v2638 = vunpack.c.l.b16 %v2122
        %v2639 = vunpack.c.l.b16 %v2123
        %v2640 = vunpack.c.l.b16 %v2124
        %v2641 = vunpack.c.l.b16 %v2125
        %v2642 = vunpack.c.l.b16 %v2126
        %v2643 = vunpack.c.l.b16 %v2127
        %v2644 = vunpack.c.l.b16 %v2128
        %v2645 = vunpack.c.l.b16 %v2129
        %v2646 = vunpack.c.l.b16 %v2130
        %v2647 = vunpack.c.l.b16 %v2131
        %v2648 = vunpack.c.l.b16 %v2132
        %v2649 = vunpack.c.l.b16 %v2133
        %v2650 = vunpack.c.l.b16 %v2134
        %v2651 = vunpack.c.l.b16 %v2135
        %v2652 = vunpack.c.l.b16 %v2136
        %v2653 = vunpack.c.l.b16 %v2137
        %v2654 = vunpack.c.l.b16 %v2138
        %v2655 = vunpack.c.l.b16 %v2139
        %v2656 = vunpack.c.l.b16 %v2140
        %v2657 = vunpack.c.l.b16 %v2141
        %v2658 = vunpack.c.l.b16 %v2142
        %v2659 = vunpack.c.l.b16 %v2143
        %v2660 = vunpack.c.l.b16 %v2144
        %v2661 = vunpack.c.l.b16 %v2145
        %v2662 = vunpack.c.l.b16 %v2146
        %v2663 = vunpack.c.l.b16 %v2147
        %v2664 = vunpack.c.l.b16 %v2148
        %v2665 = vunpack.c.l.b16 %v2149
        %v2666 = vunpack.c.l.b16 %v2150
        %v2667 = vunpack.c.l.b16 %v2151
        %v2668 = vunpack.c.l.b16 %v2152
        %v2669 = vunpack.c.l.b16 %v2153
        %v2670 = vunpack.c.l.b16 %v2154
        %v2671 = vunpack.c.l.b16 %v2155
        %v2672 = vunpack.c.l.b16 %v2156
        %v2673 = vunpack.c.l.b16 %v2157
        %v2674 = vunpack.c.l.b16 %v2158
        %v2675 = vunpack.c.l.b16 %v2159
        %v2676 = vunpack.c.l.b16 %v2160
        %v2677 = vunpack.c.l.b16 %v2161
        %v2678 = vunpack.c.l.b16 %v2162
        %v2679 = vunpack.c.l.b16 %v2163
        %v2680 = vunpack.c.l.b16 %v2164
        %v2681 = vunpack.c.l.b16 %v2165
        %v2682 = vunpack.c.l.b16 %v2166
        %v2683 = vunpack.c.l.b16 %v2167
        %v2684 = vunpack.c.l.b16 %v2168
        %v2685 = vunpack.c.l.b16 %v2169
        %v2686 = vunpack.c.l.b16 %v2170
        %v2687 = vunpack.c.l.b16 %v2171
        %v2688 = vunpack.c.l.b16 %v2172
        %v2689 = vunpack.c.l.b16 %v2173
        %v2690 = vunpack.c.l.b16 %v2174
        %v2691 = vunpack.c.l.b16 %v2175
        %v2692 = vunpack.c.l.b16 %v2176
        %v2693 = vunpack.c.l.b16 %v2177
        %v2694 = vunpack.c.l.b16 %v2178
        %v2695 = vunpack.c.l.b16 %v2179
        %v2696 = vunpack.c.l.b16 %v2180
        %v2697 = vunpack.c.l.b16 %v2181
        %v2698 = vunpack.c.l.b16 %v2182
        %v2699 = vunpack.c.l.b16 %v2183
        %v2700 = vunpack.c.l.b16 %v2184
        %v2701 = vunpack.c.l.b16 %v2185
        %v2702 = vunpack.c.l.b16 %v2186
        %v2703 = vunpack.c.l.b16 %v2187
        %v2704 = vunpack.c.l.b16 %v2188
        %v2705 = vunpack.c.l.b16 %v2189
        %v2706 = vunpack.c.l.b16 %v2190
        %v2707 = vunpack.c.l.b16 %v2191
        %v2708 = vunpack.c.l.b16 %v2192
        %v2709 = vunpack.c.l.b16 %v2193
        %v2710 = vunpack.c.l.b16 %v2194
        %v2711 = vunpack.c.l.b16 %v2195
        %v2712 = vunpack.c.l.b16 %v2196
        %v2713 = vunpack.c.l.b16 %v2197
        %v2714 = vunpack.c.l.b16 %v2198
        %v2715 = vunpack.c.l.b16 %v2199
        %v2716 = vunpack.c.l.b16 %v2200
        %v2717 = vunpack.c.l.b16 %v2201
        %v2718 = vunpack.c.l.b16 %v2202
        %v2719 = vunpack.c.l.b16 %v2203
        %v2720 = vunpack.c.l.b16 %v2204
        %v2721 = vunpack.c.l.b16 %v2205
        %v2722 = vunpack.c.l.b16 %v2206
        %v2723 = vunpack.c.l.b16 %v2207
        %v2724 = vunpack.c.l.b16 %v2208
        %v2725 = vunpack.c.l.b16 %v2209
        %v2726 = vunpack.c.l.b16 %v2210
        %v2727 = vunpack.c.l.b16 %v2211
        %v2728 = vunpack.c.l.b16 %v2212
        %v2729 = vunpack.c.l.b16 %v2213
        %v2730 = vunpack.c.l.b16 %v2214
        %v2731 = vunpack.c.l.b16 %v2215
        %v2732 = vunpack.c.l.b16 %v2216
        %v2733 = vunpack.c.l.b16 %v2217
        %v2734 = vunpack.c.l.b16 %v2218
        %v2735 = vunpack.c.l.b16 %v2219
        %v2736 = vunpack.c.l.b16 %v2220
        %v2737 = vunpack.c.l.b16 %v2221
        %v2738 = vunpack.c.l.b16 %v2222
        %v2739 = vunpack.c.l.b16 %v2223
        %v2740 = vpack.c.b16 %v2485, %v2484
        %v2741 = vpack.c.b16 %v2487, %v2486
        %v2742 = vpack.c.b16 %v2489, %v2488
        %v2743 = vpack.c.b16 %v2491, %v2490
        %v2744 = vpack.c.b16 %v2493, %v2492
        %v2745 = vpack.c.b16 %v2495, %v2494
        %v2746 = vpack.c.b16 %v2497, %v2496
        %v2747 = vpack.c.b16 %v2499, %v2498
        %v2748 = vpack.c.b16 %v2501, %v2500
        %v2749 = vpack.c.b16 %v2503, %v2502
        %v2750 = vpack.c.b16 %v2505, %v2504
        %v2751 = vpack.c.b16 %v2507, %v2506
        %v2752 = vpack.c.b16 %v2509, %v2508
        %v2753 = vpack.c.b16 %v2511, %v2510
        %v2754 = vpack.c.b16 %v2513, %v2512
        %v2755 = vpack.c.b16 %v2515, %v2514
        %v2756 = vpack.c.b16 %v2517, %v2516
        %v2757 = vpack.c.b16 %v2519, %v2518
        %v2758 = vpack.c.b16 %v2521, %v2520
        %v2759 = vpack.c.b16 %v2523, %v2522
        %v2760 = vpack.c.b16 %v2525, %v2524
        %v2761 = vpack.c.b16 %v2527, %v2526
        %v2762 = vpack.c.b16 %v2529, %v2528
        %v2763 = vpack.c.b16 %v2531, %v2530
        %v2764 = vpack.c.b16 %v2533, %v2532
        %v2765 = vpack.c.b16 %v2535, %v2534
        %v2766 = vpack.c.b16 %v2537, %v2536
        %v2767 = vpack.c.b16 %v2539, %v2538
        %v2768 = vpack.c.b16 %v2541, %v2540
        %v2769 = vpack.c.b16 %v2543, %v2542
        %v2770 = vpack.c.b16 %v2545, %v2544
        %v2771 = vpack.c.b16 %v2547, %v2546
        %v2772 = vpack.c.b16 %v2549, %v2548
        %v2773 = vpack.c.b16 %v2551, %v2550
        %v2774 = vpack.c.b16 %v2553, %v2552
        %v2775 = vpack.c.b16 %v2555, %v2554
        %v2776 = vpack.c.b16 %v2557, %v2556
        %v2777 = vpack.c.b16 %v2559, %v2558
        %v2778 = vpack.c.b16 %v2561, %v2560
        %v2779 = vpack.c.b16 %v2563, %v2562
        %v2780 = vpack.c.b16 %v2565, %v2564
        %v2781 = vpack.c.b16 %v2567, %v2566
        %v2782 = vpack.c.b16 %v2569, %v2568
        %v2783 = vpack.c.b16 %v2571, %v2570
        %v2784 = vpack.c.b16 %v2573, %v2572
        %v2785 = vpack.c.b16 %v2575, %v2574
        %v2786 = vpack.c.b16 %v2577, %v2576
        %v2787 = vpack.c.b16 %v2579, %v2578
        %v2788 = vpack.c.b16 %v2581, %v2580
        %v2789 = vpack.c.b16 %v2583, %v2582
        %v2790 = vpack.c.b16 %v2585, %v2584
        %v2791 = vpack.c.b16 %v2587, %v2586
        %v2792 = vpack.c.b16 %v2589, %v2588
        %v2793 = vpack.c.b16 %v2591, %v2590
        %v2794 = vpack.c.b16 %v2593, %v2592
        %v2795 = vpack.c.b16 %v2595, %v2594
        %v2796 = vpack.c.b16 %v2597, %v2596
        %v2797 = vpack.c.b16 %v2599, %v2598
        %v2798 = vpack.c.b16 %v2601, %v2600
        %v2799 = vpack.c.b16 %v2603, %v2602
        %v2800 = vpack.c.b16 %v2605, %v2604
        %v2801 = vpack.c.b16 %v2607, %v2606
        %v2802 = vpack.c.b16 %v2609, %v2608
        %v2803 = vpack.c.b16 %v2611, %v2610
        %v2804 = vpack.c.b16 %v2613, %v2612
        %v2805 = vpack.c.b16 %v2615, %v2614
        %v2806 = vpack.c.b16 %v2617, %v2616
        %v2807 = vpack.c.b16 %v2619, %v2618
        %v2808 = vpack.c.b16 %v2621, %v2620
        %v2809 = vpack.c.b16 %v2623, %v2622
        %v2810 = vpack.c.b16 %v2625, %v2624
        %v2811 = vpack.c.b16 %v2627, %v2626
        %v2812 = vpack.c.b16 %v2629, %v2628
        %v2813 = vpack.c.b16 %v2631, %v2630
        %v2814 = vpack.c.b16 %v2633, %v2632
        %v2815 = vpack.c.b16 %v2635, %v2634
        %v2816 = vpack.c.b16 %v2637, %v2636
        %v2817 = vpack.c.b16 %v2639, %v2638
        %v2818 = vpack.c.b16 %v2641, %v2640
        %v2819 = vpack.c.b16 %v2643, %v2642
        %v2820 = vpack.c.b16 %v2645, %v2644
        %v2821 = vpack.c.b16 %v2647, %v2646
        %v2822 = vpack.c.b16 %v2649, %v2648
        %v2823 = vpack.c.b16 %v2651, %v2650
        %v2824 = vpack.c.b16 %v2653, %v2652
        %v2825 = vpack.c.b16 %v2655, %v2654
        %v2826 = vpack.c.b16 %v2657, %v2656
        %v2827 = vpack.c.b16 %v2659, %v2658
        %v2828 = vpack.c.b16 %v2661, %v2660
        %v2829 = vpack.c.b16 %v2663, %v2662
        %v2830 = vpack.c.b16 %v2665, %v2664
        %v2831 = vpack.c.b16 %v2667, %v2666
        %v2832 = vpack.c.b16 %v2669, %v2668
        %v2833 = vpack.c.b16 %v2671, %v2670
        %v2834 = vpack.c.b16 %v2673, %v2672
        %v2835 = vpack.c.b16 %v2675, %v2674
        %v2836 = vpack.c.b16 %v2677, %v2676
        %v2837 = vpack.c.b16 %v2679, %v2678
        %v2838 = vpack.c.b16 %v2681, %v2680
        %v2839 = vpack.c.b16 %v2683, %v2682
        %v2840 = vpack.c.b16 %v2685, %v2684
        %v2841 = vpack.c.b16 %v2687, %v2686
        %v2842 = vpack.c.b16 %v2689, %v2688
        %v2843 = vpack.c.b16 %v2691, %v2690
        %v2844 = vpack.c.b16 %v2693, %v2692
        %v2845 = vpack.c.b16 %v2695, %v2694
        %v2846 = vpack.c.b16 %v2697, %v2696
        %v2847 = vpack.c.b16 %v2699, %v2698
        %v2848 = vpack.c.b16 %v2701, %v2700
        %v2849 = vpack.c.b16 %v2703, %v2702
        %v2850 = vpack.c.b16 %v2705, %v2704
        %v2851 = vpack.c.b16 %v2707, %v2706
        %v2852 = vpack.c.b16 %v2709, %v2708
        %v2853 = vpack.c.b16 %v2711, %v2710
        %v2854 = vpack.c.b16 %v2713, %v2712
        %v2855 = vpack.c.b16 %v2715, %v2714
        %v2856 = vpack.c.b16 %v2717, %v2716
        %v2857 = vpack.c.b16 %v2719, %v2718
        %v2858 = vpack.c.b16 %v2721, %v2720
        %v2859 = vpack.c.b16 %v2723, %v2722
        %v2860 = vpack.c.b16 %v2725, %v2724
        %v2861 = vpack.c.b16 %v2727, %v2726
        %v2862 = vpack.c.b16 %v2729, %v2728
        %v2863 = vpack.c.b16 %v2731, %v2730
        %v2864 = vpack.c.b16 %v2733, %v2732
        %v2865 = vpack.c.b16 %v2735, %v2734
        %v2866 = vpack.c.b16 %v2737, %v2736
        %v2867 = vpack.c.b16 %v2739, %v2738
        %2996 = vmatpush.bf16.msra.mxu0 %v2747
        %2997 = vmatpush.bf16.msra.mxu0 %v2746
        %2998 = vmatpush.bf16.msra.mxu0 %v2745
        %2999 = vmatpush.bf16.msra.mxu0 %v2744
        %3000 = vmatpush.bf16.msra.mxu0 %v2743
        %3001 = vmatpush.bf16.msra.mxu0 %v2742
        %3002 = vmatpush.bf16.msra.mxu0 %v2741
        %3003 = vmatpush.bf16.msra.mxu0 %v2740
        %3004 = vmatmul.bf16.gmra.mxu0 %v1952
        %v3005 = vpop.f32.mrf.mxu0
        %v3006 = vadd.f32 %v2226, %v3005
        %v3007 = vpop.f32.mrf.mxu0
        %3008 = vdwg.mxu0
        %3009 = vmatpush.bf16.msra.mxu0 %v2755
        %3010 = vmatpush.bf16.msra.mxu0 %v2754
        %3011 = vmatpush.bf16.msra.mxu0 %v2753
        %3012 = vmatpush.bf16.msra.mxu0 %v2752
        %3013 = vmatpush.bf16.msra.mxu0 %v2751
        %3014 = vmatpush.bf16.msra.mxu0 %v2750
        %3015 = vmatpush.bf16.msra.mxu0 %v2749
        %3016 = vmatpush.bf16.msra.mxu0 %v2748
        %3017 = vmatmul.bf16.gmra.mxu0 %v1953
        %v3018 = vpop.f32.mrf.mxu0
        %v3019 = vadd.f32 %v3006, %v3018
        %v3020 = vpop.f32.mrf.mxu0
        %3021 = vdwg.mxu0
        %3022 = vmatpush.bf16.msra.mxu0 %v2763
        %3023 = vmatpush.bf16.msra.mxu0 %v2762
        %3024 = vmatpush.bf16.msra.mxu0 %v2761
        %3025 = vmatpush.bf16.msra.mxu0 %v2760
        %3026 = vmatpush.bf16.msra.mxu0 %v2759
        %3027 = vmatpush.bf16.msra.mxu0 %v2758
        %3028 = vmatpush.bf16.msra.mxu0 %v2757
        %3029 = vmatpush.bf16.msra.mxu0 %v2756
        %3030 = vmatmul.bf16.gmra.mxu0 %v1954
        %v3031 = vpop.f32.mrf.mxu0
        %v3032 = vadd.f32 %v3019, %v3031
        %v3033 = vpop.f32.mrf.mxu0
        %3034 = vdwg.mxu0
        %3035 = vmatpush.bf16.msra.mxu0 %v2771
        %3036 = vmatpush.bf16.msra.mxu0 %v2770
        %3037 = vmatpush.bf16.msra.mxu0 %v2769
        %3038 = vmatpush.bf16.msra.mxu0 %v2768
        %3039 = vmatpush.bf16.msra.mxu0 %v2767
        %3040 = vmatpush.bf16.msra.mxu0 %v2766
        %3041 = vmatpush.bf16.msra.mxu0 %v2765
        %3042 = vmatpush.bf16.msra.mxu0 %v2764
        %3043 = vmatmul.bf16.gmra.mxu0 %v1955
        %v3044 = vpop.f32.mrf.mxu0
        %v3045 = vadd.f32 %v3032, %v3044
        %v3046 = vpop.f32.mrf.mxu0
        %3047 = vdwg.mxu0
        %3048 = vmatpush.bf16.msra.mxu0 %v2779
        %3049 = vmatpush.bf16.msra.mxu0 %v2778
        %3050 = vmatpush.bf16.msra.mxu0 %v2777
        %3051 = vmatpush.bf16.msra.mxu0 %v2776
        %3052 = vmatpush.bf16.msra.mxu0 %v2775
        %3053 = vmatpush.bf16.msra.mxu0 %v2774
        %3054 = vmatpush.bf16.msra.mxu0 %v2773
        %3055 = vmatpush.bf16.msra.mxu0 %v2772
        %3056 = vmatmul.bf16.gmra.mxu0 %v1956
        %v3057 = vpop.f32.mrf.mxu0
        %v3058 = vadd.f32 %v3045, %v3057
        %v3059 = vpop.f32.mrf.mxu0
        %3060 = vdwg.mxu0
        %3061 = vmatpush.bf16.msra.mxu0 %v2787
        %3062 = vmatpush.bf16.msra.mxu0 %v2786
        %3063 = vmatpush.bf16.msra.mxu0 %v2785
        %3064 = vmatpush.bf16.msra.mxu0 %v2784
        %3065 = vmatpush.bf16.msra.mxu0 %v2783
        %3066 = vmatpush.bf16.msra.mxu0 %v2782
        %3067 = vmatpush.bf16.msra.mxu0 %v2781
        %3068 = vmatpush.bf16.msra.mxu0 %v2780
        %3069 = vmatmul.bf16.gmra.mxu0 %v1957
        %v3070 = vpop.f32.mrf.mxu0
        %v3071 = vadd.f32 %v3058, %v3070
        %v3072 = vpop.f32.mrf.mxu0
        %3073 = vdwg.mxu0
        %3074 = vmatpush.bf16.msra.mxu0 %v2795
        %3075 = vmatpush.bf16.msra.mxu0 %v2794
        %3076 = vmatpush.bf16.msra.mxu0 %v2793
        %3077 = vmatpush.bf16.msra.mxu0 %v2792
        %3078 = vmatpush.bf16.msra.mxu0 %v2791
        %3079 = vmatpush.bf16.msra.mxu0 %v2790
        %3080 = vmatpush.bf16.msra.mxu0 %v2789
        %3081 = vmatpush.bf16.msra.mxu0 %v2788
        %3082 = vmatmul.bf16.gmra.mxu0 %v1958
        %v3083 = vpop.f32.mrf.mxu0
        %v3084 = vadd.f32 %v3071, %v3083
        %v3085 = vpop.f32.mrf.mxu0
        %3086 = vdwg.mxu0
        %3087 = vmatpush.bf16.msra.mxu0 %v2803
        %3088 = vmatpush.bf16.msra.mxu0 %v2802
        %3089 = vmatpush.bf16.msra.mxu0 %v2801
        %3090 = vmatpush.bf16.msra.mxu0 %v2800
        %3091 = vmatpush.bf16.msra.mxu0 %v2799
        %3092 = vmatpush.bf16.msra.mxu0 %v2798
        %3093 = vmatpush.bf16.msra.mxu0 %v2797
        %3094 = vmatpush.bf16.msra.mxu0 %v2796
        %3095 = vmatmul.bf16.gmra.mxu0 %v1959
        %v3096 = vpop.f32.mrf.mxu0
        %v3097 = vadd.f32 %v3084, %v3096
        %v3098 = vpop.f32.mrf.mxu0
        %3099 = vdwg.mxu0
        %3100 = vmatpush.bf16.msra.mxu0 %v2811
        %3101 = vmatpush.bf16.msra.mxu0 %v2810
        %3102 = vmatpush.bf16.msra.mxu0 %v2809
        %3103 = vmatpush.bf16.msra.mxu0 %v2808
        %3104 = vmatpush.bf16.msra.mxu0 %v2807
        %3105 = vmatpush.bf16.msra.mxu0 %v2806
        %3106 = vmatpush.bf16.msra.mxu0 %v2805
        %3107 = vmatpush.bf16.msra.mxu0 %v2804
        %3108 = vmatmul.bf16.gmra.mxu0 %v1960
        %v3109 = vpop.f32.mrf.mxu0
        %v3110 = vadd.f32 %v3097, %v3109
        %v3111 = vpop.f32.mrf.mxu0
        %3112 = vdwg.mxu0
        %3113 = vmatpush.bf16.msra.mxu0 %v2819
        %3114 = vmatpush.bf16.msra.mxu0 %v2818
        %3115 = vmatpush.bf16.msra.mxu0 %v2817
        %3116 = vmatpush.bf16.msra.mxu0 %v2816
        %3117 = vmatpush.bf16.msra.mxu0 %v2815
        %3118 = vmatpush.bf16.msra.mxu0 %v2814
        %3119 = vmatpush.bf16.msra.mxu0 %v2813
        %3120 = vmatpush.bf16.msra.mxu0 %v2812
        %3121 = vmatmul.bf16.gmra.mxu0 %v1961
        %v3122 = vpop.f32.mrf.mxu0
        %v3123 = vadd.f32 %v3110, %v3122
        %v3124 = vpop.f32.mrf.mxu0
        %3125 = vdwg.mxu0
        %3126 = vmatpush.bf16.msra.mxu0 %v2827
        %3127 = vmatpush.bf16.msra.mxu0 %v2826
        %3128 = vmatpush.bf16.msra.mxu0 %v2825
        %3129 = vmatpush.bf16.msra.mxu0 %v2824
        %3130 = vmatpush.bf16.msra.mxu0 %v2823
        %3131 = vmatpush.bf16.msra.mxu0 %v2822
        %3132 = vmatpush.bf16.msra.mxu0 %v2821
        %3133 = vmatpush.bf16.msra.mxu0 %v2820
        %3134 = vmatmul.bf16.gmra.mxu0 %v1962
        %v3135 = vpop.f32.mrf.mxu0
        %v3136 = vadd.f32 %v3123, %v3135
        %v3137 = vpop.f32.mrf.mxu0
        %3138 = vdwg.mxu0
        %3139 = vmatpush.bf16.msra.mxu0 %v2835
        %3140 = vmatpush.bf16.msra.mxu0 %v2834
        %3141 = vmatpush.bf16.msra.mxu0 %v2833
        %3142 = vmatpush.bf16.msra.mxu0 %v2832
        %3143 = vmatpush.bf16.msra.mxu0 %v2831
        %3144 = vmatpush.bf16.msra.mxu0 %v2830
        %3145 = vmatpush.bf16.msra.mxu0 %v2829
        %3146 = vmatpush.bf16.msra.mxu0 %v2828
        %3147 = vmatmul.bf16.gmra.mxu0 %v1963
        %v3148 = vpop.f32.mrf.mxu0
        %v3149 = vadd.f32 %v3136, %v3148
        %v3150 = vpop.f32.mrf.mxu0
        %3151 = vdwg.mxu0
        %3152 = vmatpush.bf16.msra.mxu0 %v2843
        %3153 = vmatpush.bf16.msra.mxu0 %v2842
        %3154 = vmatpush.bf16.msra.mxu0 %v2841
        %3155 = vmatpush.bf16.msra.mxu0 %v2840
        %3156 = vmatpush.bf16.msra.mxu0 %v2839
        %3157 = vmatpush.bf16.msra.mxu0 %v2838
        %3158 = vmatpush.bf16.msra.mxu0 %v2837
        %3159 = vmatpush.bf16.msra.mxu0 %v2836
        %3160 = vmatmul.bf16.gmra.mxu0 %v1964
        %v3161 = vpop.f32.mrf.mxu0
        %v3162 = vadd.f32 %v3149, %v3161
        %v3163 = vpop.f32.mrf.mxu0
        %3164 = vdwg.mxu0
        %3165 = vmatpush.bf16.msra.mxu0 %v2851
        %3166 = vmatpush.bf16.msra.mxu0 %v2850
        %3167 = vmatpush.bf16.msra.mxu0 %v2849
        %3168 = vmatpush.bf16.msra.mxu0 %v2848
        %3169 = vmatpush.bf16.msra.mxu0 %v2847
        %3170 = vmatpush.bf16.msra.mxu0 %v2846
        %3171 = vmatpush.bf16.msra.mxu0 %v2845
        %3172 = vmatpush.bf16.msra.mxu0 %v2844
        %3173 = vmatmul.bf16.gmra.mxu0 %v1965
        %v3174 = vpop.f32.mrf.mxu0
        %v3175 = vadd.f32 %v3162, %v3174
        %v3176 = vpop.f32.mrf.mxu0
        %3177 = vdwg.mxu0
        %3178 = vmatpush.bf16.msra.mxu0 %v2859
        %3179 = vmatpush.bf16.msra.mxu0 %v2858
        %3180 = vmatpush.bf16.msra.mxu0 %v2857
        %3181 = vmatpush.bf16.msra.mxu0 %v2856
        %3182 = vmatpush.bf16.msra.mxu0 %v2855
        %3183 = vmatpush.bf16.msra.mxu0 %v2854
        %3184 = vmatpush.bf16.msra.mxu0 %v2853
        %3185 = vmatpush.bf16.msra.mxu0 %v2852
        %3186 = vmatmul.bf16.gmra.mxu0 %v1966
        %v3187 = vpop.f32.mrf.mxu0
        %v3188 = vadd.f32 %v3175, %v3187
        %v3189 = vpop.f32.mrf.mxu0
        %3190 = vdwg.mxu0
        %3191 = vmatpush.bf16.msra.mxu0 %v2867
        %3192 = vmatpush.bf16.msra.mxu0 %v2866
        %3193 = vmatpush.bf16.msra.mxu0 %v2865
        %3194 = vmatpush.bf16.msra.mxu0 %v2864
        %3195 = vmatpush.bf16.msra.mxu0 %v2863
        %3196 = vmatpush.bf16.msra.mxu0 %v2862
        %3197 = vmatpush.bf16.msra.mxu0 %v2861
        %3198 = vmatpush.bf16.msra.mxu0 %v2860
        %3199 = vmatmul.bf16.gmra.mxu0 %v1967
        %v3200 = vpop.f32.mrf.mxu0
        %v3201 = vadd.f32 %v3188, %v3200
        %v3202 = vpop.f32.mrf.mxu0
        %3203 = vdwg.mxu0
        %v3204 = vadd.f32 %v1495, %v3201
        %v3205 = vld [vmem:[%s41] sm:$0x1]
        %v3206 = vld [vmem:[%s43] sm:$0x1]
        %v3207 = vsel %vm1262, %v3204, 0.0
        %3208 = vadd.xlane.f32.xlu0 %v3207
        %v3209 = vpop.xlane.xlu0 %3208
        %v3210 = vmul.f32 %v3209, %v1468
        %v3211 = vsub.f32 %v3204, %v3210
        %v3212 = vmul.f32 %v3211, %v3211
        %v3213 = vsel %vm1262, %v3212, 0.0
        %3214 = vadd.xlane.f32.xlu0 %v3213
        %v3215 = vpop.xlane.xlu0 %3214
        %v3216 = vmul.f32 %v3215, %v1468
        %v3217 = vadd.f32 %v3216, 1e-05
        %v3218 = vrsqrt.pop %v3217
        %v3219 = vmul.f32 %v3218, %v3217
        %v3220 = vmul.f32 %v3219, %v3218
        %v3221 = vmul.f32 0.5, %v3220
        %v3222 = vsub.f32 1.5, %v3221
        %v3223 = vmul.f32 %v3218, %v3222
        %vm3224 = vweird.f32 %v3217
        %vm3225 = vweird.f32 %v3218
        %vm3226 = vmor %vm3224, %vm3225
        %v3227 = vsel %vm3226, %v3218, %v3223
        %v3228 = vmul.f32 %v3211, %v3227
        %v3230 = vperm.slane %v3205, 0
        %v3232 = vmul.f32 %v3228, %v3230
        %v3234 = vperm.slane %v3206, 0
        %v3236 = vadd.f32 %v3232, %v3234
        %v3237 = vpack.c.bf16 %v3236, %v3236
        %s3238 = scalar_lea.vmem %s21, 48
        %v3239 = vld [vmem:[%s3238] sm:$0xf]
        %v3240 = vld [vmem:[%s3238 + $0x4] sm:$0xf]
        %v3241 = vld [vmem:[%s3238 + $0x8] sm:$0xf]
        %v3242 = vld [vmem:[%s3238 + $0xc] sm:$0xf]
        %s3243 = scalar_lea.vmem %s23, 3
        %v3244 = vld [vmem:[%s3243] sm:$0x1]
        %v3246 = vperm.slane %v3244, 0
        %v3252 = vunpack.c.l.b16 %v3239
        %v3253 = vunpack.c.l.b16 %v3240
        %v3254 = vunpack.c.l.b16 %v3241
        %v3255 = vunpack.c.l.b16 %v3242
        %v3256 = vpack.c.b16 %v3253, %v3252
        %v3257 = vpack.c.b16 %v3255, %v3254
        %v3261 = vsel %vm1262, %v3237, 0
        %3263 = vmatpush.bf16.msra.mxu0 0
        %3264 = vmatpush.bf16.msra.mxu0 0
        %3265 = vmatpush.bf16.msra.mxu0 0
        %3266 = vmatpush.bf16.msra.mxu0 0
        %3267 = vmatpush.bf16.msra.mxu0 0
        %3268 = vmatpush.bf16.msra.mxu0 0
        %3269 = vmatpush.bf16.msra.mxu0 %v3257
        %3270 = vmatpush.bf16.msra.mxu0 %v3256
        %3271 = vmatmul.bf16.gmra.mxu0 %v3261
        %v3272 = vpop.f32.mrf.mxu0
        %v3273 = vadd.f32 %v3246, %v3272
        %v3274 = vpop.f32.mrf.mxu0
        %3275 = vdwg.mxu0
        %s3276 = scalar_lea.vmem %s21, 64
        %v3277 = vld [vmem:[%s3276] sm:$0xf]
        %v3278 = vld [vmem:[%s3276 + $0x4] sm:$0xf]
        %v3279 = vld [vmem:[%s3276 + $0x8] sm:$0xf]
        %v3280 = vld [vmem:[%s3276 + $0xc] sm:$0xf]
        %s3281 = scalar_lea.vmem %s23, 4
        %v3282 = vld [vmem:[%s3281] sm:$0x1]
        %v3284 = vperm.slane %v3282, 0
        %v3290 = vunpack.c.l.b16 %v3277
        %v3291 = vunpack.c.l.b16 %v3278
        %v3292 = vunpack.c.l.b16 %v3279
        %v3293 = vunpack.c.l.b16 %v3280
        %v3294 = vpack.c.b16 %v3291, %v3290
        %v3295 = vpack.c.b16 %v3293, %v3292
        %3298 = vmatpush.bf16.msra.mxu0 0
        %3299 = vmatpush.bf16.msra.mxu0 0
        %3300 = vmatpush.bf16.msra.mxu0 0
        %3301 = vmatpush.bf16.msra.mxu0 0
        %3302 = vmatpush.bf16.msra.mxu0 0
        %3303 = vmatpush.bf16.msra.mxu0 0
        %3304 = vmatpush.bf16.msra.mxu0 %v3295
        %3305 = vmatpush.bf16.msra.mxu0 %v3294
        %3306 = vmatmul.bf16.gmra.mxu0 %v3261
        %v3307 = vpop.f32.mrf.mxu0
        %v3308 = vadd.f32 %v3284, %v3307
        %v3309 = vpop.f32.mrf.mxu0
        %3310 = vdwg.mxu0
        %s3311 = scalar_lea.vmem %s21, 80
        %v3312 = vld [vmem:[%s3311] sm:$0xf]
        %v3313 = vld [vmem:[%s3311 + $0x4] sm:$0xf]
        %v3314 = vld [vmem:[%s3311 + $0x8] sm:$0xf]
        %v3315 = vld [vmem:[%s3311 + $0xc] sm:$0xf]
        %s3316 = scalar_lea.vmem %s23, 5
        %v3317 = vld [vmem:[%s3316] sm:$0x1]
        %v3319 = vperm.slane %v3317, 0
        %v3325 = vunpack.c.l.b16 %v3312
        %v3326 = vunpack.c.l.b16 %v3313
        %v3327 = vunpack.c.l.b16 %v3314
        %v3328 = vunpack.c.l.b16 %v3315
        %v3329 = vpack.c.b16 %v3326, %v3325
        %v3330 = vpack.c.b16 %v3328, %v3327
        %3333 = vmatpush.bf16.msra.mxu0 0
        %3334 = vmatpush.bf16.msra.mxu0 0
        %3335 = vmatpush.bf16.msra.mxu0 0
        %3336 = vmatpush.bf16.msra.mxu0 0
        %3337 = vmatpush.bf16.msra.mxu0 0
        %3338 = vmatpush.bf16.msra.mxu0 0
        %3339 = vmatpush.bf16.msra.mxu0 %v3330
        %3340 = vmatpush.bf16.msra.mxu0 %v3329
        %3341 = vmatmul.bf16.gmra.mxu0 %v3261
        %v3342 = vpop.f32.mrf.mxu0
        %v3343 = vadd.f32 %v3319, %v3342
        %v3344 = vpop.f32.mrf.mxu0
        %3345 = vdwg.mxu0
        %v3346 = vpack.c.bf16 %v3273, %v3273
        %v3347 = vpack.c.bf16 %v3308, %v3308
        %v3349 = vsel %vm1262, %v3346, 0
        %v3352 = vsel %vm1262, %v3347, 0
        %3354 = vmatpush.bf16.xpose.msra.mxu0 0
        %3355 = vmatpush.bf16.xpose.msra.mxu0 0
        %3356 = vmatpush.bf16.xpose.msra.mxu0 0
        %3357 = vmatpush.bf16.xpose.msra.mxu0 0
        %3358 = vmatpush.bf16.xpose.msra.mxu0 0
        %3359 = vmatpush.bf16.xpose.msra.mxu0 0
        %3360 = vmatpush.bf16.xpose.msra.mxu0 0
        %3361 = vmatpush.bf16.xpose.msra.mxu0 %v3352
        %3362 = vmatmul.bf16.gmra.mxu0 %v3349
        %v3363 = vpop.f32.mrf.mxu0
        %v3364 = vadd.f32 0.0, %v3363
        %v3365 = vpop.f32.mrf.mxu0
        %3366 = vdwg.mxu0
        %v3367 = vmul.f32 %v3364, 0.17677669
        %v3368 = vadd.f32 %v3367, %v1172
        %v3369 = vsel %vm1372, %v3368, -inf
        %3370 = vmax.xlane.f32.xlu0 %v3369
        %v3371 = vpop.xlane.xlu0 %3370
        %v3372 = vsub.f32 %v3368, %v3371
        %v3373 = vmul.f32 %v3372, 1.442695
        %v3374 = vpow.pop %v3373
        %v3375 = vsel %vm1372, %v3374, 0.0
        %3376 = vadd.xlane.f32.xlu0 %v3375
        %v3377 = vpop.xlane.xlu0 %3376
        %v3378 = vrcp.pop %v3377
        %v3379 = vmul.f32 %v3377, %v3378
        %v3380 = vsub.f32 1.0, %v3379
        %v3381 = vmul.f32 %v3378, %v3380
        %v3382 = vadd.f32 %v3378, %v3381
        %vm3383 = vweird.f32 %v3377
        %vm3384 = vweird.f32 %v3378
        %vm3385 = vmor %vm3383, %vm3384
        %v3386 = vsel %vm3385, %v3378, %v3382
        %v3387 = vand.u32 2147483647, %v3377
        %vm3388 = vcmp.eq.f32.partialorder %v3387, 8.507059e+37
        %v3389 = vand.u32 %v3377, 2147483648
        %v3390 = vor.u32 1.1754944e-38, %v3389
        %v3391 = vsel %vm3388, %v3390, %v3386
        %v3392 = vmul.f32 %v3374, %v3391
        %v3393 = vpack.c.bf16 %v3392, %v3392
        %v3394 = vpack.c.bf16 %v3343, %v3343
        %v3396 = vsel %vm1372, %v3393, 0
        %v3399 = vsel %vm1402, %v3394, 0
        %3401 = vmatpush.bf16.msra.mxu0 0
        %3402 = vmatpush.bf16.msra.mxu0 0
        %3403 = vmatpush.bf16.msra.mxu0 0
        %3404 = vmatpush.bf16.msra.mxu0 0
        %3405 = vmatpush.bf16.msra.mxu0 0
        %3406 = vmatpush.bf16.msra.mxu0 0
        %3407 = vmatpush.bf16.msra.mxu0 0
        %3408 = vmatpush.bf16.msra.mxu0 %v3399
        %3409 = vmatmul.bf16.gmra.mxu0 %v3396
        %v3410 = vpop.f32.mrf.mxu0
        %v3411 = vadd.f32 0.0, %v3410
        %v3412 = vpop.f32.mrf.mxu0
        %3413 = vdwg.mxu0
        %v3414 = vpack.c.bf16 %v3411, %v3411
        %s3415 = scalar_lea.vmem %s25, 16
        %v3416 = vld [vmem:[%s3415] sm:$0xf]
        %v3417 = vld [vmem:[%s3415 + $0x4] sm:$0xf]
        %v3418 = vld [vmem:[%s3415 + $0x8] sm:$0xf]
        %v3419 = vld [vmem:[%s3415 + $0xc] sm:$0xf]
        %s3420 = scalar_lea.vmem %s27, 1
        %v3421 = vld [vmem:[%s3420] sm:$0x1]
        %v3423 = vperm.slane %v3421, 0
        %v3429 = vunpack.c.l.b16 %v3416
        %v3430 = vunpack.c.l.b16 %v3417
        %v3431 = vunpack.c.l.b16 %v3418
        %v3432 = vunpack.c.l.b16 %v3419
        %v3433 = vpack.c.b16 %v3430, %v3429
        %v3434 = vpack.c.b16 %v3432, %v3431
        %v3438 = vsel %vm1262, %v3414, 0
        %3440 = vmatpush.bf16.msra.mxu0 0
        %3441 = vmatpush.bf16.msra.mxu0 0
        %3442 = vmatpush.bf16.msra.mxu0 0
        %3443 = vmatpush.bf16.msra.mxu0 0
        %3444 = vmatpush.bf16.msra.mxu0 0
        %3445 = vmatpush.bf16.msra.mxu0 0
        %3446 = vmatpush.bf16.msra.mxu0 %v3434
        %3447 = vmatpush.bf16.msra.mxu0 %v3433
        %3448 = vmatmul.bf16.gmra.mxu0 %v3438
        %v3449 = vpop.f32.mrf.mxu0
        %v3450 = vadd.f32 %v3423, %v3449
        %v3451 = vpop.f32.mrf.mxu0
        %3452 = vdwg.mxu0
        %v3453 = vadd.f32 %v3236, %v3450
        %s3454 = scalar_lea.vmem %s37, 1
        %v3455 = vld [vmem:[%s3454] sm:$0x1]
        %s3456 = scalar_lea.vmem %s39, 1
        %v3457 = vld [vmem:[%s3456] sm:$0x1]
        %v3458 = vsel %vm1262, %v3453, 0.0
        %3459 = vadd.xlane.f32.xlu0 %v3458
        %v3460 = vpop.xlane.xlu0 %3459
        %v3461 = vmul.f32 %v3460, %v1468
        %v3462 = vsub.f32 %v3453, %v3461
        %v3463 = vmul.f32 %v3462, %v3462
        %v3464 = vsel %vm1262, %v3463, 0.0
        %3465 = vadd.xlane.f32.xlu0 %v3464
        %v3466 = vpop.xlane.xlu0 %3465
        %v3467 = vmul.f32 %v3466, %v1468
        %v3468 = vadd.f32 %v3467, 1e-05
        %v3469 = vrsqrt.pop %v3468
        %v3470 = vmul.f32 %v3469, %v3468
        %v3471 = vmul.f32 %v3470, %v3469
        %v3472 = vmul.f32 0.5, %v3471
        %v3473 = vsub.f32 1.5, %v3472
        %v3474 = vmul.f32 %v3469, %v3473
        %vm3475 = vweird.f32 %v3468
        %vm3476 = vweird.f32 %v3469
        %vm3477 = vmor %vm3475, %vm3476
        %v3478 = vsel %vm3477, %v3469, %v3474
        %v3479 = vmul.f32 %v3462, %v3478
        %v3481 = vperm.slane %v3455, 0
        %v3483 = vmul.f32 %v3479, %v3481
        %v3485 = vperm.slane %v3457, 0
        %v3487 = vadd.f32 %v3483, %v3485
        %v3488 = vpack.c.bf16 %v3487, %v3487
        %s3489 = scalar_lea.vmem %s29, 256
        %v3490 = vld [vmem:[%s3489] sm:$0xff]
        %v3491 = vld [vmem:[%s3489 + $0x8] sm:$0xff]
        %v3492 = vld [vmem:[%s3489 + $0x10] sm:$0xff]
        %v3493 = vld [vmem:[%s3489 + $0x18] sm:$0xff]
        %v3494 = vld [vmem:[%s3489 + $0x20] sm:$0xff]
        %v3495 = vld [vmem:[%s3489 + $0x28] sm:$0xff]
        %v3496 = vld [vmem:[%s3489 + $0x30] sm:$0xff]
        %v3497 = vld [vmem:[%s3489 + $0x38] sm:$0xff]
        %v3498 = vld [vmem:[%s3489 + $0x40] sm:$0xff]
        %v3499 = vld [vmem:[%s3489 + $0x48] sm:$0xff]
        %v3500 = vld [vmem:[%s3489 + $0x50] sm:$0xff]
        %v3501 = vld [vmem:[%s3489 + $0x58] sm:$0xff]
        %v3502 = vld [vmem:[%s3489 + $0x60] sm:$0xff]
        %v3503 = vld [vmem:[%s3489 + $0x68] sm:$0xff]
        %v3504 = vld [vmem:[%s3489 + $0x70] sm:$0xff]
        %v3505 = vld [vmem:[%s3489 + $0x78] sm:$0xff]
        %v3506 = vld [vmem:[%s3489 + $0x80] sm:$0xff]
        %v3507 = vld [vmem:[%s3489 + $0x88] sm:$0xff]
        %v3508 = vld [vmem:[%s3489 + $0x90] sm:$0xff]
        %v3509 = vld [vmem:[%s3489 + $0x98] sm:$0xff]
        %v3510 = vld [vmem:[%s3489 + $0xa0] sm:$0xff]
        %v3511 = vld [vmem:[%s3489 + $0xa8] sm:$0xff]
        %v3512 = vld [vmem:[%s3489 + $0xb0] sm:$0xff]
        %v3513 = vld [vmem:[%s3489 + $0xb8] sm:$0xff]
        %v3514 = vld [vmem:[%s3489 + $0xc0] sm:$0xff]
        %v3515 = vld [vmem:[%s3489 + $0xc8] sm:$0xff]
        %v3516 = vld [vmem:[%s3489 + $0xd0] sm:$0xff]
        %v3517 = vld [vmem:[%s3489 + $0xd8] sm:$0xff]
        %v3518 = vld [vmem:[%s3489 + $0xe0] sm:$0xff]
        %v3519 = vld [vmem:[%s3489 + $0xe8] sm:$0xff]
        %v3520 = vld [vmem:[%s3489 + $0xf0] sm:$0xff]
        %v3521 = vld [vmem:[%s3489 + $0xf8] sm:$0xff]
        %s3522 = scalar_lea.vmem %s31, 16
        %v3523 = vld [vmem:[%s3522] sm:$0xff]
        %v3524 = vld [vmem:[%s3522 + $0x8] sm:$0xff]
        %v3527 = vperm.slane %v3523, 0
        %v3528 = vperm.slane %v3523, 1
        %v3529 = vperm.slane %v3523, 2
        %v3530 = vperm.slane %v3523, 3
        %v3531 = vperm.slane %v3523, 4
        %v3532 = vperm.slane %v3523, 5
        %v3533 = vperm.slane %v3523, 6
        %v3534 = vperm.slane %v3523, 7
        %v3535 = vperm.slane %v3524, 0
        %v3536 = vperm.slane %v3524, 1
        %v3537 = vperm.slane %v3524, 2
        %v3538 = vperm.slane %v3524, 3
        %v3539 = vperm.slane %v3524, 4
        %v3540 = vperm.slane %v3524, 5
        %v3541 = vperm.slane %v3524, 6
        %v3542 = vperm.slane %v3524, 7
        %v3591 = vunpack.c.l.b16 %v3490
        %v3592 = vunpack.c.h.b16 %v3490
        %v3593 = vunpack.c.l.b16 %v3491
        %v3594 = vunpack.c.h.b16 %v3491
        %v3595 = vunpack.c.l.b16 %v3492
        %v3596 = vunpack.c.h.b16 %v3492
        %v3597 = vunpack.c.l.b16 %v3493
        %v3598 = vunpack.c.h.b16 %v3493
        %v3599 = vunpack.c.l.b16 %v3494
        %v3600 = vunpack.c.h.b16 %v3494
        %v3601 = vunpack.c.l.b16 %v3495
        %v3602 = vunpack.c.h.b16 %v3495
        %v3603 = vunpack.c.l.b16 %v3496
        %v3604 = vunpack.c.h.b16 %v3496
        %v3605 = vunpack.c.l.b16 %v3497
        %v3606 = vunpack.c.h.b16 %v3497
        %v3607 = vunpack.c.l.b16 %v3498
        %v3608 = vunpack.c.h.b16 %v3498
        %v3609 = vunpack.c.l.b16 %v3499
        %v3610 = vunpack.c.h.b16 %v3499
        %v3611 = vunpack.c.l.b16 %v3500
        %v3612 = vunpack.c.h.b16 %v3500
        %v3613 = vunpack.c.l.b16 %v3501
        %v3614 = vunpack.c.h.b16 %v3501
        %v3615 = vunpack.c.l.b16 %v3502
        %v3616 = vunpack.c.h.b16 %v3502
        %v3617 = vunpack.c.l.b16 %v3503
        %v3618 = vunpack.c.h.b16 %v3503
        %v3619 = vunpack.c.l.b16 %v3504
        %v3620 = vunpack.c.h.b16 %v3504
        %v3621 = vunpack.c.l.b16 %v3505
        %v3622 = vunpack.c.h.b16 %v3505
        %v3623 = vunpack.c.l.b16 %v3506
        %v3624 = vunpack.c.h.b16 %v3506
        %v3625 = vunpack.c.l.b16 %v3507
        %v3626 = vunpack.c.h.b16 %v3507
        %v3627 = vunpack.c.l.b16 %v3508
        %v3628 = vunpack.c.h.b16 %v3508
        %v3629 = vunpack.c.l.b16 %v3509
        %v3630 = vunpack.c.h.b16 %v3509
        %v3631 = vunpack.c.l.b16 %v3510
        %v3632 = vunpack.c.h.b16 %v3510
        %v3633 = vunpack.c.l.b16 %v3511
        %v3634 = vunpack.c.h.b16 %v3511
        %v3635 = vunpack.c.l.b16 %v3512
        %v3636 = vunpack.c.h.b16 %v3512
        %v3637 = vunpack.c.l.b16 %v3513
        %v3638 = vunpack.c.h.b16 %v3513
        %v3639 = vunpack.c.l.b16 %v3514
        %v3640 = vunpack.c.h.b16 %v3514
        %v3641 = vunpack.c.l.b16 %v3515
        %v3642 = vunpack.c.h.b16 %v3515
        %v3643 = vunpack.c.l.b16 %v3516
        %v3644 = vunpack.c.h.b16 %v3516
        %v3645 = vunpack.c.l.b16 %v3517
        %v3646 = vunpack.c.h.b16 %v3517
        %v3647 = vunpack.c.l.b16 %v3518
        %v3648 = vunpack.c.h.b16 %v3518
        %v3649 = vunpack.c.l.b16 %v3519
        %v3650 = vunpack.c.h.b16 %v3519
        %v3651 = vunpack.c.l.b16 %v3520
        %v3652 = vunpack.c.h.b16 %v3520
        %v3653 = vunpack.c.l.b16 %v3521
        %v3654 = vunpack.c.h.b16 %v3521
        %v3655 = vpack.c.b16 %v3607, %v3591
        %v3656 = vpack.c.b16 %v3608, %v3592
        %v3657 = vpack.c.b16 %v3609, %v3593
        %v3658 = vpack.c.b16 %v3610, %v3594
        %v3659 = vpack.c.b16 %v3611, %v3595
        %v3660 = vpack.c.b16 %v3612, %v3596
        %v3661 = vpack.c.b16 %v3613, %v3597
        %v3662 = vpack.c.b16 %v3614, %v3598
        %v3663 = vpack.c.b16 %v3615, %v3599
        %v3664 = vpack.c.b16 %v3616, %v3600
        %v3665 = vpack.c.b16 %v3617, %v3601
        %v3666 = vpack.c.b16 %v3618, %v3602
        %v3667 = vpack.c.b16 %v3619, %v3603
        %v3668 = vpack.c.b16 %v3620, %v3604
        %v3669 = vpack.c.b16 %v3621, %v3605
        %v3670 = vpack.c.b16 %v3622, %v3606
        %v3671 = vpack.c.b16 %v3639, %v3623
        %v3672 = vpack.c.b16 %v3640, %v3624
        %v3673 = vpack.c.b16 %v3641, %v3625
        %v3674 = vpack.c.b16 %v3642, %v3626
        %v3675 = vpack.c.b16 %v3643, %v3627
        %v3676 = vpack.c.b16 %v3644, %v3628
        %v3677 = vpack.c.b16 %v3645, %v3629
        %v3678 = vpack.c.b16 %v3646, %v3630
        %v3679 = vpack.c.b16 %v3647, %v3631
        %v3680 = vpack.c.b16 %v3648, %v3632
        %v3681 = vpack.c.b16 %v3649, %v3633
        %v3682 = vpack.c.b16 %v3650, %v3634
        %v3683 = vpack.c.b16 %v3651, %v3635
        %v3684 = vpack.c.b16 %v3652, %v3636
        %v3685 = vpack.c.b16 %v3653, %v3637
        %v3686 = vpack.c.b16 %v3654, %v3638
        %v3720 = vsel %vm1262, %v3488, 0
        %3722 = vmatpush.bf16.msra.mxu0 0
        %3723 = vmatpush.bf16.msra.mxu0 0
        %3724 = vmatpush.bf16.msra.mxu0 0
        %3725 = vmatpush.bf16.msra.mxu0 0
        %3726 = vmatpush.bf16.msra.mxu0 0
        %3727 = vmatpush.bf16.msra.mxu0 0
        %3728 = vmatpush.bf16.msra.mxu0 %v3671
        %3729 = vmatpush.bf16.msra.mxu0 %v3655
        %3730 = vmatmul.bf16.gmra.mxu0 %v3720
        %v3731 = vpop.f32.mrf.mxu0
        %v3732 = vadd.f32 %v3527, %v3731
        %v3733 = vpop.f32.mrf.mxu0
        %3734 = vdwg.mxu0
        %3735 = vmatpush.bf16.msra.mxu0 0
        %3736 = vmatpush.bf16.msra.mxu0 0
        %3737 = vmatpush.bf16.msra.mxu0 0
        %3738 = vmatpush.bf16.msra.mxu0 0
        %3739 = vmatpush.bf16.msra.mxu0 0
        %3740 = vmatpush.bf16.msra.mxu0 0
        %3741 = vmatpush.bf16.msra.mxu0 %v3672
        %3742 = vmatpush.bf16.msra.mxu0 %v3656
        %3743 = vmatmul.bf16.gmra.mxu0 %v3720
        %v3744 = vpop.f32.mrf.mxu0
        %v3745 = vadd.f32 %v3528, %v3744
        %v3746 = vpop.f32.mrf.mxu0
        %3747 = vdwg.mxu0
        %3748 = vmatpush.bf16.msra.mxu0 0
        %3749 = vmatpush.bf16.msra.mxu0 0
        %3750 = vmatpush.bf16.msra.mxu0 0
        %3751 = vmatpush.bf16.msra.mxu0 0
        %3752 = vmatpush.bf16.msra.mxu0 0
        %3753 = vmatpush.bf16.msra.mxu0 0
        %3754 = vmatpush.bf16.msra.mxu0 %v3673
        %3755 = vmatpush.bf16.msra.mxu0 %v3657
        %3756 = vmatmul.bf16.gmra.mxu0 %v3720
        %v3757 = vpop.f32.mrf.mxu0
        %v3758 = vadd.f32 %v3529, %v3757
        %v3759 = vpop.f32.mrf.mxu0
        %3760 = vdwg.mxu0
        %3761 = vmatpush.bf16.msra.mxu0 0
        %3762 = vmatpush.bf16.msra.mxu0 0
        %3763 = vmatpush.bf16.msra.mxu0 0
        %3764 = vmatpush.bf16.msra.mxu0 0
        %3765 = vmatpush.bf16.msra.mxu0 0
        %3766 = vmatpush.bf16.msra.mxu0 0
        %3767 = vmatpush.bf16.msra.mxu0 %v3674
        %3768 = vmatpush.bf16.msra.mxu0 %v3658
        %3769 = vmatmul.bf16.gmra.mxu0 %v3720
        %v3770 = vpop.f32.mrf.mxu0
        %v3771 = vadd.f32 %v3530, %v3770
        %v3772 = vpop.f32.mrf.mxu0
        %3773 = vdwg.mxu0
        %3774 = vmatpush.bf16.msra.mxu0 0
        %3775 = vmatpush.bf16.msra.mxu0 0
        %3776 = vmatpush.bf16.msra.mxu0 0
        %3777 = vmatpush.bf16.msra.mxu0 0
        %3778 = vmatpush.bf16.msra.mxu0 0
        %3779 = vmatpush.bf16.msra.mxu0 0
        %3780 = vmatpush.bf16.msra.mxu0 %v3675
        %3781 = vmatpush.bf16.msra.mxu0 %v3659
        %3782 = vmatmul.bf16.gmra.mxu0 %v3720
        %v3783 = vpop.f32.mrf.mxu0
        %v3784 = vadd.f32 %v3531, %v3783
        %v3785 = vpop.f32.mrf.mxu0
        %3786 = vdwg.mxu0
        %3787 = vmatpush.bf16.msra.mxu0 0
        %3788 = vmatpush.bf16.msra.mxu0 0
        %3789 = vmatpush.bf16.msra.mxu0 0
        %3790 = vmatpush.bf16.msra.mxu0 0
        %3791 = vmatpush.bf16.msra.mxu0 0
        %3792 = vmatpush.bf16.msra.mxu0 0
        %3793 = vmatpush.bf16.msra.mxu0 %v3676
        %3794 = vmatpush.bf16.msra.mxu0 %v3660
        %3795 = vmatmul.bf16.gmra.mxu0 %v3720
        %v3796 = vpop.f32.mrf.mxu0
        %v3797 = vadd.f32 %v3532, %v3796
        %v3798 = vpop.f32.mrf.mxu0
        %3799 = vdwg.mxu0
        %3800 = vmatpush.bf16.msra.mxu0 0
        %3801 = vmatpush.bf16.msra.mxu0 0
        %3802 = vmatpush.bf16.msra.mxu0 0
        %3803 = vmatpush.bf16.msra.mxu0 0
        %3804 = vmatpush.bf16.msra.mxu0 0
        %3805 = vmatpush.bf16.msra.mxu0 0
        %3806 = vmatpush.bf16.msra.mxu0 %v3677
        %3807 = vmatpush.bf16.msra.mxu0 %v3661
        %3808 = vmatmul.bf16.gmra.mxu0 %v3720
        %v3809 = vpop.f32.mrf.mxu0
        %v3810 = vadd.f32 %v3533, %v3809
        %v3811 = vpop.f32.mrf.mxu0
        %3812 = vdwg.mxu0
        %3813 = vmatpush.bf16.msra.mxu0 0
        %3814 = vmatpush.bf16.msra.mxu0 0
        %3815 = vmatpush.bf16.msra.mxu0 0
        %3816 = vmatpush.bf16.msra.mxu0 0
        %3817 = vmatpush.bf16.msra.mxu0 0
        %3818 = vmatpush.bf16.msra.mxu0 0
        %3819 = vmatpush.bf16.msra.mxu0 %v3678
        %3820 = vmatpush.bf16.msra.mxu0 %v3662
        %3821 = vmatmul.bf16.gmra.mxu0 %v3720
        %v3822 = vpop.f32.mrf.mxu0
        %v3823 = vadd.f32 %v3534, %v3822
        %v3824 = vpop.f32.mrf.mxu0
        %3825 = vdwg.mxu0
        %3826 = vmatpush.bf16.msra.mxu0 0
        %3827 = vmatpush.bf16.msra.mxu0 0
        %3828 = vmatpush.bf16.msra.mxu0 0
        %3829 = vmatpush.bf16.msra.mxu0 0
        %3830 = vmatpush.bf16.msra.mxu0 0
        %3831 = vmatpush.bf16.msra.mxu0 0
        %3832 = vmatpush.bf16.msra.mxu0 %v3679
        %3833 = vmatpush.bf16.msra.mxu0 %v3663
        %3834 = vmatmul.bf16.gmra.mxu0 %v3720
        %v3835 = vpop.f32.mrf.mxu0
        %v3836 = vadd.f32 %v3535, %v3835
        %v3837 = vpop.f32.mrf.mxu0
        %3838 = vdwg.mxu0
        %3839 = vmatpush.bf16.msra.mxu0 0
        %3840 = vmatpush.bf16.msra.mxu0 0
        %3841 = vmatpush.bf16.msra.mxu0 0
        %3842 = vmatpush.bf16.msra.mxu0 0
        %3843 = vmatpush.bf16.msra.mxu0 0
        %3844 = vmatpush.bf16.msra.mxu0 0
        %3845 = vmatpush.bf16.msra.mxu0 %v3680
        %3846 = vmatpush.bf16.msra.mxu0 %v3664
        %3847 = vmatmul.bf16.gmra.mxu0 %v3720
        %v3848 = vpop.f32.mrf.mxu0
        %v3849 = vadd.f32 %v3536, %v3848
        %v3850 = vpop.f32.mrf.mxu0
        %3851 = vdwg.mxu0
        %3852 = vmatpush.bf16.msra.mxu0 0
        %3853 = vmatpush.bf16.msra.mxu0 0
        %3854 = vmatpush.bf16.msra.mxu0 0
        %3855 = vmatpush.bf16.msra.mxu0 0
        %3856 = vmatpush.bf16.msra.mxu0 0
        %3857 = vmatpush.bf16.msra.mxu0 0
        %3858 = vmatpush.bf16.msra.mxu0 %v3681
        %3859 = vmatpush.bf16.msra.mxu0 %v3665
        %3860 = vmatmul.bf16.gmra.mxu0 %v3720
        %v3861 = vpop.f32.mrf.mxu0
        %v3862 = vadd.f32 %v3537, %v3861
        %v3863 = vpop.f32.mrf.mxu0
        %3864 = vdwg.mxu0
        %3865 = vmatpush.bf16.msra.mxu0 0
        %3866 = vmatpush.bf16.msra.mxu0 0
        %3867 = vmatpush.bf16.msra.mxu0 0
        %3868 = vmatpush.bf16.msra.mxu0 0
        %3869 = vmatpush.bf16.msra.mxu0 0
        %3870 = vmatpush.bf16.msra.mxu0 0
        %3871 = vmatpush.bf16.msra.mxu0 %v3682
        %3872 = vmatpush.bf16.msra.mxu0 %v3666
        %3873 = vmatmul.bf16.gmra.mxu0 %v3720
        %v3874 = vpop.f32.mrf.mxu0
        %v3875 = vadd.f32 %v3538, %v3874
        %v3876 = vpop.f32.mrf.mxu0
        %3877 = vdwg.mxu0
        %3878 = vmatpush.bf16.msra.mxu0 0
        %3879 = vmatpush.bf16.msra.mxu0 0
        %3880 = vmatpush.bf16.msra.mxu0 0
        %3881 = vmatpush.bf16.msra.mxu0 0
        %3882 = vmatpush.bf16.msra.mxu0 0
        %3883 = vmatpush.bf16.msra.mxu0 0
        %3884 = vmatpush.bf16.msra.mxu0 %v3683
        %3885 = vmatpush.bf16.msra.mxu0 %v3667
        %3886 = vmatmul.bf16.gmra.mxu0 %v3720
        %v3887 = vpop.f32.mrf.mxu0
        %v3888 = vadd.f32 %v3539, %v3887
        %v3889 = vpop.f32.mrf.mxu0
        %3890 = vdwg.mxu0
        %3891 = vmatpush.bf16.msra.mxu0 0
        %3892 = vmatpush.bf16.msra.mxu0 0
        %3893 = vmatpush.bf16.msra.mxu0 0
        %3894 = vmatpush.bf16.msra.mxu0 0
        %3895 = vmatpush.bf16.msra.mxu0 0
        %3896 = vmatpush.bf16.msra.mxu0 0
        %3897 = vmatpush.bf16.msra.mxu0 %v3684
        %3898 = vmatpush.bf16.msra.mxu0 %v3668
        %3899 = vmatmul.bf16.gmra.mxu0 %v3720
        %v3900 = vpop.f32.mrf.mxu0
        %v3901 = vadd.f32 %v3540, %v3900
        %v3902 = vpop.f32.mrf.mxu0
        %3903 = vdwg.mxu0
        %3904 = vmatpush.bf16.msra.mxu0 0
        %3905 = vmatpush.bf16.msra.mxu0 0
        %3906 = vmatpush.bf16.msra.mxu0 0
        %3907 = vmatpush.bf16.msra.mxu0 0
        %3908 = vmatpush.bf16.msra.mxu0 0
        %3909 = vmatpush.bf16.msra.mxu0 0
        %3910 = vmatpush.bf16.msra.mxu0 %v3685
        %3911 = vmatpush.bf16.msra.mxu0 %v3669
        %3912 = vmatmul.bf16.gmra.mxu0 %v3720
        %v3913 = vpop.f32.mrf.mxu0
        %v3914 = vadd.f32 %v3541, %v3913
        %v3915 = vpop.f32.mrf.mxu0
        %3916 = vdwg.mxu0
        %3917 = vmatpush.bf16.msra.mxu0 0
        %3918 = vmatpush.bf16.msra.mxu0 0
        %3919 = vmatpush.bf16.msra.mxu0 0
        %3920 = vmatpush.bf16.msra.mxu0 0
        %3921 = vmatpush.bf16.msra.mxu0 0
        %3922 = vmatpush.bf16.msra.mxu0 0
        %3923 = vmatpush.bf16.msra.mxu0 %v3686
        %3924 = vmatpush.bf16.msra.mxu0 %v3670
        %3925 = vmatmul.bf16.gmra.mxu0 %v3720
        %v3926 = vpop.f32.mrf.mxu0
        %v3927 = vadd.f32 %v3542, %v3926
        %v3928 = vpop.f32.mrf.mxu0
        %3929 = vdwg.mxu0
        %v3930 = vmax.f32 %v3732, 0.0
        %v3931 = vmax.f32 %v3745, 0.0
        %v3932 = vmax.f32 %v3758, 0.0
        %v3933 = vmax.f32 %v3771, 0.0
        %v3934 = vmax.f32 %v3784, 0.0
        %v3935 = vmax.f32 %v3797, 0.0
        %v3936 = vmax.f32 %v3810, 0.0
        %v3937 = vmax.f32 %v3823, 0.0
        %v3938 = vmax.f32 %v3836, 0.0
        %v3939 = vmax.f32 %v3849, 0.0
        %v3940 = vmax.f32 %v3862, 0.0
        %v3941 = vmax.f32 %v3875, 0.0
        %v3942 = vmax.f32 %v3888, 0.0
        %v3943 = vmax.f32 %v3901, 0.0
        %v3944 = vmax.f32 %v3914, 0.0
        %v3945 = vmax.f32 %v3927, 0.0
        %v3946 = vpack.c.bf16 %v3930, %v3930
        %v3947 = vpack.c.bf16 %v3931, %v3931
        %v3948 = vpack.c.bf16 %v3932, %v3932
        %v3949 = vpack.c.bf16 %v3933, %v3933
        %v3950 = vpack.c.bf16 %v3934, %v3934
        %v3951 = vpack.c.bf16 %v3935, %v3935
        %v3952 = vpack.c.bf16 %v3936, %v3936
        %v3953 = vpack.c.bf16 %v3937, %v3937
        %v3954 = vpack.c.bf16 %v3938, %v3938
        %v3955 = vpack.c.bf16 %v3939, %v3939
        %v3956 = vpack.c.bf16 %v3940, %v3940
        %v3957 = vpack.c.bf16 %v3941, %v3941
        %v3958 = vpack.c.bf16 %v3942, %v3942
        %v3959 = vpack.c.bf16 %v3943, %v3943
        %v3960 = vpack.c.bf16 %v3944, %v3944
        %v3961 = vpack.c.bf16 %v3945, %v3945
        %s3962 = scalar_lea.vmem %s33, 1024
        %v3963 = vld [vmem:[%s3962] sm:$0xf]
        %v3964 = vld [vmem:[%s3962 + $0x4] sm:$0xf]
        %v3965 = vld [vmem:[%s3962 + $0x8] sm:$0xf]
        %v3966 = vld [vmem:[%s3962 + $0xc] sm:$0xf]
        %v3967 = vld [vmem:[%s3962 + $0x10] sm:$0xf]
        %v3968 = vld [vmem:[%s3962 + $0x14] sm:$0xf]
        %v3969 = vld [vmem:[%s3962 + $0x18] sm:$0xf]
        %v3970 = vld [vmem:[%s3962 + $0x1c] sm:$0xf]
        %v3971 = vld [vmem:[%s3962 + $0x20] sm:$0xf]
        %v3972 = vld [vmem:[%s3962 + $0x24] sm:$0xf]
        %v3973 = vld [vmem:[%s3962 + $0x28] sm:$0xf]
        %v3974 = vld [vmem:[%s3962 + $0x2c] sm:$0xf]
        %v3975 = vld [vmem:[%s3962 + $0x30] sm:$0xf]
        %v3976 = vld [vmem:[%s3962 + $0x34] sm:$0xf]
        %v3977 = vld [vmem:[%s3962 + $0x38] sm:$0xf]
        %v3978 = vld [vmem:[%s3962 + $0x3c] sm:$0xf]
        %v3979 = vld [vmem:[%s3962 + $0x40] sm:$0xf]
        %v3980 = vld [vmem:[%s3962 + $0x44] sm:$0xf]
        %v3981 = vld [vmem:[%s3962 + $0x48] sm:$0xf]
        %v3982 = vld [vmem:[%s3962 + $0x4c] sm:$0xf]
        %v3983 = vld [vmem:[%s3962 + $0x50] sm:$0xf]
        %v3984 = vld [vmem:[%s3962 + $0x54] sm:$0xf]
        %v3985 = vld [vmem:[%s3962 + $0x58] sm:$0xf]
        %v3986 = vld [vmem:[%s3962 + $0x5c] sm:$0xf]
        %v3987 = vld [vmem:[%s3962 + $0x60] sm:$0xf]
        %v3988 = vld [vmem:[%s3962 + $0x64] sm:$0xf]
        %v3989 = vld [vmem:[%s3962 + $0x68] sm:$0xf]
        %v3990 = vld [vmem:[%s3962 + $0x6c] sm:$0xf]
        %v3991 = vld [vmem:[%s3962 + $0x70] sm:$0xf]
        %v3992 = vld [vmem:[%s3962 + $0x74] sm:$0xf]
        %v3993 = vld [vmem:[%s3962 + $0x78] sm:$0xf]
        %v3994 = vld [vmem:[%s3962 + $0x7c] sm:$0xf]
        %v3995 = vld [vmem:[%s3962 + $0x80] sm:$0xf]
        %v3996 = vld [vmem:[%s3962 + $0x84] sm:$0xf]
        %v3997 = vld [vmem:[%s3962 + $0x88] sm:$0xf]
        %v3998 = vld [vmem:[%s3962 + $0x8c] sm:$0xf]
        %v3999 = vld [vmem:[%s3962 + $0x90] sm:$0xf]
        %v4000 = vld [vmem:[%s3962 + $0x94] sm:$0xf]
        %v4001 = vld [vmem:[%s3962 + $0x98] sm:$0xf]
        %v4002 = vld [vmem:[%s3962 + $0x9c] sm:$0xf]
        %v4003 = vld [vmem:[%s3962 + $0xa0] sm:$0xf]
        %v4004 = vld [vmem:[%s3962 + $0xa4] sm:$0xf]
        %v4005 = vld [vmem:[%s3962 + $0xa8] sm:$0xf]
        %v4006 = vld [vmem:[%s3962 + $0xac] sm:$0xf]
        %v4007 = vld [vmem:[%s3962 + $0xb0] sm:$0xf]
        %v4008 = vld [vmem:[%s3962 + $0xb4] sm:$0xf]
        %v4009 = vld [vmem:[%s3962 + $0xb8] sm:$0xf]
        %v4010 = vld [vmem:[%s3962 + $0xbc] sm:$0xf]
        %v4011 = vld [vmem:[%s3962 + $0xc0] sm:$0xf]
        %v4012 = vld [vmem:[%s3962 + $0xc4] sm:$0xf]
        %v4013 = vld [vmem:[%s3962 + $0xc8] sm:$0xf]
        %v4014 = vld [vmem:[%s3962 + $0xcc] sm:$0xf]
        %v4015 = vld [vmem:[%s3962 + $0xd0] sm:$0xf]
        %v4016 = vld [vmem:[%s3962 + $0xd4] sm:$0xf]
        %v4017 = vld [vmem:[%s3962 + $0xd8] sm:$0xf]
        %v4018 = vld [vmem:[%s3962 + $0xdc] sm:$0xf]
        %v4019 = vld [vmem:[%s3962 + $0xe0] sm:$0xf]
        %v4020 = vld [vmem:[%s3962 + $0xe4] sm:$0xf]
        %v4021 = vld [vmem:[%s3962 + $0xe8] sm:$0xf]
        %v4022 = vld [vmem:[%s3962 + $0xec] sm:$0xf]
        %v4023 = vld [vmem:[%s3962 + $0xf0] sm:$0xf]
        %v4024 = vld [vmem:[%s3962 + $0xf4] sm:$0xf]
        %v4025 = vld [vmem:[%s3962 + $0xf8] sm:$0xf]
        %v4026 = vld [vmem:[%s3962 + $0xfc] sm:$0xf]
        %v4027 = vld [vmem:[%s3962 + $0x100] sm:$0xf]
        %v4028 = vld [vmem:[%s3962 + $0x104] sm:$0xf]
        %v4029 = vld [vmem:[%s3962 + $0x108] sm:$0xf]
        %v4030 = vld [vmem:[%s3962 + $0x10c] sm:$0xf]
        %v4031 = vld [vmem:[%s3962 + $0x110] sm:$0xf]
        %v4032 = vld [vmem:[%s3962 + $0x114] sm:$0xf]
        %v4033 = vld [vmem:[%s3962 + $0x118] sm:$0xf]
        %v4034 = vld [vmem:[%s3962 + $0x11c] sm:$0xf]
        %v4035 = vld [vmem:[%s3962 + $0x120] sm:$0xf]
        %v4036 = vld [vmem:[%s3962 + $0x124] sm:$0xf]
        %v4037 = vld [vmem:[%s3962 + $0x128] sm:$0xf]
        %v4038 = vld [vmem:[%s3962 + $0x12c] sm:$0xf]
        %v4039 = vld [vmem:[%s3962 + $0x130] sm:$0xf]
        %v4040 = vld [vmem:[%s3962 + $0x134] sm:$0xf]
        %v4041 = vld [vmem:[%s3962 + $0x138] sm:$0xf]
        %v4042 = vld [vmem:[%s3962 + $0x13c] sm:$0xf]
        %v4043 = vld [vmem:[%s3962 + $0x140] sm:$0xf]
        %v4044 = vld [vmem:[%s3962 + $0x144] sm:$0xf]
        %v4045 = vld [vmem:[%s3962 + $0x148] sm:$0xf]
        %v4046 = vld [vmem:[%s3962 + $0x14c] sm:$0xf]
        %v4047 = vld [vmem:[%s3962 + $0x150] sm:$0xf]
        %v4048 = vld [vmem:[%s3962 + $0x154] sm:$0xf]
        %v4049 = vld [vmem:[%s3962 + $0x158] sm:$0xf]
        %v4050 = vld [vmem:[%s3962 + $0x15c] sm:$0xf]
        %v4051 = vld [vmem:[%s3962 + $0x160] sm:$0xf]
        %v4052 = vld [vmem:[%s3962 + $0x164] sm:$0xf]
        %v4053 = vld [vmem:[%s3962 + $0x168] sm:$0xf]
        %v4054 = vld [vmem:[%s3962 + $0x16c] sm:$0xf]
        %v4055 = vld [vmem:[%s3962 + $0x170] sm:$0xf]
        %v4056 = vld [vmem:[%s3962 + $0x174] sm:$0xf]
        %v4057 = vld [vmem:[%s3962 + $0x178] sm:$0xf]
        %v4058 = vld [vmem:[%s3962 + $0x17c] sm:$0xf]
        %v4059 = vld [vmem:[%s3962 + $0x180] sm:$0xf]
        %v4060 = vld [vmem:[%s3962 + $0x184] sm:$0xf]
        %v4061 = vld [vmem:[%s3962 + $0x188] sm:$0xf]
        %v4062 = vld [vmem:[%s3962 + $0x18c] sm:$0xf]
        %v4063 = vld [vmem:[%s3962 + $0x190] sm:$0xf]
        %v4064 = vld [vmem:[%s3962 + $0x194] sm:$0xf]
        %v4065 = vld [vmem:[%s3962 + $0x198] sm:$0xf]
        %v4066 = vld [vmem:[%s3962 + $0x19c] sm:$0xf]
        %v4067 = vld [vmem:[%s3962 + $0x1a0] sm:$0xf]
        %v4068 = vld [vmem:[%s3962 + $0x1a4] sm:$0xf]
        %v4069 = vld [vmem:[%s3962 + $0x1a8] sm:$0xf]
        %v4070 = vld [vmem:[%s3962 + $0x1ac] sm:$0xf]
        %v4071 = vld [vmem:[%s3962 + $0x1b0] sm:$0xf]
        %v4072 = vld [vmem:[%s3962 + $0x1b4] sm:$0xf]
        %v4073 = vld [vmem:[%s3962 + $0x1b8] sm:$0xf]
        %v4074 = vld [vmem:[%s3962 + $0x1bc] sm:$0xf]
        %v4075 = vld [vmem:[%s3962 + $0x1c0] sm:$0xf]
        %v4076 = vld [vmem:[%s3962 + $0x1c4] sm:$0xf]
        %v4077 = vld [vmem:[%s3962 + $0x1c8] sm:$0xf]
        %v4078 = vld [vmem:[%s3962 + $0x1cc] sm:$0xf]
        %v4079 = vld [vmem:[%s3962 + $0x1d0] sm:$0xf]
        %v4080 = vld [vmem:[%s3962 + $0x1d4] sm:$0xf]
        %v4081 = vld [vmem:[%s3962 + $0x1d8] sm:$0xf]
        %v4082 = vld [vmem:[%s3962 + $0x1dc] sm:$0xf]
        %v4083 = vld [vmem:[%s3962 + $0x1e0] sm:$0xf]
        %v4084 = vld [vmem:[%s3962 + $0x1e4] sm:$0xf]
        %v4085 = vld [vmem:[%s3962 + $0x1e8] sm:$0xf]
        %v4086 = vld [vmem:[%s3962 + $0x1ec] sm:$0xf]
        %v4087 = vld [vmem:[%s3962 + $0x1f0] sm:$0xf]
        %v4088 = vld [vmem:[%s3962 + $0x1f4] sm:$0xf]
        %v4089 = vld [vmem:[%s3962 + $0x1f8] sm:$0xf]
        %v4090 = vld [vmem:[%s3962 + $0x1fc] sm:$0xf]
        %v4091 = vld [vmem:[%s3962 + $0x200] sm:$0xf]
        %v4092 = vld [vmem:[%s3962 + $0x204] sm:$0xf]
        %v4093 = vld [vmem:[%s3962 + $0x208] sm:$0xf]
        %v4094 = vld [vmem:[%s3962 + $0x20c] sm:$0xf]
        %v4095 = vld [vmem:[%s3962 + $0x210] sm:$0xf]
        %v4096 = vld [vmem:[%s3962 + $0x214] sm:$0xf]
        %v4097 = vld [vmem:[%s3962 + $0x218] sm:$0xf]
        %v4098 = vld [vmem:[%s3962 + $0x21c] sm:$0xf]
        %v4099 = vld [vmem:[%s3962 + $0x220] sm:$0xf]
        %v4100 = vld [vmem:[%s3962 + $0x224] sm:$0xf]
        %v4101 = vld [vmem:[%s3962 + $0x228] sm:$0xf]
        %v4102 = vld [vmem:[%s3962 + $0x22c] sm:$0xf]
        %v4103 = vld [vmem:[%s3962 + $0x230] sm:$0xf]
        %v4104 = vld [vmem:[%s3962 + $0x234] sm:$0xf]
        %v4105 = vld [vmem:[%s3962 + $0x238] sm:$0xf]
        %v4106 = vld [vmem:[%s3962 + $0x23c] sm:$0xf]
        %v4107 = vld [vmem:[%s3962 + $0x240] sm:$0xf]
        %v4108 = vld [vmem:[%s3962 + $0x244] sm:$0xf]
        %v4109 = vld [vmem:[%s3962 + $0x248] sm:$0xf]
        %v4110 = vld [vmem:[%s3962 + $0x24c] sm:$0xf]
        %v4111 = vld [vmem:[%s3962 + $0x250] sm:$0xf]
        %v4112 = vld [vmem:[%s3962 + $0x254] sm:$0xf]
        %v4113 = vld [vmem:[%s3962 + $0x258] sm:$0xf]
        %v4114 = vld [vmem:[%s3962 + $0x25c] sm:$0xf]
        %v4115 = vld [vmem:[%s3962 + $0x260] sm:$0xf]
        %v4116 = vld [vmem:[%s3962 + $0x264] sm:$0xf]
        %v4117 = vld [vmem:[%s3962 + $0x268] sm:$0xf]
        %v4118 = vld [vmem:[%s3962 + $0x26c] sm:$0xf]
        %v4119 = vld [vmem:[%s3962 + $0x270] sm:$0xf]
        %v4120 = vld [vmem:[%s3962 + $0x274] sm:$0xf]
        %v4121 = vld [vmem:[%s3962 + $0x278] sm:$0xf]
        %v4122 = vld [vmem:[%s3962 + $0x27c] sm:$0xf]
        %v4123 = vld [vmem:[%s3962 + $0x280] sm:$0xf]
        %v4124 = vld [vmem:[%s3962 + $0x284] sm:$0xf]
        %v4125 = vld [vmem:[%s3962 + $0x288] sm:$0xf]
        %v4126 = vld [vmem:[%s3962 + $0x28c] sm:$0xf]
        %v4127 = vld [vmem:[%s3962 + $0x290] sm:$0xf]
        %v4128 = vld [vmem:[%s3962 + $0x294] sm:$0xf]
        %v4129 = vld [vmem:[%s3962 + $0x298] sm:$0xf]
        %v4130 = vld [vmem:[%s3962 + $0x29c] sm:$0xf]
        %v4131 = vld [vmem:[%s3962 + $0x2a0] sm:$0xf]
        %v4132 = vld [vmem:[%s3962 + $0x2a4] sm:$0xf]
        %v4133 = vld [vmem:[%s3962 + $0x2a8] sm:$0xf]
        %v4134 = vld [vmem:[%s3962 + $0x2ac] sm:$0xf]
        %v4135 = vld [vmem:[%s3962 + $0x2b0] sm:$0xf]
        %v4136 = vld [vmem:[%s3962 + $0x2b4] sm:$0xf]
        %v4137 = vld [vmem:[%s3962 + $0x2b8] sm:$0xf]
        %v4138 = vld [vmem:[%s3962 + $0x2bc] sm:$0xf]
        %v4139 = vld [vmem:[%s3962 + $0x2c0] sm:$0xf]
        %v4140 = vld [vmem:[%s3962 + $0x2c4] sm:$0xf]
        %v4141 = vld [vmem:[%s3962 + $0x2c8] sm:$0xf]
        %v4142 = vld [vmem:[%s3962 + $0x2cc] sm:$0xf]
        %v4143 = vld [vmem:[%s3962 + $0x2d0] sm:$0xf]
        %v4144 = vld [vmem:[%s3962 + $0x2d4] sm:$0xf]
        %v4145 = vld [vmem:[%s3962 + $0x2d8] sm:$0xf]
        %v4146 = vld [vmem:[%s3962 + $0x2dc] sm:$0xf]
        %v4147 = vld [vmem:[%s3962 + $0x2e0] sm:$0xf]
        %v4148 = vld [vmem:[%s3962 + $0x2e4] sm:$0xf]
        %v4149 = vld [vmem:[%s3962 + $0x2e8] sm:$0xf]
        %v4150 = vld [vmem:[%s3962 + $0x2ec] sm:$0xf]
        %v4151 = vld [vmem:[%s3962 + $0x2f0] sm:$0xf]
        %v4152 = vld [vmem:[%s3962 + $0x2f4] sm:$0xf]
        %v4153 = vld [vmem:[%s3962 + $0x2f8] sm:$0xf]
        %v4154 = vld [vmem:[%s3962 + $0x2fc] sm:$0xf]
        %v4155 = vld [vmem:[%s3962 + $0x300] sm:$0xf]
        %v4156 = vld [vmem:[%s3962 + $0x304] sm:$0xf]
        %v4157 = vld [vmem:[%s3962 + $0x308] sm:$0xf]
        %v4158 = vld [vmem:[%s3962 + $0x30c] sm:$0xf]
        %v4159 = vld [vmem:[%s3962 + $0x310] sm:$0xf]
        %v4160 = vld [vmem:[%s3962 + $0x314] sm:$0xf]
        %v4161 = vld [vmem:[%s3962 + $0x318] sm:$0xf]
        %v4162 = vld [vmem:[%s3962 + $0x31c] sm:$0xf]
        %v4163 = vld [vmem:[%s3962 + $0x320] sm:$0xf]
        %v4164 = vld [vmem:[%s3962 + $0x324] sm:$0xf]
        %v4165 = vld [vmem:[%s3962 + $0x328] sm:$0xf]
        %v4166 = vld [vmem:[%s3962 + $0x32c] sm:$0xf]
        %v4167 = vld [vmem:[%s3962 + $0x330] sm:$0xf]
        %v4168 = vld [vmem:[%s3962 + $0x334] sm:$0xf]
        %v4169 = vld [vmem:[%s3962 + $0x338] sm:$0xf]
        %v4170 = vld [vmem:[%s3962 + $0x33c] sm:$0xf]
        %v4171 = vld [vmem:[%s3962 + $0x340] sm:$0xf]
        %v4172 = vld [vmem:[%s3962 + $0x344] sm:$0xf]
        %v4173 = vld [vmem:[%s3962 + $0x348] sm:$0xf]
        %v4174 = vld [vmem:[%s3962 + $0x34c] sm:$0xf]
        %v4175 = vld [vmem:[%s3962 + $0x350] sm:$0xf]
        %v4176 = vld [vmem:[%s3962 + $0x354] sm:$0xf]
        %v4177 = vld [vmem:[%s3962 + $0x358] sm:$0xf]
        %v4178 = vld [vmem:[%s3962 + $0x35c] sm:$0xf]
        %v4179 = vld [vmem:[%s3962 + $0x360] sm:$0xf]
        %v4180 = vld [vmem:[%s3962 + $0x364] sm:$0xf]
        %v4181 = vld [vmem:[%s3962 + $0x368] sm:$0xf]
        %v4182 = vld [vmem:[%s3962 + $0x36c] sm:$0xf]
        %v4183 = vld [vmem:[%s3962 + $0x370] sm:$0xf]
        %v4184 = vld [vmem:[%s3962 + $0x374] sm:$0xf]
        %v4185 = vld [vmem:[%s3962 + $0x378] sm:$0xf]
        %v4186 = vld [vmem:[%s3962 + $0x37c] sm:$0xf]
        %v4187 = vld [vmem:[%s3962 + $0x380] sm:$0xf]
        %v4188 = vld [vmem:[%s3962 + $0x384] sm:$0xf]
        %v4189 = vld [vmem:[%s3962 + $0x388] sm:$0xf]
        %v4190 = vld [vmem:[%s3962 + $0x38c] sm:$0xf]
        %v4191 = vld [vmem:[%s3962 + $0x390] sm:$0xf]
        %v4192 = vld [vmem:[%s3962 + $0x394] sm:$0xf]
        %v4193 = vld [vmem:[%s3962 + $0x398] sm:$0xf]
        %v4194 = vld [vmem:[%s3962 + $0x39c] sm:$0xf]
        %v4195 = vld [vmem:[%s3962 + $0x3a0] sm:$0xf]
        %v4196 = vld [vmem:[%s3962 + $0x3a4] sm:$0xf]
        %v4197 = vld [vmem:[%s3962 + $0x3a8] sm:$0xf]
        %v4198 = vld [vmem:[%s3962 + $0x3ac] sm:$0xf]
        %v4199 = vld [vmem:[%s3962 + $0x3b0] sm:$0xf]
        %v4200 = vld [vmem:[%s3962 + $0x3b4] sm:$0xf]
        %v4201 = vld [vmem:[%s3962 + $0x3b8] sm:$0xf]
        %v4202 = vld [vmem:[%s3962 + $0x3bc] sm:$0xf]
        %v4203 = vld [vmem:[%s3962 + $0x3c0] sm:$0xf]
        %v4204 = vld [vmem:[%s3962 + $0x3c4] sm:$0xf]
        %v4205 = vld [vmem:[%s3962 + $0x3c8] sm:$0xf]
        %v4206 = vld [vmem:[%s3962 + $0x3cc] sm:$0xf]
        %v4207 = vld [vmem:[%s3962 + $0x3d0] sm:$0xf]
        %v4208 = vld [vmem:[%s3962 + $0x3d4] sm:$0xf]
        %v4209 = vld [vmem:[%s3962 + $0x3d8] sm:$0xf]
        %v4210 = vld [vmem:[%s3962 + $0x3dc] sm:$0xf]
        %v4211 = vld [vmem:[%s3962 + $0x3e0] sm:$0xf]
        %v4212 = vld [vmem:[%s3962 + $0x3e4] sm:$0xf]
        %v4213 = vld [vmem:[%s3962 + $0x3e8] sm:$0xf]
        %v4214 = vld [vmem:[%s3962 + $0x3ec] sm:$0xf]
        %v4215 = vld [vmem:[%s3962 + $0x3f0] sm:$0xf]
        %v4216 = vld [vmem:[%s3962 + $0x3f4] sm:$0xf]
        %v4217 = vld [vmem:[%s3962 + $0x3f8] sm:$0xf]
        %v4218 = vld [vmem:[%s3962 + $0x3fc] sm:$0xf]
        %s4219 = scalar_lea.vmem %s35, 1
        %v4220 = vld [vmem:[%s4219] sm:$0x1]
        %v4222 = vperm.slane %v4220, 0
        %v4480 = vunpack.c.l.b16 %v3963
        %v4481 = vunpack.c.l.b16 %v3964
        %v4482 = vunpack.c.l.b16 %v3965
        %v4483 = vunpack.c.l.b16 %v3966
        %v4484 = vunpack.c.l.b16 %v3967
        %v4485 = vunpack.c.l.b16 %v3968
        %v4486 = vunpack.c.l.b16 %v3969
        %v4487 = vunpack.c.l.b16 %v3970
        %v4488 = vunpack.c.l.b16 %v3971
        %v4489 = vunpack.c.l.b16 %v3972
        %v4490 = vunpack.c.l.b16 %v3973
        %v4491 = vunpack.c.l.b16 %v3974
        %v4492 = vunpack.c.l.b16 %v3975
        %v4493 = vunpack.c.l.b16 %v3976
        %v4494 = vunpack.c.l.b16 %v3977
        %v4495 = vunpack.c.l.b16 %v3978
        %v4496 = vunpack.c.l.b16 %v3979
        %v4497 = vunpack.c.l.b16 %v3980
        %v4498 = vunpack.c.l.b16 %v3981
        %v4499 = vunpack.c.l.b16 %v3982
        %v4500 = vunpack.c.l.b16 %v3983
        %v4501 = vunpack.c.l.b16 %v3984
        %v4502 = vunpack.c.l.b16 %v3985
        %v4503 = vunpack.c.l.b16 %v3986
        %v4504 = vunpack.c.l.b16 %v3987
        %v4505 = vunpack.c.l.b16 %v3988
        %v4506 = vunpack.c.l.b16 %v3989
        %v4507 = vunpack.c.l.b16 %v3990
        %v4508 = vunpack.c.l.b16 %v3991
        %v4509 = vunpack.c.l.b16 %v3992
        %v4510 = vunpack.c.l.b16 %v3993
        %v4511 = vunpack.c.l.b16 %v3994
        %v4512 = vunpack.c.l.b16 %v3995
        %v4513 = vunpack.c.l.b16 %v3996
        %v4514 = vunpack.c.l.b16 %v3997
        %v4515 = vunpack.c.l.b16 %v3998
        %v4516 = vunpack.c.l.b16 %v3999
        %v4517 = vunpack.c.l.b16 %v4000
        %v4518 = vunpack.c.l.b16 %v4001
        %v4519 = vunpack.c.l.b16 %v4002
        %v4520 = vunpack.c.l.b16 %v4003
        %v4521 = vunpack.c.l.b16 %v4004
        %v4522 = vunpack.c.l.b16 %v4005
        %v4523 = vunpack.c.l.b16 %v4006
        %v4524 = vunpack.c.l.b16 %v4007
        %v4525 = vunpack.c.l.b16 %v4008
        %v4526 = vunpack.c.l.b16 %v4009
        %v4527 = vunpack.c.l.b16 %v4010
        %v4528 = vunpack.c.l.b16 %v4011
        %v4529 = vunpack.c.l.b16 %v4012
        %v4530 = vunpack.c.l.b16 %v4013
        %v4531 = vunpack.c.l.b16 %v4014
        %v4532 = vunpack.c.l.b16 %v4015
        %v4533 = vunpack.c.l.b16 %v4016
        %v4534 = vunpack.c.l.b16 %v4017
        %v4535 = vunpack.c.l.b16 %v4018
        %v4536 = vunpack.c.l.b16 %v4019
        %v4537 = vunpack.c.l.b16 %v4020
        %v4538 = vunpack.c.l.b16 %v4021
        %v4539 = vunpack.c.l.b16 %v4022
        %v4540 = vunpack.c.l.b16 %v4023
        %v4541 = vunpack.c.l.b16 %v4024
        %v4542 = vunpack.c.l.b16 %v4025
        %v4543 = vunpack.c.l.b16 %v4026
        %v4544 = vunpack.c.l.b16 %v4027
        %v4545 = vunpack.c.l.b16 %v4028
        %v4546 = vunpack.c.l.b16 %v4029
        %v4547 = vunpack.c.l.b16 %v4030
        %v4548 = vunpack.c.l.b16 %v4031
        %v4549 = vunpack.c.l.b16 %v4032
        %v4550 = vunpack.c.l.b16 %v4033
        %v4551 = vunpack.c.l.b16 %v4034
        %v4552 = vunpack.c.l.b16 %v4035
        %v4553 = vunpack.c.l.b16 %v4036
        %v4554 = vunpack.c.l.b16 %v4037
        %v4555 = vunpack.c.l.b16 %v4038
        %v4556 = vunpack.c.l.b16 %v4039
        %v4557 = vunpack.c.l.b16 %v4040
        %v4558 = vunpack.c.l.b16 %v4041
        %v4559 = vunpack.c.l.b16 %v4042
        %v4560 = vunpack.c.l.b16 %v4043
        %v4561 = vunpack.c.l.b16 %v4044
        %v4562 = vunpack.c.l.b16 %v4045
        %v4563 = vunpack.c.l.b16 %v4046
        %v4564 = vunpack.c.l.b16 %v4047
        %v4565 = vunpack.c.l.b16 %v4048
        %v4566 = vunpack.c.l.b16 %v4049
        %v4567 = vunpack.c.l.b16 %v4050
        %v4568 = vunpack.c.l.b16 %v4051
        %v4569 = vunpack.c.l.b16 %v4052
        %v4570 = vunpack.c.l.b16 %v4053
        %v4571 = vunpack.c.l.b16 %v4054
        %v4572 = vunpack.c.l.b16 %v4055
        %v4573 = vunpack.c.l.b16 %v4056
        %v4574 = vunpack.c.l.b16 %v4057
        %v4575 = vunpack.c.l.b16 %v4058
        %v4576 = vunpack.c.l.b16 %v4059
        %v4577 = vunpack.c.l.b16 %v4060
        %v4578 = vunpack.c.l.b16 %v4061
        %v4579 = vunpack.c.l.b16 %v4062
        %v4580 = vunpack.c.l.b16 %v4063
        %v4581 = vunpack.c.l.b16 %v4064
        %v4582 = vunpack.c.l.b16 %v4065
        %v4583 = vunpack.c.l.b16 %v4066
        %v4584 = vunpack.c.l.b16 %v4067
        %v4585 = vunpack.c.l.b16 %v4068
        %v4586 = vunpack.c.l.b16 %v4069
        %v4587 = vunpack.c.l.b16 %v4070
        %v4588 = vunpack.c.l.b16 %v4071
        %v4589 = vunpack.c.l.b16 %v4072
        %v4590 = vunpack.c.l.b16 %v4073
        %v4591 = vunpack.c.l.b16 %v4074
        %v4592 = vunpack.c.l.b16 %v4075
        %v4593 = vunpack.c.l.b16 %v4076
        %v4594 = vunpack.c.l.b16 %v4077
        %v4595 = vunpack.c.l.b16 %v4078
        %v4596 = vunpack.c.l.b16 %v4079
        %v4597 = vunpack.c.l.b16 %v4080
        %v4598 = vunpack.c.l.b16 %v4081
        %v4599 = vunpack.c.l.b16 %v4082
        %v4600 = vunpack.c.l.b16 %v4083
        %v4601 = vunpack.c.l.b16 %v4084
        %v4602 = vunpack.c.l.b16 %v4085
        %v4603 = vunpack.c.l.b16 %v4086
        %v4604 = vunpack.c.l.b16 %v4087
        %v4605 = vunpack.c.l.b16 %v4088
        %v4606 = vunpack.c.l.b16 %v4089
        %v4607 = vunpack.c.l.b16 %v4090
        %v4608 = vunpack.c.l.b16 %v4091
        %v4609 = vunpack.c.l.b16 %v4092
        %v4610 = vunpack.c.l.b16 %v4093
        %v4611 = vunpack.c.l.b16 %v4094
        %v4612 = vunpack.c.l.b16 %v4095
        %v4613 = vunpack.c.l.b16 %v4096
        %v4614 = vunpack.c.l.b16 %v4097
        %v4615 = vunpack.c.l.b16 %v4098
        %v4616 = vunpack.c.l.b16 %v4099
        %v4617 = vunpack.c.l.b16 %v4100
        %v4618 = vunpack.c.l.b16 %v4101
        %v4619 = vunpack.c.l.b16 %v4102
        %v4620 = vunpack.c.l.b16 %v4103
        %v4621 = vunpack.c.l.b16 %v4104
        %v4622 = vunpack.c.l.b16 %v4105
        %v4623 = vunpack.c.l.b16 %v4106
        %v4624 = vunpack.c.l.b16 %v4107
        %v4625 = vunpack.c.l.b16 %v4108
        %v4626 = vunpack.c.l.b16 %v4109
        %v4627 = vunpack.c.l.b16 %v4110
        %v4628 = vunpack.c.l.b16 %v4111
        %v4629 = vunpack.c.l.b16 %v4112
        %v4630 = vunpack.c.l.b16 %v4113
        %v4631 = vunpack.c.l.b16 %v4114
        %v4632 = vunpack.c.l.b16 %v4115
        %v4633 = vunpack.c.l.b16 %v4116
        %v4634 = vunpack.c.l.b16 %v4117
        %v4635 = vunpack.c.l.b16 %v4118
        %v4636 = vunpack.c.l.b16 %v4119
        %v4637 = vunpack.c.l.b16 %v4120
        %v4638 = vunpack.c.l.b16 %v4121
        %v4639 = vunpack.c.l.b16 %v4122
        %v4640 = vunpack.c.l.b16 %v4123
        %v4641 = vunpack.c.l.b16 %v4124
        %v4642 = vunpack.c.l.b16 %v4125
        %v4643 = vunpack.c.l.b16 %v4126
        %v4644 = vunpack.c.l.b16 %v4127
        %v4645 = vunpack.c.l.b16 %v4128
        %v4646 = vunpack.c.l.b16 %v4129
        %v4647 = vunpack.c.l.b16 %v4130
        %v4648 = vunpack.c.l.b16 %v4131
        %v4649 = vunpack.c.l.b16 %v4132
        %v4650 = vunpack.c.l.b16 %v4133
        %v4651 = vunpack.c.l.b16 %v4134
        %v4652 = vunpack.c.l.b16 %v4135
        %v4653 = vunpack.c.l.b16 %v4136
        %v4654 = vunpack.c.l.b16 %v4137
        %v4655 = vunpack.c.l.b16 %v4138
        %v4656 = vunpack.c.l.b16 %v4139
        %v4657 = vunpack.c.l.b16 %v4140
        %v4658 = vunpack.c.l.b16 %v4141
        %v4659 = vunpack.c.l.b16 %v4142
        %v4660 = vunpack.c.l.b16 %v4143
        %v4661 = vunpack.c.l.b16 %v4144
        %v4662 = vunpack.c.l.b16 %v4145
        %v4663 = vunpack.c.l.b16 %v4146
        %v4664 = vunpack.c.l.b16 %v4147
        %v4665 = vunpack.c.l.b16 %v4148
        %v4666 = vunpack.c.l.b16 %v4149
        %v4667 = vunpack.c.l.b16 %v4150
        %v4668 = vunpack.c.l.b16 %v4151
        %v4669 = vunpack.c.l.b16 %v4152
        %v4670 = vunpack.c.l.b16 %v4153
        %v4671 = vunpack.c.l.b16 %v4154
        %v4672 = vunpack.c.l.b16 %v4155
        %v4673 = vunpack.c.l.b16 %v4156
        %v4674 = vunpack.c.l.b16 %v4157
        %v4675 = vunpack.c.l.b16 %v4158
        %v4676 = vunpack.c.l.b16 %v4159
        %v4677 = vunpack.c.l.b16 %v4160
        %v4678 = vunpack.c.l.b16 %v4161
        %v4679 = vunpack.c.l.b16 %v4162
        %v4680 = vunpack.c.l.b16 %v4163
        %v4681 = vunpack.c.l.b16 %v4164
        %v4682 = vunpack.c.l.b16 %v4165
        %v4683 = vunpack.c.l.b16 %v4166
        %v4684 = vunpack.c.l.b16 %v4167
        %v4685 = vunpack.c.l.b16 %v4168
        %v4686 = vunpack.c.l.b16 %v4169
        %v4687 = vunpack.c.l.b16 %v4170
        %v4688 = vunpack.c.l.b16 %v4171
        %v4689 = vunpack.c.l.b16 %v4172
        %v4690 = vunpack.c.l.b16 %v4173
        %v4691 = vunpack.c.l.b16 %v4174
        %v4692 = vunpack.c.l.b16 %v4175
        %v4693 = vunpack.c.l.b16 %v4176
        %v4694 = vunpack.c.l.b16 %v4177
        %v4695 = vunpack.c.l.b16 %v4178
        %v4696 = vunpack.c.l.b16 %v4179
        %v4697 = vunpack.c.l.b16 %v4180
        %v4698 = vunpack.c.l.b16 %v4181
        %v4699 = vunpack.c.l.b16 %v4182
        %v4700 = vunpack.c.l.b16 %v4183
        %v4701 = vunpack.c.l.b16 %v4184
        %v4702 = vunpack.c.l.b16 %v4185
        %v4703 = vunpack.c.l.b16 %v4186
        %v4704 = vunpack.c.l.b16 %v4187
        %v4705 = vunpack.c.l.b16 %v4188
        %v4706 = vunpack.c.l.b16 %v4189
        %v4707 = vunpack.c.l.b16 %v4190
        %v4708 = vunpack.c.l.b16 %v4191
        %v4709 = vunpack.c.l.b16 %v4192
        %v4710 = vunpack.c.l.b16 %v4193
        %v4711 = vunpack.c.l.b16 %v4194
        %v4712 = vunpack.c.l.b16 %v4195
        %v4713 = vunpack.c.l.b16 %v4196
        %v4714 = vunpack.c.l.b16 %v4197
        %v4715 = vunpack.c.l.b16 %v4198
        %v4716 = vunpack.c.l.b16 %v4199
        %v4717 = vunpack.c.l.b16 %v4200
        %v4718 = vunpack.c.l.b16 %v4201
        %v4719 = vunpack.c.l.b16 %v4202
        %v4720 = vunpack.c.l.b16 %v4203
        %v4721 = vunpack.c.l.b16 %v4204
        %v4722 = vunpack.c.l.b16 %v4205
        %v4723 = vunpack.c.l.b16 %v4206
        %v4724 = vunpack.c.l.b16 %v4207
        %v4725 = vunpack.c.l.b16 %v4208
        %v4726 = vunpack.c.l.b16 %v4209
        %v4727 = vunpack.c.l.b16 %v4210
        %v4728 = vunpack.c.l.b16 %v4211
        %v4729 = vunpack.c.l.b16 %v4212
        %v4730 = vunpack.c.l.b16 %v4213
        %v4731 = vunpack.c.l.b16 %v4214
        %v4732 = vunpack.c.l.b16 %v4215
        %v4733 = vunpack.c.l.b16 %v4216
        %v4734 = vunpack.c.l.b16 %v4217
        %v4735 = vunpack.c.l.b16 %v4218
        %v4736 = vpack.c.b16 %v4481, %v4480
        %v4737 = vpack.c.b16 %v4483, %v4482
        %v4738 = vpack.c.b16 %v4485, %v4484
        %v4739 = vpack.c.b16 %v4487, %v4486
        %v4740 = vpack.c.b16 %v4489, %v4488
        %v4741 = vpack.c.b16 %v4491, %v4490
        %v4742 = vpack.c.b16 %v4493, %v4492
        %v4743 = vpack.c.b16 %v4495, %v4494
        %v4744 = vpack.c.b16 %v4497, %v4496
        %v4745 = vpack.c.b16 %v4499, %v4498
        %v4746 = vpack.c.b16 %v4501, %v4500
        %v4747 = vpack.c.b16 %v4503, %v4502
        %v4748 = vpack.c.b16 %v4505, %v4504
        %v4749 = vpack.c.b16 %v4507, %v4506
        %v4750 = vpack.c.b16 %v4509, %v4508
        %v4751 = vpack.c.b16 %v4511, %v4510
        %v4752 = vpack.c.b16 %v4513, %v4512
        %v4753 = vpack.c.b16 %v4515, %v4514
        %v4754 = vpack.c.b16 %v4517, %v4516
        %v4755 = vpack.c.b16 %v4519, %v4518
        %v4756 = vpack.c.b16 %v4521, %v4520
        %v4757 = vpack.c.b16 %v4523, %v4522
        %v4758 = vpack.c.b16 %v4525, %v4524
        %v4759 = vpack.c.b16 %v4527, %v4526
        %v4760 = vpack.c.b16 %v4529, %v4528
        %v4761 = vpack.c.b16 %v4531, %v4530
        %v4762 = vpack.c.b16 %v4533, %v4532
        %v4763 = vpack.c.b16 %v4535, %v4534
        %v4764 = vpack.c.b16 %v4537, %v4536
        %v4765 = vpack.c.b16 %v4539, %v4538
        %v4766 = vpack.c.b16 %v4541, %v4540
        %v4767 = vpack.c.b16 %v4543, %v4542
        %v4768 = vpack.c.b16 %v4545, %v4544
        %v4769 = vpack.c.b16 %v4547, %v4546
        %v4770 = vpack.c.b16 %v4549, %v4548
        %v4771 = vpack.c.b16 %v4551, %v4550
        %v4772 = vpack.c.b16 %v4553, %v4552
        %v4773 = vpack.c.b16 %v4555, %v4554
        %v4774 = vpack.c.b16 %v4557, %v4556
        %v4775 = vpack.c.b16 %v4559, %v4558
        %v4776 = vpack.c.b16 %v4561, %v4560
        %v4777 = vpack.c.b16 %v4563, %v4562
        %v4778 = vpack.c.b16 %v4565, %v4564
        %v4779 = vpack.c.b16 %v4567, %v4566
        %v4780 = vpack.c.b16 %v4569, %v4568
        %v4781 = vpack.c.b16 %v4571, %v4570
        %v4782 = vpack.c.b16 %v4573, %v4572
        %v4783 = vpack.c.b16 %v4575, %v4574
        %v4784 = vpack.c.b16 %v4577, %v4576
        %v4785 = vpack.c.b16 %v4579, %v4578
        %v4786 = vpack.c.b16 %v4581, %v4580
        %v4787 = vpack.c.b16 %v4583, %v4582
        %v4788 = vpack.c.b16 %v4585, %v4584
        %v4789 = vpack.c.b16 %v4587, %v4586
        %v4790 = vpack.c.b16 %v4589, %v4588
        %v4791 = vpack.c.b16 %v4591, %v4590
        %v4792 = vpack.c.b16 %v4593, %v4592
        %v4793 = vpack.c.b16 %v4595, %v4594
        %v4794 = vpack.c.b16 %v4597, %v4596
        %v4795 = vpack.c.b16 %v4599, %v4598
        %v4796 = vpack.c.b16 %v4601, %v4600
        %v4797 = vpack.c.b16 %v4603, %v4602
        %v4798 = vpack.c.b16 %v4605, %v4604
        %v4799 = vpack.c.b16 %v4607, %v4606
        %v4800 = vpack.c.b16 %v4609, %v4608
        %v4801 = vpack.c.b16 %v4611, %v4610
        %v4802 = vpack.c.b16 %v4613, %v4612
        %v4803 = vpack.c.b16 %v4615, %v4614
        %v4804 = vpack.c.b16 %v4617, %v4616
        %v4805 = vpack.c.b16 %v4619, %v4618
        %v4806 = vpack.c.b16 %v4621, %v4620
        %v4807 = vpack.c.b16 %v4623, %v4622
        %v4808 = vpack.c.b16 %v4625, %v4624
        %v4809 = vpack.c.b16 %v4627, %v4626
        %v4810 = vpack.c.b16 %v4629, %v4628
        %v4811 = vpack.c.b16 %v4631, %v4630
        %v4812 = vpack.c.b16 %v4633, %v4632
        %v4813 = vpack.c.b16 %v4635, %v4634
        %v4814 = vpack.c.b16 %v4637, %v4636
        %v4815 = vpack.c.b16 %v4639, %v4638
        %v4816 = vpack.c.b16 %v4641, %v4640
        %v4817 = vpack.c.b16 %v4643, %v4642
        %v4818 = vpack.c.b16 %v4645, %v4644
        %v4819 = vpack.c.b16 %v4647, %v4646
        %v4820 = vpack.c.b16 %v4649, %v4648
        %v4821 = vpack.c.b16 %v4651, %v4650
        %v4822 = vpack.c.b16 %v4653, %v4652
        %v4823 = vpack.c.b16 %v4655, %v4654
        %v4824 = vpack.c.b16 %v4657, %v4656
        %v4825 = vpack.c.b16 %v4659, %v4658
        %v4826 = vpack.c.b16 %v4661, %v4660
        %v4827 = vpack.c.b16 %v4663, %v4662
        %v4828 = vpack.c.b16 %v4665, %v4664
        %v4829 = vpack.c.b16 %v4667, %v4666
        %v4830 = vpack.c.b16 %v4669, %v4668
        %v4831 = vpack.c.b16 %v4671, %v4670
        %v4832 = vpack.c.b16 %v4673, %v4672
        %v4833 = vpack.c.b16 %v4675, %v4674
        %v4834 = vpack.c.b16 %v4677, %v4676
        %v4835 = vpack.c.b16 %v4679, %v4678
        %v4836 = vpack.c.b16 %v4681, %v4680
        %v4837 = vpack.c.b16 %v4683, %v4682
        %v4838 = vpack.c.b16 %v4685, %v4684
        %v4839 = vpack.c.b16 %v4687, %v4686
        %v4840 = vpack.c.b16 %v4689, %v4688
        %v4841 = vpack.c.b16 %v4691, %v4690
        %v4842 = vpack.c.b16 %v4693, %v4692
        %v4843 = vpack.c.b16 %v4695, %v4694
        %v4844 = vpack.c.b16 %v4697, %v4696
        %v4845 = vpack.c.b16 %v4699, %v4698
        %v4846 = vpack.c.b16 %v4701, %v4700
        %v4847 = vpack.c.b16 %v4703, %v4702
        %v4848 = vpack.c.b16 %v4705, %v4704
        %v4849 = vpack.c.b16 %v4707, %v4706
        %v4850 = vpack.c.b16 %v4709, %v4708
        %v4851 = vpack.c.b16 %v4711, %v4710
        %v4852 = vpack.c.b16 %v4713, %v4712
        %v4853 = vpack.c.b16 %v4715, %v4714
        %v4854 = vpack.c.b16 %v4717, %v4716
        %v4855 = vpack.c.b16 %v4719, %v4718
        %v4856 = vpack.c.b16 %v4721, %v4720
        %v4857 = vpack.c.b16 %v4723, %v4722
        %v4858 = vpack.c.b16 %v4725, %v4724
        %v4859 = vpack.c.b16 %v4727, %v4726
        %v4860 = vpack.c.b16 %v4729, %v4728
        %v4861 = vpack.c.b16 %v4731, %v4730
        %v4862 = vpack.c.b16 %v4733, %v4732
        %v4863 = vpack.c.b16 %v4735, %v4734
        %4992 = vmatpush.bf16.msra.mxu0 %v4743
        %4993 = vmatpush.bf16.msra.mxu0 %v4742
        %4994 = vmatpush.bf16.msra.mxu0 %v4741
        %4995 = vmatpush.bf16.msra.mxu0 %v4740
        %4996 = vmatpush.bf16.msra.mxu0 %v4739
        %4997 = vmatpush.bf16.msra.mxu0 %v4738
        %4998 = vmatpush.bf16.msra.mxu0 %v4737
        %4999 = vmatpush.bf16.msra.mxu0 %v4736
        %5000 = vmatmul.bf16.gmra.mxu0 %v3946
        %v5001 = vpop.f32.mrf.mxu0
        %v5002 = vadd.f32 %v4222, %v5001
        %v5003 = vpop.f32.mrf.mxu0
        %5004 = vdwg.mxu0
        %5005 = vmatpush.bf16.msra.mxu0 %v4751
        %5006 = vmatpush.bf16.msra.mxu0 %v4750
        %5007 = vmatpush.bf16.msra.mxu0 %v4749
        %5008 = vmatpush.bf16.msra.mxu0 %v4748
        %5009 = vmatpush.bf16.msra.mxu0 %v4747
        %5010 = vmatpush.bf16.msra.mxu0 %v4746
        %5011 = vmatpush.bf16.msra.mxu0 %v4745
        %5012 = vmatpush.bf16.msra.mxu0 %v4744
        %5013 = vmatmul.bf16.gmra.mxu0 %v3947
        %v5014 = vpop.f32.mrf.mxu0
        %v5015 = vadd.f32 %v5002, %v5014
        %v5016 = vpop.f32.mrf.mxu0
        %5017 = vdwg.mxu0
        %5018 = vmatpush.bf16.msra.mxu0 %v4759
        %5019 = vmatpush.bf16.msra.mxu0 %v4758
        %5020 = vmatpush.bf16.msra.mxu0 %v4757
        %5021 = vmatpush.bf16.msra.mxu0 %v4756
        %5022 = vmatpush.bf16.msra.mxu0 %v4755
        %5023 = vmatpush.bf16.msra.mxu0 %v4754
        %5024 = vmatpush.bf16.msra.mxu0 %v4753
        %5025 = vmatpush.bf16.msra.mxu0 %v4752
        %5026 = vmatmul.bf16.gmra.mxu0 %v3948
        %v5027 = vpop.f32.mrf.mxu0
        %v5028 = vadd.f32 %v5015, %v5027
        %v5029 = vpop.f32.mrf.mxu0
        %5030 = vdwg.mxu0
        %5031 = vmatpush.bf16.msra.mxu0 %v4767
        %5032 = vmatpush.bf16.msra.mxu0 %v4766
        %5033 = vmatpush.bf16.msra.mxu0 %v4765
        %5034 = vmatpush.bf16.msra.mxu0 %v4764
        %5035 = vmatpush.bf16.msra.mxu0 %v4763
        %5036 = vmatpush.bf16.msra.mxu0 %v4762
        %5037 = vmatpush.bf16.msra.mxu0 %v4761
        %5038 = vmatpush.bf16.msra.mxu0 %v4760
        %5039 = vmatmul.bf16.gmra.mxu0 %v3949
        %v5040 = vpop.f32.mrf.mxu0
        %v5041 = vadd.f32 %v5028, %v5040
        %v5042 = vpop.f32.mrf.mxu0
        %5043 = vdwg.mxu0
        %5044 = vmatpush.bf16.msra.mxu0 %v4775
        %5045 = vmatpush.bf16.msra.mxu0 %v4774
        %5046 = vmatpush.bf16.msra.mxu0 %v4773
        %5047 = vmatpush.bf16.msra.mxu0 %v4772
        %5048 = vmatpush.bf16.msra.mxu0 %v4771
        %5049 = vmatpush.bf16.msra.mxu0 %v4770
        %5050 = vmatpush.bf16.msra.mxu0 %v4769
        %5051 = vmatpush.bf16.msra.mxu0 %v4768
        %5052 = vmatmul.bf16.gmra.mxu0 %v3950
        %v5053 = vpop.f32.mrf.mxu0
        %v5054 = vadd.f32 %v5041, %v5053
        %v5055 = vpop.f32.mrf.mxu0
        %5056 = vdwg.mxu0
        %5057 = vmatpush.bf16.msra.mxu0 %v4783
        %5058 = vmatpush.bf16.msra.mxu0 %v4782
        %5059 = vmatpush.bf16.msra.mxu0 %v4781
        %5060 = vmatpush.bf16.msra.mxu0 %v4780
        %5061 = vmatpush.bf16.msra.mxu0 %v4779
        %5062 = vmatpush.bf16.msra.mxu0 %v4778
        %5063 = vmatpush.bf16.msra.mxu0 %v4777
        %5064 = vmatpush.bf16.msra.mxu0 %v4776
        %5065 = vmatmul.bf16.gmra.mxu0 %v3951
        %v5066 = vpop.f32.mrf.mxu0
        %v5067 = vadd.f32 %v5054, %v5066
        %v5068 = vpop.f32.mrf.mxu0
        %5069 = vdwg.mxu0
        %5070 = vmatpush.bf16.msra.mxu0 %v4791
        %5071 = vmatpush.bf16.msra.mxu0 %v4790
        %5072 = vmatpush.bf16.msra.mxu0 %v4789
        %5073 = vmatpush.bf16.msra.mxu0 %v4788
        %5074 = vmatpush.bf16.msra.mxu0 %v4787
        %5075 = vmatpush.bf16.msra.mxu0 %v4786
        %5076 = vmatpush.bf16.msra.mxu0 %v4785
        %5077 = vmatpush.bf16.msra.mxu0 %v4784
        %5078 = vmatmul.bf16.gmra.mxu0 %v3952
        %v5079 = vpop.f32.mrf.mxu0
        %v5080 = vadd.f32 %v5067, %v5079
        %v5081 = vpop.f32.mrf.mxu0
        %5082 = vdwg.mxu0
        %5083 = vmatpush.bf16.msra.mxu0 %v4799
        %5084 = vmatpush.bf16.msra.mxu0 %v4798
        %5085 = vmatpush.bf16.msra.mxu0 %v4797
        %5086 = vmatpush.bf16.msra.mxu0 %v4796
        %5087 = vmatpush.bf16.msra.mxu0 %v4795
        %5088 = vmatpush.bf16.msra.mxu0 %v4794
        %5089 = vmatpush.bf16.msra.mxu0 %v4793
        %5090 = vmatpush.bf16.msra.mxu0 %v4792
        %5091 = vmatmul.bf16.gmra.mxu0 %v3953
        %v5092 = vpop.f32.mrf.mxu0
        %v5093 = vadd.f32 %v5080, %v5092
        %v5094 = vpop.f32.mrf.mxu0
        %5095 = vdwg.mxu0
        %5096 = vmatpush.bf16.msra.mxu0 %v4807
        %5097 = vmatpush.bf16.msra.mxu0 %v4806
        %5098 = vmatpush.bf16.msra.mxu0 %v4805
        %5099 = vmatpush.bf16.msra.mxu0 %v4804
        %5100 = vmatpush.bf16.msra.mxu0 %v4803
        %5101 = vmatpush.bf16.msra.mxu0 %v4802
        %5102 = vmatpush.bf16.msra.mxu0 %v4801
        %5103 = vmatpush.bf16.msra.mxu0 %v4800
        %5104 = vmatmul.bf16.gmra.mxu0 %v3954
        %v5105 = vpop.f32.mrf.mxu0
        %v5106 = vadd.f32 %v5093, %v5105
        %v5107 = vpop.f32.mrf.mxu0
        %5108 = vdwg.mxu0
        %5109 = vmatpush.bf16.msra.mxu0 %v4815
        %5110 = vmatpush.bf16.msra.mxu0 %v4814
        %5111 = vmatpush.bf16.msra.mxu0 %v4813
        %5112 = vmatpush.bf16.msra.mxu0 %v4812
        %5113 = vmatpush.bf16.msra.mxu0 %v4811
        %5114 = vmatpush.bf16.msra.mxu0 %v4810
        %5115 = vmatpush.bf16.msra.mxu0 %v4809
        %5116 = vmatpush.bf16.msra.mxu0 %v4808
        %5117 = vmatmul.bf16.gmra.mxu0 %v3955
        %v5118 = vpop.f32.mrf.mxu0
        %v5119 = vadd.f32 %v5106, %v5118
        %v5120 = vpop.f32.mrf.mxu0
        %5121 = vdwg.mxu0
        %5122 = vmatpush.bf16.msra.mxu0 %v4823
        %5123 = vmatpush.bf16.msra.mxu0 %v4822
        %5124 = vmatpush.bf16.msra.mxu0 %v4821
        %5125 = vmatpush.bf16.msra.mxu0 %v4820
        %5126 = vmatpush.bf16.msra.mxu0 %v4819
        %5127 = vmatpush.bf16.msra.mxu0 %v4818
        %5128 = vmatpush.bf16.msra.mxu0 %v4817
        %5129 = vmatpush.bf16.msra.mxu0 %v4816
        %5130 = vmatmul.bf16.gmra.mxu0 %v3956
        %v5131 = vpop.f32.mrf.mxu0
        %v5132 = vadd.f32 %v5119, %v5131
        %v5133 = vpop.f32.mrf.mxu0
        %5134 = vdwg.mxu0
        %5135 = vmatpush.bf16.msra.mxu0 %v4831
        %5136 = vmatpush.bf16.msra.mxu0 %v4830
        %5137 = vmatpush.bf16.msra.mxu0 %v4829
        %5138 = vmatpush.bf16.msra.mxu0 %v4828
        %5139 = vmatpush.bf16.msra.mxu0 %v4827
        %5140 = vmatpush.bf16.msra.mxu0 %v4826
        %5141 = vmatpush.bf16.msra.mxu0 %v4825
        %5142 = vmatpush.bf16.msra.mxu0 %v4824
        %5143 = vmatmul.bf16.gmra.mxu0 %v3957
        %v5144 = vpop.f32.mrf.mxu0
        %v5145 = vadd.f32 %v5132, %v5144
        %v5146 = vpop.f32.mrf.mxu0
        %5147 = vdwg.mxu0
        %5148 = vmatpush.bf16.msra.mxu0 %v4839
        %5149 = vmatpush.bf16.msra.mxu0 %v4838
        %5150 = vmatpush.bf16.msra.mxu0 %v4837
        %5151 = vmatpush.bf16.msra.mxu0 %v4836
        %5152 = vmatpush.bf16.msra.mxu0 %v4835
        %5153 = vmatpush.bf16.msra.mxu0 %v4834
        %5154 = vmatpush.bf16.msra.mxu0 %v4833
        %5155 = vmatpush.bf16.msra.mxu0 %v4832
        %5156 = vmatmul.bf16.gmra.mxu0 %v3958
        %v5157 = vpop.f32.mrf.mxu0
        %v5158 = vadd.f32 %v5145, %v5157
        %v5159 = vpop.f32.mrf.mxu0
        %5160 = vdwg.mxu0
        %5161 = vmatpush.bf16.msra.mxu0 %v4847
        %5162 = vmatpush.bf16.msra.mxu0 %v4846
        %5163 = vmatpush.bf16.msra.mxu0 %v4845
        %5164 = vmatpush.bf16.msra.mxu0 %v4844
        %5165 = vmatpush.bf16.msra.mxu0 %v4843
        %5166 = vmatpush.bf16.msra.mxu0 %v4842
        %5167 = vmatpush.bf16.msra.mxu0 %v4841
        %5168 = vmatpush.bf16.msra.mxu0 %v4840
        %5169 = vmatmul.bf16.gmra.mxu0 %v3959
        %v5170 = vpop.f32.mrf.mxu0
        %v5171 = vadd.f32 %v5158, %v5170
        %v5172 = vpop.f32.mrf.mxu0
        %5173 = vdwg.mxu0
        %5174 = vmatpush.bf16.msra.mxu0 %v4855
        %5175 = vmatpush.bf16.msra.mxu0 %v4854
        %5176 = vmatpush.bf16.msra.mxu0 %v4853
        %5177 = vmatpush.bf16.msra.mxu0 %v4852
        %5178 = vmatpush.bf16.msra.mxu0 %v4851
        %5179 = vmatpush.bf16.msra.mxu0 %v4850
        %5180 = vmatpush.bf16.msra.mxu0 %v4849
        %5181 = vmatpush.bf16.msra.mxu0 %v4848
        %5182 = vmatmul.bf16.gmra.mxu0 %v3960
        %v5183 = vpop.f32.mrf.mxu0
        %v5184 = vadd.f32 %v5171, %v5183
        %v5185 = vpop.f32.mrf.mxu0
        %5186 = vdwg.mxu0
        %5187 = vmatpush.bf16.msra.mxu0 %v4863
        %5188 = vmatpush.bf16.msra.mxu0 %v4862
        %5189 = vmatpush.bf16.msra.mxu0 %v4861
        %5190 = vmatpush.bf16.msra.mxu0 %v4860
        %5191 = vmatpush.bf16.msra.mxu0 %v4859
        %5192 = vmatpush.bf16.msra.mxu0 %v4858
        %5193 = vmatpush.bf16.msra.mxu0 %v4857
        %5194 = vmatpush.bf16.msra.mxu0 %v4856
        %5195 = vmatmul.bf16.gmra.mxu0 %v3961
        %v5196 = vpop.f32.mrf.mxu0
        %v5197 = vadd.f32 %v5184, %v5196
        %v5198 = vpop.f32.mrf.mxu0
        %5199 = vdwg.mxu0
        %v5200 = vadd.f32 %v3487, %v5197
        %s5201 = scalar_lea.vmem %s41, 1
        %v5202 = vld [vmem:[%s5201] sm:$0x1]
        %s5203 = scalar_lea.vmem %s43, 1
        %v5204 = vld [vmem:[%s5203] sm:$0x1]
        %v5205 = vsel %vm1262, %v5200, 0.0
        %5206 = vadd.xlane.f32.xlu0 %v5205
        %v5207 = vpop.xlane.xlu0 %5206
        %v5208 = vmul.f32 %v5207, %v1468
        %v5209 = vsub.f32 %v5200, %v5208
        %v5210 = vmul.f32 %v5209, %v5209
        %v5211 = vsel %vm1262, %v5210, 0.0
        %5212 = vadd.xlane.f32.xlu0 %v5211
        %v5213 = vpop.xlane.xlu0 %5212
        %v5214 = vmul.f32 %v5213, %v1468
        %v5215 = vadd.f32 %v5214, 1e-05
        %v5216 = vrsqrt.pop %v5215
        %v5217 = vmul.f32 %v5216, %v5215
        %v5218 = vmul.f32 %v5217, %v5216
        %v5219 = vmul.f32 0.5, %v5218
        %v5220 = vsub.f32 1.5, %v5219
        %v5221 = vmul.f32 %v5216, %v5220
        %vm5222 = vweird.f32 %v5215
        %vm5223 = vweird.f32 %v5216
        %vm5224 = vmor %vm5222, %vm5223
        %v5225 = vsel %vm5224, %v5216, %v5221
        %v5226 = vmul.f32 %v5209, %v5225
        %v5228 = vperm.slane %v5202, 0
        %v5230 = vmul.f32 %v5226, %v5228
        %v5232 = vperm.slane %v5204, 0
        %v5234 = vadd.f32 %v5230, %v5232
        %v5235 = vpack.c.bf16 %v5234, %v5234
        %v5236 = vld [vmem:[%s53] sm:$0xff]
        %v5237 = vld [vmem:[%s53 + $0x8] sm:$0xf]
        %v5238 = vld [vmem:[%s53 + $0xc] sm:$0xff]
        %v5239 = vld [vmem:[%s53 + $0x14] sm:$0xf]
        %v5240 = vld [vmem:[%s53 + $0x18] sm:$0xff]
        %v5241 = vld [vmem:[%s53 + $0x20] sm:$0xf]
        %v5242 = vld [vmem:[%s53 + $0x24] sm:$0xff]
        %v5243 = vld [vmem:[%s53 + $0x2c] sm:$0xf]
        %v5244 = vld [vmem:[%s55] sm:$0x7]
        %v5246 = vperm.slane %v5244, 0
        %v5247 = vperm.slane %v5244, 1
        %v5248 = vperm.slane %v5244, 2
        %v5260 = vunpack.c.l.b16 %v5236
        %v5261 = vunpack.c.h.b16 %v5236
        %v5262 = vunpack.c.l.b16 %v5237
        %v5263 = vunpack.c.l.b16 %v5238
        %v5264 = vunpack.c.h.b16 %v5238
        %v5265 = vunpack.c.l.b16 %v5239
        %v5266 = vunpack.c.l.b16 %v5240
        %v5267 = vunpack.c.h.b16 %v5240
        %v5268 = vunpack.c.l.b16 %v5241
        %v5269 = vunpack.c.l.b16 %v5242
        %v5270 = vunpack.c.h.b16 %v5242
        %v5271 = vunpack.c.l.b16 %v5243
        %v5272 = vpack.c.b16 %v5263, %v5260
        %v5273 = vpack.c.b16 %v5264, %v5261
        %v5274 = vpack.c.b16 %v5265, %v5262
        %v5275 = vpack.c.b16 %v5269, %v5266
        %v5276 = vpack.c.b16 %v5270, %v5267
        %v5277 = vpack.c.b16 %v5271, %v5268
        %v5285 = vsel %vm1262, %v5235, 0
        %5287 = vmatpush.bf16.msra.mxu0 0
        %5288 = vmatpush.bf16.msra.mxu0 0
        %5289 = vmatpush.bf16.msra.mxu0 0
        %5290 = vmatpush.bf16.msra.mxu0 0
        %5291 = vmatpush.bf16.msra.mxu0 0
        %5292 = vmatpush.bf16.msra.mxu0 0
        %5293 = vmatpush.bf16.msra.mxu0 %v5275
        %5294 = vmatpush.bf16.msra.mxu0 %v5272
        %5295 = vmatmul.bf16.gmra.mxu0 %v5285
        %v5296 = vpop.f32.mrf.mxu0
        %v5297 = vadd.f32 %v5246, %v5296
        %v5298 = vpop.f32.mrf.mxu0
        %5299 = vdwg.mxu0
        %5300 = vmatpush.bf16.msra.mxu0 0
        %5301 = vmatpush.bf16.msra.mxu0 0
        %5302 = vmatpush.bf16.msra.mxu0 0
        %5303 = vmatpush.bf16.msra.mxu0 0
        %5304 = vmatpush.bf16.msra.mxu0 0
        %5305 = vmatpush.bf16.msra.mxu0 0
        %5306 = vmatpush.bf16.msra.mxu0 %v5276
        %5307 = vmatpush.bf16.msra.mxu0 %v5273
        %5308 = vmatmul.bf16.gmra.mxu0 %v5285
        %v5309 = vpop.f32.mrf.mxu0
        %v5310 = vadd.f32 %v5247, %v5309
        %v5311 = vpop.f32.mrf.mxu0
        %5312 = vdwg.mxu0
        %5313 = vmatpush.bf16.msra.mxu0 0
        %5314 = vmatpush.bf16.msra.mxu0 0
        %5315 = vmatpush.bf16.msra.mxu0 0
        %5316 = vmatpush.bf16.msra.mxu0 0
        %5317 = vmatpush.bf16.msra.mxu0 0
        %5318 = vmatpush.bf16.msra.mxu0 0
        %5319 = vmatpush.bf16.msra.mxu0 %v5277
        %5320 = vmatpush.bf16.msra.mxu0 %v5274
        %5321 = vmatmul.bf16.gmra.mxu0 %v5285
        %v5322 = vpop.f32.mrf.mxu0
        %v5323 = vadd.f32 %v5248, %v5322
        %v5324 = vpop.f32.mrf.mxu0
        %5325 = vdwg.mxu0
        %s5326 = scalar_lea.vmem %s7, %s87
        %v5327 = vld [vmem:[%s5326] sm:$0x1]
        %v5328 = vpack.c.bf16 %v5327, %v5327
        %v5329 = vld [vmem:[%s45] sm:$0xf]
        %v5330 = vld [vmem:[%s45 + $0x4] sm:$0xf]
        %v5331 = vld [vmem:[%s45 + $0x8] sm:$0xf]
        %v5332 = vld [vmem:[%s45 + $0xc] sm:$0xf]
        %v5333 = vld [vmem:[%s45 + $0x10] sm:$0xf]
        %v5334 = vld [vmem:[%s45 + $0x14] sm:$0xf]
        %v5335 = vld [vmem:[%s45 + $0x18] sm:$0xf]
        %v5336 = vld [vmem:[%s45 + $0x1c] sm:$0xf]
        %v5337 = vld [vmem:[%s47] sm:$0x1]
        %v5346 = vunpack.c.l.b16 %v5329
        %v5347 = vunpack.c.l.b16 %v5330
        %v5348 = vunpack.c.l.b16 %v5331
        %v5349 = vunpack.c.l.b16 %v5332
        %v5350 = vunpack.c.l.b16 %v5333
        %v5351 = vunpack.c.l.b16 %v5334
        %v5352 = vunpack.c.l.b16 %v5335
        %v5353 = vunpack.c.l.b16 %v5336
        %v5354 = vpack.c.b16 %v5347, %v5346
        %v5355 = vpack.c.b16 %v5349, %v5348
        %v5356 = vpack.c.b16 %v5351, %v5350
        %v5357 = vpack.c.b16 %v5353, %v5352
        %vm5362 = vcmask 523264
        %v5364 = vsel %vm5362, %v5328, 0
        %5366 = vmatpush.bf16.msra.mxu0 0
        %5367 = vmatpush.bf16.msra.mxu0 0
        %5368 = vmatpush.bf16.msra.mxu0 0
        %5369 = vmatpush.bf16.msra.mxu0 0
        %5370 = vmatpush.bf16.msra.mxu0 %v5357
        %5371 = vmatpush.bf16.msra.mxu0 %v5356
        %5372 = vmatpush.bf16.msra.mxu0 %v5355
        %5373 = vmatpush.bf16.msra.mxu0 %v5354
        %5374 = vmatmul.bf16.gmra.mxu0 %v5364
        %v5375 = vpop.f32.mrf.mxu0
        %v5376 = vadd.f32 %v5337, %v5375
        %v5377 = vpop.f32.mrf.mxu0
        %5378 = vdwg.mxu0
        %v5379 = vpack.c.bf16 %v5376, %v5376
        %v5380 = vld [vmem:[%s49] sm:$0xf]
        %v5381 = vld [vmem:[%s49 + $0x4] sm:$0xf]
        %v5382 = vld [vmem:[%s49 + $0x8] sm:$0xf]
        %v5383 = vld [vmem:[%s49 + $0xc] sm:$0xf]
        %v5384 = vld [vmem:[%s51] sm:$0x1]
        %v5389 = vunpack.c.l.b16 %v5380
        %v5390 = vunpack.c.l.b16 %v5381
        %v5391 = vunpack.c.l.b16 %v5382
        %v5392 = vunpack.c.l.b16 %v5383
        %v5393 = vpack.c.b16 %v5390, %v5389
        %v5394 = vpack.c.b16 %v5392, %v5391
        %v5398 = vsel %vm1262, %v5379, 0
        %5400 = vmatpush.bf16.msra.mxu0 0
        %5401 = vmatpush.bf16.msra.mxu0 0
        %5402 = vmatpush.bf16.msra.mxu0 0
        %5403 = vmatpush.bf16.msra.mxu0 0
        %5404 = vmatpush.bf16.msra.mxu0 0
        %5405 = vmatpush.bf16.msra.mxu0 0
        %5406 = vmatpush.bf16.msra.mxu0 %v5394
        %5407 = vmatpush.bf16.msra.mxu0 %v5393
        %5408 = vmatmul.bf16.gmra.mxu0 %v5398
        %v5409 = vpop.f32.mrf.mxu0
        %v5410 = vadd.f32 %v5384, %v5409
        %v5411 = vpop.f32.mrf.mxu0
        %5412 = vdwg.mxu0
        %v5413 = vpack.c.bf16 %v5410, %v5410
        %v5414 = vpack.c.bf16 %v5297, %v5297
        %v5416 = vsel %vm1262, %v5413, 0
        %v5419 = vsel %vm1262, %v5414, 0
        %5421 = vmatpush.bf16.xpose.msra.mxu0 0
        %5422 = vmatpush.bf16.xpose.msra.mxu0 0
        %5423 = vmatpush.bf16.xpose.msra.mxu0 0
        %5424 = vmatpush.bf16.xpose.msra.mxu0 0
        %5425 = vmatpush.bf16.xpose.msra.mxu0 0
        %5426 = vmatpush.bf16.xpose.msra.mxu0 0
        %5427 = vmatpush.bf16.xpose.msra.mxu0 0
        %5428 = vmatpush.bf16.xpose.msra.mxu0 %v5419
        %5429 = vmatmul.bf16.gmra.mxu0 %v5416
        %v5430 = vpop.f32.mrf.mxu0
        %v5431 = vadd.f32 0.0, %v5430
        %v5432 = vpop.f32.mrf.mxu0
        %5433 = vdwg.mxu0
        %v5434 = vmul.f32 %v5431, 0.17677669
        %vm5435 = vcmask 57344
        %v5436 = vsel %vm5435, %v5434, -inf
        %5437 = vmax.xlane.f32.xlu0 %v5436
        %v5438 = vpop.xlane.xlu0 %5437
        %v5439 = vsub.f32 %v5434, %v5438
        %v5440 = vmul.f32 %v5439, 1.442695
        %v5441 = vpow.pop %v5440
        %v5442 = vsel %vm5435, %v5441, 0.0
        %5443 = vadd.xlane.f32.xlu0 %v5442
        %v5444 = vpop.xlane.xlu0 %5443
        %v5445 = vrcp.pop %v5444
        %v5446 = vmul.f32 %v5444, %v5445
        %v5447 = vsub.f32 1.0, %v5446
        %v5448 = vmul.f32 %v5445, %v5447
        %v5449 = vadd.f32 %v5445, %v5448
        %vm5450 = vweird.f32 %v5444
        %vm5451 = vweird.f32 %v5445
        %vm5452 = vmor %vm5450, %vm5451
        %v5453 = vsel %vm5452, %v5445, %v5449
        %v5454 = vand.u32 2147483647, %v5444
        %vm5455 = vcmp.eq.f32.partialorder %v5454, 8.507059e+37
        %v5456 = vand.u32 %v5444, 2147483648
        %v5457 = vor.u32 1.1754944e-38, %v5456
        %v5458 = vsel %vm5455, %v5457, %v5453
        %v5459 = vmul.f32 %v5441, %v5458
        %v5460 = vpack.c.bf16 %v5459, %v5459
        %5462 = vrot.lane.b32.xlu0 %v5414, 96
        %v5463 = vpop.permute.xlu0 %5462
        %v5465 = vsel %vm1372, %v5460, 0
        %v5468 = vsel %vm1402, %v5463, 0
        %5470 = vmatpush.bf16.msra.mxu0 0
        %5471 = vmatpush.bf16.msra.mxu0 0
        %5472 = vmatpush.bf16.msra.mxu0 0
        %5473 = vmatpush.bf16.msra.mxu0 0
        %5474 = vmatpush.bf16.msra.mxu0 0
        %5475 = vmatpush.bf16.msra.mxu0 0
        %5476 = vmatpush.bf16.msra.mxu0 0
        %5477 = vmatpush.bf16.msra.mxu0 %v5468
        %5478 = vmatmul.bf16.gmra.mxu0 %v5465
        %v5479 = vpop.f32.mrf.mxu0
        %v5480 = vadd.f32 0.0, %v5479
        %v5481 = vpop.f32.mrf.mxu0
        %5482 = vdwg.mxu0
        %v5483 = vpack.c.bf16 %v5480, %v5480
        %v5484 = vld [vmem:[%s57] sm:$0xf]
        %v5485 = vld [vmem:[%s57 + $0x4] sm:$0xf]
        %v5486 = vld [vmem:[%s57 + $0x8] sm:$0xf]
        %v5487 = vld [vmem:[%s57 + $0xc] sm:$0xf]
        %v5488 = vld [vmem:[%s59] sm:$0x1]
        %v5493 = vunpack.c.l.b16 %v5484
        %v5494 = vunpack.c.l.b16 %v5485
        %v5495 = vunpack.c.l.b16 %v5486
        %v5496 = vunpack.c.l.b16 %v5487
        %v5497 = vpack.c.b16 %v5494, %v5493
        %v5498 = vpack.c.b16 %v5496, %v5495
        %v5502 = vsel %vm1262, %v5483, 0
        %5504 = vmatpush.bf16.msra.mxu0 0
        %5505 = vmatpush.bf16.msra.mxu0 0
        %5506 = vmatpush.bf16.msra.mxu0 0
        %5507 = vmatpush.bf16.msra.mxu0 0
        %5508 = vmatpush.bf16.msra.mxu0 0
        %5509 = vmatpush.bf16.msra.mxu0 0
        %5510 = vmatpush.bf16.msra.mxu0 %v5498
        %5511 = vmatpush.bf16.msra.mxu0 %v5497
        %5512 = vmatmul.bf16.gmra.mxu0 %v5502
        %v5513 = vpop.f32.mrf.mxu0
        %v5514 = vadd.f32 %v5488, %v5513
        %v5515 = vpop.f32.mrf.mxu0
        %5516 = vdwg.mxu0
        %v5517 = vadd.f32 %v5376, %v5514
        %v5518 = vld [vmem:[%s61] sm:$0x1]
        %v5519 = vld [vmem:[%s63] sm:$0x1]
        %vm5520 = vcmask 253952
        %v5521 = vsel %vm5520, %v5517, 0.0
        %5522 = vadd.xlane.f32.xlu0 %v5521
        %v5523 = vpop.xlane.xlu0 %5522
        %v5524 = vmul.f32 %v5523, %v1468
        %v5525 = vsub.f32 %v5517, %v5524
        %v5526 = vmul.f32 %v5525, %v5525
        %v5527 = vsel %vm5520, %v5526, 0.0
        %5528 = vadd.xlane.f32.xlu0 %v5527
        %v5529 = vpop.xlane.xlu0 %5528
        %v5530 = vmul.f32 %v5529, %v1468
        %v5531 = vadd.f32 %v5530, 1e-05
        %v5532 = vrsqrt.pop %v5531
        %v5533 = vmul.f32 %v5532, %v5531
        %v5534 = vmul.f32 %v5533, %v5532
        %v5535 = vmul.f32 0.5, %v5534
        %v5536 = vsub.f32 1.5, %v5535
        %v5537 = vmul.f32 %v5532, %v5536
        %vm5538 = vweird.f32 %v5531
        %vm5539 = vweird.f32 %v5532
        %vm5540 = vmor %vm5538, %vm5539
        %v5541 = vsel %vm5540, %v5532, %v5537
        %v5542 = vmul.f32 %v5525, %v5541
        %v5543 = vmul.f32 %v5542, %v5518
        %v5544 = vadd.f32 %v5543, %v5519
        %v5545 = vpack.c.bf16 %v5544, %v5544
        %s5546 = scalar_lea.vmem %s49, 16
        %v5547 = vld [vmem:[%s5546] sm:$0xf]
        %v5548 = vld [vmem:[%s5546 + $0x4] sm:$0xf]
        %v5549 = vld [vmem:[%s5546 + $0x8] sm:$0xf]
        %v5550 = vld [vmem:[%s5546 + $0xc] sm:$0xf]
        %s5551 = scalar_lea.vmem %s51, 1
        %v5552 = vld [vmem:[%s5551] sm:$0x1]
        %v5557 = vunpack.c.l.b16 %v5547
        %v5558 = vunpack.c.l.b16 %v5548
        %v5559 = vunpack.c.l.b16 %v5549
        %v5560 = vunpack.c.l.b16 %v5550
        %v5561 = vpack.c.b16 %v5558, %v5557
        %v5562 = vpack.c.b16 %v5560, %v5559
        %v5566 = vsel %vm1262, %v5545, 0
        %5568 = vmatpush.bf16.msra.mxu0 0
        %5569 = vmatpush.bf16.msra.mxu0 0
        %5570 = vmatpush.bf16.msra.mxu0 0
        %5571 = vmatpush.bf16.msra.mxu0 0
        %5572 = vmatpush.bf16.msra.mxu0 0
        %5573 = vmatpush.bf16.msra.mxu0 0
        %5574 = vmatpush.bf16.msra.mxu0 %v5562
        %5575 = vmatpush.bf16.msra.mxu0 %v5561
        %5576 = vmatmul.bf16.gmra.mxu0 %v5566
        %v5577 = vpop.f32.mrf.mxu0
        %v5578 = vadd.f32 %v5552, %v5577
        %v5579 = vpop.f32.mrf.mxu0
        %5580 = vdwg.mxu0
        %v5581 = vpack.c.bf16 %v5578, %v5578
        %5582 = vrot.lane.b32.xlu0 %v5414, 64
        %v5583 = vpop.permute.xlu0 %5582
        %v5585 = vsel %vm1262, %v5581, 0
        %v5588 = vsel %vm1262, %v5583, 0
        %5590 = vmatpush.bf16.xpose.msra.mxu0 0
        %5591 = vmatpush.bf16.xpose.msra.mxu0 0
        %5592 = vmatpush.bf16.xpose.msra.mxu0 0
        %5593 = vmatpush.bf16.xpose.msra.mxu0 0
        %5594 = vmatpush.bf16.xpose.msra.mxu0 0
        %5595 = vmatpush.bf16.xpose.msra.mxu0 0
        %5596 = vmatpush.bf16.xpose.msra.mxu0 0
        %5597 = vmatpush.bf16.xpose.msra.mxu0 %v5588
        %5598 = vmatmul.bf16.gmra.mxu0 %v5585
        %v5599 = vpop.f32.mrf.mxu0
        %v5600 = vadd.f32 0.0, %v5599
        %v5601 = vpop.f32.mrf.mxu0
        %5602 = vdwg.mxu0
        %v5603 = vmul.f32 %v5600, 0.17677669
        %v5604 = vsel %vm5435, %v5603, -inf
        %5605 = vmax.xlane.f32.xlu0 %v5604
        %v5606 = vpop.xlane.xlu0 %5605
        %v5607 = vsub.f32 %v5603, %v5606
        %v5608 = vmul.f32 %v5607, 1.442695
        %v5609 = vpow.pop %v5608
        %v5610 = vsel %vm5435, %v5609, 0.0
        %5611 = vadd.xlane.f32.xlu0 %v5610
        %v5612 = vpop.xlane.xlu0 %5611
        %v5613 = vrcp.pop %v5612
        %v5614 = vmul.f32 %v5612, %v5613
        %v5615 = vsub.f32 1.0, %v5614
        %v5616 = vmul.f32 %v5613, %v5615
        %v5617 = vadd.f32 %v5613, %v5616
        %vm5618 = vweird.f32 %v5612
        %vm5619 = vweird.f32 %v5613
        %vm5620 = vmor %vm5618, %vm5619
        %v5621 = vsel %vm5620, %v5613, %v5617
        %v5622 = vand.u32 2147483647, %v5612
        %vm5623 = vcmp.eq.f32.partialorder %v5622, 8.507059e+37
        %v5624 = vand.u32 %v5612, 2147483648
        %v5625 = vor.u32 1.1754944e-38, %v5624
        %v5626 = vsel %vm5623, %v5625, %v5621
        %v5627 = vmul.f32 %v5609, %v5626
        %v5628 = vpack.c.bf16 %v5627, %v5627
        %5629 = vrot.lane.b32.xlu0 %v5414, 32
        %v5630 = vpop.permute.xlu0 %5629
        %v5632 = vsel %vm1372, %v5628, 0
        %v5635 = vsel %vm1402, %v5630, 0
        %5637 = vmatpush.bf16.msra.mxu0 0
        %5638 = vmatpush.bf16.msra.mxu0 0
        %5639 = vmatpush.bf16.msra.mxu0 0
        %5640 = vmatpush.bf16.msra.mxu0 0
        %5641 = vmatpush.bf16.msra.mxu0 0
        %5642 = vmatpush.bf16.msra.mxu0 0
        %5643 = vmatpush.bf16.msra.mxu0 0
        %5644 = vmatpush.bf16.msra.mxu0 %v5635
        %5645 = vmatmul.bf16.gmra.mxu0 %v5632
        %v5646 = vpop.f32.mrf.mxu0
        %v5647 = vadd.f32 0.0, %v5646
        %v5648 = vpop.f32.mrf.mxu0
        %5649 = vdwg.mxu0
        %v5650 = vpack.c.bf16 %v5647, %v5647
        %s5651 = scalar_lea.vmem %s57, 16
        %v5652 = vld [vmem:[%s5651] sm:$0xf]
        %v5653 = vld [vmem:[%s5651 + $0x4] sm:$0xf]
        %v5654 = vld [vmem:[%s5651 + $0x8] sm:$0xf]
        %v5655 = vld [vmem:[%s5651 + $0xc] sm:$0xf]
        %s5656 = scalar_lea.vmem %s59, 1
        %v5657 = vld [vmem:[%s5656] sm:$0x1]
        %v5662 = vunpack.c.l.b16 %v5652
        %v5663 = vunpack.c.l.b16 %v5653
        %v5664 = vunpack.c.l.b16 %v5654
        %v5665 = vunpack.c.l.b16 %v5655
        %v5666 = vpack.c.b16 %v5663, %v5662
        %v5667 = vpack.c.b16 %v5665, %v5664
        %v5671 = vsel %vm1262, %v5650, 0
        %5673 = vmatpush.bf16.msra.mxu0 0
        %5674 = vmatpush.bf16.msra.mxu0 0
        %5675 = vmatpush.bf16.msra.mxu0 0
        %5676 = vmatpush.bf16.msra.mxu0 0
        %5677 = vmatpush.bf16.msra.mxu0 0
        %5678 = vmatpush.bf16.msra.mxu0 0
        %5679 = vmatpush.bf16.msra.mxu0 %v5667
        %5680 = vmatpush.bf16.msra.mxu0 %v5666
        %5681 = vmatmul.bf16.gmra.mxu0 %v5671
        %v5682 = vpop.f32.mrf.mxu0
        %v5683 = vadd.f32 %v5657, %v5682
        %v5684 = vpop.f32.mrf.mxu0
        %5685 = vdwg.mxu0
        %v5686 = vadd.f32 %v5544, %v5683
        %s5687 = scalar_lea.vmem %s61, 1
        %v5688 = vld [vmem:[%s5687] sm:$0x1]
        %s5689 = scalar_lea.vmem %s63, 1
        %v5690 = vld [vmem:[%s5689] sm:$0x1]
        %v5691 = vsel %vm5520, %v5686, 0.0
        %5692 = vadd.xlane.f32.xlu0 %v5691
        %v5693 = vpop.xlane.xlu0 %5692
        %v5694 = vmul.f32 %v5693, %v1468
        %v5695 = vsub.f32 %v5686, %v5694
        %v5696 = vmul.f32 %v5695, %v5695
        %v5697 = vsel %vm5520, %v5696, 0.0
        %5698 = vadd.xlane.f32.xlu0 %v5697
        %v5699 = vpop.xlane.xlu0 %5698
        %v5700 = vmul.f32 %v5699, %v1468
        %v5701 = vadd.f32 %v5700, 1e-05
        %v5702 = vrsqrt.pop %v5701
        %v5703 = vmul.f32 %v5702, %v5701
        %v5704 = vmul.f32 %v5703, %v5702
        %v5705 = vmul.f32 0.5, %v5704
        %v5706 = vsub.f32 1.5, %v5705
        %v5707 = vmul.f32 %v5702, %v5706
        %vm5708 = vweird.f32 %v5701
        %vm5709 = vweird.f32 %v5702
        %vm5710 = vmor %vm5708, %vm5709
        %v5711 = vsel %vm5710, %v5702, %v5707
        %v5712 = vmul.f32 %v5695, %v5711
        %v5713 = vmul.f32 %v5712, %v5688
        %v5714 = vadd.f32 %v5713, %v5690
        %s5715 = scalar_lea.vmem %s9, %s87
        %v5716 = vld [vmem:[%s5715] sm:$0x1]
        %v5717 = vpack.c.bf16 %v5716, %v5716
        %s5718 = scalar_lea.vmem %s45, 32
        %v5719 = vld [vmem:[%s5718] sm:$0xf]
        %v5720 = vld [vmem:[%s5718 + $0x4] sm:$0xf]
        %v5721 = vld [vmem:[%s5718 + $0x8] sm:$0xf]
        %v5722 = vld [vmem:[%s5718 + $0xc] sm:$0xf]
        %v5723 = vld [vmem:[%s5718 + $0x10] sm:$0xf]
        %v5724 = vld [vmem:[%s5718 + $0x14] sm:$0xf]
        %v5725 = vld [vmem:[%s5718 + $0x18] sm:$0xf]
        %v5726 = vld [vmem:[%s5718 + $0x1c] sm:$0xf]
        %s5727 = scalar_lea.vmem %s47, 1
        %v5728 = vld [vmem:[%s5727] sm:$0x1]
        %v5737 = vunpack.c.l.b16 %v5719
        %v5738 = vunpack.c.l.b16 %v5720
        %v5739 = vunpack.c.l.b16 %v5721
        %v5740 = vunpack.c.l.b16 %v5722
        %v5741 = vunpack.c.l.b16 %v5723
        %v5742 = vunpack.c.l.b16 %v5724
        %v5743 = vunpack.c.l.b16 %v5725
        %v5744 = vunpack.c.l.b16 %v5726
        %v5745 = vpack.c.b16 %v5738, %v5737
        %v5746 = vpack.c.b16 %v5740, %v5739
        %v5747 = vpack.c.b16 %v5742, %v5741
        %v5748 = vpack.c.b16 %v5744, %v5743
        %v5754 = vsel %vm5362, %v5717, 0
        %5756 = vmatpush.bf16.msra.mxu0 0
        %5757 = vmatpush.bf16.msra.mxu0 0
        %5758 = vmatpush.bf16.msra.mxu0 0
        %5759 = vmatpush.bf16.msra.mxu0 0
        %5760 = vmatpush.bf16.msra.mxu0 %v5748
        %5761 = vmatpush.bf16.msra.mxu0 %v5747
        %5762 = vmatpush.bf16.msra.mxu0 %v5746
        %5763 = vmatpush.bf16.msra.mxu0 %v5745
        %5764 = vmatmul.bf16.gmra.mxu0 %v5754
        %v5765 = vpop.f32.mrf.mxu0
        %v5766 = vadd.f32 %v5728, %v5765
        %v5767 = vpop.f32.mrf.mxu0
        %5768 = vdwg.mxu0
        %v5769 = vpack.c.bf16 %v5766, %v5766
        %s5770 = scalar_lea.vmem %s49, 32
        %v5771 = vld [vmem:[%s5770] sm:$0xf]
        %v5772 = vld [vmem:[%s5770 + $0x4] sm:$0xf]
        %v5773 = vld [vmem:[%s5770 + $0x8] sm:$0xf]
        %v5774 = vld [vmem:[%s5770 + $0xc] sm:$0xf]
        %s5775 = scalar_lea.vmem %s51, 2
        %v5776 = vld [vmem:[%s5775] sm:$0x1]
        %v5781 = vunpack.c.l.b16 %v5771
        %v5782 = vunpack.c.l.b16 %v5772
        %v5783 = vunpack.c.l.b16 %v5773
        %v5784 = vunpack.c.l.b16 %v5774
        %v5785 = vpack.c.b16 %v5782, %v5781
        %v5786 = vpack.c.b16 %v5784, %v5783
        %v5790 = vsel %vm1262, %v5769, 0
        %5792 = vmatpush.bf16.msra.mxu0 0
        %5793 = vmatpush.bf16.msra.mxu0 0
        %5794 = vmatpush.bf16.msra.mxu0 0
        %5795 = vmatpush.bf16.msra.mxu0 0
        %5796 = vmatpush.bf16.msra.mxu0 0
        %5797 = vmatpush.bf16.msra.mxu0 0
        %5798 = vmatpush.bf16.msra.mxu0 %v5786
        %5799 = vmatpush.bf16.msra.mxu0 %v5785
        %5800 = vmatmul.bf16.gmra.mxu0 %v5790
        %v5801 = vpop.f32.mrf.mxu0
        %v5802 = vadd.f32 %v5776, %v5801
        %v5803 = vpop.f32.mrf.mxu0
        %5804 = vdwg.mxu0
        %v5805 = vpack.c.bf16 %v5802, %v5802
        %v5806 = vpack.c.bf16 %v5310, %v5310
        %v5808 = vsel %vm1262, %v5805, 0
        %v5811 = vsel %vm1262, %v5806, 0
        %5813 = vmatpush.bf16.xpose.msra.mxu0 0
        %5814 = vmatpush.bf16.xpose.msra.mxu0 0
        %5815 = vmatpush.bf16.xpose.msra.mxu0 0
        %5816 = vmatpush.bf16.xpose.msra.mxu0 0
        %5817 = vmatpush.bf16.xpose.msra.mxu0 0
        %5818 = vmatpush.bf16.xpose.msra.mxu0 0
        %5819 = vmatpush.bf16.xpose.msra.mxu0 0
        %5820 = vmatpush.bf16.xpose.msra.mxu0 %v5811
        %5821 = vmatmul.bf16.gmra.mxu0 %v5808
        %v5822 = vpop.f32.mrf.mxu0
        %v5823 = vadd.f32 0.0, %v5822
        %v5824 = vpop.f32.mrf.mxu0
        %5825 = vdwg.mxu0
        %v5826 = vmul.f32 %v5823, 0.17677669
        %v5827 = vsel %vm5435, %v5826, -inf
        %5828 = vmax.xlane.f32.xlu0 %v5827
        %v5829 = vpop.xlane.xlu0 %5828
        %v5830 = vsub.f32 %v5826, %v5829
        %v5831 = vmul.f32 %v5830, 1.442695
        %v5832 = vpow.pop %v5831
        %v5833 = vsel %vm5435, %v5832, 0.0
        %5834 = vadd.xlane.f32.xlu0 %v5833
        %v5835 = vpop.xlane.xlu0 %5834
        %v5836 = vrcp.pop %v5835
        %v5837 = vmul.f32 %v5835, %v5836
        %v5838 = vsub.f32 1.0, %v5837
        %v5839 = vmul.f32 %v5836, %v5838
        %v5840 = vadd.f32 %v5836, %v5839
        %vm5841 = vweird.f32 %v5835
        %vm5842 = vweird.f32 %v5836
        %vm5843 = vmor %vm5841, %vm5842
        %v5844 = vsel %vm5843, %v5836, %v5840
        %v5845 = vand.u32 2147483647, %v5835
        %vm5846 = vcmp.eq.f32.partialorder %v5845, 8.507059e+37
        %v5847 = vand.u32 %v5835, 2147483648
        %v5848 = vor.u32 1.1754944e-38, %v5847
        %v5849 = vsel %vm5846, %v5848, %v5844
        %v5850 = vmul.f32 %v5832, %v5849
        %v5851 = vpack.c.bf16 %v5850, %v5850
        %5853 = vrot.lane.b32.xlu0 %v5806, 96
        %v5854 = vpop.permute.xlu0 %5853
        %v5856 = vsel %vm1372, %v5851, 0
        %v5859 = vsel %vm1402, %v5854, 0
        %5861 = vmatpush.bf16.msra.mxu0 0
        %5862 = vmatpush.bf16.msra.mxu0 0
        %5863 = vmatpush.bf16.msra.mxu0 0
        %5864 = vmatpush.bf16.msra.mxu0 0
        %5865 = vmatpush.bf16.msra.mxu0 0
        %5866 = vmatpush.bf16.msra.mxu0 0
        %5867 = vmatpush.bf16.msra.mxu0 0
        %5868 = vmatpush.bf16.msra.mxu0 %v5859
        %5869 = vmatmul.bf16.gmra.mxu0 %v5856
        %v5870 = vpop.f32.mrf.mxu0
        %v5871 = vadd.f32 0.0, %v5870
        %v5872 = vpop.f32.mrf.mxu0
        %5873 = vdwg.mxu0
        %v5874 = vpack.c.bf16 %v5871, %v5871
        %s5875 = scalar_lea.vmem %s57, 32
        %v5876 = vld [vmem:[%s5875] sm:$0xf]
        %v5877 = vld [vmem:[%s5875 + $0x4] sm:$0xf]
        %v5878 = vld [vmem:[%s5875 + $0x8] sm:$0xf]
        %v5879 = vld [vmem:[%s5875 + $0xc] sm:$0xf]
        %s5880 = scalar_lea.vmem %s59, 2
        %v5881 = vld [vmem:[%s5880] sm:$0x1]
        %v5886 = vunpack.c.l.b16 %v5876
        %v5887 = vunpack.c.l.b16 %v5877
        %v5888 = vunpack.c.l.b16 %v5878
        %v5889 = vunpack.c.l.b16 %v5879
        %v5890 = vpack.c.b16 %v5887, %v5886
        %v5891 = vpack.c.b16 %v5889, %v5888
        %v5895 = vsel %vm1262, %v5874, 0
        %5897 = vmatpush.bf16.msra.mxu0 0
        %5898 = vmatpush.bf16.msra.mxu0 0
        %5899 = vmatpush.bf16.msra.mxu0 0
        %5900 = vmatpush.bf16.msra.mxu0 0
        %5901 = vmatpush.bf16.msra.mxu0 0
        %5902 = vmatpush.bf16.msra.mxu0 0
        %5903 = vmatpush.bf16.msra.mxu0 %v5891
        %5904 = vmatpush.bf16.msra.mxu0 %v5890
        %5905 = vmatmul.bf16.gmra.mxu0 %v5895
        %v5906 = vpop.f32.mrf.mxu0
        %v5907 = vadd.f32 %v5881, %v5906
        %v5908 = vpop.f32.mrf.mxu0
        %5909 = vdwg.mxu0
        %v5910 = vadd.f32 %v5766, %v5907
        %s5911 = scalar_lea.vmem %s61, 2
        %v5912 = vld [vmem:[%s5911] sm:$0x1]
        %s5913 = scalar_lea.vmem %s63, 2
        %v5914 = vld [vmem:[%s5913] sm:$0x1]
        %v5915 = vsel %vm5520, %v5910, 0.0
        %5916 = vadd.xlane.f32.xlu0 %v5915
        %v5917 = vpop.xlane.xlu0 %5916
        %v5918 = vmul.f32 %v5917, %v1468
        %v5919 = vsub.f32 %v5910, %v5918
        %v5920 = vmul.f32 %v5919, %v5919
        %v5921 = vsel %vm5520, %v5920, 0.0
        %5922 = vadd.xlane.f32.xlu0 %v5921
        %v5923 = vpop.xlane.xlu0 %5922
        %v5924 = vmul.f32 %v5923, %v1468
        %v5925 = vadd.f32 %v5924, 1e-05
        %v5926 = vrsqrt.pop %v5925
        %v5927 = vmul.f32 %v5926, %v5925
        %v5928 = vmul.f32 %v5927, %v5926
        %v5929 = vmul.f32 0.5, %v5928
        %v5930 = vsub.f32 1.5, %v5929
        %v5931 = vmul.f32 %v5926, %v5930
        %vm5932 = vweird.f32 %v5925
        %vm5933 = vweird.f32 %v5926
        %vm5934 = vmor %vm5932, %vm5933
        %v5935 = vsel %vm5934, %v5926, %v5931
        %v5936 = vmul.f32 %v5919, %v5935
        %v5937 = vmul.f32 %v5936, %v5912
        %v5938 = vadd.f32 %v5937, %v5914
        %v5939 = vpack.c.bf16 %v5938, %v5938
        %s5940 = scalar_lea.vmem %s49, 48
        %v5941 = vld [vmem:[%s5940] sm:$0xf]
        %v5942 = vld [vmem:[%s5940 + $0x4] sm:$0xf]
        %v5943 = vld [vmem:[%s5940 + $0x8] sm:$0xf]
        %v5944 = vld [vmem:[%s5940 + $0xc] sm:$0xf]
        %s5945 = scalar_lea.vmem %s51, 3
        %v5946 = vld [vmem:[%s5945] sm:$0x1]
        %v5951 = vunpack.c.l.b16 %v5941
        %v5952 = vunpack.c.l.b16 %v5942
        %v5953 = vunpack.c.l.b16 %v5943
        %v5954 = vunpack.c.l.b16 %v5944
        %v5955 = vpack.c.b16 %v5952, %v5951
        %v5956 = vpack.c.b16 %v5954, %v5953
        %v5960 = vsel %vm1262, %v5939, 0
        %5962 = vmatpush.bf16.msra.mxu0 0
        %5963 = vmatpush.bf16.msra.mxu0 0
        %5964 = vmatpush.bf16.msra.mxu0 0
        %5965 = vmatpush.bf16.msra.mxu0 0
        %5966 = vmatpush.bf16.msra.mxu0 0
        %5967 = vmatpush.bf16.msra.mxu0 0
        %5968 = vmatpush.bf16.msra.mxu0 %v5956
        %5969 = vmatpush.bf16.msra.mxu0 %v5955
        %5970 = vmatmul.bf16.gmra.mxu0 %v5960
        %v5971 = vpop.f32.mrf.mxu0
        %v5972 = vadd.f32 %v5946, %v5971
        %v5973 = vpop.f32.mrf.mxu0
        %5974 = vdwg.mxu0
        %v5975 = vpack.c.bf16 %v5972, %v5972
        %5976 = vrot.lane.b32.xlu0 %v5806, 64
        %v5977 = vpop.permute.xlu0 %5976
        %v5979 = vsel %vm1262, %v5975, 0
        %v5982 = vsel %vm1262, %v5977, 0
        %5984 = vmatpush.bf16.xpose.msra.mxu0 0
        %5985 = vmatpush.bf16.xpose.msra.mxu0 0
        %5986 = vmatpush.bf16.xpose.msra.mxu0 0
        %5987 = vmatpush.bf16.xpose.msra.mxu0 0
        %5988 = vmatpush.bf16.xpose.msra.mxu0 0
        %5989 = vmatpush.bf16.xpose.msra.mxu0 0
        %5990 = vmatpush.bf16.xpose.msra.mxu0 0
        %5991 = vmatpush.bf16.xpose.msra.mxu0 %v5982
        %5992 = vmatmul.bf16.gmra.mxu0 %v5979
        %v5993 = vpop.f32.mrf.mxu0
        %v5994 = vadd.f32 0.0, %v5993
        %v5995 = vpop.f32.mrf.mxu0
        %5996 = vdwg.mxu0
        %v5997 = vmul.f32 %v5994, 0.17677669
        %v5998 = vsel %vm5435, %v5997, -inf
        %5999 = vmax.xlane.f32.xlu0 %v5998
        %v6000 = vpop.xlane.xlu0 %5999
        %v6001 = vsub.f32 %v5997, %v6000
        %v6002 = vmul.f32 %v6001, 1.442695
        %v6003 = vpow.pop %v6002
        %v6004 = vsel %vm5435, %v6003, 0.0
        %6005 = vadd.xlane.f32.xlu0 %v6004
        %v6006 = vpop.xlane.xlu0 %6005
        %v6007 = vrcp.pop %v6006
        %v6008 = vmul.f32 %v6006, %v6007
        %v6009 = vsub.f32 1.0, %v6008
        %v6010 = vmul.f32 %v6007, %v6009
        %v6011 = vadd.f32 %v6007, %v6010
        %vm6012 = vweird.f32 %v6006
        %vm6013 = vweird.f32 %v6007
        %vm6014 = vmor %vm6012, %vm6013
        %v6015 = vsel %vm6014, %v6007, %v6011
        %v6016 = vand.u32 2147483647, %v6006
        %vm6017 = vcmp.eq.f32.partialorder %v6016, 8.507059e+37
        %v6018 = vand.u32 %v6006, 2147483648
        %v6019 = vor.u32 1.1754944e-38, %v6018
        %v6020 = vsel %vm6017, %v6019, %v6015
        %v6021 = vmul.f32 %v6003, %v6020
        %v6022 = vpack.c.bf16 %v6021, %v6021
        %6023 = vrot.lane.b32.xlu0 %v5806, 32
        %v6024 = vpop.permute.xlu0 %6023
        %v6026 = vsel %vm1372, %v6022, 0
        %v6029 = vsel %vm1402, %v6024, 0
        %6031 = vmatpush.bf16.msra.mxu0 0
        %6032 = vmatpush.bf16.msra.mxu0 0
        %6033 = vmatpush.bf16.msra.mxu0 0
        %6034 = vmatpush.bf16.msra.mxu0 0
        %6035 = vmatpush.bf16.msra.mxu0 0
        %6036 = vmatpush.bf16.msra.mxu0 0
        %6037 = vmatpush.bf16.msra.mxu0 0
        %6038 = vmatpush.bf16.msra.mxu0 %v6029
        %6039 = vmatmul.bf16.gmra.mxu0 %v6026
        %v6040 = vpop.f32.mrf.mxu0
        %v6041 = vadd.f32 0.0, %v6040
        %v6042 = vpop.f32.mrf.mxu0
        %6043 = vdwg.mxu0
        %v6044 = vpack.c.bf16 %v6041, %v6041
        %s6045 = scalar_lea.vmem %s57, 48
        %v6046 = vld [vmem:[%s6045] sm:$0xf]
        %v6047 = vld [vmem:[%s6045 + $0x4] sm:$0xf]
        %v6048 = vld [vmem:[%s6045 + $0x8] sm:$0xf]
        %v6049 = vld [vmem:[%s6045 + $0xc] sm:$0xf]
        %s6050 = scalar_lea.vmem %s59, 3
        %v6051 = vld [vmem:[%s6050] sm:$0x1]
        %v6056 = vunpack.c.l.b16 %v6046
        %v6057 = vunpack.c.l.b16 %v6047
        %v6058 = vunpack.c.l.b16 %v6048
        %v6059 = vunpack.c.l.b16 %v6049
        %v6060 = vpack.c.b16 %v6057, %v6056
        %v6061 = vpack.c.b16 %v6059, %v6058
        %v6065 = vsel %vm1262, %v6044, 0
        %6067 = vmatpush.bf16.msra.mxu0 0
        %6068 = vmatpush.bf16.msra.mxu0 0
        %6069 = vmatpush.bf16.msra.mxu0 0
        %6070 = vmatpush.bf16.msra.mxu0 0
        %6071 = vmatpush.bf16.msra.mxu0 0
        %6072 = vmatpush.bf16.msra.mxu0 0
        %6073 = vmatpush.bf16.msra.mxu0 %v6061
        %6074 = vmatpush.bf16.msra.mxu0 %v6060
        %6075 = vmatmul.bf16.gmra.mxu0 %v6065
        %v6076 = vpop.f32.mrf.mxu0
        %v6077 = vadd.f32 %v6051, %v6076
        %v6078 = vpop.f32.mrf.mxu0
        %6079 = vdwg.mxu0
        %v6080 = vadd.f32 %v5938, %v6077
        %s6081 = scalar_lea.vmem %s61, 3
        %v6082 = vld [vmem:[%s6081] sm:$0x1]
        %s6083 = scalar_lea.vmem %s63, 3
        %v6084 = vld [vmem:[%s6083] sm:$0x1]
        %v6085 = vsel %vm5520, %v6080, 0.0
        %6086 = vadd.xlane.f32.xlu0 %v6085
        %v6087 = vpop.xlane.xlu0 %6086
        %v6088 = vmul.f32 %v6087, %v1468
        %v6089 = vsub.f32 %v6080, %v6088
        %v6090 = vmul.f32 %v6089, %v6089
        %v6091 = vsel %vm5520, %v6090, 0.0
        %6092 = vadd.xlane.f32.xlu0 %v6091
        %v6093 = vpop.xlane.xlu0 %6092
        %v6094 = vmul.f32 %v6093, %v1468
        %v6095 = vadd.f32 %v6094, 1e-05
        %v6096 = vrsqrt.pop %v6095
        %v6097 = vmul.f32 %v6096, %v6095
        %v6098 = vmul.f32 %v6097, %v6096
        %v6099 = vmul.f32 0.5, %v6098
        %v6100 = vsub.f32 1.5, %v6099
        %v6101 = vmul.f32 %v6096, %v6100
        %vm6102 = vweird.f32 %v6095
        %vm6103 = vweird.f32 %v6096
        %vm6104 = vmor %vm6102, %vm6103
        %v6105 = vsel %vm6104, %v6096, %v6101
        %v6106 = vmul.f32 %v6089, %v6105
        %v6107 = vmul.f32 %v6106, %v6082
        %v6108 = vadd.f32 %v6107, %v6084
        %s6109 = scalar_lea.vmem %s11, %s87
        %v6110 = vld [vmem:[%s6109] sm:$0x1]
        %v6111 = vpack.c.bf16 %v6110, %v6110
        %s6112 = scalar_lea.vmem %s45, 64
        %v6113 = vld [vmem:[%s6112] sm:$0xf]
        %v6114 = vld [vmem:[%s6112 + $0x4] sm:$0xf]
        %v6115 = vld [vmem:[%s6112 + $0x8] sm:$0xf]
        %v6116 = vld [vmem:[%s6112 + $0xc] sm:$0xf]
        %v6117 = vld [vmem:[%s6112 + $0x10] sm:$0xf]
        %v6118 = vld [vmem:[%s6112 + $0x14] sm:$0xf]
        %v6119 = vld [vmem:[%s6112 + $0x18] sm:$0xf]
        %v6120 = vld [vmem:[%s6112 + $0x1c] sm:$0xf]
        %s6121 = scalar_lea.vmem %s47, 2
        %v6122 = vld [vmem:[%s6121] sm:$0x1]
        %v6131 = vunpack.c.l.b16 %v6113
        %v6132 = vunpack.c.l.b16 %v6114
        %v6133 = vunpack.c.l.b16 %v6115
        %v6134 = vunpack.c.l.b16 %v6116
        %v6135 = vunpack.c.l.b16 %v6117
        %v6136 = vunpack.c.l.b16 %v6118
        %v6137 = vunpack.c.l.b16 %v6119
        %v6138 = vunpack.c.l.b16 %v6120
        %v6139 = vpack.c.b16 %v6132, %v6131
        %v6140 = vpack.c.b16 %v6134, %v6133
        %v6141 = vpack.c.b16 %v6136, %v6135
        %v6142 = vpack.c.b16 %v6138, %v6137
        %v6148 = vsel %vm5362, %v6111, 0
        %6150 = vmatpush.bf16.msra.mxu0 0
        %6151 = vmatpush.bf16.msra.mxu0 0
        %6152 = vmatpush.bf16.msra.mxu0 0
        %6153 = vmatpush.bf16.msra.mxu0 0
        %6154 = vmatpush.bf16.msra.mxu0 %v6142
        %6155 = vmatpush.bf16.msra.mxu0 %v6141
        %6156 = vmatpush.bf16.msra.mxu0 %v6140
        %6157 = vmatpush.bf16.msra.mxu0 %v6139
        %6158 = vmatmul.bf16.gmra.mxu0 %v6148
        %v6159 = vpop.f32.mrf.mxu0
        %v6160 = vadd.f32 %v6122, %v6159
        %v6161 = vpop.f32.mrf.mxu0
        %6162 = vdwg.mxu0
        %v6163 = vpack.c.bf16 %v6160, %v6160
        %s6164 = scalar_lea.vmem %s49, 64
        %v6165 = vld [vmem:[%s6164] sm:$0xf]
        %v6166 = vld [vmem:[%s6164 + $0x4] sm:$0xf]
        %v6167 = vld [vmem:[%s6164 + $0x8] sm:$0xf]
        %v6168 = vld [vmem:[%s6164 + $0xc] sm:$0xf]
        %s6169 = scalar_lea.vmem %s51, 4
        %v6170 = vld [vmem:[%s6169] sm:$0x1]
        %v6175 = vunpack.c.l.b16 %v6165
        %v6176 = vunpack.c.l.b16 %v6166
        %v6177 = vunpack.c.l.b16 %v6167
        %v6178 = vunpack.c.l.b16 %v6168
        %v6179 = vpack.c.b16 %v6176, %v6175
        %v6180 = vpack.c.b16 %v6178, %v6177
        %v6184 = vsel %vm1262, %v6163, 0
        %6186 = vmatpush.bf16.msra.mxu0 0
        %6187 = vmatpush.bf16.msra.mxu0 0
        %6188 = vmatpush.bf16.msra.mxu0 0
        %6189 = vmatpush.bf16.msra.mxu0 0
        %6190 = vmatpush.bf16.msra.mxu0 0
        %6191 = vmatpush.bf16.msra.mxu0 0
        %6192 = vmatpush.bf16.msra.mxu0 %v6180
        %6193 = vmatpush.bf16.msra.mxu0 %v6179
        %6194 = vmatmul.bf16.gmra.mxu0 %v6184
        %v6195 = vpop.f32.mrf.mxu0
        %v6196 = vadd.f32 %v6170, %v6195
        %v6197 = vpop.f32.mrf.mxu0
        %6198 = vdwg.mxu0
        %v6199 = vpack.c.bf16 %v6196, %v6196
        %v6200 = vpack.c.bf16 %v5323, %v5323
        %v6202 = vsel %vm1262, %v6199, 0
        %v6205 = vsel %vm1262, %v6200, 0
        %6207 = vmatpush.bf16.xpose.msra.mxu0 0
        %6208 = vmatpush.bf16.xpose.msra.mxu0 0
        %6209 = vmatpush.bf16.xpose.msra.mxu0 0
        %6210 = vmatpush.bf16.xpose.msra.mxu0 0
        %6211 = vmatpush.bf16.xpose.msra.mxu0 0
        %6212 = vmatpush.bf16.xpose.msra.mxu0 0
        %6213 = vmatpush.bf16.xpose.msra.mxu0 0
        %6214 = vmatpush.bf16.xpose.msra.mxu0 %v6205
        %6215 = vmatmul.bf16.gmra.mxu0 %v6202
        %v6216 = vpop.f32.mrf.mxu0
        %v6217 = vadd.f32 0.0, %v6216
        %v6218 = vpop.f32.mrf.mxu0
        %6219 = vdwg.mxu0
        %v6220 = vmul.f32 %v6217, 0.17677669
        %v6221 = vsel %vm5435, %v6220, -inf
        %6222 = vmax.xlane.f32.xlu0 %v6221
        %v6223 = vpop.xlane.xlu0 %6222
        %v6224 = vsub.f32 %v6220, %v6223
        %v6225 = vmul.f32 %v6224, 1.442695
        %v6226 = vpow.pop %v6225
        %v6227 = vsel %vm5435, %v6226, 0.0
        %6228 = vadd.xlane.f32.xlu0 %v6227
        %v6229 = vpop.xlane.xlu0 %6228
        %v6230 = vrcp.pop %v6229
        %v6231 = vmul.f32 %v6229, %v6230
        %v6232 = vsub.f32 1.0, %v6231
        %v6233 = vmul.f32 %v6230, %v6232
        %v6234 = vadd.f32 %v6230, %v6233
        %vm6235 = vweird.f32 %v6229
        %vm6236 = vweird.f32 %v6230
        %vm6237 = vmor %vm6235, %vm6236
        %v6238 = vsel %vm6237, %v6230, %v6234
        %v6239 = vand.u32 2147483647, %v6229
        %vm6240 = vcmp.eq.f32.partialorder %v6239, 8.507059e+37
        %v6241 = vand.u32 %v6229, 2147483648
        %v6242 = vor.u32 1.1754944e-38, %v6241
        %v6243 = vsel %vm6240, %v6242, %v6238
        %v6244 = vmul.f32 %v6226, %v6243
        %v6245 = vpack.c.bf16 %v6244, %v6244
        %6247 = vrot.lane.b32.xlu0 %v6200, 96
        %v6248 = vpop.permute.xlu0 %6247
        %v6250 = vsel %vm1372, %v6245, 0
        %v6253 = vsel %vm1402, %v6248, 0
        %6255 = vmatpush.bf16.msra.mxu0 0
        %6256 = vmatpush.bf16.msra.mxu0 0
        %6257 = vmatpush.bf16.msra.mxu0 0
        %6258 = vmatpush.bf16.msra.mxu0 0
        %6259 = vmatpush.bf16.msra.mxu0 0
        %6260 = vmatpush.bf16.msra.mxu0 0
        %6261 = vmatpush.bf16.msra.mxu0 0
        %6262 = vmatpush.bf16.msra.mxu0 %v6253
        %6263 = vmatmul.bf16.gmra.mxu0 %v6250
        %v6264 = vpop.f32.mrf.mxu0
        %v6265 = vadd.f32 0.0, %v6264
        %v6266 = vpop.f32.mrf.mxu0
        %6267 = vdwg.mxu0
        %v6268 = vpack.c.bf16 %v6265, %v6265
        %s6269 = scalar_lea.vmem %s57, 64
        %v6270 = vld [vmem:[%s6269] sm:$0xf]
        %v6271 = vld [vmem:[%s6269 + $0x4] sm:$0xf]
        %v6272 = vld [vmem:[%s6269 + $0x8] sm:$0xf]
        %v6273 = vld [vmem:[%s6269 + $0xc] sm:$0xf]
        %s6274 = scalar_lea.vmem %s59, 4
        %v6275 = vld [vmem:[%s6274] sm:$0x1]
        %v6280 = vunpack.c.l.b16 %v6270
        %v6281 = vunpack.c.l.b16 %v6271
        %v6282 = vunpack.c.l.b16 %v6272
        %v6283 = vunpack.c.l.b16 %v6273
        %v6284 = vpack.c.b16 %v6281, %v6280
        %v6285 = vpack.c.b16 %v6283, %v6282
        %v6289 = vsel %vm1262, %v6268, 0
        %6291 = vmatpush.bf16.msra.mxu0 0
        %6292 = vmatpush.bf16.msra.mxu0 0
        %6293 = vmatpush.bf16.msra.mxu0 0
        %6294 = vmatpush.bf16.msra.mxu0 0
        %6295 = vmatpush.bf16.msra.mxu0 0
        %6296 = vmatpush.bf16.msra.mxu0 0
        %6297 = vmatpush.bf16.msra.mxu0 %v6285
        %6298 = vmatpush.bf16.msra.mxu0 %v6284
        %6299 = vmatmul.bf16.gmra.mxu0 %v6289
        %v6300 = vpop.f32.mrf.mxu0
        %v6301 = vadd.f32 %v6275, %v6300
        %v6302 = vpop.f32.mrf.mxu0
        %6303 = vdwg.mxu0
        %v6304 = vadd.f32 %v6160, %v6301
        %s6305 = scalar_lea.vmem %s61, 4
        %v6306 = vld [vmem:[%s6305] sm:$0x1]
        %s6307 = scalar_lea.vmem %s63, 4
        %v6308 = vld [vmem:[%s6307] sm:$0x1]
        %v6309 = vsel %vm5520, %v6304, 0.0
        %6310 = vadd.xlane.f32.xlu0 %v6309
        %v6311 = vpop.xlane.xlu0 %6310
        %v6312 = vmul.f32 %v6311, %v1468
        %v6313 = vsub.f32 %v6304, %v6312
        %v6314 = vmul.f32 %v6313, %v6313
        %v6315 = vsel %vm5520, %v6314, 0.0
        %6316 = vadd.xlane.f32.xlu0 %v6315
        %v6317 = vpop.xlane.xlu0 %6316
        %v6318 = vmul.f32 %v6317, %v1468
        %v6319 = vadd.f32 %v6318, 1e-05
        %v6320 = vrsqrt.pop %v6319
        %v6321 = vmul.f32 %v6320, %v6319
        %v6322 = vmul.f32 %v6321, %v6320
        %v6323 = vmul.f32 0.5, %v6322
        %v6324 = vsub.f32 1.5, %v6323
        %v6325 = vmul.f32 %v6320, %v6324
        %vm6326 = vweird.f32 %v6319
        %vm6327 = vweird.f32 %v6320
        %vm6328 = vmor %vm6326, %vm6327
        %v6329 = vsel %vm6328, %v6320, %v6325
        %v6330 = vmul.f32 %v6313, %v6329
        %v6331 = vmul.f32 %v6330, %v6306
        %v6332 = vadd.f32 %v6331, %v6308
        %v6333 = vpack.c.bf16 %v6332, %v6332
        %s6334 = scalar_lea.vmem %s49, 80
        %v6335 = vld [vmem:[%s6334] sm:$0xf]
        %v6336 = vld [vmem:[%s6334 + $0x4] sm:$0xf]
        %v6337 = vld [vmem:[%s6334 + $0x8] sm:$0xf]
        %v6338 = vld [vmem:[%s6334 + $0xc] sm:$0xf]
        %s6339 = scalar_lea.vmem %s51, 5
        %v6340 = vld [vmem:[%s6339] sm:$0x1]
        %v6345 = vunpack.c.l.b16 %v6335
        %v6346 = vunpack.c.l.b16 %v6336
        %v6347 = vunpack.c.l.b16 %v6337
        %v6348 = vunpack.c.l.b16 %v6338
        %v6349 = vpack.c.b16 %v6346, %v6345
        %v6350 = vpack.c.b16 %v6348, %v6347
        %v6354 = vsel %vm1262, %v6333, 0
        %6356 = vmatpush.bf16.msra.mxu0 0
        %6357 = vmatpush.bf16.msra.mxu0 0
        %6358 = vmatpush.bf16.msra.mxu0 0
        %6359 = vmatpush.bf16.msra.mxu0 0
        %6360 = vmatpush.bf16.msra.mxu0 0
        %6361 = vmatpush.bf16.msra.mxu0 0
        %6362 = vmatpush.bf16.msra.mxu0 %v6350
        %6363 = vmatpush.bf16.msra.mxu0 %v6349
        %6364 = vmatmul.bf16.gmra.mxu0 %v6354
        %v6365 = vpop.f32.mrf.mxu0
        %v6366 = vadd.f32 %v6340, %v6365
        %v6367 = vpop.f32.mrf.mxu0
        %6368 = vdwg.mxu0
        %v6369 = vpack.c.bf16 %v6366, %v6366
        %6370 = vrot.lane.b32.xlu0 %v6200, 64
        %v6371 = vpop.permute.xlu0 %6370
        %v6373 = vsel %vm1262, %v6369, 0
        %v6376 = vsel %vm1262, %v6371, 0
        %6378 = vmatpush.bf16.xpose.msra.mxu0 0
        %6379 = vmatpush.bf16.xpose.msra.mxu0 0
        %6380 = vmatpush.bf16.xpose.msra.mxu0 0
        %6381 = vmatpush.bf16.xpose.msra.mxu0 0
        %6382 = vmatpush.bf16.xpose.msra.mxu0 0
        %6383 = vmatpush.bf16.xpose.msra.mxu0 0
        %6384 = vmatpush.bf16.xpose.msra.mxu0 0
        %6385 = vmatpush.bf16.xpose.msra.mxu0 %v6376
        %6386 = vmatmul.bf16.gmra.mxu0 %v6373
        %v6387 = vpop.f32.mrf.mxu0
        %v6388 = vadd.f32 0.0, %v6387
        %v6389 = vpop.f32.mrf.mxu0
        %6390 = vdwg.mxu0
        %v6391 = vmul.f32 %v6388, 0.17677669
        %v6392 = vsel %vm5435, %v6391, -inf
        %6393 = vmax.xlane.f32.xlu0 %v6392
        %v6394 = vpop.xlane.xlu0 %6393
        %v6395 = vsub.f32 %v6391, %v6394
        %v6396 = vmul.f32 %v6395, 1.442695
        %v6397 = vpow.pop %v6396
        %v6398 = vsel %vm5435, %v6397, 0.0
        %6399 = vadd.xlane.f32.xlu0 %v6398
        %v6400 = vpop.xlane.xlu0 %6399
        %v6401 = vrcp.pop %v6400
        %v6402 = vmul.f32 %v6400, %v6401
        %v6403 = vsub.f32 1.0, %v6402
        %v6404 = vmul.f32 %v6401, %v6403
        %v6405 = vadd.f32 %v6401, %v6404
        %vm6406 = vweird.f32 %v6400
        %vm6407 = vweird.f32 %v6401
        %vm6408 = vmor %vm6406, %vm6407
        %v6409 = vsel %vm6408, %v6401, %v6405
        %v6410 = vand.u32 2147483647, %v6400
        %vm6411 = vcmp.eq.f32.partialorder %v6410, 8.507059e+37
        %v6412 = vand.u32 %v6400, 2147483648
        %v6413 = vor.u32 1.1754944e-38, %v6412
        %v6414 = vsel %vm6411, %v6413, %v6409
        %v6415 = vmul.f32 %v6397, %v6414
        %v6416 = vpack.c.bf16 %v6415, %v6415
        %6417 = vrot.lane.b32.xlu0 %v6200, 32
        %v6418 = vpop.permute.xlu0 %6417
        %v6420 = vsel %vm1372, %v6416, 0
        %v6423 = vsel %vm1402, %v6418, 0
        %6425 = vmatpush.bf16.msra.mxu0 0
        %6426 = vmatpush.bf16.msra.mxu0 0
        %6427 = vmatpush.bf16.msra.mxu0 0
        %6428 = vmatpush.bf16.msra.mxu0 0
        %6429 = vmatpush.bf16.msra.mxu0 0
        %6430 = vmatpush.bf16.msra.mxu0 0
        %6431 = vmatpush.bf16.msra.mxu0 0
        %6432 = vmatpush.bf16.msra.mxu0 %v6423
        %6433 = vmatmul.bf16.gmra.mxu0 %v6420
        %v6434 = vpop.f32.mrf.mxu0
        %v6435 = vadd.f32 0.0, %v6434
        %v6436 = vpop.f32.mrf.mxu0
        %6437 = vdwg.mxu0
        %v6438 = vpack.c.bf16 %v6435, %v6435
        %s6439 = scalar_lea.vmem %s57, 80
        %v6440 = vld [vmem:[%s6439] sm:$0xf]
        %v6441 = vld [vmem:[%s6439 + $0x4] sm:$0xf]
        %v6442 = vld [vmem:[%s6439 + $0x8] sm:$0xf]
        %v6443 = vld [vmem:[%s6439 + $0xc] sm:$0xf]
        %s6444 = scalar_lea.vmem %s59, 5
        %v6445 = vld [vmem:[%s6444] sm:$0x1]
        %v6450 = vunpack.c.l.b16 %v6440
        %v6451 = vunpack.c.l.b16 %v6441
        %v6452 = vunpack.c.l.b16 %v6442
        %v6453 = vunpack.c.l.b16 %v6443
        %v6454 = vpack.c.b16 %v6451, %v6450
        %v6455 = vpack.c.b16 %v6453, %v6452
        %v6459 = vsel %vm1262, %v6438, 0
        %6461 = vmatpush.bf16.msra.mxu0 0
        %6462 = vmatpush.bf16.msra.mxu0 0
        %6463 = vmatpush.bf16.msra.mxu0 0
        %6464 = vmatpush.bf16.msra.mxu0 0
        %6465 = vmatpush.bf16.msra.mxu0 0
        %6466 = vmatpush.bf16.msra.mxu0 0
        %6467 = vmatpush.bf16.msra.mxu0 %v6455
        %6468 = vmatpush.bf16.msra.mxu0 %v6454
        %6469 = vmatmul.bf16.gmra.mxu0 %v6459
        %v6470 = vpop.f32.mrf.mxu0
        %v6471 = vadd.f32 %v6445, %v6470
        %v6472 = vpop.f32.mrf.mxu0
        %6473 = vdwg.mxu0
        %v6474 = vadd.f32 %v6332, %v6471
        %s6475 = scalar_lea.vmem %s61, 5
        %v6476 = vld [vmem:[%s6475] sm:$0x1]
        %s6477 = scalar_lea.vmem %s63, 5
        %v6478 = vld [vmem:[%s6477] sm:$0x1]
        %v6479 = vsel %vm5520, %v6474, 0.0
        %6480 = vadd.xlane.f32.xlu0 %v6479
        %v6481 = vpop.xlane.xlu0 %6480
        %v6482 = vmul.f32 %v6481, %v1468
        %v6483 = vsub.f32 %v6474, %v6482
        %v6484 = vmul.f32 %v6483, %v6483
        %v6485 = vsel %vm5520, %v6484, 0.0
        %6486 = vadd.xlane.f32.xlu0 %v6485
        %v6487 = vpop.xlane.xlu0 %6486
        %v6488 = vmul.f32 %v6487, %v1468
        %v6489 = vadd.f32 %v6488, 1e-05
        %v6490 = vrsqrt.pop %v6489
        %v6491 = vmul.f32 %v6490, %v6489
        %v6492 = vmul.f32 %v6491, %v6490
        %v6493 = vmul.f32 0.5, %v6492
        %v6494 = vsub.f32 1.5, %v6493
        %v6495 = vmul.f32 %v6490, %v6494
        %vm6496 = vweird.f32 %v6489
        %vm6497 = vweird.f32 %v6490
        %vm6498 = vmor %vm6496, %vm6497
        %v6499 = vsel %vm6498, %v6490, %v6495
        %v6500 = vmul.f32 %v6483, %v6499
        %v6501 = vmul.f32 %v6500, %v6476
        %v6502 = vadd.f32 %v6501, %v6478
        %6504 = vrot.lane.b32.xlu0 %v6108, 32
        %v6505 = vpop.permute.xlu0 %6504
        %6508 = vrot.lane.b32.xlu0 %v6502, 64
        %v6509 = vpop.permute.xlu0 %6508
        %v6511 = vsel %vm1262, %v5714, %v6505
        %v6512 = vsel %vm5362, %v6511, %v6509
        %v6513 = vpack.c.bf16 %v6512, %v6512
        %v6514 = vld [vmem:[%s65] sm:$0xff]
        %v6515 = vld [vmem:[%s65 + $0x8] sm:$0xff]
        %v6516 = vld [vmem:[%s65 + $0x10] sm:$0xff]
        %v6517 = vld [vmem:[%s65 + $0x18] sm:$0xff]
        %v6518 = vld [vmem:[%s65 + $0x20] sm:$0xff]
        %v6519 = vld [vmem:[%s65 + $0x28] sm:$0xff]
        %v6520 = vld [vmem:[%s65 + $0x30] sm:$0xff]
        %v6521 = vld [vmem:[%s65 + $0x38] sm:$0xff]
        %v6522 = vld [vmem:[%s65 + $0x40] sm:$0xff]
        %v6523 = vld [vmem:[%s65 + $0x48] sm:$0xff]
        %v6524 = vld [vmem:[%s65 + $0x50] sm:$0xff]
        %v6525 = vld [vmem:[%s65 + $0x58] sm:$0xff]
        %v6526 = vld [vmem:[%s67] sm:$0x3]
        %v6539 = vunpack.c.l.b16 %v6514
        %v6540 = vunpack.c.h.b16 %v6514
        %v6541 = vunpack.c.l.b16 %v6515
        %v6542 = vunpack.c.h.b16 %v6515
        %v6543 = vunpack.c.l.b16 %v6516
        %v6544 = vunpack.c.h.b16 %v6516
        %v6545 = vunpack.c.l.b16 %v6517
        %v6546 = vunpack.c.h.b16 %v6517
        %v6547 = vunpack.c.l.b16 %v6518
        %v6548 = vunpack.c.h.b16 %v6518
        %v6549 = vunpack.c.l.b16 %v6519
        %v6550 = vunpack.c.h.b16 %v6519
        %v6551 = vunpack.c.l.b16 %v6520
        %v6552 = vunpack.c.h.b16 %v6520
        %v6553 = vunpack.c.l.b16 %v6521
        %v6554 = vunpack.c.h.b16 %v6521
        %v6555 = vunpack.c.l.b16 %v6522
        %v6556 = vunpack.c.h.b16 %v6522
        %v6557 = vunpack.c.l.b16 %v6523
        %v6558 = vunpack.c.h.b16 %v6523
        %v6559 = vunpack.c.l.b16 %v6524
        %v6560 = vunpack.c.h.b16 %v6524
        %v6561 = vunpack.c.l.b16 %v6525
        %v6562 = vunpack.c.h.b16 %v6525
        %v6563 = vpack.c.b16 %v6541, %v6539
        %v6564 = vpack.c.b16 %v6542, %v6540
        %v6565 = vpack.c.b16 %v6545, %v6543
        %v6566 = vpack.c.b16 %v6546, %v6544
        %v6567 = vpack.c.b16 %v6549, %v6547
        %v6568 = vpack.c.b16 %v6550, %v6548
        %v6569 = vpack.c.b16 %v6553, %v6551
        %v6570 = vpack.c.b16 %v6554, %v6552
        %v6571 = vpack.c.b16 %v6557, %v6555
        %v6572 = vpack.c.b16 %v6558, %v6556
        %v6573 = vpack.c.b16 %v6561, %v6559
        %v6574 = vpack.c.b16 %v6562, %v6560
        %v6588 = vperm.slane %v6526, 0
        %v6589 = vperm.slane %v6526, 1
        %vm6592 = vcmask 785408
        %v6594 = vsel %vm6592, %v6513, 0
        %6596 = vmatpush.bf16.msra.mxu0 0
        %6597 = vmatpush.bf16.msra.mxu0 0
        %6598 = vmatpush.bf16.msra.mxu0 %v6573
        %6599 = vmatpush.bf16.msra.mxu0 %v6571
        %6600 = vmatpush.bf16.msra.mxu0 %v6569
        %6601 = vmatpush.bf16.msra.mxu0 %v6567
        %6602 = vmatpush.bf16.msra.mxu0 %v6565
        %6603 = vmatpush.bf16.msra.mxu0 %v6563
        %6604 = vmatmul.bf16.gmra.mxu0 %v6594
        %v6605 = vpop.f32.mrf.mxu0
        %v6606 = vadd.f32 %v6588, %v6605
        %v6607 = vpop.f32.mrf.mxu0
        %6608 = vdwg.mxu0
        %6609 = vmatpush.bf16.msra.mxu0 0
        %6610 = vmatpush.bf16.msra.mxu0 0
        %6611 = vmatpush.bf16.msra.mxu0 %v6574
        %6612 = vmatpush.bf16.msra.mxu0 %v6572
        %6613 = vmatpush.bf16.msra.mxu0 %v6570
        %6614 = vmatpush.bf16.msra.mxu0 %v6568
        %6615 = vmatpush.bf16.msra.mxu0 %v6566
        %6616 = vmatpush.bf16.msra.mxu0 %v6564
        %6617 = vmatmul.bf16.gmra.mxu0 %v6594
        %v6618 = vpop.f32.mrf.mxu0
        %v6619 = vadd.f32 %v6589, %v6618
        %v6620 = vpop.f32.mrf.mxu0
        %6621 = vdwg.mxu0
        %v6622 = vmax.f32 %v6606, 0.0
        %v6623 = vmax.f32 %v6619, 0.0
        %v6624 = vpack.c.bf16 %v6622, %v6622
        %v6625 = vpack.c.bf16 %v6623, %v6623
        %v6626 = vld [vmem:[%s69] sm:$0xf]
        %v6627 = vld [vmem:[%s69 + $0x4] sm:$0xf]
        %v6628 = vld [vmem:[%s69 + $0x8] sm:$0xf]
        %v6629 = vld [vmem:[%s69 + $0xc] sm:$0xf]
        %v6630 = vld [vmem:[%s69 + $0x10] sm:$0xf]
        %v6631 = vld [vmem:[%s69 + $0x14] sm:$0xf]
        %v6632 = vld [vmem:[%s69 + $0x18] sm:$0xf]
        %v6633 = vld [vmem:[%s69 + $0x1c] sm:$0xf]
        %v6634 = vld [vmem:[%s69 + $0x20] sm:$0xf]
        %v6635 = vld [vmem:[%s69 + $0x24] sm:$0xf]
        %v6636 = vld [vmem:[%s69 + $0x28] sm:$0xf]
        %v6637 = vld [vmem:[%s69 + $0x2c] sm:$0xf]
        %v6638 = vld [vmem:[%s69 + $0x30] sm:$0xf]
        %v6639 = vld [vmem:[%s69 + $0x34] sm:$0xf]
        %v6640 = vld [vmem:[%s69 + $0x38] sm:$0xf]
        %v6641 = vld [vmem:[%s69 + $0x3c] sm:$0xf]
        %v6642 = vld [vmem:[%s69 + $0x40] sm:$0xf]
        %v6643 = vld [vmem:[%s69 + $0x44] sm:$0xf]
        %v6644 = vld [vmem:[%s69 + $0x48] sm:$0xf]
        %v6645 = vld [vmem:[%s69 + $0x4c] sm:$0xf]
        %v6646 = vld [vmem:[%s69 + $0x50] sm:$0xf]
        %v6647 = vld [vmem:[%s69 + $0x54] sm:$0xf]
        %v6648 = vld [vmem:[%s69 + $0x58] sm:$0xf]
        %v6649 = vld [vmem:[%s69 + $0x5c] sm:$0xf]
        %v6650 = vld [vmem:[%s69 + $0x60] sm:$0xf]
        %v6651 = vld [vmem:[%s69 + $0x64] sm:$0xf]
        %v6652 = vld [vmem:[%s69 + $0x68] sm:$0xf]
        %v6653 = vld [vmem:[%s69 + $0x6c] sm:$0xf]
        %v6654 = vld [vmem:[%s69 + $0x70] sm:$0xf]
        %v6655 = vld [vmem:[%s69 + $0x74] sm:$0xf]
        %v6656 = vld [vmem:[%s69 + $0x78] sm:$0xf]
        %v6657 = vld [vmem:[%s69 + $0x7c] sm:$0xf]
        %v6658 = vld [vmem:[#allocation2] sm:$0x1]
        %v6691 = vunpack.c.l.b16 %v6626
        %v6692 = vunpack.c.l.b16 %v6627
        %v6693 = vunpack.c.l.b16 %v6628
        %v6694 = vunpack.c.l.b16 %v6629
        %v6695 = vunpack.c.l.b16 %v6630
        %v6696 = vunpack.c.l.b16 %v6631
        %v6697 = vunpack.c.l.b16 %v6632
        %v6698 = vunpack.c.l.b16 %v6633
        %v6699 = vunpack.c.l.b16 %v6634
        %v6700 = vunpack.c.l.b16 %v6635
        %v6701 = vunpack.c.l.b16 %v6636
        %v6702 = vunpack.c.l.b16 %v6637
        %v6703 = vunpack.c.l.b16 %v6638
        %v6704 = vunpack.c.l.b16 %v6639
        %v6705 = vunpack.c.l.b16 %v6640
        %v6706 = vunpack.c.l.b16 %v6641
        %v6707 = vunpack.c.l.b16 %v6642
        %v6708 = vunpack.c.l.b16 %v6643
        %v6709 = vunpack.c.l.b16 %v6644
        %v6710 = vunpack.c.l.b16 %v6645
        %v6711 = vunpack.c.l.b16 %v6646
        %v6712 = vunpack.c.l.b16 %v6647
        %v6713 = vunpack.c.l.b16 %v6648
        %v6714 = vunpack.c.l.b16 %v6649
        %v6715 = vunpack.c.l.b16 %v6650
        %v6716 = vunpack.c.l.b16 %v6651
        %v6717 = vunpack.c.l.b16 %v6652
        %v6718 = vunpack.c.l.b16 %v6653
        %v6719 = vunpack.c.l.b16 %v6654
        %v6720 = vunpack.c.l.b16 %v6655
        %v6721 = vunpack.c.l.b16 %v6656
        %v6722 = vunpack.c.l.b16 %v6657
        %v6723 = vpack.c.b16 %v6692, %v6691
        %v6724 = vpack.c.b16 %v6694, %v6693
        %v6725 = vpack.c.b16 %v6696, %v6695
        %v6726 = vpack.c.b16 %v6698, %v6697
        %v6727 = vpack.c.b16 %v6700, %v6699
        %v6728 = vpack.c.b16 %v6702, %v6701
        %v6729 = vpack.c.b16 %v6704, %v6703
        %v6730 = vpack.c.b16 %v6706, %v6705
        %v6731 = vpack.c.b16 %v6708, %v6707
        %v6732 = vpack.c.b16 %v6710, %v6709
        %v6733 = vpack.c.b16 %v6712, %v6711
        %v6734 = vpack.c.b16 %v6714, %v6713
        %v6735 = vpack.c.b16 %v6716, %v6715
        %v6736 = vpack.c.b16 %v6718, %v6717
        %v6737 = vpack.c.b16 %v6720, %v6719
        %v6738 = vpack.c.b16 %v6722, %v6721
        %6755 = vmatpush.bf16.msra.mxu0 %v6730
        %6756 = vmatpush.bf16.msra.mxu0 %v6729
        %6757 = vmatpush.bf16.msra.mxu0 %v6728
        %6758 = vmatpush.bf16.msra.mxu0 %v6727
        %6759 = vmatpush.bf16.msra.mxu0 %v6726
        %6760 = vmatpush.bf16.msra.mxu0 %v6725
        %6761 = vmatpush.bf16.msra.mxu0 %v6724
        %6762 = vmatpush.bf16.msra.mxu0 %v6723
        %6763 = vmatmul.bf16.gmra.mxu0 %v6624
        %v6764 = vpop.f32.mrf.mxu0
        %v6765 = vadd.f32 %v6658, %v6764
        %v6766 = vpop.f32.mrf.mxu0
        %6767 = vdwg.mxu0
        %6768 = vmatpush.bf16.msra.mxu0 %v6738
        %6769 = vmatpush.bf16.msra.mxu0 %v6737
        %6770 = vmatpush.bf16.msra.mxu0 %v6736
        %6771 = vmatpush.bf16.msra.mxu0 %v6735
        %6772 = vmatpush.bf16.msra.mxu0 %v6734
        %6773 = vmatpush.bf16.msra.mxu0 %v6733
        %6774 = vmatpush.bf16.msra.mxu0 %v6732
        %6775 = vmatpush.bf16.msra.mxu0 %v6731
        %6776 = vmatmul.bf16.gmra.mxu0 %v6625
        %v6777 = vpop.f32.mrf.mxu0
        %v6778 = vadd.f32 %v6765, %v6777
        %v6779 = vpop.f32.mrf.mxu0
        %6780 = vdwg.mxu0
        %vm6781 = vcmask 0
        %6782 = vst.msk [vmem:[%s1141] sm:$0x1] %vm6781, %v6778
        %p6783 = scmp.lt.s32.totalorder %s87, 1
        %s6784 = scalar_select %p6783, %s87, 1
        %s6785 = scalar_lea.vmem %s73, %s6784
        // Predicated region
        $region169: #{bgd_forward.1} parent=163 // pred_check
          %p6786 = pneg %p876
        $region170: #{bgd_forward.1} parent=163 // pred_check_branch
          %6788 = sbr.rel (%p6786) target = $region172
        $region171: #{bgd_forward.1} parent=163 // pred_region
          _
        $region172: #{bgd_forward.1} parent=163 // pred_fallthru
          _
      $region164: #{bgd_forward.1} parent=5 // pred_fallthru
        _
      %p6789 = scmp.le.s32.totalorder 2, %s82
      // Predicated region
      $region173: #{bgd_forward.1} parent=5 // pred_check
        %p6790 = pneg %p6789
      $region174: #{bgd_forward.1} parent=5 // pred_check_branch
        %6792 = sbr.rel (%p6790) target = $region176
      $region175: #{bgd_forward.1} parent=5 // pred_region
        %s6793 = ssub.s32 %s82, 2
        // Predicated region
        $region177: #{bgd_forward.1} parent=175 // pred_check
          %p6794 = pneg %p882
        $region178: #{bgd_forward.1} parent=175 // pred_check_branch
          %6796 = sbr.rel (%p6794) target = $region180
        $region179: #{bgd_forward.1} parent=175 // pred_region
          %p6797 = scmp.lt.s32.totalorder %s88, 1
          %s6798 = scalar_select %p6797, %s88, 1
          %s6799 = scalar_lea.vmem %s73, %s6798
        $region180: #{bgd_forward.1} parent=175 // pred_fallthru
          _
      $region176: #{bgd_forward.1} parent=5 // pred_fallthru
        _
    $region6: #{bgd_forward.1} parent=1 // loop_footer
      %s86 = sadd.s32 1, %s82
    $region7: #{bgd_forward.1} parent=1 // loop_footer_branch
      %81 = sbr.rel target = $region3
    $region8: #{bgd_forward.1} parent=1 // loop_exit
      _
    %6800 = vsyncpa [#allocation4], 1
    %s6801 = scalar_lea.sflag [#allocation4], 1
    %6802 = vsyncpa %s6801, 1

</llo_original>
